<compile_context>
chip_gen: v7x
topology: tpu7x:2x2x1
jax: 0.10.0
libtpu: 0.0.40
codegen_flags: <defaults>
</compile_context>

<pallas_src>
import functools

import jax
import jax.numpy as jnp
import numpy as np
from jax.experimental import pallas as pl
from jax.experimental.pallas import tpu as pltpu


# MnistNet(input_dim=1, n_downsample=1, n_resblocks=1, ngf=8, n_classes=10)
INPUT_DIM, N_DOWN, N_RES, NGF, N_CLASSES = 1, 1, 1, 8, 10
H = W = 16                       # spatial size the kernel is specialised to
HS, WS = H // 2, W // 2          # after the single stride-2 downsample
C1, C2 = NGF, NGF * 2            # 8, 16 channels
EPS = 1e-5                       # BatchNorm2d eps
_EMB_W = 4 * (C1 + C2)           # 96 = concat of the four FiLM embedding tables


# ============================================================================
# Fused kernel body
# ============================================================================

def _mnist_kernel(y_ref,                               # (N,) int32 SMEM (scalar prefetch)
                  x_ref, emb_ref,
                  l0_ref, r0_ref, c0_ref,              # Conv7x7(1->8, pad3)
                  l1_ref, r1_ref, c1_ref,              # Conv4x4(8->16, s2, pad1)
                  lr_ref, rr_ref, cr_ref,              # ResBlock Conv3x3(16->16, pad1)
                  lt_ref, rt_ref, ct_ref,              # ConvT4x4(16->8, s2, pad1)
                  ro_ref, co_ref,                      # Conv7x7(8->1, pad3) (reuses l0)
                  e8_ref, et8_ref, e16_ref, et16_ref,  # FiLM channel spread/reduce mats
                  bc16_ref, bc8_ref,                   # per-sample row broadcast mats
                  out_ref,
                  e_scr):                              # (N, 96) VMEM scratch
    f32 = jnp.float32
    n = x_ref.shape[0]

    def mm(a, b):
        return jnp.dot(a, b, preferred_element_type=f32)

    # --- in-kernel embedding gather (labels scalar-prefetched into SMEM) ----
    for i in range(n):
        e_scr[i:i + 1, :] = emb_ref[pl.ds(y_ref[i], 1), :]
    e_all = e_scr[...]                                  # (N, 96)

    e8, et8 = e8_ref[...], et8_ref[...]
    e16, et16 = e16_ref[...], et16_ref[...]
    bc16, bc8 = bc16_ref[...], bc8_ref[...]

    def film_relu(x, emb, spread, reduce, bcast):
        """BatchNorm2d(affine=False, training-mode batch stats, biased var)
        + per-sample FiLM affine + ReLU on a lane-dense (N*H, W*C) tensor."""
        rows, lanes = x.shape
        c = reduce.shape[1]
        cnt = rows * (lanes // c)                                    # N*H*W
        s_c = mm(jnp.sum(x, axis=0, keepdims=True), reduce)          # (1, C)
        q_c = mm(jnp.sum(x * x, axis=0, keepdims=True), reduce)      # (1, C)
        mean = s_c * (1.0 / cnt)
        var = q_c * (1.0 / cnt) - mean * mean                        # biased
        inv = jax.lax.rsqrt(var + EPS)                               # (1, C)
        alpha, beta = emb[:, :c], emb[:, c:]                         # (N, C)
        scale = inv * (1.0 + beta)                                   # (N, C)
        shift = alpha - mean * scale                                 # (N, C)
        scale_r = mm(bcast, mm(scale, spread))                       # (N*H, W*C)
        shift_r = mm(bcast, mm(shift, spread))
        return jnp.maximum(x * scale_r + shift_r, 0.0)

    def band_conv(x, l_ref, r_ref, bias_ref, k):
        """Full conv layer on the MXU:  sum_kh L[kh] @ x @ R[kh]  + bias."""
        acc = None
        for kh in range(k):
            t = mm(mm(l_ref[kh], x), r_ref[kh])
            acc = t if acc is None else acc + t
        return acc + bias_ref[...]

    # ---- Conv7x7(pad3) + FiLM + ReLU ----------------------------------------
    x0 = x_ref[...].reshape(n * H, W)                   # (32, 16)
    h1 = band_conv(x0, l0_ref, r0_ref, c0_ref, 7)       # (32, 128)
    h1 = film_relu(h1, e_all[:, 0:2 * C1], e8, et8, bc16)

    # ---- Conv4x4(stride 2, pad1) + FiLM + ReLU -------------------------------
    h2 = band_conv(h1, l1_ref, r1_ref, c1_ref, 4)       # (16, 128)
    h2 = film_relu(h2, e_all[:, 16:16 + 2 * C2], e16, et16, bc8)

    # ---- ResBlock: h2 + Conv3x3(ReLU(FiLM(h2))) ------------------------------
    r = film_relu(h2, e_all[:, 48:48 + 2 * C2], e16, et16, bc8)
    h3 = h2 + band_conv(r, lr_ref, rr_ref, cr_ref, 3)   # (16, 128)

    # ---- ConvTranspose4x4(stride 2, pad1) + FiLM + ReLU ----------------------
    up = band_conv(h3, lt_ref, rt_ref, ct_ref, 4)       # (32, 128)
    up = film_relu(up, e_all[:, 80:80 + 2 * C1], e8, et8, bc16)

    # ---- Conv7x7(pad3) + Tanh ------------------------------------------------
    o = band_conv(up, l0_ref, ro_ref, co_ref, 7)        # (32, 16)
    out_ref[...] = jnp.tanh(o).reshape(n, H, W)


# ============================================================================
# Host-side constant / weight repacking (one-time, not per-forward glue)
# ============================================================================

def _row_select(n, h_out, h_in, k, row_map):
    """L[kh][b*h_out + i, b*h_in + r] = 1 for r = row_map(i, kh) in range.
    Folds a conv's kh window + H stride/padding into a 0/1 row-mixing matrix
    (block-diagonal over the batch)."""
    sel = np.zeros((k, n * h_out, n * h_in), np.float32)
    for kh in range(k):
        for b in range(n):
            for i in range(h_out):
                r = row_map(i, kh)
                if r is not None and 0 <= r < h_in:
                    sel[kh, b * h_out + i, b * h_in + r] = 1.0
    return jnp.asarray(sel)


def _col_band(w, w_in, w_out, stride, pad):
    """Per-kh banded matrix for a Conv2d weight (Cout, Cin, K, K): folds the kw
    window, W stride/padding and ci->co mixing into (W_in*Cin, W_out*Cout)."""
    co, ci, k, _ = (int(s) for s in w.shape)
    wn = np.asarray(w, np.float32)
    band = np.zeros((k, w_in * ci, w_out * co), np.float32)
    for kh in range(k):
        for jo in range(w_out):
            for kw in range(k):
                ji = stride * jo + kw - pad
                if 0 <= ji < w_in:
                    band[kh, ji * ci:(ji + 1) * ci, jo * co:(jo + 1) * co] = \
                        wn[:, :, kh, kw].T
    return jnp.asarray(band)


def _col_band_t(w, w_in, w_out, stride, pad):
    """Same, for a ConvTranspose2d weight (Cin, Cout, K, K)."""
    ci, co, k, _ = (int(s) for s in w.shape)
    wn = np.asarray(w, np.float32)
    band = np.zeros((k, w_in * ci, w_out * co), np.float32)
    for kh in range(k):
        for jo in range(w_out):
            for kw in range(k):
                num = jo + pad - kw
                if num % stride:
                    continue
                ji = num // stride
                if 0 <= ji < w_in:
                    band[kh, ji * ci:(ji + 1) * ci, jo * co:(jo + 1) * co] = \
                        wn[:, :, kh, kw]
    return jnp.asarray(band)


def _film_mats(c, w):
    """Spread (C, W*C) / reduce (W*C, C) matrices for per-channel stats and
    FiLM broadcast in the lane-dense (.., W*C) layout (lane = j*C + c)."""
    e = np.zeros((c, w * c), np.float32)
    for j in range(w):
        for cc in range(c):
            e[cc, j * c + cc] = 1.0
    return jnp.asarray(e), jnp.asarray(np.ascontiguousarray(e.T))


def _bcast_rows(n, h):
    """(N*H, N) 0/1 matrix broadcasting a per-sample row over its H rows."""
    b = np.zeros((n * h, n), np.float32)
    for i in range(n):
        b[i * h:(i + 1) * h, i] = 1.0
    return jnp.asarray(b)


@functools.lru_cache(maxsize=None)
def _geometry(n):
    """Batch-size dependent constant matrices (built once per batch size)."""
    l0 = _row_select(n, H, H, 7, lambda i, kh: i + kh - 3)         # conv7 pad3
    l1 = _row_select(n, HS, H, 4, lambda i, kh: 2 * i + kh - 1)    # conv4 s2 pad1
    lr = _row_select(n, HS, HS, 3, lambda i, kh: i + kh - 1)       # conv3 pad1
    lt = _row_select(n, H, HS, 4,
                     lambda i, kh: (i + 1 - kh) // 2
                     if (i + 1 - kh) % 2 == 0 else None)           # convT4 s2 pad1
    e8, et8 = _film_mats(C1, W)
    e16, et16 = _film_mats(C2, WS)
    bc16 = _bcast_rows(n, H)
    bc8 = _bcast_rows(n, HS)
    return l0, l1, lr, lt, e8, et8, e16, et16, bc16, bc8


def init_params(key):
    """Random parameters in the PyTorch module's native layouts."""
    ks = jax.random.split(key, 14)
    nrm = lambda k, shape, s=0.05: s * jax.random.normal(k, shape, jnp.float32)
    p = {}
    p["w0"] = nrm(ks[0], (NGF, INPUT_DIM, 7, 7));      p["b0"] = nrm(ks[1], (NGF,))
    p["emb0"] = nrm(ks[2], (N_CLASSES, NGF * 2), 0.1)
    p["w1"] = nrm(ks[3], (NGF * 2, NGF, 4, 4));        p["b1"] = nrm(ks[4], (NGF * 2,))
    p["emb1"] = nrm(ks[5], (N_CLASSES, NGF * 4), 0.1)
    p["emb_r"] = nrm(ks[6], (N_CLASSES, NGF * 4), 0.1)
    p["wr"] = nrm(ks[7], (NGF * 2, NGF * 2, 3, 3));    p["br"] = nrm(ks[8], (NGF * 2,))
    p["wt"] = nrm(ks[9], (NGF * 2, NGF, 4, 4));        p["bt"] = nrm(ks[10], (NGF,))
    p["emb2"] = nrm(ks[11], (N_CLASSES, NGF * 2), 0.1)
    p["w_out"] = nrm(ks[12], (INPUT_DIM, NGF, 7, 7));  p["b_out"] = nrm(ks[13], (INPUT_DIM,))
    return p


def prepare_params(p):
    """One-time repack of PyTorch-layout weights into the kernel's lane-dense
    banded-matmul layouts (plus lane-tiled biases and one fused emb table)."""
    q = {}
    q["R0"] = _col_band(p["w0"], W, W, 1, 3)             # (7,  16, 128)
    q["c0"] = jnp.tile(p["b0"], W).reshape(1, W * C1)
    q["R1"] = _col_band(p["w1"], W, WS, 2, 1)            # (4, 128, 128)
    q["c1"] = jnp.tile(p["b1"], WS).reshape(1, WS * C2)
    q["Rr"] = _col_band(p["wr"], WS, WS, 1, 1)           # (3, 128, 128)
    q["cr"] = jnp.tile(p["br"], WS).reshape(1, WS * C2)
    q["Rt"] = _col_band_t(p["wt"], WS, W, 2, 1)          # (4, 128, 128)
    q["ct"] = jnp.tile(p["bt"], W).reshape(1, W * C1)
    q["Ro"] = _col_band(p["w_out"], W, W, 1, 3)          # (7, 128, 16)
    q["co"] = jnp.tile(p["b_out"], W).reshape(1, W * INPUT_DIM)
    q["emb_all"] = jnp.concatenate(
        [p["emb0"], p["emb1"], p["emb_r"], p["emb2"]], axis=1)   # (10, 96)
    return q


# ============================================================================
# Forward wrapper: a single pallas_call, no per-forward XLA glue beyond two
# free row-major reshapes.
# ============================================================================

def mnist_net_forward(params, x, y):
    """x: (N, 16, 16, 1) NHWC f32, y: (N,) int class ids -> (N, 16, 16, 1)."""
    n, h, w, c = x.shape
    assert (h, w, c) == (H, W, INPUT_DIM), "kernel specialised to 16x16x1 input"
    l0, l1, lr, lt, e8, et8, e16, et16, bc16, bc8 = _geometry(n)

    ins = (x.reshape(n, H, W), params["emb_all"],
           l0, params["R0"], params["c0"],
           l1, params["R1"], params["c1"],
           lr, params["Rr"], params["cr"],
           lt, params["Rt"], params["ct"],
           params["Ro"], params["co"],
           e8, et8, e16, et16, bc16, bc8)

    def full_spec(shape):
        zero = (0,) * len(shape)
        return pl.BlockSpec(shape, lambda i, y_sref: zero)

    out = pl.pallas_call(
        _mnist_kernel,
        out_shape=jax.ShapeDtypeStruct((n, H, W), jnp.float32),
        grid_spec=pltpu.PrefetchScalarGridSpec(
            num_scalar_prefetch=1,
            grid=(1,),
            in_specs=[full_spec(a.shape) for a in ins],
            out_specs=pl.BlockSpec((n, H, W), lambda i, y_sref: (0, 0, 0)),
            scratch_shapes=[pltpu.VMEM((n, _EMB_W), jnp.float32)],
        ),
        compiler_params=pltpu.CompilerParams(
            dimension_semantics=("arbitrary",)),
    )(y.astype(jnp.int32), *ins)
    return out.reshape(n, H, W, INPUT_DIM)


if __name__ == "__main__":
    key = jax.random.PRNGKey(0)
    kp, kx, ky = jax.random.split(key, 3)
    params = prepare_params(init_params(kp))

    N = 2
    x = jax.random.normal(kx, (N, H, W, INPUT_DIM), jnp.float32)   # NHWC
    y = jax.random.randint(ky, (N,), 0, N_CLASSES, jnp.int32)

    out = jax.jit(mnist_net_forward)(params, x, y)
    out = jax.block_until_ready(out)

    assert out.shape == (N, H, W, INPUT_DIM), out.shape
    assert bool(jnp.all(jnp.isfinite(out)))
    assert bool(jnp.all(jnp.abs(out) <= 1.0))   # tanh output range
    print("KERNEL_OK")
</pallas_src>

<mosaic_0001>
module attributes {stable_mosaic.version = 11 : i64} {
  func.func @_mnist_kernel(%arg0: i32, %arg1: memref<2xi32, #tpu.memory_space<smem>>, %arg2: memref<2x16x16xf32, #tpu.memory_space<vmem>>, %arg3: memref<10x96xf32, #tpu.memory_space<vmem>>, %arg4: memref<7x32x32xf32, #tpu.memory_space<vmem>>, %arg5: memref<7x16x128xf32, #tpu.memory_space<vmem>>, %arg6: memref<1x128xf32, #tpu.memory_space<vmem>>, %arg7: memref<4x16x32xf32, #tpu.memory_space<vmem>>, %arg8: memref<4x128x128xf32, #tpu.memory_space<vmem>>, %arg9: memref<1x128xf32, #tpu.memory_space<vmem>>, %arg10: memref<3x16x16xf32, #tpu.memory_space<vmem>>, %arg11: memref<3x128x128xf32, #tpu.memory_space<vmem>>, %arg12: memref<1x128xf32, #tpu.memory_space<vmem>>, %arg13: memref<4x32x16xf32, #tpu.memory_space<vmem>>, %arg14: memref<4x128x128xf32, #tpu.memory_space<vmem>>, %arg15: memref<1x128xf32, #tpu.memory_space<vmem>>, %arg16: memref<7x128x16xf32, #tpu.memory_space<vmem>>, %arg17: memref<1x16xf32, #tpu.memory_space<vmem>>, %arg18: memref<8x128xf32, #tpu.memory_space<vmem>>, %arg19: memref<128x8xf32, #tpu.memory_space<vmem>>, %arg20: memref<16x128xf32, #tpu.memory_space<vmem>>, %arg21: memref<128x16xf32, #tpu.memory_space<vmem>>, %arg22: memref<32x2xf32, #tpu.memory_space<vmem>>, %arg23: memref<16x2xf32, #tpu.memory_space<vmem>>, %arg24: memref<2x16x16xf32, #tpu.memory_space<vmem>>, %arg25: memref<2x96xf32, #tpu.memory_space<vmem>>) attributes {dimension_semantics = [#tpu.dimension_semantics<arbitrary>], iteration_bounds = array<i64: 1>, scalar_prefetch = 1 : i64, scratch_operands = 1 : i64, tpu.core_type = #tpu.core_type<tc>, window_params = [{pipeline_mode = #tpu.pipeline_mode<synchronous>, transform_indices = @transform_0, window_bounds = array<i64: 2, 16, 16>}, {pipeline_mode = #tpu.pipeline_mode<synchronous>, transform_indices = @transform_1, window_bounds = array<i64: 10, 96>}, {pipeline_mode = #tpu.pipeline_mode<synchronous>, transform_indices = @transform_2, window_bounds = array<i64: 7, 32, 32>}, {pipeline_mode = #tpu.pipeline_mode<synchronous>, transform_indices = @transform_3, window_bounds = array<i64: 7, 16, 128>}, {pipeline_mode = #tpu.pipeline_mode<synchronous>, transform_indices = @transform_4, window_bounds = array<i64: 1, 128>}, {pipeline_mode = #tpu.pipeline_mode<synchronous>, transform_indices = @transform_5, window_bounds = array<i64: 4, 16, 32>}, {pipeline_mode = #tpu.pipeline_mode<synchronous>, transform_indices = @transform_6, window_bounds = array<i64: 4, 128, 128>}, {pipeline_mode = #tpu.pipeline_mode<synchronous>, transform_indices = @transform_7, window_bounds = array<i64: 1, 128>}, {pipeline_mode = #tpu.pipeline_mode<synchronous>, transform_indices = @transform_8, window_bounds = array<i64: 3, 16, 16>}, {pipeline_mode = #tpu.pipeline_mode<synchronous>, transform_indices = @transform_9, window_bounds = array<i64: 3, 128, 128>}, {pipeline_mode = #tpu.pipeline_mode<synchronous>, transform_indices = @transform_10, window_bounds = array<i64: 1, 128>}, {pipeline_mode = #tpu.pipeline_mode<synchronous>, transform_indices = @transform_11, window_bounds = array<i64: 4, 32, 16>}, {pipeline_mode = #tpu.pipeline_mode<synchronous>, transform_indices = @transform_12, window_bounds = array<i64: 4, 128, 128>}, {pipeline_mode = #tpu.pipeline_mode<synchronous>, transform_indices = @transform_13, window_bounds = array<i64: 1, 128>}, {pipeline_mode = #tpu.pipeline_mode<synchronous>, transform_indices = @transform_14, window_bounds = array<i64: 7, 128, 16>}, {pipeline_mode = #tpu.pipeline_mode<synchronous>, transform_indices = @transform_15, window_bounds = array<i64: 1, 16>}, {pipeline_mode = #tpu.pipeline_mode<synchronous>, transform_indices = @transform_16, window_bounds = array<i64: 8, 128>}, {pipeline_mode = #tpu.pipeline_mode<synchronous>, transform_indices = @transform_17, window_bounds = array<i64: 128, 8>}, {pipeline_mode = #tpu.pipeline_mode<synchronous>, transform_indices = @transform_18, window_bounds = array<i64: 16, 128>}, {pipeline_mode = #tpu.pipeline_mode<synchronous>, transform_indices = @transform_19, window_bounds = array<i64: 128, 16>}, {pipeline_mode = #tpu.pipeline_mode<synchronous>, transform_indices = @transform_20, window_bounds = array<i64: 32, 2>}, {pipeline_mode = #tpu.pipeline_mode<synchronous>, transform_indices = @transform_21, window_bounds = array<i64: 16, 2>}, {pipeline_mode = #tpu.pipeline_mode<synchronous>, transform_indices = @transform_22, window_bounds = array<i64: 2, 16, 16>}]} {
    %c0 = arith.constant 0 : index
    %0 = memref.load %arg1[%c0] : memref<2xi32, #tpu.memory_space<smem>>
    %1 = arith.index_cast %0 : i32 to index
    %c0_0 = arith.constant 0 : index
    %2 = vector.load %arg3[%1, %c0_0] : memref<10x96xf32, #tpu.memory_space<vmem>>, vector<1x96xf32>
    %c0_1 = arith.constant 0 : index
    %c0_2 = arith.constant 0 : index
    %3 = vector.load %arg25[%c0_1, %c0_2] : memref<2x96xf32, #tpu.memory_space<vmem>>, vector<1x96xf32>
    tpu.vector_store %arg25[%c0_1, %c0_2], %2 {strides = array<i32>} : memref<2x96xf32, #tpu.memory_space<vmem>>, vector<1x96xf32>,
    %c1 = arith.constant 1 : index
    %4 = memref.load %arg1[%c1] : memref<2xi32, #tpu.memory_space<smem>>
    %5 = arith.index_cast %4 : i32 to index
    %c0_3 = arith.constant 0 : index
    %6 = vector.load %arg3[%5, %c0_3] : memref<10x96xf32, #tpu.memory_space<vmem>>, vector<1x96xf32>
    %c1_4 = arith.constant 1 : index
    %c0_5 = arith.constant 0 : index
    %7 = vector.load %arg25[%c1_4, %c0_5] : memref<2x96xf32, #tpu.memory_space<vmem>>, vector<1x96xf32>
    tpu.vector_store %arg25[%c1_4, %c0_5], %6 {strides = array<i32>} : memref<2x96xf32, #tpu.memory_space<vmem>>, vector<1x96xf32>,
    %c0_6 = arith.constant 0 : index
    %c0_7 = arith.constant 0 : index
    %8 = vector.load %arg25[%c0_6, %c0_7] : memref<2x96xf32, #tpu.memory_space<vmem>>, vector<2x96xf32>
    %c0_8 = arith.constant 0 : index
    %c0_9 = arith.constant 0 : index
    %9 = vector.load %arg18[%c0_8, %c0_9] : memref<8x128xf32, #tpu.memory_space<vmem>>, vector<8x128xf32>
    %c0_10 = arith.constant 0 : index
    %c0_11 = arith.constant 0 : index
    %10 = vector.load %arg19[%c0_10, %c0_11] : memref<128x8xf32, #tpu.memory_space<vmem>>, vector<128x8xf32>
    %c0_12 = arith.constant 0 : index
    %c0_13 = arith.constant 0 : index
    %11 = vector.load %arg20[%c0_12, %c0_13] : memref<16x128xf32, #tpu.memory_space<vmem>>, vector<16x128xf32>
    %c0_14 = arith.constant 0 : index
    %c0_15 = arith.constant 0 : index
    %12 = vector.load %arg21[%c0_14, %c0_15] : memref<128x16xf32, #tpu.memory_space<vmem>>, vector<128x16xf32>
    %c0_16 = arith.constant 0 : index
    %c0_17 = arith.constant 0 : index
    %13 = vector.load %arg22[%c0_16, %c0_17] : memref<32x2xf32, #tpu.memory_space<vmem>>, vector<32x2xf32>
    %c0_18 = arith.constant 0 : index
    %c0_19 = arith.constant 0 : index
    %14 = vector.load %arg23[%c0_18, %c0_19] : memref<16x2xf32, #tpu.memory_space<vmem>>, vector<16x2xf32>
    %c0_20 = arith.constant 0 : index
    %c0_21 = arith.constant 0 : index
    %c0_22 = arith.constant 0 : index
    %15 = vector.load %arg2[%c0_20, %c0_21, %c0_22] : memref<2x16x16xf32, #tpu.memory_space<vmem>>, vector<2x16x16xf32>
    %16 = vector.shape_cast %15 : vector<2x16x16xf32> to vector<32x16xf32>
    %c0_23 = arith.constant 0 : index
    %c0_24 = arith.constant 0 : index
    %c0_25 = arith.constant 0 : index
    %17 = vector.load %arg4[%c0_23, %c0_24, %c0_25] : memref<7x32x32xf32, #tpu.memory_space<vmem>>, vector<1x32x32xf32>
    %18 = vector.shape_cast %17 : vector<1x32x32xf32> to vector<32x32xf32>
    %cst = arith.constant dense<0.000000e+00> : vector<32x16xf32>
    %19 = tpu.matmul %18, %16, %cst {dimension_numbers = #tpu.dot_dimension_numbers<[1], [0], [0], [1], [0, 0, 1, 1], [], []>} : vector<32x32xf32>, vector<32x16xf32>, vector<32x16xf32> -> vector<32x16xf32>
    %c0_26 = arith.constant 0 : index
    %c0_27 = arith.constant 0 : index
    %c0_28 = arith.constant 0 : index
    %20 = vector.load %arg5[%c0_26, %c0_27, %c0_28] : memref<7x16x128xf32, #tpu.memory_space<vmem>>, vector<1x16x128xf32>
    %21 = vector.shape_cast %20 : vector<1x16x128xf32> to vector<16x128xf32>
    %cst_29 = arith.constant dense<0.000000e+00> : vector<32x128xf32>
    %22 = tpu.matmul %19, %21, %cst_29 {dimension_numbers = #tpu.dot_dimension_numbers<[1], [0], [0], [1], [0, 0, 1, 1], [], []>} : vector<32x16xf32>, vector<16x128xf32>, vector<32x128xf32> -> vector<32x128xf32>
    %c1_30 = arith.constant 1 : index
    %c0_31 = arith.constant 0 : index
    %c0_32 = arith.constant 0 : index
    %23 = vector.load %arg4[%c1_30, %c0_31, %c0_32] : memref<7x32x32xf32, #tpu.memory_space<vmem>>, vector<1x32x32xf32>
    %24 = vector.shape_cast %23 : vector<1x32x32xf32> to vector<32x32xf32>
    %cst_33 = arith.constant dense<0.000000e+00> : vector<32x16xf32>
    %25 = tpu.matmul %24, %16, %cst_33 {dimension_numbers = #tpu.dot_dimension_numbers<[1], [0], [0], [1], [0, 0, 1, 1], [], []>} : vector<32x32xf32>, vector<32x16xf32>, vector<32x16xf32> -> vector<32x16xf32>
    %c1_34 = arith.constant 1 : index
    %c0_35 = arith.constant 0 : index
    %c0_36 = arith.constant 0 : index
    %26 = vector.load %arg5[%c1_34, %c0_35, %c0_36] : memref<7x16x128xf32, #tpu.memory_space<vmem>>, vector<1x16x128xf32>
    %27 = vector.shape_cast %26 : vector<1x16x128xf32> to vector<16x128xf32>
    %cst_37 = arith.constant dense<0.000000e+00> : vector<32x128xf32>
    %28 = tpu.matmul %25, %27, %cst_37 {dimension_numbers = #tpu.dot_dimension_numbers<[1], [0], [0], [1], [0, 0, 1, 1], [], []>} : vector<32x16xf32>, vector<16x128xf32>, vector<32x128xf32> -> vector<32x128xf32>
    %29 = arith.addf %22, %28 : vector<32x128xf32>
    %c2 = arith.constant 2 : index
    %c0_38 = arith.constant 0 : index
    %c0_39 = arith.constant 0 : index
    %30 = vector.load %arg4[%c2, %c0_38, %c0_39] : memref<7x32x32xf32, #tpu.memory_space<vmem>>, vector<1x32x32xf32>
    %31 = vector.shape_cast %30 : vector<1x32x32xf32> to vector<32x32xf32>
    %cst_40 = arith.constant dense<0.000000e+00> : vector<32x16xf32>
    %32 = tpu.matmul %31, %16, %cst_40 {dimension_numbers = #tpu.dot_dimension_numbers<[1], [0], [0], [1], [0, 0, 1, 1], [], []>} : vector<32x32xf32>, vector<32x16xf32>, vector<32x16xf32> -> vector<32x16xf32>
    %c2_41 = arith.constant 2 : index
    %c0_42 = arith.constant 0 : index
    %c0_43 = arith.constant 0 : index
    %33 = vector.load %arg5[%c2_41, %c0_42, %c0_43] : memref<7x16x128xf32, #tpu.memory_space<vmem>>, vector<1x16x128xf32>
    %34 = vector.shape_cast %33 : vector<1x16x128xf32> to vector<16x128xf32>
    %cst_44 = arith.constant dense<0.000000e+00> : vector<32x128xf32>
    %35 = tpu.matmul %32, %34, %cst_44 {dimension_numbers = #tpu.dot_dimension_numbers<[1], [0], [0], [1], [0, 0, 1, 1], [], []>} : vector<32x16xf32>, vector<16x128xf32>, vector<32x128xf32> -> vector<32x128xf32>
    %36 = arith.addf %29, %35 : vector<32x128xf32>
    %c3 = arith.constant 3 : index
    %c0_45 = arith.constant 0 : index
    %c0_46 = arith.constant 0 : index
    %37 = vector.load %arg4[%c3, %c0_45, %c0_46] : memref<7x32x32xf32, #tpu.memory_space<vmem>>, vector<1x32x32xf32>
    %38 = vector.shape_cast %37 : vector<1x32x32xf32> to vector<32x32xf32>
    %cst_47 = arith.constant dense<0.000000e+00> : vector<32x16xf32>
    %39 = tpu.matmul %38, %16, %cst_47 {dimension_numbers = #tpu.dot_dimension_numbers<[1], [0], [0], [1], [0, 0, 1, 1], [], []>} : vector<32x32xf32>, vector<32x16xf32>, vector<32x16xf32> -> vector<32x16xf32>
    %c3_48 = arith.constant 3 : index
    %c0_49 = arith.constant 0 : index
    %c0_50 = arith.constant 0 : index
    %40 = vector.load %arg5[%c3_48, %c0_49, %c0_50] : memref<7x16x128xf32, #tpu.memory_space<vmem>>, vector<1x16x128xf32>
    %41 = vector.shape_cast %40 : vector<1x16x128xf32> to vector<16x128xf32>
    %cst_51 = arith.constant dense<0.000000e+00> : vector<32x128xf32>
    %42 = tpu.matmul %39, %41, %cst_51 {dimension_numbers = #tpu.dot_dimension_numbers<[1], [0], [0], [1], [0, 0, 1, 1], [], []>} : vector<32x16xf32>, vector<16x128xf32>, vector<32x128xf32> -> vector<32x128xf32>
    %43 = arith.addf %36, %42 : vector<32x128xf32>
    %c4 = arith.constant 4 : index
    %c0_52 = arith.constant 0 : index
    %c0_53 = arith.constant 0 : index
    %44 = vector.load %arg4[%c4, %c0_52, %c0_53] : memref<7x32x32xf32, #tpu.memory_space<vmem>>, vector<1x32x32xf32>
    %45 = vector.shape_cast %44 : vector<1x32x32xf32> to vector<32x32xf32>
    %cst_54 = arith.constant dense<0.000000e+00> : vector<32x16xf32>
    %46 = tpu.matmul %45, %16, %cst_54 {dimension_numbers = #tpu.dot_dimension_numbers<[1], [0], [0], [1], [0, 0, 1, 1], [], []>} : vector<32x32xf32>, vector<32x16xf32>, vector<32x16xf32> -> vector<32x16xf32>
    %c4_55 = arith.constant 4 : index
    %c0_56 = arith.constant 0 : index
    %c0_57 = arith.constant 0 : index
    %47 = vector.load %arg5[%c4_55, %c0_56, %c0_57] : memref<7x16x128xf32, #tpu.memory_space<vmem>>, vector<1x16x128xf32>
    %48 = vector.shape_cast %47 : vector<1x16x128xf32> to vector<16x128xf32>
    %cst_58 = arith.constant dense<0.000000e+00> : vector<32x128xf32>
    %49 = tpu.matmul %46, %48, %cst_58 {dimension_numbers = #tpu.dot_dimension_numbers<[1], [0], [0], [1], [0, 0, 1, 1], [], []>} : vector<32x16xf32>, vector<16x128xf32>, vector<32x128xf32> -> vector<32x128xf32>
    %50 = arith.addf %43, %49 : vector<32x128xf32>
    %c5 = arith.constant 5 : index
    %c0_59 = arith.constant 0 : index
    %c0_60 = arith.constant 0 : index
    %51 = vector.load %arg4[%c5, %c0_59, %c0_60] : memref<7x32x32xf32, #tpu.memory_space<vmem>>, vector<1x32x32xf32>
    %52 = vector.shape_cast %51 : vector<1x32x32xf32> to vector<32x32xf32>
    %cst_61 = arith.constant dense<0.000000e+00> : vector<32x16xf32>
    %53 = tpu.matmul %52, %16, %cst_61 {dimension_numbers = #tpu.dot_dimension_numbers<[1], [0], [0], [1], [0, 0, 1, 1], [], []>} : vector<32x32xf32>, vector<32x16xf32>, vector<32x16xf32> -> vector<32x16xf32>
    %c5_62 = arith.constant 5 : index
    %c0_63 = arith.constant 0 : index
    %c0_64 = arith.constant 0 : index
    %54 = vector.load %arg5[%c5_62, %c0_63, %c0_64] : memref<7x16x128xf32, #tpu.memory_space<vmem>>, vector<1x16x128xf32>
    %55 = vector.shape_cast %54 : vector<1x16x128xf32> to vector<16x128xf32>
    %cst_65 = arith.constant dense<0.000000e+00> : vector<32x128xf32>
    %56 = tpu.matmul %53, %55, %cst_65 {dimension_numbers = #tpu.dot_dimension_numbers<[1], [0], [0], [1], [0, 0, 1, 1], [], []>} : vector<32x16xf32>, vector<16x128xf32>, vector<32x128xf32> -> vector<32x128xf32>
    %57 = arith.addf %50, %56 : vector<32x128xf32>
    %c6 = arith.constant 6 : index
    %c0_66 = arith.constant 0 : index
    %c0_67 = arith.constant 0 : index
    %58 = vector.load %arg4[%c6, %c0_66, %c0_67] : memref<7x32x32xf32, #tpu.memory_space<vmem>>, vector<1x32x32xf32>
    %59 = vector.shape_cast %58 : vector<1x32x32xf32> to vector<32x32xf32>
    %cst_68 = arith.constant dense<0.000000e+00> : vector<32x16xf32>
    %60 = tpu.matmul %59, %16, %cst_68 {dimension_numbers = #tpu.dot_dimension_numbers<[1], [0], [0], [1], [0, 0, 1, 1], [], []>} : vector<32x32xf32>, vector<32x16xf32>, vector<32x16xf32> -> vector<32x16xf32>
    %c6_69 = arith.constant 6 : index
    %c0_70 = arith.constant 0 : index
    %c0_71 = arith.constant 0 : index
    %61 = vector.load %arg5[%c6_69, %c0_70, %c0_71] : memref<7x16x128xf32, #tpu.memory_space<vmem>>, vector<1x16x128xf32>
    %62 = vector.shape_cast %61 : vector<1x16x128xf32> to vector<16x128xf32>
    %cst_72 = arith.constant dense<0.000000e+00> : vector<32x128xf32>
    %63 = tpu.matmul %60, %62, %cst_72 {dimension_numbers = #tpu.dot_dimension_numbers<[1], [0], [0], [1], [0, 0, 1, 1], [], []>} : vector<32x16xf32>, vector<16x128xf32>, vector<32x128xf32> -> vector<32x128xf32>
    %64 = arith.addf %57, %63 : vector<32x128xf32>
    %c0_73 = arith.constant 0 : index
    %c0_74 = arith.constant 0 : index
    %65 = vector.load %arg6[%c0_73, %c0_74] : memref<1x128xf32, #tpu.memory_space<vmem>>, vector<1x128xf32>
    %66 = vector.broadcast %65 : vector<1x128xf32> to vector<32x128xf32>
    %67 = arith.addf %64, %66 : vector<32x128xf32>
    %68 = vector.extract_strided_slice %8 {offsets = [0, 0], sizes = [2, 16], strides = [1, 1]} : vector<2x96xf32> to vector<2x16xf32>
    %cst_75 = arith.constant dense<0.000000e+00> : vector<128xf32>
    %69 = vector.multi_reduction <add>, %67, %cst_75 [0] : vector<32x128xf32> to vector<128xf32>
    %70 = vector.shape_cast %69 : vector<128xf32> to vector<1x128xf32>
    %cst_76 = arith.constant dense<0.000000e+00> : vector<1x8xf32>
    %71 = tpu.matmul %70, %10, %cst_76 {dimension_numbers = #tpu.dot_dimension_numbers<[1], [0], [0], [1], [0, 0, 1, 1], [], []>} : vector<1x128xf32>, vector<128x8xf32>, vector<1x8xf32> -> vector<1x8xf32>
    %72 = arith.mulf %67, %67 : vector<32x128xf32>
    %cst_77 = arith.constant dense<0.000000e+00> : vector<128xf32>
    %73 = vector.multi_reduction <add>, %72, %cst_77 [0] : vector<32x128xf32> to vector<128xf32>
    %74 = vector.shape_cast %73 : vector<128xf32> to vector<1x128xf32>
    %cst_78 = arith.constant dense<0.000000e+00> : vector<1x8xf32>
    %75 = tpu.matmul %74, %10, %cst_78 {dimension_numbers = #tpu.dot_dimension_numbers<[1], [0], [0], [1], [0, 0, 1, 1], [], []>} : vector<1x128xf32>, vector<128x8xf32>, vector<1x8xf32> -> vector<1x8xf32>
    %cst_79 = arith.constant 0.001953125 : f32
    %76 = vector.broadcast %cst_79 : f32 to vector<1x8xf32>
    %77 = arith.mulf %71, %76 : vector<1x8xf32>
    %cst_80 = arith.constant 0.001953125 : f32
    %78 = vector.broadcast %cst_80 : f32 to vector<1x8xf32>
    %79 = arith.mulf %75, %78 : vector<1x8xf32>
    %80 = arith.mulf %77, %77 : vector<1x8xf32>
    %81 = arith.subf %79, %80 : vector<1x8xf32>
    %cst_81 = arith.constant 9.99999974E-6 : f32
    %82 = vector.broadcast %cst_81 : f32 to vector<1x8xf32>
    %83 = arith.addf %81, %82 : vector<1x8xf32>
    %84 = math.rsqrt %83 : vector<1x8xf32>
    %85 = vector.extract_strided_slice %68 {offsets = [0, 0], sizes = [2, 8], strides = [1, 1]} : vector<2x16xf32> to vector<2x8xf32>
    %86 = vector.extract_strided_slice %68 {offsets = [0, 8], sizes = [2, 8], strides = [1, 1]} : vector<2x16xf32> to vector<2x8xf32>
    %cst_82 = arith.constant 1.000000e+00 : f32
    %87 = vector.broadcast %cst_82 : f32 to vector<2x8xf32>
    %88 = arith.addf %87, %86 : vector<2x8xf32>
    %89 = vector.broadcast %84 : vector<1x8xf32> to vector<2x8xf32>
    %90 = arith.mulf %89, %88 : vector<2x8xf32>
    %91 = vector.broadcast %77 : vector<1x8xf32> to vector<2x8xf32>
    %92 = arith.mulf %91, %90 : vector<2x8xf32>
    %93 = arith.subf %85, %92 : vector<2x8xf32>
    %cst_83 = arith.constant dense<0.000000e+00> : vector<2x128xf32>
    %94 = tpu.matmul %90, %9, %cst_83 {dimension_numbers = #tpu.dot_dimension_numbers<[1], [0], [0], [1], [0, 0, 1, 1], [], []>} : vector<2x8xf32>, vector<8x128xf32>, vector<2x128xf32> -> vector<2x128xf32>
    %cst_84 = arith.constant dense<0.000000e+00> : vector<32x128xf32>
    %95 = tpu.matmul %13, %94, %cst_84 {dimension_numbers = #tpu.dot_dimension_numbers<[1], [0], [0], [1], [0, 0, 1, 1], [], []>} : vector<32x2xf32>, vector<2x128xf32>, vector<32x128xf32> -> vector<32x128xf32>
    %cst_85 = arith.constant dense<0.000000e+00> : vector<2x128xf32>
    %96 = tpu.matmul %93, %9, %cst_85 {dimension_numbers = #tpu.dot_dimension_numbers<[1], [0], [0], [1], [0, 0, 1, 1], [], []>} : vector<2x8xf32>, vector<8x128xf32>, vector<2x128xf32> -> vector<2x128xf32>
    %cst_86 = arith.constant dense<0.000000e+00> : vector<32x128xf32>
    %97 = tpu.matmul %13, %96, %cst_86 {dimension_numbers = #tpu.dot_dimension_numbers<[1], [0], [0], [1], [0, 0, 1, 1], [], []>} : vector<32x2xf32>, vector<2x128xf32>, vector<32x128xf32> -> vector<32x128xf32>
    %98 = arith.mulf %67, %95 : vector<32x128xf32>
    %99 = arith.addf %98, %97 : vector<32x128xf32>
    %cst_87 = arith.constant 0.000000e+00 : f32
    %100 = vector.broadcast %cst_87 : f32 to vector<32x128xf32>
    %101 = arith.maximumf %99, %100 : vector<32x128xf32>
    %c0_88 = arith.constant 0 : index
    %c0_89 = arith.constant 0 : index
    %c0_90 = arith.constant 0 : index
    %102 = vector.load %arg7[%c0_88, %c0_89, %c0_90] : memref<4x16x32xf32, #tpu.memory_space<vmem>>, vector<1x16x32xf32>
    %103 = vector.shape_cast %102 : vector<1x16x32xf32> to vector<16x32xf32>
    %cst_91 = arith.constant dense<0.000000e+00> : vector<16x128xf32>
    %104 = tpu.matmul %103, %101, %cst_91 {dimension_numbers = #tpu.dot_dimension_numbers<[1], [0], [0], [1], [0, 0, 1, 1], [], []>} : vector<16x32xf32>, vector<32x128xf32>, vector<16x128xf32> -> vector<16x128xf32>
    %c0_92 = arith.constant 0 : index
    %c0_93 = arith.constant 0 : index
    %c0_94 = arith.constant 0 : index
    %105 = vector.load %arg8[%c0_92, %c0_93, %c0_94] : memref<4x128x128xf32, #tpu.memory_space<vmem>>, vector<1x128x128xf32>
    %106 = vector.shape_cast %105 : vector<1x128x128xf32> to vector<128x128xf32>
    %cst_95 = arith.constant dense<0.000000e+00> : vector<16x128xf32>
    %107 = tpu.matmul %104, %106, %cst_95 {dimension_numbers = #tpu.dot_dimension_numbers<[1], [0], [0], [1], [0, 0, 1, 1], [], []>} : vector<16x128xf32>, vector<128x128xf32>, vector<16x128xf32> -> vector<16x128xf32>
    %c1_96 = arith.constant 1 : index
    %c0_97 = arith.constant 0 : index
    %c0_98 = arith.constant 0 : index
    %108 = vector.load %arg7[%c1_96, %c0_97, %c0_98] : memref<4x16x32xf32, #tpu.memory_space<vmem>>, vector<1x16x32xf32>
    %109 = vector.shape_cast %108 : vector<1x16x32xf32> to vector<16x32xf32>
    %cst_99 = arith.constant dense<0.000000e+00> : vector<16x128xf32>
    %110 = tpu.matmul %109, %101, %cst_99 {dimension_numbers = #tpu.dot_dimension_numbers<[1], [0], [0], [1], [0, 0, 1, 1], [], []>} : vector<16x32xf32>, vector<32x128xf32>, vector<16x128xf32> -> vector<16x128xf32>
    %c1_100 = arith.constant 1 : index
    %c0_101 = arith.constant 0 : index
    %c0_102 = arith.constant 0 : index
    %111 = vector.load %arg8[%c1_100, %c0_101, %c0_102] : memref<4x128x128xf32, #tpu.memory_space<vmem>>, vector<1x128x128xf32>
    %112 = vector.shape_cast %111 : vector<1x128x128xf32> to vector<128x128xf32>
    %cst_103 = arith.constant dense<0.000000e+00> : vector<16x128xf32>
    %113 = tpu.matmul %110, %112, %cst_103 {dimension_numbers = #tpu.dot_dimension_numbers<[1], [0], [0], [1], [0, 0, 1, 1], [], []>} : vector<16x128xf32>, vector<128x128xf32>, vector<16x128xf32> -> vector<16x128xf32>
    %114 = arith.addf %107, %113 : vector<16x128xf32>
    %c2_104 = arith.constant 2 : index
    %c0_105 = arith.constant 0 : index
    %c0_106 = arith.constant 0 : index
    %115 = vector.load %arg7[%c2_104, %c0_105, %c0_106] : memref<4x16x32xf32, #tpu.memory_space<vmem>>, vector<1x16x32xf32>
    %116 = vector.shape_cast %115 : vector<1x16x32xf32> to vector<16x32xf32>
    %cst_107 = arith.constant dense<0.000000e+00> : vector<16x128xf32>
    %117 = tpu.matmul %116, %101, %cst_107 {dimension_numbers = #tpu.dot_dimension_numbers<[1], [0], [0], [1], [0, 0, 1, 1], [], []>} : vector<16x32xf32>, vector<32x128xf32>, vector<16x128xf32> -> vector<16x128xf32>
    %c2_108 = arith.constant 2 : index
    %c0_109 = arith.constant 0 : index
    %c0_110 = arith.constant 0 : index
    %118 = vector.load %arg8[%c2_108, %c0_109, %c0_110] : memref<4x128x128xf32, #tpu.memory_space<vmem>>, vector<1x128x128xf32>
    %119 = vector.shape_cast %118 : vector<1x128x128xf32> to vector<128x128xf32>
    %cst_111 = arith.constant dense<0.000000e+00> : vector<16x128xf32>
    %120 = tpu.matmul %117, %119, %cst_111 {dimension_numbers = #tpu.dot_dimension_numbers<[1], [0], [0], [1], [0, 0, 1, 1], [], []>} : vector<16x128xf32>, vector<128x128xf32>, vector<16x128xf32> -> vector<16x128xf32>
    %121 = arith.addf %114, %120 : vector<16x128xf32>
    %c3_112 = arith.constant 3 : index
    %c0_113 = arith.constant 0 : index
    %c0_114 = arith.constant 0 : index
    %122 = vector.load %arg7[%c3_112, %c0_113, %c0_114] : memref<4x16x32xf32, #tpu.memory_space<vmem>>, vector<1x16x32xf32>
    %123 = vector.shape_cast %122 : vector<1x16x32xf32> to vector<16x32xf32>
    %cst_115 = arith.constant dense<0.000000e+00> : vector<16x128xf32>
    %124 = tpu.matmul %123, %101, %cst_115 {dimension_numbers = #tpu.dot_dimension_numbers<[1], [0], [0], [1], [0, 0, 1, 1], [], []>} : vector<16x32xf32>, vector<32x128xf32>, vector<16x128xf32> -> vector<16x128xf32>
    %c3_116 = arith.constant 3 : index
    %c0_117 = arith.constant 0 : index
    %c0_118 = arith.constant 0 : index
    %125 = vector.load %arg8[%c3_116, %c0_117, %c0_118] : memref<4x128x128xf32, #tpu.memory_space<vmem>>, vector<1x128x128xf32>
    %126 = vector.shape_cast %125 : vector<1x128x128xf32> to vector<128x128xf32>
    %cst_119 = arith.constant dense<0.000000e+00> : vector<16x128xf32>
    %127 = tpu.matmul %124, %126, %cst_119 {dimension_numbers = #tpu.dot_dimension_numbers<[1], [0], [0], [1], [0, 0, 1, 1], [], []>} : vector<16x128xf32>, vector<128x128xf32>, vector<16x128xf32> -> vector<16x128xf32>
    %128 = arith.addf %121, %127 : vector<16x128xf32>
    %c0_120 = arith.constant 0 : index
    %c0_121 = arith.constant 0 : index
    %129 = vector.load %arg9[%c0_120, %c0_121] : memref<1x128xf32, #tpu.memory_space<vmem>>, vector<1x128xf32>
    %130 = vector.broadcast %129 : vector<1x128xf32> to vector<16x128xf32>
    %131 = arith.addf %128, %130 : vector<16x128xf32>
    %132 = vector.extract_strided_slice %8 {offsets = [0, 16], sizes = [2, 32], strides = [1, 1]} : vector<2x96xf32> to vector<2x32xf32>
    %cst_122 = arith.constant dense<0.000000e+00> : vector<128xf32>
    %133 = vector.multi_reduction <add>, %131, %cst_122 [0] : vector<16x128xf32> to vector<128xf32>
    %134 = vector.shape_cast %133 : vector<128xf32> to vector<1x128xf32>
    %cst_123 = arith.constant dense<0.000000e+00> : vector<1x16xf32>
    %135 = tpu.matmul %134, %12, %cst_123 {dimension_numbers = #tpu.dot_dimension_numbers<[1], [0], [0], [1], [0, 0, 1, 1], [], []>} : vector<1x128xf32>, vector<128x16xf32>, vector<1x16xf32> -> vector<1x16xf32>
    %136 = arith.mulf %131, %131 : vector<16x128xf32>
    %cst_124 = arith.constant dense<0.000000e+00> : vector<128xf32>
    %137 = vector.multi_reduction <add>, %136, %cst_124 [0] : vector<16x128xf32> to vector<128xf32>
    %138 = vector.shape_cast %137 : vector<128xf32> to vector<1x128xf32>
    %cst_125 = arith.constant dense<0.000000e+00> : vector<1x16xf32>
    %139 = tpu.matmul %138, %12, %cst_125 {dimension_numbers = #tpu.dot_dimension_numbers<[1], [0], [0], [1], [0, 0, 1, 1], [], []>} : vector<1x128xf32>, vector<128x16xf32>, vector<1x16xf32> -> vector<1x16xf32>
    %cst_126 = arith.constant 7.812500e-03 : f32
    %140 = vector.broadcast %cst_126 : f32 to vector<1x16xf32>
    %141 = arith.mulf %135, %140 : vector<1x16xf32>
    %cst_127 = arith.constant 7.812500e-03 : f32
    %142 = vector.broadcast %cst_127 : f32 to vector<1x16xf32>
    %143 = arith.mulf %139, %142 : vector<1x16xf32>
    %144 = arith.mulf %141, %141 : vector<1x16xf32>
    %145 = arith.subf %143, %144 : vector<1x16xf32>
    %cst_128 = arith.constant 9.99999974E-6 : f32
    %146 = vector.broadcast %cst_128 : f32 to vector<1x16xf32>
    %147 = arith.addf %145, %146 : vector<1x16xf32>
    %148 = math.rsqrt %147 : vector<1x16xf32>
    %149 = vector.extract_strided_slice %132 {offsets = [0, 0], sizes = [2, 16], strides = [1, 1]} : vector<2x32xf32> to vector<2x16xf32>
    %150 = vector.extract_strided_slice %132 {offsets = [0, 16], sizes = [2, 16], strides = [1, 1]} : vector<2x32xf32> to vector<2x16xf32>
    %cst_129 = arith.constant 1.000000e+00 : f32
    %151 = vector.broadcast %cst_129 : f32 to vector<2x16xf32>
    %152 = arith.addf %151, %150 : vector<2x16xf32>
    %153 = vector.broadcast %148 : vector<1x16xf32> to vector<2x16xf32>
    %154 = arith.mulf %153, %152 : vector<2x16xf32>
    %155 = vector.broadcast %141 : vector<1x16xf32> to vector<2x16xf32>
    %156 = arith.mulf %155, %154 : vector<2x16xf32>
    %157 = arith.subf %149, %156 : vector<2x16xf32>
    %cst_130 = arith.constant dense<0.000000e+00> : vector<2x128xf32>
    %158 = tpu.matmul %154, %11, %cst_130 {dimension_numbers = #tpu.dot_dimension_numbers<[1], [0], [0], [1], [0, 0, 1, 1], [], []>} : vector<2x16xf32>, vector<16x128xf32>, vector<2x128xf32> -> vector<2x128xf32>
    %cst_131 = arith.constant dense<0.000000e+00> : vector<16x128xf32>
    %159 = tpu.matmul %14, %158, %cst_131 {dimension_numbers = #tpu.dot_dimension_numbers<[1], [0], [0], [1], [0, 0, 1, 1], [], []>} : vector<16x2xf32>, vector<2x128xf32>, vector<16x128xf32> -> vector<16x128xf32>
    %cst_132 = arith.constant dense<0.000000e+00> : vector<2x128xf32>
    %160 = tpu.matmul %157, %11, %cst_132 {dimension_numbers = #tpu.dot_dimension_numbers<[1], [0], [0], [1], [0, 0, 1, 1], [], []>} : vector<2x16xf32>, vector<16x128xf32>, vector<2x128xf32> -> vector<2x128xf32>
    %cst_133 = arith.constant dense<0.000000e+00> : vector<16x128xf32>
    %161 = tpu.matmul %14, %160, %cst_133 {dimension_numbers = #tpu.dot_dimension_numbers<[1], [0], [0], [1], [0, 0, 1, 1], [], []>} : vector<16x2xf32>, vector<2x128xf32>, vector<16x128xf32> -> vector<16x128xf32>
    %162 = arith.mulf %131, %159 : vector<16x128xf32>
    %163 = arith.addf %162, %161 : vector<16x128xf32>
    %cst_134 = arith.constant 0.000000e+00 : f32
    %164 = vector.broadcast %cst_134 : f32 to vector<16x128xf32>
    %165 = arith.maximumf %163, %164 : vector<16x128xf32>
    %166 = vector.extract_strided_slice %8 {offsets = [0, 48], sizes = [2, 32], strides = [1, 1]} : vector<2x96xf32> to vector<2x32xf32>
    %cst_135 = arith.constant dense<0.000000e+00> : vector<128xf32>
    %167 = vector.multi_reduction <add>, %165, %cst_135 [0] : vector<16x128xf32> to vector<128xf32>
    %168 = vector.shape_cast %167 : vector<128xf32> to vector<1x128xf32>
    %cst_136 = arith.constant dense<0.000000e+00> : vector<1x16xf32>
    %169 = tpu.matmul %168, %12, %cst_136 {dimension_numbers = #tpu.dot_dimension_numbers<[1], [0], [0], [1], [0, 0, 1, 1], [], []>} : vector<1x128xf32>, vector<128x16xf32>, vector<1x16xf32> -> vector<1x16xf32>
    %170 = arith.mulf %165, %165 : vector<16x128xf32>
    %cst_137 = arith.constant dense<0.000000e+00> : vector<128xf32>
    %171 = vector.multi_reduction <add>, %170, %cst_137 [0] : vector<16x128xf32> to vector<128xf32>
    %172 = vector.shape_cast %171 : vector<128xf32> to vector<1x128xf32>
    %cst_138 = arith.constant dense<0.000000e+00> : vector<1x16xf32>
    %173 = tpu.matmul %172, %12, %cst_138 {dimension_numbers = #tpu.dot_dimension_numbers<[1], [0], [0], [1], [0, 0, 1, 1], [], []>} : vector<1x128xf32>, vector<128x16xf32>, vector<1x16xf32> -> vector<1x16xf32>
    %cst_139 = arith.constant 7.812500e-03 : f32
    %174 = vector.broadcast %cst_139 : f32 to vector<1x16xf32>
    %175 = arith.mulf %169, %174 : vector<1x16xf32>
    %cst_140 = arith.constant 7.812500e-03 : f32
    %176 = vector.broadcast %cst_140 : f32 to vector<1x16xf32>
    %177 = arith.mulf %173, %176 : vector<1x16xf32>
    %178 = arith.mulf %175, %175 : vector<1x16xf32>
    %179 = arith.subf %177, %178 : vector<1x16xf32>
    %cst_141 = arith.constant 9.99999974E-6 : f32
    %180 = vector.broadcast %cst_141 : f32 to vector<1x16xf32>
    %181 = arith.addf %179, %180 : vector<1x16xf32>
    %182 = math.rsqrt %181 : vector<1x16xf32>
    %183 = vector.extract_strided_slice %166 {offsets = [0, 0], sizes = [2, 16], strides = [1, 1]} : vector<2x32xf32> to vector<2x16xf32>
    %184 = vector.extract_strided_slice %166 {offsets = [0, 16], sizes = [2, 16], strides = [1, 1]} : vector<2x32xf32> to vector<2x16xf32>
    %cst_142 = arith.constant 1.000000e+00 : f32
    %185 = vector.broadcast %cst_142 : f32 to vector<2x16xf32>
    %186 = arith.addf %185, %184 : vector<2x16xf32>
    %187 = vector.broadcast %182 : vector<1x16xf32> to vector<2x16xf32>
    %188 = arith.mulf %187, %186 : vector<2x16xf32>
    %189 = vector.broadcast %175 : vector<1x16xf32> to vector<2x16xf32>
    %190 = arith.mulf %189, %188 : vector<2x16xf32>
    %191 = arith.subf %183, %190 : vector<2x16xf32>
    %cst_143 = arith.constant dense<0.000000e+00> : vector<2x128xf32>
    %192 = tpu.matmul %188, %11, %cst_143 {dimension_numbers = #tpu.dot_dimension_numbers<[1], [0], [0], [1], [0, 0, 1, 1], [], []>} : vector<2x16xf32>, vector<16x128xf32>, vector<2x128xf32> -> vector<2x128xf32>
    %cst_144 = arith.constant dense<0.000000e+00> : vector<16x128xf32>
    %193 = tpu.matmul %14, %192, %cst_144 {dimension_numbers = #tpu.dot_dimension_numbers<[1], [0], [0], [1], [0, 0, 1, 1], [], []>} : vector<16x2xf32>, vector<2x128xf32>, vector<16x128xf32> -> vector<16x128xf32>
    %cst_145 = arith.constant dense<0.000000e+00> : vector<2x128xf32>
    %194 = tpu.matmul %191, %11, %cst_145 {dimension_numbers = #tpu.dot_dimension_numbers<[1], [0], [0], [1], [0, 0, 1, 1], [], []>} : vector<2x16xf32>, vector<16x128xf32>, vector<2x128xf32> -> vector<2x128xf32>
    %cst_146 = arith.constant dense<0.000000e+00> : vector<16x128xf32>
    %195 = tpu.matmul %14, %194, %cst_146 {dimension_numbers = #tpu.dot_dimension_numbers<[1], [0], [0], [1], [0, 0, 1, 1], [], []>} : vector<16x2xf32>, vector<2x128xf32>, vector<16x128xf32> -> vector<16x128xf32>
    %196 = arith.mulf %165, %193 : vector<16x128xf32>
    %197 = arith.addf %196, %195 : vector<16x128xf32>
    %cst_147 = arith.constant 0.000000e+00 : f32
    %198 = vector.broadcast %cst_147 : f32 to vector<16x128xf32>
    %199 = arith.maximumf %197, %198 : vector<16x128xf32>
    %c0_148 = arith.constant 0 : index
    %c0_149 = arith.constant 0 : index
    %c0_150 = arith.constant 0 : index
    %200 = vector.load %arg10[%c0_148, %c0_149, %c0_150] : memref<3x16x16xf32, #tpu.memory_space<vmem>>, vector<1x16x16xf32>
    %201 = vector.shape_cast %200 : vector<1x16x16xf32> to vector<16x16xf32>
    %cst_151 = arith.constant dense<0.000000e+00> : vector<16x128xf32>
    %202 = tpu.matmul %201, %199, %cst_151 {dimension_numbers = #tpu.dot_dimension_numbers<[1], [0], [0], [1], [0, 0, 1, 1], [], []>} : vector<16x16xf32>, vector<16x128xf32>, vector<16x128xf32> -> vector<16x128xf32>
    %c0_152 = arith.constant 0 : index
    %c0_153 = arith.constant 0 : index
    %c0_154 = arith.constant 0 : index
    %203 = vector.load %arg11[%c0_152, %c0_153, %c0_154] : memref<3x128x128xf32, #tpu.memory_space<vmem>>, vector<1x128x128xf32>
    %204 = vector.shape_cast %203 : vector<1x128x128xf32> to vector<128x128xf32>
    %cst_155 = arith.constant dense<0.000000e+00> : vector<16x128xf32>
    %205 = tpu.matmul %202, %204, %cst_155 {dimension_numbers = #tpu.dot_dimension_numbers<[1], [0], [0], [1], [0, 0, 1, 1], [], []>} : vector<16x128xf32>, vector<128x128xf32>, vector<16x128xf32> -> vector<16x128xf32>
    %c1_156 = arith.constant 1 : index
    %c0_157 = arith.constant 0 : index
    %c0_158 = arith.constant 0 : index
    %206 = vector.load %arg10[%c1_156, %c0_157, %c0_158] : memref<3x16x16xf32, #tpu.memory_space<vmem>>, vector<1x16x16xf32>
    %207 = vector.shape_cast %206 : vector<1x16x16xf32> to vector<16x16xf32>
    %cst_159 = arith.constant dense<0.000000e+00> : vector<16x128xf32>
    %208 = tpu.matmul %207, %199, %cst_159 {dimension_numbers = #tpu.dot_dimension_numbers<[1], [0], [0], [1], [0, 0, 1, 1], [], []>} : vector<16x16xf32>, vector<16x128xf32>, vector<16x128xf32> -> vector<16x128xf32>
    %c1_160 = arith.constant 1 : index
    %c0_161 = arith.constant 0 : index
    %c0_162 = arith.constant 0 : index
    %209 = vector.load %arg11[%c1_160, %c0_161, %c0_162] : memref<3x128x128xf32, #tpu.memory_space<vmem>>, vector<1x128x128xf32>
    %210 = vector.shape_cast %209 : vector<1x128x128xf32> to vector<128x128xf32>
    %cst_163 = arith.constant dense<0.000000e+00> : vector<16x128xf32>
    %211 = tpu.matmul %208, %210, %cst_163 {dimension_numbers = #tpu.dot_dimension_numbers<[1], [0], [0], [1], [0, 0, 1, 1], [], []>} : vector<16x128xf32>, vector<128x128xf32>, vector<16x128xf32> -> vector<16x128xf32>
    %212 = arith.addf %205, %211 : vector<16x128xf32>
    %c2_164 = arith.constant 2 : index
    %c0_165 = arith.constant 0 : index
    %c0_166 = arith.constant 0 : index
    %213 = vector.load %arg10[%c2_164, %c0_165, %c0_166] : memref<3x16x16xf32, #tpu.memory_space<vmem>>, vector<1x16x16xf32>
    %214 = vector.shape_cast %213 : vector<1x16x16xf32> to vector<16x16xf32>
    %cst_167 = arith.constant dense<0.000000e+00> : vector<16x128xf32>
    %215 = tpu.matmul %214, %199, %cst_167 {dimension_numbers = #tpu.dot_dimension_numbers<[1], [0], [0], [1], [0, 0, 1, 1], [], []>} : vector<16x16xf32>, vector<16x128xf32>, vector<16x128xf32> -> vector<16x128xf32>
    %c2_168 = arith.constant 2 : index
    %c0_169 = arith.constant 0 : index
    %c0_170 = arith.constant 0 : index
    %216 = vector.load %arg11[%c2_168, %c0_169, %c0_170] : memref<3x128x128xf32, #tpu.memory_space<vmem>>, vector<1x128x128xf32>
    %217 = vector.shape_cast %216 : vector<1x128x128xf32> to vector<128x128xf32>
    %cst_171 = arith.constant dense<0.000000e+00> : vector<16x128xf32>
    %218 = tpu.matmul %215, %217, %cst_171 {dimension_numbers = #tpu.dot_dimension_numbers<[1], [0], [0], [1], [0, 0, 1, 1], [], []>} : vector<16x128xf32>, vector<128x128xf32>, vector<16x128xf32> -> vector<16x128xf32>
    %219 = arith.addf %212, %218 : vector<16x128xf32>
    %c0_172 = arith.constant 0 : index
    %c0_173 = arith.constant 0 : index
    %220 = vector.load %arg12[%c0_172, %c0_173] : memref<1x128xf32, #tpu.memory_space<vmem>>, vector<1x128xf32>
    %221 = vector.broadcast %220 : vector<1x128xf32> to vector<16x128xf32>
    %222 = arith.addf %219, %221 : vector<16x128xf32>
    %223 = arith.addf %165, %222 : vector<16x128xf32>
    %c0_174 = arith.constant 0 : index
    %c0_175 = arith.constant 0 : index
    %c0_176 = arith.constant 0 : index
    %224 = vector.load %arg13[%c0_174, %c0_175, %c0_176] : memref<4x32x16xf32, #tpu.memory_space<vmem>>, vector<1x32x16xf32>
    %225 = vector.shape_cast %224 : vector<1x32x16xf32> to vector<32x16xf32>
    %cst_177 = arith.constant dense<0.000000e+00> : vector<32x128xf32>
    %226 = tpu.matmul %225, %223, %cst_177 {dimension_numbers = #tpu.dot_dimension_numbers<[1], [0], [0], [1], [0, 0, 1, 1], [], []>} : vector<32x16xf32>, vector<16x128xf32>, vector<32x128xf32> -> vector<32x128xf32>
    %c0_178 = arith.constant 0 : index
    %c0_179 = arith.constant 0 : index
    %c0_180 = arith.constant 0 : index
    %227 = vector.load %arg14[%c0_178, %c0_179, %c0_180] : memref<4x128x128xf32, #tpu.memory_space<vmem>>, vector<1x128x128xf32>
    %228 = vector.shape_cast %227 : vector<1x128x128xf32> to vector<128x128xf32>
    %cst_181 = arith.constant dense<0.000000e+00> : vector<32x128xf32>
    %229 = tpu.matmul %226, %228, %cst_181 {dimension_numbers = #tpu.dot_dimension_numbers<[1], [0], [0], [1], [0, 0, 1, 1], [], []>} : vector<32x128xf32>, vector<128x128xf32>, vector<32x128xf32> -> vector<32x128xf32>
    %c1_182 = arith.constant 1 : index
    %c0_183 = arith.constant 0 : index
    %c0_184 = arith.constant 0 : index
    %230 = vector.load %arg13[%c1_182, %c0_183, %c0_184] : memref<4x32x16xf32, #tpu.memory_space<vmem>>, vector<1x32x16xf32>
    %231 = vector.shape_cast %230 : vector<1x32x16xf32> to vector<32x16xf32>
    %cst_185 = arith.constant dense<0.000000e+00> : vector<32x128xf32>
    %232 = tpu.matmul %231, %223, %cst_185 {dimension_numbers = #tpu.dot_dimension_numbers<[1], [0], [0], [1], [0, 0, 1, 1], [], []>} : vector<32x16xf32>, vector<16x128xf32>, vector<32x128xf32> -> vector<32x128xf32>
    %c1_186 = arith.constant 1 : index
    %c0_187 = arith.constant 0 : index
    %c0_188 = arith.constant 0 : index
    %233 = vector.load %arg14[%c1_186, %c0_187, %c0_188] : memref<4x128x128xf32, #tpu.memory_space<vmem>>, vector<1x128x128xf32>
    %234 = vector.shape_cast %233 : vector<1x128x128xf32> to vector<128x128xf32>
    %cst_189 = arith.constant dense<0.000000e+00> : vector<32x128xf32>
    %235 = tpu.matmul %232, %234, %cst_189 {dimension_numbers = #tpu.dot_dimension_numbers<[1], [0], [0], [1], [0, 0, 1, 1], [], []>} : vector<32x128xf32>, vector<128x128xf32>, vector<32x128xf32> -> vector<32x128xf32>
    %236 = arith.addf %229, %235 : vector<32x128xf32>
    %c2_190 = arith.constant 2 : index
    %c0_191 = arith.constant 0 : index
    %c0_192 = arith.constant 0 : index
    %237 = vector.load %arg13[%c2_190, %c0_191, %c0_192] : memref<4x32x16xf32, #tpu.memory_space<vmem>>, vector<1x32x16xf32>
    %238 = vector.shape_cast %237 : vector<1x32x16xf32> to vector<32x16xf32>
    %cst_193 = arith.constant dense<0.000000e+00> : vector<32x128xf32>
    %239 = tpu.matmul %238, %223, %cst_193 {dimension_numbers = #tpu.dot_dimension_numbers<[1], [0], [0], [1], [0, 0, 1, 1], [], []>} : vector<32x16xf32>, vector<16x128xf32>, vector<32x128xf32> -> vector<32x128xf32>
    %c2_194 = arith.constant 2 : index
    %c0_195 = arith.constant 0 : index
    %c0_196 = arith.constant 0 : index
    %240 = vector.load %arg14[%c2_194, %c0_195, %c0_196] : memref<4x128x128xf32, #tpu.memory_space<vmem>>, vector<1x128x128xf32>
    %241 = vector.shape_cast %240 : vector<1x128x128xf32> to vector<128x128xf32>
    %cst_197 = arith.constant dense<0.000000e+00> : vector<32x128xf32>
    %242 = tpu.matmul %239, %241, %cst_197 {dimension_numbers = #tpu.dot_dimension_numbers<[1], [0], [0], [1], [0, 0, 1, 1], [], []>} : vector<32x128xf32>, vector<128x128xf32>, vector<32x128xf32> -> vector<32x128xf32>
    %243 = arith.addf %236, %242 : vector<32x128xf32>
    %c3_198 = arith.constant 3 : index
    %c0_199 = arith.constant 0 : index
    %c0_200 = arith.constant 0 : index
    %244 = vector.load %arg13[%c3_198, %c0_199, %c0_200] : memref<4x32x16xf32, #tpu.memory_space<vmem>>, vector<1x32x16xf32>
    %245 = vector.shape_cast %244 : vector<1x32x16xf32> to vector<32x16xf32>
    %cst_201 = arith.constant dense<0.000000e+00> : vector<32x128xf32>
    %246 = tpu.matmul %245, %223, %cst_201 {dimension_numbers = #tpu.dot_dimension_numbers<[1], [0], [0], [1], [0, 0, 1, 1], [], []>} : vector<32x16xf32>, vector<16x128xf32>, vector<32x128xf32> -> vector<32x128xf32>
    %c3_202 = arith.constant 3 : index
    %c0_203 = arith.constant 0 : index
    %c0_204 = arith.constant 0 : index
    %247 = vector.load %arg14[%c3_202, %c0_203, %c0_204] : memref<4x128x128xf32, #tpu.memory_space<vmem>>, vector<1x128x128xf32>
    %248 = vector.shape_cast %247 : vector<1x128x128xf32> to vector<128x128xf32>
    %cst_205 = arith.constant dense<0.000000e+00> : vector<32x128xf32>
    %249 = tpu.matmul %246, %248, %cst_205 {dimension_numbers = #tpu.dot_dimension_numbers<[1], [0], [0], [1], [0, 0, 1, 1], [], []>} : vector<32x128xf32>, vector<128x128xf32>, vector<32x128xf32> -> vector<32x128xf32>
    %250 = arith.addf %243, %249 : vector<32x128xf32>
    %c0_206 = arith.constant 0 : index
    %c0_207 = arith.constant 0 : index
    %251 = vector.load %arg15[%c0_206, %c0_207] : memref<1x128xf32, #tpu.memory_space<vmem>>, vector<1x128xf32>
    %252 = vector.broadcast %251 : vector<1x128xf32> to vector<32x128xf32>
    %253 = arith.addf %250, %252 : vector<32x128xf32>
    %254 = vector.extract_strided_slice %8 {offsets = [0, 80], sizes = [2, 16], strides = [1, 1]} : vector<2x96xf32> to vector<2x16xf32>
    %cst_208 = arith.constant dense<0.000000e+00> : vector<128xf32>
    %255 = vector.multi_reduction <add>, %253, %cst_208 [0] : vector<32x128xf32> to vector<128xf32>
    %256 = vector.shape_cast %255 : vector<128xf32> to vector<1x128xf32>
    %cst_209 = arith.constant dense<0.000000e+00> : vector<1x8xf32>
    %257 = tpu.matmul %256, %10, %cst_209 {dimension_numbers = #tpu.dot_dimension_numbers<[1], [0], [0], [1], [0, 0, 1, 1], [], []>} : vector<1x128xf32>, vector<128x8xf32>, vector<1x8xf32> -> vector<1x8xf32>
    %258 = arith.mulf %253, %253 : vector<32x128xf32>
    %cst_210 = arith.constant dense<0.000000e+00> : vector<128xf32>
    %259 = vector.multi_reduction <add>, %258, %cst_210 [0] : vector<32x128xf32> to vector<128xf32>
    %260 = vector.shape_cast %259 : vector<128xf32> to vector<1x128xf32>
    %cst_211 = arith.constant dense<0.000000e+00> : vector<1x8xf32>
    %261 = tpu.matmul %260, %10, %cst_211 {dimension_numbers = #tpu.dot_dimension_numbers<[1], [0], [0], [1], [0, 0, 1, 1], [], []>} : vector<1x128xf32>, vector<128x8xf32>, vector<1x8xf32> -> vector<1x8xf32>
    %cst_212 = arith.constant 0.001953125 : f32
    %262 = vector.broadcast %cst_212 : f32 to vector<1x8xf32>
    %263 = arith.mulf %257, %262 : vector<1x8xf32>
    %cst_213 = arith.constant 0.001953125 : f32
    %264 = vector.broadcast %cst_213 : f32 to vector<1x8xf32>
    %265 = arith.mulf %261, %264 : vector<1x8xf32>
    %266 = arith.mulf %263, %263 : vector<1x8xf32>
    %267 = arith.subf %265, %266 : vector<1x8xf32>
    %cst_214 = arith.constant 9.99999974E-6 : f32
    %268 = vector.broadcast %cst_214 : f32 to vector<1x8xf32>
    %269 = arith.addf %267, %268 : vector<1x8xf32>
    %270 = math.rsqrt %269 : vector<1x8xf32>
    %271 = vector.extract_strided_slice %254 {offsets = [0, 0], sizes = [2, 8], strides = [1, 1]} : vector<2x16xf32> to vector<2x8xf32>
    %272 = vector.extract_strided_slice %254 {offsets = [0, 8], sizes = [2, 8], strides = [1, 1]} : vector<2x16xf32> to vector<2x8xf32>
    %cst_215 = arith.constant 1.000000e+00 : f32
    %273 = vector.broadcast %cst_215 : f32 to vector<2x8xf32>
    %274 = arith.addf %273, %272 : vector<2x8xf32>
    %275 = vector.broadcast %270 : vector<1x8xf32> to vector<2x8xf32>
    %276 = arith.mulf %275, %274 : vector<2x8xf32>
    %277 = vector.broadcast %263 : vector<1x8xf32> to vector<2x8xf32>
    %278 = arith.mulf %277, %276 : vector<2x8xf32>
    %279 = arith.subf %271, %278 : vector<2x8xf32>
    %cst_216 = arith.constant dense<0.000000e+00> : vector<2x128xf32>
    %280 = tpu.matmul %276, %9, %cst_216 {dimension_numbers = #tpu.dot_dimension_numbers<[1], [0], [0], [1], [0, 0, 1, 1], [], []>} : vector<2x8xf32>, vector<8x128xf32>, vector<2x128xf32> -> vector<2x128xf32>
    %cst_217 = arith.constant dense<0.000000e+00> : vector<32x128xf32>
    %281 = tpu.matmul %13, %280, %cst_217 {dimension_numbers = #tpu.dot_dimension_numbers<[1], [0], [0], [1], [0, 0, 1, 1], [], []>} : vector<32x2xf32>, vector<2x128xf32>, vector<32x128xf32> -> vector<32x128xf32>
    %cst_218 = arith.constant dense<0.000000e+00> : vector<2x128xf32>
    %282 = tpu.matmul %279, %9, %cst_218 {dimension_numbers = #tpu.dot_dimension_numbers<[1], [0], [0], [1], [0, 0, 1, 1], [], []>} : vector<2x8xf32>, vector<8x128xf32>, vector<2x128xf32> -> vector<2x128xf32>
    %cst_219 = arith.constant dense<0.000000e+00> : vector<32x128xf32>
    %283 = tpu.matmul %13, %282, %cst_219 {dimension_numbers = #tpu.dot_dimension_numbers<[1], [0], [0], [1], [0, 0, 1, 1], [], []>} : vector<32x2xf32>, vector<2x128xf32>, vector<32x128xf32> -> vector<32x128xf32>
    %284 = arith.mulf %253, %281 : vector<32x128xf32>
    %285 = arith.addf %284, %283 : vector<32x128xf32>
    %cst_220 = arith.constant 0.000000e+00 : f32
    %286 = vector.broadcast %cst_220 : f32 to vector<32x128xf32>
    %287 = arith.maximumf %285, %286 : vector<32x128xf32>
    %c0_221 = arith.constant 0 : index
    %c0_222 = arith.constant 0 : index
    %c0_223 = arith.constant 0 : index
    %288 = vector.load %arg4[%c0_221, %c0_222, %c0_223] : memref<7x32x32xf32, #tpu.memory_space<vmem>>, vector<1x32x32xf32>
    %289 = vector.shape_cast %288 : vector<1x32x32xf32> to vector<32x32xf32>
    %cst_224 = arith.constant dense<0.000000e+00> : vector<32x128xf32>
    %290 = tpu.matmul %289, %287, %cst_224 {dimension_numbers = #tpu.dot_dimension_numbers<[1], [0], [0], [1], [0, 0, 1, 1], [], []>} : vector<32x32xf32>, vector<32x128xf32>, vector<32x128xf32> -> vector<32x128xf32>
    %c0_225 = arith.constant 0 : index
    %c0_226 = arith.constant 0 : index
    %c0_227 = arith.constant 0 : index
    %291 = vector.load %arg16[%c0_225, %c0_226, %c0_227] : memref<7x128x16xf32, #tpu.memory_space<vmem>>, vector<1x128x16xf32>
    %292 = vector.shape_cast %291 : vector<1x128x16xf32> to vector<128x16xf32>
    %cst_228 = arith.constant dense<0.000000e+00> : vector<32x16xf32>
    %293 = tpu.matmul %290, %292, %cst_228 {dimension_numbers = #tpu.dot_dimension_numbers<[1], [0], [0], [1], [0, 0, 1, 1], [], []>} : vector<32x128xf32>, vector<128x16xf32>, vector<32x16xf32> -> vector<32x16xf32>
    %c1_229 = arith.constant 1 : index
    %c0_230 = arith.constant 0 : index
    %c0_231 = arith.constant 0 : index
    %294 = vector.load %arg4[%c1_229, %c0_230, %c0_231] : memref<7x32x32xf32, #tpu.memory_space<vmem>>, vector<1x32x32xf32>
    %295 = vector.shape_cast %294 : vector<1x32x32xf32> to vector<32x32xf32>
    %cst_232 = arith.constant dense<0.000000e+00> : vector<32x128xf32>
    %296 = tpu.matmul %295, %287, %cst_232 {dimension_numbers = #tpu.dot_dimension_numbers<[1], [0], [0], [1], [0, 0, 1, 1], [], []>} : vector<32x32xf32>, vector<32x128xf32>, vector<32x128xf32> -> vector<32x128xf32>
    %c1_233 = arith.constant 1 : index
    %c0_234 = arith.constant 0 : index
    %c0_235 = arith.constant 0 : index
    %297 = vector.load %arg16[%c1_233, %c0_234, %c0_235] : memref<7x128x16xf32, #tpu.memory_space<vmem>>, vector<1x128x16xf32>
    %298 = vector.shape_cast %297 : vector<1x128x16xf32> to vector<128x16xf32>
    %cst_236 = arith.constant dense<0.000000e+00> : vector<32x16xf32>
    %299 = tpu.matmul %296, %298, %cst_236 {dimension_numbers = #tpu.dot_dimension_numbers<[1], [0], [0], [1], [0, 0, 1, 1], [], []>} : vector<32x128xf32>, vector<128x16xf32>, vector<32x16xf32> -> vector<32x16xf32>
    %300 = arith.addf %293, %299 : vector<32x16xf32>
    %c2_237 = arith.constant 2 : index
    %c0_238 = arith.constant 0 : index
    %c0_239 = arith.constant 0 : index
    %301 = vector.load %arg4[%c2_237, %c0_238, %c0_239] : memref<7x32x32xf32, #tpu.memory_space<vmem>>, vector<1x32x32xf32>
    %302 = vector.shape_cast %301 : vector<1x32x32xf32> to vector<32x32xf32>
    %cst_240 = arith.constant dense<0.000000e+00> : vector<32x128xf32>
    %303 = tpu.matmul %302, %287, %cst_240 {dimension_numbers = #tpu.dot_dimension_numbers<[1], [0], [0], [1], [0, 0, 1, 1], [], []>} : vector<32x32xf32>, vector<32x128xf32>, vector<32x128xf32> -> vector<32x128xf32>
    %c2_241 = arith.constant 2 : index
    %c0_242 = arith.constant 0 : index
    %c0_243 = arith.constant 0 : index
    %304 = vector.load %arg16[%c2_241, %c0_242, %c0_243] : memref<7x128x16xf32, #tpu.memory_space<vmem>>, vector<1x128x16xf32>
    %305 = vector.shape_cast %304 : vector<1x128x16xf32> to vector<128x16xf32>
    %cst_244 = arith.constant dense<0.000000e+00> : vector<32x16xf32>
    %306 = tpu.matmul %303, %305, %cst_244 {dimension_numbers = #tpu.dot_dimension_numbers<[1], [0], [0], [1], [0, 0, 1, 1], [], []>} : vector<32x128xf32>, vector<128x16xf32>, vector<32x16xf32> -> vector<32x16xf32>
    %307 = arith.addf %300, %306 : vector<32x16xf32>
    %c3_245 = arith.constant 3 : index
    %c0_246 = arith.constant 0 : index
    %c0_247 = arith.constant 0 : index
    %308 = vector.load %arg4[%c3_245, %c0_246, %c0_247] : memref<7x32x32xf32, #tpu.memory_space<vmem>>, vector<1x32x32xf32>
    %309 = vector.shape_cast %308 : vector<1x32x32xf32> to vector<32x32xf32>
    %cst_248 = arith.constant dense<0.000000e+00> : vector<32x128xf32>
    %310 = tpu.matmul %309, %287, %cst_248 {dimension_numbers = #tpu.dot_dimension_numbers<[1], [0], [0], [1], [0, 0, 1, 1], [], []>} : vector<32x32xf32>, vector<32x128xf32>, vector<32x128xf32> -> vector<32x128xf32>
    %c3_249 = arith.constant 3 : index
    %c0_250 = arith.constant 0 : index
    %c0_251 = arith.constant 0 : index
    %311 = vector.load %arg16[%c3_249, %c0_250, %c0_251] : memref<7x128x16xf32, #tpu.memory_space<vmem>>, vector<1x128x16xf32>
    %312 = vector.shape_cast %311 : vector<1x128x16xf32> to vector<128x16xf32>
    %cst_252 = arith.constant dense<0.000000e+00> : vector<32x16xf32>
    %313 = tpu.matmul %310, %312, %cst_252 {dimension_numbers = #tpu.dot_dimension_numbers<[1], [0], [0], [1], [0, 0, 1, 1], [], []>} : vector<32x128xf32>, vector<128x16xf32>, vector<32x16xf32> -> vector<32x16xf32>
    %314 = arith.addf %307, %313 : vector<32x16xf32>
    %c4_253 = arith.constant 4 : index
    %c0_254 = arith.constant 0 : index
    %c0_255 = arith.constant 0 : index
    %315 = vector.load %arg4[%c4_253, %c0_254, %c0_255] : memref<7x32x32xf32, #tpu.memory_space<vmem>>, vector<1x32x32xf32>
    %316 = vector.shape_cast %315 : vector<1x32x32xf32> to vector<32x32xf32>
    %cst_256 = arith.constant dense<0.000000e+00> : vector<32x128xf32>
    %317 = tpu.matmul %316, %287, %cst_256 {dimension_numbers = #tpu.dot_dimension_numbers<[1], [0], [0], [1], [0, 0, 1, 1], [], []>} : vector<32x32xf32>, vector<32x128xf32>, vector<32x128xf32> -> vector<32x128xf32>
    %c4_257 = arith.constant 4 : index
    %c0_258 = arith.constant 0 : index
    %c0_259 = arith.constant 0 : index
    %318 = vector.load %arg16[%c4_257, %c0_258, %c0_259] : memref<7x128x16xf32, #tpu.memory_space<vmem>>, vector<1x128x16xf32>
    %319 = vector.shape_cast %318 : vector<1x128x16xf32> to vector<128x16xf32>
    %cst_260 = arith.constant dense<0.000000e+00> : vector<32x16xf32>
    %320 = tpu.matmul %317, %319, %cst_260 {dimension_numbers = #tpu.dot_dimension_numbers<[1], [0], [0], [1], [0, 0, 1, 1], [], []>} : vector<32x128xf32>, vector<128x16xf32>, vector<32x16xf32> -> vector<32x16xf32>
    %321 = arith.addf %314, %320 : vector<32x16xf32>
    %c5_261 = arith.constant 5 : index
    %c0_262 = arith.constant 0 : index
    %c0_263 = arith.constant 0 : index
    %322 = vector.load %arg4[%c5_261, %c0_262, %c0_263] : memref<7x32x32xf32, #tpu.memory_space<vmem>>, vector<1x32x32xf32>
    %323 = vector.shape_cast %322 : vector<1x32x32xf32> to vector<32x32xf32>
    %cst_264 = arith.constant dense<0.000000e+00> : vector<32x128xf32>
    %324 = tpu.matmul %323, %287, %cst_264 {dimension_numbers = #tpu.dot_dimension_numbers<[1], [0], [0], [1], [0, 0, 1, 1], [], []>} : vector<32x32xf32>, vector<32x128xf32>, vector<32x128xf32> -> vector<32x128xf32>
    %c5_265 = arith.constant 5 : index
    %c0_266 = arith.constant 0 : index
    %c0_267 = arith.constant 0 : index
    %325 = vector.load %arg16[%c5_265, %c0_266, %c0_267] : memref<7x128x16xf32, #tpu.memory_space<vmem>>, vector<1x128x16xf32>
    %326 = vector.shape_cast %325 : vector<1x128x16xf32> to vector<128x16xf32>
    %cst_268 = arith.constant dense<0.000000e+00> : vector<32x16xf32>
    %327 = tpu.matmul %324, %326, %cst_268 {dimension_numbers = #tpu.dot_dimension_numbers<[1], [0], [0], [1], [0, 0, 1, 1], [], []>} : vector<32x128xf32>, vector<128x16xf32>, vector<32x16xf32> -> vector<32x16xf32>
    %328 = arith.addf %321, %327 : vector<32x16xf32>
    %c6_269 = arith.constant 6 : index
    %c0_270 = arith.constant 0 : index
    %c0_271 = arith.constant 0 : index
    %329 = vector.load %arg4[%c6_269, %c0_270, %c0_271] : memref<7x32x32xf32, #tpu.memory_space<vmem>>, vector<1x32x32xf32>
    %330 = vector.shape_cast %329 : vector<1x32x32xf32> to vector<32x32xf32>
    %cst_272 = arith.constant dense<0.000000e+00> : vector<32x128xf32>
    %331 = tpu.matmul %330, %287, %cst_272 {dimension_numbers = #tpu.dot_dimension_numbers<[1], [0], [0], [1], [0, 0, 1, 1], [], []>} : vector<32x32xf32>, vector<32x128xf32>, vector<32x128xf32> -> vector<32x128xf32>
    %c6_273 = arith.constant 6 : index
    %c0_274 = arith.constant 0 : index
    %c0_275 = arith.constant 0 : index
    %332 = vector.load %arg16[%c6_273, %c0_274, %c0_275] : memref<7x128x16xf32, #tpu.memory_space<vmem>>, vector<1x128x16xf32>
    %333 = vector.shape_cast %332 : vector<1x128x16xf32> to vector<128x16xf32>
    %cst_276 = arith.constant dense<0.000000e+00> : vector<32x16xf32>
    %334 = tpu.matmul %331, %333, %cst_276 {dimension_numbers = #tpu.dot_dimension_numbers<[1], [0], [0], [1], [0, 0, 1, 1], [], []>} : vector<32x128xf32>, vector<128x16xf32>, vector<32x16xf32> -> vector<32x16xf32>
    %335 = arith.addf %328, %334 : vector<32x16xf32>
    %c0_277 = arith.constant 0 : index
    %c0_278 = arith.constant 0 : index
    %336 = vector.load %arg17[%c0_277, %c0_278] : memref<1x16xf32, #tpu.memory_space<vmem>>, vector<1x16xf32>
    %337 = vector.broadcast %336 : vector<1x16xf32> to vector<32x16xf32>
    %338 = arith.addf %335, %337 : vector<32x16xf32>
    %339 = math.tanh %338 : vector<32x16xf32>
    %340 = vector.shape_cast %339 : vector<32x16xf32> to vector<2x16x16xf32>
    %c0_279 = arith.constant 0 : index
    %c0_280 = arith.constant 0 : index
    %c0_281 = arith.constant 0 : index
    %341 = vector.load %arg24[%c0_279, %c0_280, %c0_281] : memref<2x16x16xf32, #tpu.memory_space<vmem>>, vector<2x16x16xf32>
    tpu.vector_store %arg24[%c0_279, %c0_280, %c0_281], %340 {strides = array<i32>} : memref<2x16x16xf32, #tpu.memory_space<vmem>>, vector<2x16x16xf32>,
    return
  }
  func.func @transform_0(%arg0: i32, %arg1: memref<2xi32, #tpu.memory_space<smem>>) -> (i32, i32, i32) {
    %c0_i32 = arith.constant 0 : i32
    %c0_i32_0 = arith.constant 0 : i32
    %c0_i32_1 = arith.constant 0 : i32
    %c0_i32_2 = arith.constant 0 : i32
    return %c0_i32, %c0_i32_0, %c0_i32_1 : i32, i32, i32
  }
  func.func @transform_1(%arg0: i32, %arg1: memref<2xi32, #tpu.memory_space<smem>>) -> (i32, i32) {
    %c0_i32 = arith.constant 0 : i32
    %c0_i32_0 = arith.constant 0 : i32
    %c0_i32_1 = arith.constant 0 : i32
    return %c0_i32, %c0_i32_0 : i32, i32
  }
  func.func @transform_2(%arg0: i32, %arg1: memref<2xi32, #tpu.memory_space<smem>>) -> (i32, i32, i32) {
    %c0_i32 = arith.constant 0 : i32
    %c0_i32_0 = arith.constant 0 : i32
    %c0_i32_1 = arith.constant 0 : i32
    %c0_i32_2 = arith.constant 0 : i32
    return %c0_i32, %c0_i32_0, %c0_i32_1 : i32, i32, i32
  }
  func.func @transform_3(%arg0: i32, %arg1: memref<2xi32, #tpu.memory_space<smem>>) -> (i32, i32, i32) {
    %c0_i32 = arith.constant 0 : i32
    %c0_i32_0 = arith.constant 0 : i32
    %c0_i32_1 = arith.constant 0 : i32
    %c0_i32_2 = arith.constant 0 : i32
    return %c0_i32, %c0_i32_0, %c0_i32_1 : i32, i32, i32
  }
  func.func @transform_4(%arg0: i32, %arg1: memref<2xi32, #tpu.memory_space<smem>>) -> (i32, i32) {
    %c0_i32 = arith.constant 0 : i32
    %c0_i32_0 = arith.constant 0 : i32
    %c0_i32_1 = arith.constant 0 : i32
    return %c0_i32, %c0_i32_0 : i32, i32
  }
  func.func @transform_5(%arg0: i32, %arg1: memref<2xi32, #tpu.memory_space<smem>>) -> (i32, i32, i32) {
    %c0_i32 = arith.constant 0 : i32
    %c0_i32_0 = arith.constant 0 : i32
    %c0_i32_1 = arith.constant 0 : i32
    %c0_i32_2 = arith.constant 0 : i32
    return %c0_i32, %c0_i32_0, %c0_i32_1 : i32, i32, i32
  }
  func.func @transform_6(%arg0: i32, %arg1: memref<2xi32, #tpu.memory_space<smem>>) -> (i32, i32, i32) {
    %c0_i32 = arith.constant 0 : i32
    %c0_i32_0 = arith.constant 0 : i32
    %c0_i32_1 = arith.constant 0 : i32
    %c0_i32_2 = arith.constant 0 : i32
    return %c0_i32, %c0_i32_0, %c0_i32_1 : i32, i32, i32
  }
  func.func @transform_7(%arg0: i32, %arg1: memref<2xi32, #tpu.memory_space<smem>>) -> (i32, i32) {
    %c0_i32 = arith.constant 0 : i32
    %c0_i32_0 = arith.constant 0 : i32
    %c0_i32_1 = arith.constant 0 : i32
    return %c0_i32, %c0_i32_0 : i32, i32
  }
  func.func @transform_8(%arg0: i32, %arg1: memref<2xi32, #tpu.memory_space<smem>>) -> (i32, i32, i32) {
    %c0_i32 = arith.constant 0 : i32
    %c0_i32_0 = arith.constant 0 : i32
    %c0_i32_1 = arith.constant 0 : i32
    %c0_i32_2 = arith.constant 0 : i32
    return %c0_i32, %c0_i32_0, %c0_i32_1 : i32, i32, i32
  }
  func.func @transform_9(%arg0: i32, %arg1: memref<2xi32, #tpu.memory_space<smem>>) -> (i32, i32, i32) {
    %c0_i32 = arith.constant 0 : i32
    %c0_i32_0 = arith.constant 0 : i32
    %c0_i32_1 = arith.constant 0 : i32
    %c0_i32_2 = arith.constant 0 : i32
    return %c0_i32, %c0_i32_0, %c0_i32_1 : i32, i32, i32
  }
  func.func @transform_10(%arg0: i32, %arg1: memref<2xi32, #tpu.memory_space<smem>>) -> (i32, i32) {
    %c0_i32 = arith.constant 0 : i32
    %c0_i32_0 = arith.constant 0 : i32
    %c0_i32_1 = arith.constant 0 : i32
    return %c0_i32, %c0_i32_0 : i32, i32
  }
  func.func @transform_11(%arg0: i32, %arg1: memref<2xi32, #tpu.memory_space<smem>>) -> (i32, i32, i32) {
    %c0_i32 = arith.constant 0 : i32
    %c0_i32_0 = arith.constant 0 : i32
    %c0_i32_1 = arith.constant 0 : i32
    %c0_i32_2 = arith.constant 0 : i32
    return %c0_i32, %c0_i32_0, %c0_i32_1 : i32, i32, i32
  }
  func.func @transform_12(%arg0: i32, %arg1: memref<2xi32, #tpu.memory_space<smem>>) -> (i32, i32, i32) {
    %c0_i32 = arith.constant 0 : i32
    %c0_i32_0 = arith.constant 0 : i32
    %c0_i32_1 = arith.constant 0 : i32
    %c0_i32_2 = arith.constant 0 : i32
    return %c0_i32, %c0_i32_0, %c0_i32_1 : i32, i32, i32
  }
  func.func @transform_13(%arg0: i32, %arg1: memref<2xi32, #tpu.memory_space<smem>>) -> (i32, i32) {
    %c0_i32 = arith.constant 0 : i32
    %c0_i32_0 = arith.constant 0 : i32
    %c0_i32_1 = arith.constant 0 : i32
    return %c0_i32, %c0_i32_0 : i32, i32
  }
  func.func @transform_14(%arg0: i32, %arg1: memref<2xi32, #tpu.memory_space<smem>>) -> (i32, i32, i32) {
    %c0_i32 = arith.constant 0 : i32
    %c0_i32_0 = arith.constant 0 : i32
    %c0_i32_1 = arith.constant 0 : i32
    %c0_i32_2 = arith.constant 0 : i32
    return %c0_i32, %c0_i32_0, %c0_i32_1 : i32, i32, i32
  }
  func.func @transform_15(%arg0: i32, %arg1: memref<2xi32, #tpu.memory_space<smem>>) -> (i32, i32) {
    %c0_i32 = arith.constant 0 : i32
    %c0_i32_0 = arith.constant 0 : i32
    %c0_i32_1 = arith.constant 0 : i32
    return %c0_i32, %c0_i32_0 : i32, i32
  }
  func.func @transform_16(%arg0: i32, %arg1: memref<2xi32, #tpu.memory_space<smem>>) -> (i32, i32) {
    %c0_i32 = arith.constant 0 : i32
    %c0_i32_0 = arith.constant 0 : i32
    %c0_i32_1 = arith.constant 0 : i32
    return %c0_i32, %c0_i32_0 : i32, i32
  }
  func.func @transform_17(%arg0: i32, %arg1: memref<2xi32, #tpu.memory_space<smem>>) -> (i32, i32) {
    %c0_i32 = arith.constant 0 : i32
    %c0_i32_0 = arith.constant 0 : i32
    %c0_i32_1 = arith.constant 0 : i32
    return %c0_i32, %c0_i32_0 : i32, i32
  }
  func.func @transform_18(%arg0: i32, %arg1: memref<2xi32, #tpu.memory_space<smem>>) -> (i32, i32) {
    %c0_i32 = arith.constant 0 : i32
    %c0_i32_0 = arith.constant 0 : i32
    %c0_i32_1 = arith.constant 0 : i32
    return %c0_i32, %c0_i32_0 : i32, i32
  }
  func.func @transform_19(%arg0: i32, %arg1: memref<2xi32, #tpu.memory_space<smem>>) -> (i32, i32) {
    %c0_i32 = arith.constant 0 : i32
    %c0_i32_0 = arith.constant 0 : i32
    %c0_i32_1 = arith.constant 0 : i32
    return %c0_i32, %c0_i32_0 : i32, i32
  }
  func.func @transform_20(%arg0: i32, %arg1: memref<2xi32, #tpu.memory_space<smem>>) -> (i32, i32) {
    %c0_i32 = arith.constant 0 : i32
    %c0_i32_0 = arith.constant 0 : i32
    %c0_i32_1 = arith.constant 0 : i32
    return %c0_i32, %c0_i32_0 : i32, i32
  }
  func.func @transform_21(%arg0: i32, %arg1: memref<2xi32, #tpu.memory_space<smem>>) -> (i32, i32) {
    %c0_i32 = arith.constant 0 : i32
    %c0_i32_0 = arith.constant 0 : i32
    %c0_i32_1 = arith.constant 0 : i32
    return %c0_i32, %c0_i32_0 : i32, i32
  }
  func.func @transform_22(%arg0: i32, %arg1: memref<2xi32, #tpu.memory_space<smem>>) -> (i32, i32, i32) {
    %c0_i32 = arith.constant 0 : i32
    %c0_i32_0 = arith.constant 0 : i32
    %c0_i32_1 = arith.constant 0 : i32
    %c0_i32_2 = arith.constant 0 : i32
    return %c0_i32, %c0_i32_0, %c0_i32_1 : i32, i32, i32
  }
}

</mosaic_0001>

<llo_original>
// kernel: mnist_net_forward.1
$region0: #{mnist_net_forward.1}
  #allocation0 [shape = 'u32[]', space=smem, size = 0x4, offset = 0x4, fixed_abs, tag = 'smem constant byte address 0x4 - core index']
  #allocation1 [shape = 'u32[144,128]{1,0:T(1,128)}', space=vmem, size = 0x12000, scoped, tag = 'internal scratch']
  #allocation2 [shape = 'f32[2,96]{1,0:T(2,128)}', space=vmem, size = 0x400, scoped, tag = 'scratch operand']
  #allocation3 [shape = 's32[1]{0}', space=sflag, size = 0x4, scoped, tag = 'scoped memory for mnist_net_forward.1']
  #allocation4 [shape = 'u8[512]{0}', space=smem, size = 0x200, scoped, tag = 'prefetched SMEM operand 0']
  %s0 = inlined_call_operand.vmem [shape: s32[2], index: 0, kind: input, shape index: {}]
  %s1 = inlined_call_operand.hbm [shape: f32[2,16,16], index: 1, kind: input, shape index: {}]
  %s2 = inlined_call_operand.hbm [shape: f32[10,96], index: 2, kind: input, shape index: {}]
  %s3 = inlined_call_operand.hbm [shape: f32[7,32,32], index: 3, kind: input, shape index: {}]
  %s4 = inlined_call_operand.hbm [shape: f32[7,16,128], index: 4, kind: input, shape index: {}]
  %s5 = inlined_call_operand.vmem [shape: f32[1,128], index: 5, kind: input, shape index: {}]
  %s6 = inlined_call_operand.hbm [shape: f32[4,16,32], index: 6, kind: input, shape index: {}]
  %s7 = inlined_call_operand.vmem [shape: f32[4,128,128], index: 7, kind: input, shape index: {}]
  %s8 = inlined_call_operand.vmem [shape: f32[1,128], index: 8, kind: input, shape index: {}]
  %s9 = inlined_call_operand.hbm [shape: f32[3,16,16], index: 9, kind: input, shape index: {}]
  %s10 = inlined_call_operand.hbm [shape: f32[3,128,128], index: 10, kind: input, shape index: {}]
  %s11 = inlined_call_operand.vmem [shape: f32[1,128], index: 11, kind: input, shape index: {}]
  %s12 = inlined_call_operand.hbm [shape: f32[4,32,16], index: 12, kind: input, shape index: {}]
  %s13 = inlined_call_operand.vmem [shape: f32[4,128,128], index: 13, kind: input, shape index: {}]
  %s14 = inlined_call_operand.hbm [shape: f32[1,128], index: 14, kind: input, shape index: {}]
  %s15 = inlined_call_operand.vmem [shape: f32[7,128,16], index: 15, kind: input, shape index: {}]
  %s16 = inlined_call_operand.hbm [shape: f32[1,16], index: 16, kind: input, shape index: {}]
  %s17 = inlined_call_operand.hbm [shape: f32[8,128], index: 17, kind: input, shape index: {}]
  %s18 = inlined_call_operand.hbm [shape: f32[128,8], index: 18, kind: input, shape index: {}]
  %s19 = inlined_call_operand.hbm [shape: f32[16,128], index: 19, kind: input, shape index: {}]
  %s20 = inlined_call_operand.hbm [shape: f32[128,16], index: 20, kind: input, shape index: {}]
  %s21 = inlined_call_operand.vmem [shape: f32[32,2], index: 21, kind: input, shape index: {}]
  %s22 = inlined_call_operand.vmem [shape: f32[16,2], index: 22, kind: input, shape index: {}]
  %s23 = inlined_call_operand.hbm [shape: f32[2,16,16], index: 23, kind: output, shape index: {}]
  %s24 = sld [smem:[#allocation0]]
  $region154: #{mnist_net_forward.1} parent=0
    _
  %s26 = ssub.s32 1, %s24
  %s27 = scalar_select 0, %s26, %s24
  %s28 = sshll.u32 %s0, 4
  %s29 = int_to_ptr.vmem [resolvable:$true] %s28
  %31 = dma.vmem_to_smem %s29, 16, [#allocation4], [#allocation3]
  %32 = dma.done [#allocation3], 16
  %33 = sfence
  $region1: #{mnist_net_forward.1} parent=0
    #allocation5 [shape = 'u8[16384]{0}', space=vmem, size = 0x4000, scoped, tag = 'input window, operand 1, single buffered']
    #allocation6 [shape = 's32[1]{0}', space=sflag, size = 0x4, scoped, tag = 'scoped memory for mnist_net_forward.1']
    #allocation7 [shape = 's32[1]{0}', space=sflag, size = 0x4, scoped, tag = 'scoped memory for mnist_net_forward.1']
    #allocation8 [shape = 'u8[8192]{0}', space=vmem, size = 0x2000, scoped, tag = 'input window, operand 2, single buffered']
    #allocation9 [shape = 's32[1]{0}', space=sflag, size = 0x4, scoped, tag = 'scoped memory for mnist_net_forward.1']
    #allocation10 [shape = 'u8[114688]{0}', space=vmem, size = 0x1c000, scoped, tag = 'input window, operand 3, single buffered']
    #allocation11 [shape = 'u8[57344]{0}', space=vmem, size = 0xe000, scoped, tag = 'input window, operand 4, single buffered']
    #allocation12 [shape = 's32[1]{0}', space=sflag, size = 0x4, scoped, tag = 'scoped memory for mnist_net_forward.1']
    #allocation13 [shape = 'u8[32768]{0}', space=vmem, size = 0x8000, scoped, tag = 'input window, operand 6, single buffered']
    #allocation14 [shape = 'u8[24576]{0}', space=vmem, size = 0x6000, scoped, tag = 'input window, operand 9, single buffered']
    #allocation15 [shape = 's32[1]{0}', space=sflag, size = 0x4, scoped, tag = 'scoped memory for mnist_net_forward.1']
    #allocation16 [shape = 'u8[196608]{0}', space=vmem, size = 0x30000, scoped, tag = 'input window, operand 10, single buffered']
    #allocation17 [shape = 'u8[65536]{0}', space=vmem, size = 0x10000, scoped, tag = 'input window, operand 12, single buffered']
    #allocation18 [shape = 's32[1]{0}', space=sflag, size = 0x4, scoped, tag = 'scoped memory for mnist_net_forward.1']
    #allocation19 [shape = 'u8[512]{0}', space=vmem, size = 0x400, scoped, tag = 'input window, operand 14, single buffered']
    #allocation20 [shape = 'u8[512]{0}', space=vmem, size = 0x400, scoped, tag = 'input window, operand 16, single buffered']
    #allocation21 [shape = 's32[1]{0}', space=sflag, size = 0x4, scoped, tag = 'scoped memory for mnist_net_forward.1']
    #allocation22 [shape = 'u8[4096]{0}', space=vmem, size = 0x1000, scoped, tag = 'input window, operand 17, single buffered']
    #allocation23 [shape = 'u8[65536]{0}', space=vmem, size = 0x10000, scoped, tag = 'input window, operand 18, single buffered']
    #allocation24 [shape = 's32[1]{0}', space=sflag, size = 0x4, scoped, tag = 'scoped memory for mnist_net_forward.1']
    #allocation25 [shape = 'u8[8192]{0}', space=vmem, size = 0x2000, scoped, tag = 'input window, operand 19, single buffered']
    #allocation26 [shape = 'u8[65536]{0}', space=vmem, size = 0x10000, scoped, tag = 'input window, operand 20, single buffered']
    #allocation27 [shape = 's32[1]{0}', space=sflag, size = 0x4, scoped, tag = 'scoped memory for mnist_net_forward.1']
    #allocation28 [shape = 'u8[16384]{0}', space=vmem, size = 0x4000, scoped, tag = 'output window, operand 0, single buffered']
    %34 = vsyncpa [#allocation6], 0
    %35 = vsyncpa [#allocation9], 0
    %36 = vsyncpa [#allocation12], 0
    %37 = vsyncpa [#allocation15], 0
    %38 = vsyncpa [#allocation18], 0
    %39 = vsyncpa [#allocation21], 0
    %40 = vsyncpa [#allocation24], 0
    %41 = vsyncpa [#allocation27], 0
    %42 = vsyncpa [#allocation7], 0
    // Predicated region
    $region2: #{mnist_net_forward.1} parent=1 // pred_check
      _
    $region3: #{mnist_net_forward.1} parent=1 // pred_check_branch
      %44 = sbr.rel (0) target = $region5
    $region4: #{mnist_net_forward.1} parent=1 // pred_region
      %s46 = ssub.s32 512, 512
      %47 = vsyncadd [#allocation6], %s46
      %s48 = sshll.u32 [#allocation5], 4
      %s49 = int_to_ptr.vmem [resolvable:$true] %s48
      %54 = dma.hbm_to_vmem [thread:$0]  %s1, 512, %s49, [#allocation6], 128, 128, 8
    $region5: #{mnist_net_forward.1} parent=1 // pred_fallthru
      _
    // Predicated region
    $region6: #{mnist_net_forward.1} parent=1 // pred_check
      _
    $region7: #{mnist_net_forward.1} parent=1 // pred_check_branch
      %56 = sbr.rel (0) target = $region9
    $region8: #{mnist_net_forward.1} parent=1 // pred_region
      %s58 = ssub.s32 256, 256
      %59 = vsyncadd [#allocation9], %s58
      %s60 = sshll.u32 [#allocation8], 4
      %s61 = int_to_ptr.vmem [resolvable:$true] %s60
      %66 = dma.hbm_to_vmem [thread:$0]  %s2, 256, %s61, [#allocation9], 128, 128, 8
    $region9: #{mnist_net_forward.1} parent=1 // pred_fallthru
      _
    // Predicated region
    $region10: #{mnist_net_forward.1} parent=1 // pred_check
      _
    $region11: #{mnist_net_forward.1} parent=1 // pred_check_branch
      %68 = sbr.rel (0) target = $region13
    $region12: #{mnist_net_forward.1} parent=1 // pred_region
      %s70 = ssub.s32 3584, 3584
      %71 = vsyncadd [#allocation9], %s70
      %s72 = sshll.u32 [#allocation10], 4
      %s73 = int_to_ptr.vmem [resolvable:$true] %s72
      %78 = dma.hbm_to_vmem [thread:$0]  %s3, 3584, %s73, [#allocation9], 128, 128, 8
    $region13: #{mnist_net_forward.1} parent=1 // pred_fallthru
      _
    // Predicated region
    $region14: #{mnist_net_forward.1} parent=1 // pred_check
      _
    $region15: #{mnist_net_forward.1} parent=1 // pred_check_branch
      %80 = sbr.rel (0) target = $region17
    $region16: #{mnist_net_forward.1} parent=1 // pred_region
      %s82 = ssub.s32 1792, 1792
      %83 = vsyncadd [#allocation12], %s82
      %s84 = sshll.u32 [#allocation11], 4
      %s85 = int_to_ptr.vmem [resolvable:$true] %s84
      %90 = dma.hbm_to_vmem [thread:$0]  %s4, 1792, %s85, [#allocation12], 128, 128, 8
    $region17: #{mnist_net_forward.1} parent=1 // pred_fallthru
      _
    // Predicated region
    $region18: #{mnist_net_forward.1} parent=1 // pred_check
      _
    $region19: #{mnist_net_forward.1} parent=1 // pred_check_branch
      %92 = sbr.rel (0) target = $region21
    $region20: #{mnist_net_forward.1} parent=1 // pred_region
      _
    $region21: #{mnist_net_forward.1} parent=1 // pred_fallthru
      _
    // Predicated region
    $region22: #{mnist_net_forward.1} parent=1 // pred_check
      _
    $region23: #{mnist_net_forward.1} parent=1 // pred_check_branch
      %94 = sbr.rel (0) target = $region25
    $region24: #{mnist_net_forward.1} parent=1 // pred_region
      %s96 = ssub.s32 1024, 1024
      %97 = vsyncadd [#allocation12], %s96
      %s98 = sshll.u32 [#allocation13], 4
      %s99 = int_to_ptr.vmem [resolvable:$true] %s98
      %104 = dma.hbm_to_vmem [thread:$0]  %s6, 1024, %s99, [#allocation12], 128, 128, 8
    $region25: #{mnist_net_forward.1} parent=1 // pred_fallthru
      _
    // Predicated region
    $region26: #{mnist_net_forward.1} parent=1 // pred_check
      _
    $region27: #{mnist_net_forward.1} parent=1 // pred_check_branch
      %106 = sbr.rel (0) target = $region29
    $region28: #{mnist_net_forward.1} parent=1 // pred_region
      _
    $region29: #{mnist_net_forward.1} parent=1 // pred_fallthru
      _
    // Predicated region
    $region30: #{mnist_net_forward.1} parent=1 // pred_check
      _
    $region31: #{mnist_net_forward.1} parent=1 // pred_check_branch
      %108 = sbr.rel (0) target = $region33
    $region32: #{mnist_net_forward.1} parent=1 // pred_region
      _
    $region33: #{mnist_net_forward.1} parent=1 // pred_fallthru
      _
    // Predicated region
    $region34: #{mnist_net_forward.1} parent=1 // pred_check
      _
    $region35: #{mnist_net_forward.1} parent=1 // pred_check_branch
      %110 = sbr.rel (0) target = $region37
    $region36: #{mnist_net_forward.1} parent=1 // pred_region
      %s112 = ssub.s32 768, 768
      %113 = vsyncadd [#allocation15], %s112
      %s114 = sshll.u32 [#allocation14], 4
      %s115 = int_to_ptr.vmem [resolvable:$true] %s114
      %120 = dma.hbm_to_vmem [thread:$0]  %s9, 768, %s115, [#allocation15], 128, 128, 8
    $region37: #{mnist_net_forward.1} parent=1 // pred_fallthru
      _
    // Predicated region
    $region38: #{mnist_net_forward.1} parent=1 // pred_check
      _
    $region39: #{mnist_net_forward.1} parent=1 // pred_check_branch
      %122 = sbr.rel (0) target = $region41
    $region40: #{mnist_net_forward.1} parent=1 // pred_region
      %s124 = ssub.s32 6144, 6144
      %125 = vsyncadd [#allocation15], %s124
      %s126 = sshll.u32 [#allocation16], 4
      %s127 = int_to_ptr.vmem [resolvable:$true] %s126
      %132 = dma.hbm_to_vmem [thread:$0]  %s10, 6144, %s127, [#allocation15], 128, 128, 8
    $region41: #{mnist_net_forward.1} parent=1 // pred_fallthru
      _
    // Predicated region
    $region42: #{mnist_net_forward.1} parent=1 // pred_check
      _
    $region43: #{mnist_net_forward.1} parent=1 // pred_check_branch
      %134 = sbr.rel (0) target = $region45
    $region44: #{mnist_net_forward.1} parent=1 // pred_region
      _
    $region45: #{mnist_net_forward.1} parent=1 // pred_fallthru
      _
    // Predicated region
    $region46: #{mnist_net_forward.1} parent=1 // pred_check
      _
    $region47: #{mnist_net_forward.1} parent=1 // pred_check_branch
      %136 = sbr.rel (0) target = $region49
    $region48: #{mnist_net_forward.1} parent=1 // pred_region
      %s138 = ssub.s32 2048, 2048
      %139 = vsyncadd [#allocation18], %s138
      %s140 = sshll.u32 [#allocation17], 4
      %s141 = int_to_ptr.vmem [resolvable:$true] %s140
      %146 = dma.hbm_to_vmem [thread:$0]  %s12, 2048, %s141, [#allocation18], 128, 128, 8
    $region49: #{mnist_net_forward.1} parent=1 // pred_fallthru
      _
    // Predicated region
    $region50: #{mnist_net_forward.1} parent=1 // pred_check
      _
    $region51: #{mnist_net_forward.1} parent=1 // pred_check_branch
      %148 = sbr.rel (0) target = $region53
    $region52: #{mnist_net_forward.1} parent=1 // pred_region
      _
    $region53: #{mnist_net_forward.1} parent=1 // pred_fallthru
      _
    // Predicated region
    $region54: #{mnist_net_forward.1} parent=1 // pred_check
      _
    $region55: #{mnist_net_forward.1} parent=1 // pred_check_branch
      %150 = sbr.rel (0) target = $region57
    $region56: #{mnist_net_forward.1} parent=1 // pred_region
      %s152 = ssub.s32 16, 16
      %153 = vsyncadd [#allocation18], %s152
      %s155 = sshll.u32 [#allocation19], 4
      %s156 = int_to_ptr.vmem [resolvable:$true] %s155
      %158 = dma.hbm_to_vmem [thread:$0]  %s14, 16, %s156, [#allocation18]
    $region57: #{mnist_net_forward.1} parent=1 // pred_fallthru
      _
    // Predicated region
    $region58: #{mnist_net_forward.1} parent=1 // pred_check
      _
    $region59: #{mnist_net_forward.1} parent=1 // pred_check_branch
      %160 = sbr.rel (0) target = $region61
    $region60: #{mnist_net_forward.1} parent=1 // pred_region
      _
    $region61: #{mnist_net_forward.1} parent=1 // pred_fallthru
      _
    // Predicated region
    $region62: #{mnist_net_forward.1} parent=1 // pred_check
      _
    $region63: #{mnist_net_forward.1} parent=1 // pred_check_branch
      %162 = sbr.rel (0) target = $region65
    $region64: #{mnist_net_forward.1} parent=1 // pred_region
      %s164 = ssub.s32 16, 16
      %165 = vsyncadd [#allocation21], %s164
      %s167 = sshll.u32 [#allocation20], 4
      %s168 = int_to_ptr.vmem [resolvable:$true] %s167
      %170 = dma.hbm_to_vmem [thread:$0]  %s16, 16, %s168, [#allocation21]
    $region65: #{mnist_net_forward.1} parent=1 // pred_fallthru
      _
    // Predicated region
    $region66: #{mnist_net_forward.1} parent=1 // pred_check
      _
    $region67: #{mnist_net_forward.1} parent=1 // pred_check_branch
      %172 = sbr.rel (0) target = $region69
    $region68: #{mnist_net_forward.1} parent=1 // pred_region
      %s174 = ssub.s32 128, 128
      %175 = vsyncadd [#allocation21], %s174
      %s177 = sshll.u32 [#allocation22], 4
      %s178 = int_to_ptr.vmem [resolvable:$true] %s177
      %180 = dma.hbm_to_vmem [thread:$0]  %s17, 128, %s178, [#allocation21]
    $region69: #{mnist_net_forward.1} parent=1 // pred_fallthru
      _
    // Predicated region
    $region70: #{mnist_net_forward.1} parent=1 // pred_check
      _
    $region71: #{mnist_net_forward.1} parent=1 // pred_check_branch
      %182 = sbr.rel (0) target = $region73
    $region72: #{mnist_net_forward.1} parent=1 // pred_region
      %s184 = ssub.s32 2048, 2048
      %185 = vsyncadd [#allocation24], %s184
      %s186 = sshll.u32 [#allocation23], 4
      %s187 = int_to_ptr.vmem [resolvable:$true] %s186
      %192 = dma.hbm_to_vmem [thread:$0]  %s18, 2048, %s187, [#allocation24], 128, 128, 8
    $region73: #{mnist_net_forward.1} parent=1 // pred_fallthru
      _
    // Predicated region
    $region74: #{mnist_net_forward.1} parent=1 // pred_check
      _
    $region75: #{mnist_net_forward.1} parent=1 // pred_check_branch
      %194 = sbr.rel (0) target = $region77
    $region76: #{mnist_net_forward.1} parent=1 // pred_region
      %s196 = ssub.s32 256, 256
      %197 = vsyncadd [#allocation24], %s196
      %s198 = sshll.u32 [#allocation25], 4
      %s199 = int_to_ptr.vmem [resolvable:$true] %s198
      %204 = dma.hbm_to_vmem [thread:$0]  %s19, 256, %s199, [#allocation24], 128, 128, 8
    $region77: #{mnist_net_forward.1} parent=1 // pred_fallthru
      _
    // Predicated region
    $region78: #{mnist_net_forward.1} parent=1 // pred_check
      _
    $region79: #{mnist_net_forward.1} parent=1 // pred_check_branch
      %206 = sbr.rel (0) target = $region81
    $region80: #{mnist_net_forward.1} parent=1 // pred_region
      %s208 = ssub.s32 2048, 2048
      %209 = vsyncadd [#allocation27], %s208
      %s210 = sshll.u32 [#allocation26], 4
      %s211 = int_to_ptr.vmem [resolvable:$true] %s210
      %216 = dma.hbm_to_vmem [thread:$0]  %s20, 2048, %s211, [#allocation27], 128, 128, 8
    $region81: #{mnist_net_forward.1} parent=1 // pred_fallthru
      _
    // Predicated region
    $region82: #{mnist_net_forward.1} parent=1 // pred_check
      _
    $region83: #{mnist_net_forward.1} parent=1 // pred_check_branch
      %218 = sbr.rel (0) target = $region85
    $region84: #{mnist_net_forward.1} parent=1 // pred_region
      _
    $region85: #{mnist_net_forward.1} parent=1 // pred_fallthru
      _
    // Predicated region
    $region86: #{mnist_net_forward.1} parent=1 // pred_check
      _
    $region87: #{mnist_net_forward.1} parent=1 // pred_check_branch
      %220 = sbr.rel (0) target = $region89
    $region88: #{mnist_net_forward.1} parent=1 // pred_region
      _
    $region89: #{mnist_net_forward.1} parent=1 // pred_fallthru
      _
    // Predicated region
    $region90: #{mnist_net_forward.1} parent=1 // pred_check
      _
    $region91: #{mnist_net_forward.1} parent=1 // pred_check_branch
      %222 = sbr.rel (0) target = $region93
    $region92: #{mnist_net_forward.1} parent=1 // pred_region
      %223 = dma.done [#allocation6], 512
    $region93: #{mnist_net_forward.1} parent=1 // pred_fallthru
      _
    // Predicated region
    $region94: #{mnist_net_forward.1} parent=1 // pred_check
      _
    $region95: #{mnist_net_forward.1} parent=1 // pred_check_branch
      %225 = sbr.rel (0) target = $region97
    $region96: #{mnist_net_forward.1} parent=1 // pred_region
      %226 = dma.done [#allocation9], 256
    $region97: #{mnist_net_forward.1} parent=1 // pred_fallthru
      _
    // Predicated region
    $region98: #{mnist_net_forward.1} parent=1 // pred_check
      _
    $region99: #{mnist_net_forward.1} parent=1 // pred_check_branch
      %228 = sbr.rel (0) target = $region101
    $region100: #{mnist_net_forward.1} parent=1 // pred_region
      %229 = dma.done [#allocation9], 3584
    $region101: #{mnist_net_forward.1} parent=1 // pred_fallthru
      _
    // Predicated region
    $region102: #{mnist_net_forward.1} parent=1 // pred_check
      _
    $region103: #{mnist_net_forward.1} parent=1 // pred_check_branch
      %231 = sbr.rel (0) target = $region105
    $region104: #{mnist_net_forward.1} parent=1 // pred_region
      %232 = dma.done [#allocation12], 1792
    $region105: #{mnist_net_forward.1} parent=1 // pred_fallthru
      _
    // Predicated region
    $region106: #{mnist_net_forward.1} parent=1 // pred_check
      _
    $region107: #{mnist_net_forward.1} parent=1 // pred_check_branch
      %234 = sbr.rel (0) target = $region109
    $region108: #{mnist_net_forward.1} parent=1 // pred_region
      %235 = dma.done [#allocation12], 1024
    $region109: #{mnist_net_forward.1} parent=1 // pred_fallthru
      _
    // Predicated region
    $region110: #{mnist_net_forward.1} parent=1 // pred_check
      _
    $region111: #{mnist_net_forward.1} parent=1 // pred_check_branch
      %237 = sbr.rel (0) target = $region113
    $region112: #{mnist_net_forward.1} parent=1 // pred_region
      %238 = dma.done [#allocation15], 768
    $region113: #{mnist_net_forward.1} parent=1 // pred_fallthru
      _
    // Predicated region
    $region114: #{mnist_net_forward.1} parent=1 // pred_check
      _
    $region115: #{mnist_net_forward.1} parent=1 // pred_check_branch
      %240 = sbr.rel (0) target = $region117
    $region116: #{mnist_net_forward.1} parent=1 // pred_region
      %241 = dma.done [#allocation15], 6144
    $region117: #{mnist_net_forward.1} parent=1 // pred_fallthru
      _
    // Predicated region
    $region118: #{mnist_net_forward.1} parent=1 // pred_check
      _
    $region119: #{mnist_net_forward.1} parent=1 // pred_check_branch
      %243 = sbr.rel (0) target = $region121
    $region120: #{mnist_net_forward.1} parent=1 // pred_region
      %244 = dma.done [#allocation18], 2048
    $region121: #{mnist_net_forward.1} parent=1 // pred_fallthru
      _
    // Predicated region
    $region122: #{mnist_net_forward.1} parent=1 // pred_check
      _
    $region123: #{mnist_net_forward.1} parent=1 // pred_check_branch
      %246 = sbr.rel (0) target = $region125
    $region124: #{mnist_net_forward.1} parent=1 // pred_region
      %247 = dma.done [#allocation18], 16
    $region125: #{mnist_net_forward.1} parent=1 // pred_fallthru
      _
    // Predicated region
    $region126: #{mnist_net_forward.1} parent=1 // pred_check
      _
    $region127: #{mnist_net_forward.1} parent=1 // pred_check_branch
      %249 = sbr.rel (0) target = $region129
    $region128: #{mnist_net_forward.1} parent=1 // pred_region
      %250 = dma.done [#allocation21], 16
    $region129: #{mnist_net_forward.1} parent=1 // pred_fallthru
      _
    // Predicated region
    $region130: #{mnist_net_forward.1} parent=1 // pred_check
      _
    $region131: #{mnist_net_forward.1} parent=1 // pred_check_branch
      %252 = sbr.rel (0) target = $region133
    $region132: #{mnist_net_forward.1} parent=1 // pred_region
      %253 = dma.done [#allocation21], 128
    $region133: #{mnist_net_forward.1} parent=1 // pred_fallthru
      _
    // Predicated region
    $region134: #{mnist_net_forward.1} parent=1 // pred_check
      _
    $region135: #{mnist_net_forward.1} parent=1 // pred_check_branch
      %255 = sbr.rel (0) target = $region137
    $region136: #{mnist_net_forward.1} parent=1 // pred_region
      %256 = dma.done [#allocation24], 2048
    $region137: #{mnist_net_forward.1} parent=1 // pred_fallthru
      _
    // Predicated region
    $region138: #{mnist_net_forward.1} parent=1 // pred_check
      _
    $region139: #{mnist_net_forward.1} parent=1 // pred_check_branch
      %258 = sbr.rel (0) target = $region141
    $region140: #{mnist_net_forward.1} parent=1 // pred_region
      %259 = dma.done [#allocation24], 256
    $region141: #{mnist_net_forward.1} parent=1 // pred_fallthru
      _
    // Predicated region
    $region142: #{mnist_net_forward.1} parent=1 // pred_check
      _
    $region143: #{mnist_net_forward.1} parent=1 // pred_check_branch
      %261 = sbr.rel (0) target = $region145
    $region144: #{mnist_net_forward.1} parent=1 // pred_region
      %262 = dma.done [#allocation27], 2048
    $region145: #{mnist_net_forward.1} parent=1 // pred_fallthru
      _
    %s263 = sld [smem:[#allocation4]]
    %s264 = scalar_lea.vmem [#allocation8], %s263
    %v265 = vld [vmem:[%s264] sm:$0x1]
    %vm266 = vcmask 778240
    %267 = vst.msk [vmem:[#allocation2] sm:$0x1] %vm266, %v265
    %s268 = sld [smem:[#allocation4 + $0x1]]
    %s269 = scalar_lea.vmem [#allocation8], %s268
    %v270 = vld [vmem:[%s269] sm:$0x1]
    %271 = vst.msk [vmem:[#allocation2 + $0x1] sm:$0x1] %vm266, %v270
    %v272 = vld [vmem:[#allocation2] sm:$0x3]
    %v273 = vld [vmem:[#allocation22] sm:$0xff]
    %v274 = vld [vmem:[#allocation23] sm:$0xff]
    %v275 = vld [vmem:[#allocation23 + $0x8] sm:$0xff]
    %v276 = vld [vmem:[#allocation23 + $0x10] sm:$0xff]
    %v277 = vld [vmem:[#allocation23 + $0x18] sm:$0xff]
    %v278 = vld [vmem:[#allocation23 + $0x20] sm:$0xff]
    %v279 = vld [vmem:[#allocation23 + $0x28] sm:$0xff]
    %v280 = vld [vmem:[#allocation23 + $0x30] sm:$0xff]
    %v281 = vld [vmem:[#allocation23 + $0x38] sm:$0xff]
    %v282 = vld [vmem:[#allocation23 + $0x40] sm:$0xff]
    %v283 = vld [vmem:[#allocation23 + $0x48] sm:$0xff]
    %v284 = vld [vmem:[#allocation23 + $0x50] sm:$0xff]
    %v285 = vld [vmem:[#allocation23 + $0x58] sm:$0xff]
    %v286 = vld [vmem:[#allocation23 + $0x60] sm:$0xff]
    %v287 = vld [vmem:[#allocation23 + $0x68] sm:$0xff]
    %v288 = vld [vmem:[#allocation23 + $0x70] sm:$0xff]
    %v289 = vld [vmem:[#allocation23 + $0x78] sm:$0xff]
    %v290 = vld [vmem:[#allocation25] sm:$0xff]
    %v291 = vld [vmem:[#allocation25 + $0x8] sm:$0xff]
    %v292 = vld [vmem:[#allocation26] sm:$0xff]
    %v293 = vld [vmem:[#allocation26 + $0x8] sm:$0xff]
    %v294 = vld [vmem:[#allocation26 + $0x10] sm:$0xff]
    %v295 = vld [vmem:[#allocation26 + $0x18] sm:$0xff]
    %v296 = vld [vmem:[#allocation26 + $0x20] sm:$0xff]
    %v297 = vld [vmem:[#allocation26 + $0x28] sm:$0xff]
    %v298 = vld [vmem:[#allocation26 + $0x30] sm:$0xff]
    %v299 = vld [vmem:[#allocation26 + $0x38] sm:$0xff]
    %v300 = vld [vmem:[#allocation26 + $0x40] sm:$0xff]
    %v301 = vld [vmem:[#allocation26 + $0x48] sm:$0xff]
    %v302 = vld [vmem:[#allocation26 + $0x50] sm:$0xff]
    %v303 = vld [vmem:[#allocation26 + $0x58] sm:$0xff]
    %v304 = vld [vmem:[#allocation26 + $0x60] sm:$0xff]
    %v305 = vld [vmem:[#allocation26 + $0x68] sm:$0xff]
    %v306 = vld [vmem:[#allocation26 + $0x70] sm:$0xff]
    %v307 = vld [vmem:[#allocation26 + $0x78] sm:$0xff]
    %v308 = vld [vmem:[%s21] sm:$0xff]
    %v309 = vld [vmem:[%s21 + $0x8] sm:$0xff]
    %v310 = vld [vmem:[%s21 + $0x10] sm:$0xff]
    %v311 = vld [vmem:[%s21 + $0x18] sm:$0xff]
    %v312 = vld [vmem:[%s22] sm:$0xff]
    %v313 = vld [vmem:[%s22 + $0x8] sm:$0xff]
    %v314 = vld [vmem:[#allocation5] sm:$0xff]
    %v315 = vld [vmem:[#allocation5 + $0x8] sm:$0xff]
    %v316 = vld [vmem:[#allocation5 + $0x10] sm:$0xff]
    %v317 = vld [vmem:[#allocation5 + $0x18] sm:$0xff]
    %v318 = vld [vmem:[#allocation10] sm:$0xff]
    %v319 = vld [vmem:[#allocation10 + $0x8] sm:$0xff]
    %v320 = vld [vmem:[#allocation10 + $0x10] sm:$0xff]
    %v321 = vld [vmem:[#allocation10 + $0x18] sm:$0xff]
    %vm322 = vcmask 261120
    %v324 = vsel %vm322, %v318, 0
    %v327 = vsel %vm322, %v319, 0
    %v330 = vsel %vm322, %v320, 0
    %v333 = vsel %vm322, %v321, 0
    %335 = vmatprep.subr.mxu0 0.0
    %336 = vmatpush1.msra.mxu0 %v314
    %337 = vmatprep.subr.mxu0 0.0
    %338 = vmatpush1.msra.mxu0 %v315
    %339 = vmatprep.subr.mxu0 0.0
    %340 = vmatpush1.msra.mxu0 %v316
    %341 = vmatprep.subr.mxu0 0.0
    %342 = vmatpush1.msra.mxu0 %v317
    %343 = vmatprep.subr.mxu0 0.0
    %344 = vmatpush1.msra.mxu0 0.0
    %345 = vmatprep.subr.mxu0 0.0
    %346 = vmatpush1.msra.mxu0 0.0
    %347 = vmatprep.subr.mxu0 0.0
    %348 = vmatpush1.msra.mxu0 0.0
    %349 = vmatprep.subr.mxu0 0.0
    %350 = vmatpush1.msra.mxu0 0.0
    %351 = vmatprep.subr.mxu0 0.0
    %352 = vmatpush1.msra.mxu0 0.0
    %353 = vmatprep.subr.mxu0 0.0
    %354 = vmatpush1.msra.mxu0 0.0
    %355 = vmatprep.subr.mxu0 0.0
    %356 = vmatpush1.msra.mxu0 0.0
    %357 = vmatprep.subr.mxu0 0.0
    %358 = vmatpush1.msra.mxu0 0.0
    %359 = vmatprep.subr.mxu0 0.0
    %360 = vmatpush1.msra.mxu0 0.0
    %361 = vmatprep.subr.mxu0 0.0
    %362 = vmatpush1.msra.mxu0 0.0
    %363 = vmatprep.subr.mxu0 0.0
    %364 = vmatpush1.msra.mxu0 0.0
    %365 = vmatprep.subr.mxu0 0.0
    %366 = vmatpush1.msra.mxu0 0.0
    %367 = vmatprep.subr.mxu0 0.0
    %368 = vmatpush1.msra.mxu0 0.0
    %369 = vmatprep.subr.mxu0 0.0
    %370 = vmatpush1.msra.mxu0 0.0
    %371 = vmatprep.subr.mxu0 0.0
    %372 = vmatpush1.msra.mxu0 0.0
    %373 = vmatprep.subr.mxu0 0.0
    %374 = vmatpush1.msra.mxu0 0.0
    %375 = vmatprep.subr.mxu0 0.0
    %376 = vmatpush1.msra.mxu0 0.0
    %377 = vmatprep.subr.mxu0 0.0
    %378 = vmatpush1.msra.mxu0 0.0
    %379 = vmatprep.subr.mxu0 0.0
    %380 = vmatpush1.msra.mxu0 0.0
    %381 = vmatprep.subr.mxu0 0.0
    %382 = vmatpush1.msra.mxu0 0.0
    %383 = vmatprep.subr.mxu0 0.0
    %384 = vmatpush1.msra.mxu0 0.0
    %385 = vmatprep.subr.mxu0 0.0
    %386 = vmatpush1.msra.mxu0 0.0
    %387 = vmatprep.subr.mxu0 0.0
    %388 = vmatpush1.msra.mxu0 0.0
    %389 = vmatprep.subr.mxu0 0.0
    %390 = vmatpush1.msra.mxu0 0.0
    %391 = vmatprep.subr.mxu0 0.0
    %392 = vmatpush1.msra.mxu0 0.0
    %393 = vmatprep.subr.mxu0 0.0
    %394 = vmatpush1.msra.mxu0 0.0
    %395 = vmatprep.subr.mxu0 0.0
    %396 = vmatpush1.msra.mxu0 0.0
    %397 = vmatprep.subr.mxu0 0.0
    %398 = vmatpush1.msra.mxu0 0.0
    %399 = vmatprep.mubr.f32.mxu0 0.0
    %400 = vmatmul.mubr.f32.gmra.mrb[0].mxu0 %v324
    %v401 = vpop.f32.mrb[0].mxu0
    %v402 = vadd.f32 0.0, %v401
    %v403 = vpop.f32.mrb[0].mxu0
    %404 = vmatprep.mubr.f32.mxu0 0.0
    %405 = vmatmul.mubr.f32.gmra.mrb[0].mxu0 %v327
    %v406 = vpop.f32.mrb[0].mxu0
    %v407 = vadd.f32 0.0, %v406
    %v408 = vpop.f32.mrb[0].mxu0
    %409 = vmatprep.mubr.f32.mxu0 0.0
    %410 = vmatmul.mubr.f32.gmra.mrb[0].mxu0 %v330
    %v411 = vpop.f32.mrb[0].mxu0
    %v412 = vadd.f32 0.0, %v411
    %v413 = vpop.f32.mrb[0].mxu0
    %414 = vmatprep.mubr.f32.mxu0 0.0
    %415 = vmatmul.mubr.f32.gmra.mrb[0].mxu0 %v333
    %v416 = vpop.f32.mrb[0].mxu0
    %v417 = vadd.f32 0.0, %v416
    %v418 = vpop.f32.mrb[0].mxu0
    %419 = vdwg.mxu0
    %v420 = vld [vmem:[#allocation11] sm:$0xff]
    %v421 = vld [vmem:[#allocation11 + $0x8] sm:$0xff]
    %s422 = scalar_lea.vmem [#allocation10], 32
    %v423 = vld [vmem:[%s422] sm:$0xff]
    %v424 = vld [vmem:[%s422 + $0x8] sm:$0xff]
    %v425 = vld [vmem:[%s422 + $0x10] sm:$0xff]
    %v426 = vld [vmem:[%s422 + $0x18] sm:$0xff]
    %v428 = vsel %vm322, %v423, 0
    %v431 = vsel %vm322, %v424, 0
    %v434 = vsel %vm322, %v425, 0
    %v437 = vsel %vm322, %v426, 0
    %439 = vmatprep.subr.mxu0 0.0
    %440 = vmatpush1.msra.mxu0 %v314
    %441 = vmatprep.subr.mxu0 0.0
    %442 = vmatpush1.msra.mxu0 %v315
    %443 = vmatprep.subr.mxu0 0.0
    %444 = vmatpush1.msra.mxu0 %v316
    %445 = vmatprep.subr.mxu0 0.0
    %446 = vmatpush1.msra.mxu0 %v317
    %447 = vmatprep.subr.mxu0 0.0
    %448 = vmatpush1.msra.mxu0 0.0
    %449 = vmatprep.subr.mxu0 0.0
    %450 = vmatpush1.msra.mxu0 0.0
    %451 = vmatprep.subr.mxu0 0.0
    %452 = vmatpush1.msra.mxu0 0.0
    %453 = vmatprep.subr.mxu0 0.0
    %454 = vmatpush1.msra.mxu0 0.0
    %455 = vmatprep.subr.mxu0 0.0
    %456 = vmatpush1.msra.mxu0 0.0
    %457 = vmatprep.subr.mxu0 0.0
    %458 = vmatpush1.msra.mxu0 0.0
    %459 = vmatprep.subr.mxu0 0.0
    %460 = vmatpush1.msra.mxu0 0.0
    %461 = vmatprep.subr.mxu0 0.0
    %462 = vmatpush1.msra.mxu0 0.0
    %463 = vmatprep.subr.mxu0 0.0
    %464 = vmatpush1.msra.mxu0 0.0
    %465 = vmatprep.subr.mxu0 0.0
    %466 = vmatpush1.msra.mxu0 0.0
    %467 = vmatprep.subr.mxu0 0.0
    %468 = vmatpush1.msra.mxu0 0.0
    %469 = vmatprep.subr.mxu0 0.0
    %470 = vmatpush1.msra.mxu0 0.0
    %471 = vmatprep.subr.mxu0 0.0
    %472 = vmatpush1.msra.mxu0 0.0
    %473 = vmatprep.subr.mxu0 0.0
    %474 = vmatpush1.msra.mxu0 0.0
    %475 = vmatprep.subr.mxu0 0.0
    %476 = vmatpush1.msra.mxu0 0.0
    %477 = vmatprep.subr.mxu0 0.0
    %478 = vmatpush1.msra.mxu0 0.0
    %479 = vmatprep.subr.mxu0 0.0
    %480 = vmatpush1.msra.mxu0 0.0
    %481 = vmatprep.subr.mxu0 0.0
    %482 = vmatpush1.msra.mxu0 0.0
    %483 = vmatprep.subr.mxu0 0.0
    %484 = vmatpush1.msra.mxu0 0.0
    %485 = vmatprep.subr.mxu0 0.0
    %486 = vmatpush1.msra.mxu0 0.0
    %487 = vmatprep.subr.mxu0 0.0
    %488 = vmatpush1.msra.mxu0 0.0
    %489 = vmatprep.subr.mxu0 0.0
    %490 = vmatpush1.msra.mxu0 0.0
    %491 = vmatprep.subr.mxu0 0.0
    %492 = vmatpush1.msra.mxu0 0.0
    %493 = vmatprep.subr.mxu0 0.0
    %494 = vmatpush1.msra.mxu0 0.0
    %495 = vmatprep.subr.mxu0 0.0
    %496 = vmatpush1.msra.mxu0 0.0
    %497 = vmatprep.subr.mxu0 0.0
    %498 = vmatpush1.msra.mxu0 0.0
    %499 = vmatprep.subr.mxu0 0.0
    %500 = vmatpush1.msra.mxu0 0.0
    %501 = vmatprep.subr.mxu0 0.0
    %502 = vmatpush1.msra.mxu0 0.0
    %503 = vmatprep.mubr.f32.mxu0 0.0
    %504 = vmatmul.mubr.f32.gmra.mrb[0].mxu0 %v428
    %v505 = vpop.f32.mrb[0].mxu0
    %v506 = vadd.f32 0.0, %v505
    %v507 = vpop.f32.mrb[0].mxu0
    %508 = vmatprep.mubr.f32.mxu0 0.0
    %509 = vmatmul.mubr.f32.gmra.mrb[0].mxu0 %v431
    %v510 = vpop.f32.mrb[0].mxu0
    %v511 = vadd.f32 0.0, %v510
    %v512 = vpop.f32.mrb[0].mxu0
    %513 = vmatprep.mubr.f32.mxu0 0.0
    %514 = vmatmul.mubr.f32.gmra.mrb[0].mxu0 %v434
    %v515 = vpop.f32.mrb[0].mxu0
    %v516 = vadd.f32 0.0, %v515
    %v517 = vpop.f32.mrb[0].mxu0
    %518 = vmatprep.mubr.f32.mxu0 0.0
    %519 = vmatmul.mubr.f32.gmra.mrb[0].mxu0 %v437
    %v520 = vpop.f32.mrb[0].mxu0
    %v521 = vadd.f32 0.0, %v520
    %v522 = vpop.f32.mrb[0].mxu0
    %523 = vdwg.mxu0
    %s524 = scalar_lea.vmem [#allocation11], 16
    %v525 = vld [vmem:[%s524] sm:$0xff]
    %v526 = vld [vmem:[%s524 + $0x8] sm:$0xff]
    %vm527 = vcmask 130048
    %v529 = vsel %vm527, %v506, 0
    %v532 = vsel %vm527, %v511, 0
    %v535 = vsel %vm527, %v516, 0
    %v538 = vsel %vm527, %v521, 0
    %540 = vmatprep.subr.mxu0 0.0
    %541 = vmatpush1.msra.mxu0 %v525
    %542 = vmatprep.subr.mxu0 0.0
    %543 = vmatpush1.msra.mxu0 %v526
    %544 = vmatprep.subr.mxu0 0.0
    %545 = vmatpush1.msra.mxu0 0.0
    %546 = vmatprep.subr.mxu0 0.0
    %547 = vmatpush1.msra.mxu0 0.0
    %548 = vmatprep.subr.mxu0 0.0
    %549 = vmatpush1.msra.mxu0 0.0
    %550 = vmatprep.subr.mxu0 0.0
    %551 = vmatpush1.msra.mxu0 0.0
    %552 = vmatprep.subr.mxu0 0.0
    %553 = vmatpush1.msra.mxu0 0.0
    %554 = vmatprep.subr.mxu0 0.0
    %555 = vmatpush1.msra.mxu0 0.0
    %556 = vmatprep.subr.mxu0 0.0
    %557 = vmatpush1.msra.mxu0 0.0
    %558 = vmatprep.subr.mxu0 0.0
    %559 = vmatpush1.msra.mxu0 0.0
    %560 = vmatprep.subr.mxu0 0.0
    %561 = vmatpush1.msra.mxu0 0.0
    %562 = vmatprep.subr.mxu0 0.0
    %563 = vmatpush1.msra.mxu0 0.0
    %564 = vmatprep.subr.mxu0 0.0
    %565 = vmatpush1.msra.mxu0 0.0
    %566 = vmatprep.subr.mxu0 0.0
    %567 = vmatpush1.msra.mxu0 0.0
    %568 = vmatprep.subr.mxu0 0.0
    %569 = vmatpush1.msra.mxu0 0.0
    %570 = vmatprep.subr.mxu0 0.0
    %571 = vmatpush1.msra.mxu0 0.0
    %572 = vmatprep.subr.mxu0 0.0
    %573 = vmatpush1.msra.mxu0 0.0
    %574 = vmatprep.subr.mxu0 0.0
    %575 = vmatpush1.msra.mxu0 0.0
    %576 = vmatprep.subr.mxu0 0.0
    %577 = vmatpush1.msra.mxu0 0.0
    %578 = vmatprep.subr.mxu0 0.0
    %579 = vmatpush1.msra.mxu0 0.0
    %580 = vmatprep.subr.mxu0 0.0
    %581 = vmatpush1.msra.mxu0 0.0
    %582 = vmatprep.subr.mxu0 0.0
    %583 = vmatpush1.msra.mxu0 0.0
    %584 = vmatprep.subr.mxu0 0.0
    %585 = vmatpush1.msra.mxu0 0.0
    %586 = vmatprep.subr.mxu0 0.0
    %587 = vmatpush1.msra.mxu0 0.0
    %588 = vmatprep.subr.mxu0 0.0
    %589 = vmatpush1.msra.mxu0 0.0
    %590 = vmatprep.subr.mxu0 0.0
    %591 = vmatpush1.msra.mxu0 0.0
    %592 = vmatprep.subr.mxu0 0.0
    %593 = vmatpush1.msra.mxu0 0.0
    %594 = vmatprep.subr.mxu0 0.0
    %595 = vmatpush1.msra.mxu0 0.0
    %596 = vmatprep.subr.mxu0 0.0
    %597 = vmatpush1.msra.mxu0 0.0
    %598 = vmatprep.subr.mxu0 0.0
    %599 = vmatpush1.msra.mxu0 0.0
    %600 = vmatprep.subr.mxu0 0.0
    %601 = vmatpush1.msra.mxu0 0.0
    %602 = vmatprep.subr.mxu0 0.0
    %603 = vmatpush1.msra.mxu0 0.0
    %604 = vmatprep.mubr.f32.mxu0 0.0
    %605 = vmatmul.mubr.f32.gmra.mrb[0].mxu0 %v529
    %v606 = vpop.f32.mrb[0].mxu0
    %v607 = vadd.f32 0.0, %v606
    %v608 = vpop.f32.mrb[0].mxu0
    %609 = vmatprep.mubr.f32.mxu0 0.0
    %610 = vmatmul.mubr.f32.gmra.mrb[0].mxu0 %v532
    %v611 = vpop.f32.mrb[0].mxu0
    %v612 = vadd.f32 0.0, %v611
    %v613 = vpop.f32.mrb[0].mxu0
    %614 = vmatprep.mubr.f32.mxu0 0.0
    %615 = vmatmul.mubr.f32.gmra.mrb[0].mxu0 %v535
    %v616 = vpop.f32.mrb[0].mxu0
    %v617 = vadd.f32 0.0, %v616
    %v618 = vpop.f32.mrb[0].mxu0
    %619 = vmatprep.mubr.f32.mxu0 0.0
    %620 = vmatmul.mubr.f32.gmra.mrb[0].mxu0 %v538
    %v621 = vpop.f32.mrb[0].mxu0
    %v622 = vadd.f32 0.0, %v621
    %v623 = vpop.f32.mrb[0].mxu0
    %624 = vdwg.mxu0
    %v626 = vsel %vm527, %v402, 0
    %v629 = vsel %vm527, %v407, 0
    %v632 = vsel %vm527, %v412, 0
    %v635 = vsel %vm527, %v417, 0
    %637 = vmatprep.subr.mxu0 0.0
    %638 = vmatpush1.msra.mxu0 %v420
    %639 = vmatprep.subr.mxu0 0.0
    %640 = vmatpush1.msra.mxu0 %v421
    %641 = vmatprep.subr.mxu0 0.0
    %642 = vmatpush1.msra.mxu0 0.0
    %643 = vmatprep.subr.mxu0 0.0
    %644 = vmatpush1.msra.mxu0 0.0
    %645 = vmatprep.subr.mxu0 0.0
    %646 = vmatpush1.msra.mxu0 0.0
    %647 = vmatprep.subr.mxu0 0.0
    %648 = vmatpush1.msra.mxu0 0.0
    %649 = vmatprep.subr.mxu0 0.0
    %650 = vmatpush1.msra.mxu0 0.0
    %651 = vmatprep.subr.mxu0 0.0
    %652 = vmatpush1.msra.mxu0 0.0
    %653 = vmatprep.subr.mxu0 0.0
    %654 = vmatpush1.msra.mxu0 0.0
    %655 = vmatprep.subr.mxu0 0.0
    %656 = vmatpush1.msra.mxu0 0.0
    %657 = vmatprep.subr.mxu0 0.0
    %658 = vmatpush1.msra.mxu0 0.0
    %659 = vmatprep.subr.mxu0 0.0
    %660 = vmatpush1.msra.mxu0 0.0
    %661 = vmatprep.subr.mxu0 0.0
    %662 = vmatpush1.msra.mxu0 0.0
    %663 = vmatprep.subr.mxu0 0.0
    %664 = vmatpush1.msra.mxu0 0.0
    %665 = vmatprep.subr.mxu0 0.0
    %666 = vmatpush1.msra.mxu0 0.0
    %667 = vmatprep.subr.mxu0 0.0
    %668 = vmatpush1.msra.mxu0 0.0
    %669 = vmatprep.subr.mxu0 0.0
    %670 = vmatpush1.msra.mxu0 0.0
    %671 = vmatprep.subr.mxu0 0.0
    %672 = vmatpush1.msra.mxu0 0.0
    %673 = vmatprep.subr.mxu0 0.0
    %674 = vmatpush1.msra.mxu0 0.0
    %675 = vmatprep.subr.mxu0 0.0
    %676 = vmatpush1.msra.mxu0 0.0
    %677 = vmatprep.subr.mxu0 0.0
    %678 = vmatpush1.msra.mxu0 0.0
    %679 = vmatprep.subr.mxu0 0.0
    %680 = vmatpush1.msra.mxu0 0.0
    %681 = vmatprep.subr.mxu0 0.0
    %682 = vmatpush1.msra.mxu0 0.0
    %683 = vmatprep.subr.mxu0 0.0
    %684 = vmatpush1.msra.mxu0 0.0
    %685 = vmatprep.subr.mxu0 0.0
    %686 = vmatpush1.msra.mxu0 0.0
    %687 = vmatprep.subr.mxu0 0.0
    %688 = vmatpush1.msra.mxu0 0.0
    %689 = vmatprep.subr.mxu0 0.0
    %690 = vmatpush1.msra.mxu0 0.0
    %691 = vmatprep.subr.mxu0 0.0
    %692 = vmatpush1.msra.mxu0 0.0
    %693 = vmatprep.subr.mxu0 0.0
    %694 = vmatpush1.msra.mxu0 0.0
    %695 = vmatprep.subr.mxu0 0.0
    %696 = vmatpush1.msra.mxu0 0.0
    %697 = vmatprep.subr.mxu0 0.0
    %698 = vmatpush1.msra.mxu0 0.0
    %699 = vmatprep.subr.mxu0 0.0
    %700 = vmatpush1.msra.mxu0 0.0
    %701 = vmatprep.mubr.f32.mxu0 0.0
    %702 = vmatmul.mubr.f32.gmra.mrb[0].mxu0 %v626
    %v703 = vpop.f32.mrb[0].mxu0
    %v704 = vadd.f32 %v607, %v703
    %v705 = vpop.f32.mrb[0].mxu0
    %706 = vmatprep.mubr.f32.mxu0 0.0
    %707 = vmatmul.mubr.f32.gmra.mrb[0].mxu0 %v629
    %v708 = vpop.f32.mrb[0].mxu0
    %v709 = vadd.f32 %v612, %v708
    %v710 = vpop.f32.mrb[0].mxu0
    %711 = vmatprep.mubr.f32.mxu0 0.0
    %712 = vmatmul.mubr.f32.gmra.mrb[0].mxu0 %v632
    %v713 = vpop.f32.mrb[0].mxu0
    %v714 = vadd.f32 %v617, %v713
    %v715 = vpop.f32.mrb[0].mxu0
    %716 = vmatprep.mubr.f32.mxu0 0.0
    %717 = vmatmul.mubr.f32.gmra.mrb[0].mxu0 %v635
    %v718 = vpop.f32.mrb[0].mxu0
    %v719 = vadd.f32 %v622, %v718
    %v720 = vpop.f32.mrb[0].mxu0
    %721 = vdwg.mxu0
    %s722 = scalar_lea.vmem [#allocation10], 64
    %v723 = vld [vmem:[%s722] sm:$0xff]
    %v724 = vld [vmem:[%s722 + $0x8] sm:$0xff]
    %v725 = vld [vmem:[%s722 + $0x10] sm:$0xff]
    %v726 = vld [vmem:[%s722 + $0x18] sm:$0xff]
    %v728 = vsel %vm322, %v723, 0
    %v731 = vsel %vm322, %v724, 0
    %v734 = vsel %vm322, %v725, 0
    %v737 = vsel %vm322, %v726, 0
    %739 = vmatprep.subr.mxu0 0.0
    %740 = vmatpush1.msra.mxu0 %v314
    %741 = vmatprep.subr.mxu0 0.0
    %742 = vmatpush1.msra.mxu0 %v315
    %743 = vmatprep.subr.mxu0 0.0
    %744 = vmatpush1.msra.mxu0 %v316
    %745 = vmatprep.subr.mxu0 0.0
    %746 = vmatpush1.msra.mxu0 %v317
    %747 = vmatprep.subr.mxu0 0.0
    %748 = vmatpush1.msra.mxu0 0.0
    %749 = vmatprep.subr.mxu0 0.0
    %750 = vmatpush1.msra.mxu0 0.0
    %751 = vmatprep.subr.mxu0 0.0
    %752 = vmatpush1.msra.mxu0 0.0
    %753 = vmatprep.subr.mxu0 0.0
    %754 = vmatpush1.msra.mxu0 0.0
    %755 = vmatprep.subr.mxu0 0.0
    %756 = vmatpush1.msra.mxu0 0.0
    %757 = vmatprep.subr.mxu0 0.0
    %758 = vmatpush1.msra.mxu0 0.0
    %759 = vmatprep.subr.mxu0 0.0
    %760 = vmatpush1.msra.mxu0 0.0
    %761 = vmatprep.subr.mxu0 0.0
    %762 = vmatpush1.msra.mxu0 0.0
    %763 = vmatprep.subr.mxu0 0.0
    %764 = vmatpush1.msra.mxu0 0.0
    %765 = vmatprep.subr.mxu0 0.0
    %766 = vmatpush1.msra.mxu0 0.0
    %767 = vmatprep.subr.mxu0 0.0
    %768 = vmatpush1.msra.mxu0 0.0
    %769 = vmatprep.subr.mxu0 0.0
    %770 = vmatpush1.msra.mxu0 0.0
    %771 = vmatprep.subr.mxu0 0.0
    %772 = vmatpush1.msra.mxu0 0.0
    %773 = vmatprep.subr.mxu0 0.0
    %774 = vmatpush1.msra.mxu0 0.0
    %775 = vmatprep.subr.mxu0 0.0
    %776 = vmatpush1.msra.mxu0 0.0
    %777 = vmatprep.subr.mxu0 0.0
    %778 = vmatpush1.msra.mxu0 0.0
    %779 = vmatprep.subr.mxu0 0.0
    %780 = vmatpush1.msra.mxu0 0.0
    %781 = vmatprep.subr.mxu0 0.0
    %782 = vmatpush1.msra.mxu0 0.0
    %783 = vmatprep.subr.mxu0 0.0
    %784 = vmatpush1.msra.mxu0 0.0
    %785 = vmatprep.subr.mxu0 0.0
    %786 = vmatpush1.msra.mxu0 0.0
    %787 = vmatprep.subr.mxu0 0.0
    %788 = vmatpush1.msra.mxu0 0.0
    %789 = vmatprep.subr.mxu0 0.0
    %790 = vmatpush1.msra.mxu0 0.0
    %791 = vmatprep.subr.mxu0 0.0
    %792 = vmatpush1.msra.mxu0 0.0
    %793 = vmatprep.subr.mxu0 0.0
    %794 = vmatpush1.msra.mxu0 0.0
    %795 = vmatprep.subr.mxu0 0.0
    %796 = vmatpush1.msra.mxu0 0.0
    %797 = vmatprep.subr.mxu0 0.0
    %798 = vmatpush1.msra.mxu0 0.0
    %799 = vmatprep.subr.mxu0 0.0
    %800 = vmatpush1.msra.mxu0 0.0
    %801 = vmatprep.subr.mxu0 0.0
    %802 = vmatpush1.msra.mxu0 0.0
    %803 = vmatprep.mubr.f32.mxu0 0.0
    %804 = vmatmul.mubr.f32.gmra.mrb[0].mxu0 %v728
    %v805 = vpop.f32.mrb[0].mxu0
    %v806 = vadd.f32 0.0, %v805
    %v807 = vpop.f32.mrb[0].mxu0
    %808 = vmatprep.mubr.f32.mxu0 0.0
    %809 = vmatmul.mubr.f32.gmra.mrb[0].mxu0 %v731
    %v810 = vpop.f32.mrb[0].mxu0
    %v811 = vadd.f32 0.0, %v810
    %v812 = vpop.f32.mrb[0].mxu0
    %813 = vmatprep.mubr.f32.mxu0 0.0
    %814 = vmatmul.mubr.f32.gmra.mrb[0].mxu0 %v734
    %v815 = vpop.f32.mrb[0].mxu0
    %v816 = vadd.f32 0.0, %v815
    %v817 = vpop.f32.mrb[0].mxu0
    %818 = vmatprep.mubr.f32.mxu0 0.0
    %819 = vmatmul.mubr.f32.gmra.mrb[0].mxu0 %v737
    %v820 = vpop.f32.mrb[0].mxu0
    %v821 = vadd.f32 0.0, %v820
    %v822 = vpop.f32.mrb[0].mxu0
    %823 = vdwg.mxu0
    %s824 = scalar_lea.vmem [#allocation11], 32
    %v825 = vld [vmem:[%s824] sm:$0xff]
    %v826 = vld [vmem:[%s824 + $0x8] sm:$0xff]
    %v828 = vsel %vm527, %v806, 0
    %v831 = vsel %vm527, %v811, 0
    %v834 = vsel %vm527, %v816, 0
    %v837 = vsel %vm527, %v821, 0
    %839 = vmatprep.subr.mxu0 0.0
    %840 = vmatpush1.msra.mxu0 %v825
    %841 = vmatprep.subr.mxu0 0.0
    %842 = vmatpush1.msra.mxu0 %v826
    %843 = vmatprep.subr.mxu0 0.0
    %844 = vmatpush1.msra.mxu0 0.0
    %845 = vmatprep.subr.mxu0 0.0
    %846 = vmatpush1.msra.mxu0 0.0
    %847 = vmatprep.subr.mxu0 0.0
    %848 = vmatpush1.msra.mxu0 0.0
    %849 = vmatprep.subr.mxu0 0.0
    %850 = vmatpush1.msra.mxu0 0.0
    %851 = vmatprep.subr.mxu0 0.0
    %852 = vmatpush1.msra.mxu0 0.0
    %853 = vmatprep.subr.mxu0 0.0
    %854 = vmatpush1.msra.mxu0 0.0
    %855 = vmatprep.subr.mxu0 0.0
    %856 = vmatpush1.msra.mxu0 0.0
    %857 = vmatprep.subr.mxu0 0.0
    %858 = vmatpush1.msra.mxu0 0.0
    %859 = vmatprep.subr.mxu0 0.0
    %860 = vmatpush1.msra.mxu0 0.0
    %861 = vmatprep.subr.mxu0 0.0
    %862 = vmatpush1.msra.mxu0 0.0
    %863 = vmatprep.subr.mxu0 0.0
    %864 = vmatpush1.msra.mxu0 0.0
    %865 = vmatprep.subr.mxu0 0.0
    %866 = vmatpush1.msra.mxu0 0.0
    %867 = vmatprep.subr.mxu0 0.0
    %868 = vmatpush1.msra.mxu0 0.0
    %869 = vmatprep.subr.mxu0 0.0
    %870 = vmatpush1.msra.mxu0 0.0
    %871 = vmatprep.subr.mxu0 0.0
    %872 = vmatpush1.msra.mxu0 0.0
    %873 = vmatprep.subr.mxu0 0.0
    %874 = vmatpush1.msra.mxu0 0.0
    %875 = vmatprep.subr.mxu0 0.0
    %876 = vmatpush1.msra.mxu0 0.0
    %877 = vmatprep.subr.mxu0 0.0
    %878 = vmatpush1.msra.mxu0 0.0
    %879 = vmatprep.subr.mxu0 0.0
    %880 = vmatpush1.msra.mxu0 0.0
    %881 = vmatprep.subr.mxu0 0.0
    %882 = vmatpush1.msra.mxu0 0.0
    %883 = vmatprep.subr.mxu0 0.0
    %884 = vmatpush1.msra.mxu0 0.0
    %885 = vmatprep.subr.mxu0 0.0
    %886 = vmatpush1.msra.mxu0 0.0
    %887 = vmatprep.subr.mxu0 0.0
    %888 = vmatpush1.msra.mxu0 0.0
    %889 = vmatprep.subr.mxu0 0.0
    %890 = vmatpush1.msra.mxu0 0.0
    %891 = vmatprep.subr.mxu0 0.0
    %892 = vmatpush1.msra.mxu0 0.0
    %893 = vmatprep.subr.mxu0 0.0
    %894 = vmatpush1.msra.mxu0 0.0
    %895 = vmatprep.subr.mxu0 0.0
    %896 = vmatpush1.msra.mxu0 0.0
    %897 = vmatprep.subr.mxu0 0.0
    %898 = vmatpush1.msra.mxu0 0.0
    %899 = vmatprep.subr.mxu0 0.0
    %900 = vmatpush1.msra.mxu0 0.0
    %901 = vmatprep.subr.mxu0 0.0
    %902 = vmatpush1.msra.mxu0 0.0
    %903 = vmatprep.mubr.f32.mxu0 0.0
    %904 = vmatmul.mubr.f32.gmra.mrb[0].mxu0 %v828
    %v905 = vpop.f32.mrb[0].mxu0
    %v906 = vadd.f32 0.0, %v905
    %v907 = vpop.f32.mrb[0].mxu0
    %908 = vmatprep.mubr.f32.mxu0 0.0
    %909 = vmatmul.mubr.f32.gmra.mrb[0].mxu0 %v831
    %v910 = vpop.f32.mrb[0].mxu0
    %v911 = vadd.f32 0.0, %v910
    %v912 = vpop.f32.mrb[0].mxu0
    %913 = vmatprep.mubr.f32.mxu0 0.0
    %914 = vmatmul.mubr.f32.gmra.mrb[0].mxu0 %v834
    %v915 = vpop.f32.mrb[0].mxu0
    %v916 = vadd.f32 0.0, %v915
    %v917 = vpop.f32.mrb[0].mxu0
    %918 = vmatprep.mubr.f32.mxu0 0.0
    %919 = vmatmul.mubr.f32.gmra.mrb[0].mxu0 %v837
    %v920 = vpop.f32.mrb[0].mxu0
    %v921 = vadd.f32 0.0, %v920
    %v922 = vpop.f32.mrb[0].mxu0
    %923 = vdwg.mxu0
    %v924 = vadd.f32 %v704, %v906
    %v925 = vadd.f32 %v709, %v911
    %v926 = vadd.f32 %v714, %v916
    %v927 = vadd.f32 %v719, %v921
    %s928 = scalar_lea.vmem [#allocation10], 96
    %v929 = vld [vmem:[%s928] sm:$0xff]
    %v930 = vld [vmem:[%s928 + $0x8] sm:$0xff]
    %v931 = vld [vmem:[%s928 + $0x10] sm:$0xff]
    %v932 = vld [vmem:[%s928 + $0x18] sm:$0xff]
    %v934 = vsel %vm322, %v929, 0
    %v937 = vsel %vm322, %v930, 0
    %v940 = vsel %vm322, %v931, 0
    %v943 = vsel %vm322, %v932, 0
    %945 = vmatprep.subr.mxu0 0.0
    %946 = vmatpush1.msra.mxu0 %v314
    %947 = vmatprep.subr.mxu0 0.0
    %948 = vmatpush1.msra.mxu0 %v315
    %949 = vmatprep.subr.mxu0 0.0
    %950 = vmatpush1.msra.mxu0 %v316
    %951 = vmatprep.subr.mxu0 0.0
    %952 = vmatpush1.msra.mxu0 %v317
    %953 = vmatprep.subr.mxu0 0.0
    %954 = vmatpush1.msra.mxu0 0.0
    %955 = vmatprep.subr.mxu0 0.0
    %956 = vmatpush1.msra.mxu0 0.0
    %957 = vmatprep.subr.mxu0 0.0
    %958 = vmatpush1.msra.mxu0 0.0
    %959 = vmatprep.subr.mxu0 0.0
    %960 = vmatpush1.msra.mxu0 0.0
    %961 = vmatprep.subr.mxu0 0.0
    %962 = vmatpush1.msra.mxu0 0.0
    %963 = vmatprep.subr.mxu0 0.0
    %964 = vmatpush1.msra.mxu0 0.0
    %965 = vmatprep.subr.mxu0 0.0
    %966 = vmatpush1.msra.mxu0 0.0
    %967 = vmatprep.subr.mxu0 0.0
    %968 = vmatpush1.msra.mxu0 0.0
    %969 = vmatprep.subr.mxu0 0.0
    %970 = vmatpush1.msra.mxu0 0.0
    %971 = vmatprep.subr.mxu0 0.0
    %972 = vmatpush1.msra.mxu0 0.0
    %973 = vmatprep.subr.mxu0 0.0
    %974 = vmatpush1.msra.mxu0 0.0
    %975 = vmatprep.subr.mxu0 0.0
    %976 = vmatpush1.msra.mxu0 0.0
    %977 = vmatprep.subr.mxu0 0.0
    %978 = vmatpush1.msra.mxu0 0.0
    %979 = vmatprep.subr.mxu0 0.0
    %980 = vmatpush1.msra.mxu0 0.0
    %981 = vmatprep.subr.mxu0 0.0
    %982 = vmatpush1.msra.mxu0 0.0
    %983 = vmatprep.subr.mxu0 0.0
    %984 = vmatpush1.msra.mxu0 0.0
    %985 = vmatprep.subr.mxu0 0.0
    %986 = vmatpush1.msra.mxu0 0.0
    %987 = vmatprep.subr.mxu0 0.0
    %988 = vmatpush1.msra.mxu0 0.0
    %989 = vmatprep.subr.mxu0 0.0
    %990 = vmatpush1.msra.mxu0 0.0
    %991 = vmatprep.subr.mxu0 0.0
    %992 = vmatpush1.msra.mxu0 0.0
    %993 = vmatprep.subr.mxu0 0.0
    %994 = vmatpush1.msra.mxu0 0.0
    %995 = vmatprep.subr.mxu0 0.0
    %996 = vmatpush1.msra.mxu0 0.0
    %997 = vmatprep.subr.mxu0 0.0
    %998 = vmatpush1.msra.mxu0 0.0
    %999 = vmatprep.subr.mxu0 0.0
    %1000 = vmatpush1.msra.mxu0 0.0
    %1001 = vmatprep.subr.mxu0 0.0
    %1002 = vmatpush1.msra.mxu0 0.0
    %1003 = vmatprep.subr.mxu0 0.0
    %1004 = vmatpush1.msra.mxu0 0.0
    %1005 = vmatprep.subr.mxu0 0.0
    %1006 = vmatpush1.msra.mxu0 0.0
    %1007 = vmatprep.subr.mxu0 0.0
    %1008 = vmatpush1.msra.mxu0 0.0
    %1009 = vmatprep.mubr.f32.mxu0 0.0
    %1010 = vmatmul.mubr.f32.gmra.mrb[0].mxu0 %v934
    %v1011 = vpop.f32.mrb[0].mxu0
    %v1012 = vadd.f32 0.0, %v1011
    %v1013 = vpop.f32.mrb[0].mxu0
    %1014 = vmatprep.mubr.f32.mxu0 0.0
    %1015 = vmatmul.mubr.f32.gmra.mrb[0].mxu0 %v937
    %v1016 = vpop.f32.mrb[0].mxu0
    %v1017 = vadd.f32 0.0, %v1016
    %v1018 = vpop.f32.mrb[0].mxu0
    %1019 = vmatprep.mubr.f32.mxu0 0.0
    %1020 = vmatmul.mubr.f32.gmra.mrb[0].mxu0 %v940
    %v1021 = vpop.f32.mrb[0].mxu0
    %v1022 = vadd.f32 0.0, %v1021
    %v1023 = vpop.f32.mrb[0].mxu0
    %1024 = vmatprep.mubr.f32.mxu0 0.0
    %1025 = vmatmul.mubr.f32.gmra.mrb[0].mxu0 %v943
    %v1026 = vpop.f32.mrb[0].mxu0
    %v1027 = vadd.f32 0.0, %v1026
    %v1028 = vpop.f32.mrb[0].mxu0
    %1029 = vdwg.mxu0
    %s1030 = scalar_lea.vmem [#allocation11], 48
    %v1031 = vld [vmem:[%s1030] sm:$0xff]
    %v1032 = vld [vmem:[%s1030 + $0x8] sm:$0xff]
    %v1034 = vsel %vm527, %v1012, 0
    %v1037 = vsel %vm527, %v1017, 0
    %v1040 = vsel %vm527, %v1022, 0
    %v1043 = vsel %vm527, %v1027, 0
    %1045 = vmatprep.subr.mxu0 0.0
    %1046 = vmatpush1.msra.mxu0 %v1031
    %1047 = vmatprep.subr.mxu0 0.0
    %1048 = vmatpush1.msra.mxu0 %v1032
    %1049 = vmatprep.subr.mxu0 0.0
    %1050 = vmatpush1.msra.mxu0 0.0
    %1051 = vmatprep.subr.mxu0 0.0
    %1052 = vmatpush1.msra.mxu0 0.0
    %1053 = vmatprep.subr.mxu0 0.0
    %1054 = vmatpush1.msra.mxu0 0.0
    %1055 = vmatprep.subr.mxu0 0.0
    %1056 = vmatpush1.msra.mxu0 0.0
    %1057 = vmatprep.subr.mxu0 0.0
    %1058 = vmatpush1.msra.mxu0 0.0
    %1059 = vmatprep.subr.mxu0 0.0
    %1060 = vmatpush1.msra.mxu0 0.0
    %1061 = vmatprep.subr.mxu0 0.0
    %1062 = vmatpush1.msra.mxu0 0.0
    %1063 = vmatprep.subr.mxu0 0.0
    %1064 = vmatpush1.msra.mxu0 0.0
    %1065 = vmatprep.subr.mxu0 0.0
    %1066 = vmatpush1.msra.mxu0 0.0
    %1067 = vmatprep.subr.mxu0 0.0
    %1068 = vmatpush1.msra.mxu0 0.0
    %1069 = vmatprep.subr.mxu0 0.0
    %1070 = vmatpush1.msra.mxu0 0.0
    %1071 = vmatprep.subr.mxu0 0.0
    %1072 = vmatpush1.msra.mxu0 0.0
    %1073 = vmatprep.subr.mxu0 0.0
    %1074 = vmatpush1.msra.mxu0 0.0
    %1075 = vmatprep.subr.mxu0 0.0
    %1076 = vmatpush1.msra.mxu0 0.0
    %1077 = vmatprep.subr.mxu0 0.0
    %1078 = vmatpush1.msra.mxu0 0.0
    %1079 = vmatprep.subr.mxu0 0.0
    %1080 = vmatpush1.msra.mxu0 0.0
    %1081 = vmatprep.subr.mxu0 0.0
    %1082 = vmatpush1.msra.mxu0 0.0
    %1083 = vmatprep.subr.mxu0 0.0
    %1084 = vmatpush1.msra.mxu0 0.0
    %1085 = vmatprep.subr.mxu0 0.0
    %1086 = vmatpush1.msra.mxu0 0.0
    %1087 = vmatprep.subr.mxu0 0.0
    %1088 = vmatpush1.msra.mxu0 0.0
    %1089 = vmatprep.subr.mxu0 0.0
    %1090 = vmatpush1.msra.mxu0 0.0
    %1091 = vmatprep.subr.mxu0 0.0
    %1092 = vmatpush1.msra.mxu0 0.0
    %1093 = vmatprep.subr.mxu0 0.0
    %1094 = vmatpush1.msra.mxu0 0.0
    %1095 = vmatprep.subr.mxu0 0.0
    %1096 = vmatpush1.msra.mxu0 0.0
    %1097 = vmatprep.subr.mxu0 0.0
    %1098 = vmatpush1.msra.mxu0 0.0
    %1099 = vmatprep.subr.mxu0 0.0
    %1100 = vmatpush1.msra.mxu0 0.0
    %1101 = vmatprep.subr.mxu0 0.0
    %1102 = vmatpush1.msra.mxu0 0.0
    %1103 = vmatprep.subr.mxu0 0.0
    %1104 = vmatpush1.msra.mxu0 0.0
    %1105 = vmatprep.subr.mxu0 0.0
    %1106 = vmatpush1.msra.mxu0 0.0
    %1107 = vmatprep.subr.mxu0 0.0
    %1108 = vmatpush1.msra.mxu0 0.0
    %1109 = vmatprep.mubr.f32.mxu0 0.0
    %1110 = vmatmul.mubr.f32.gmra.mrb[0].mxu0 %v1034
    %v1111 = vpop.f32.mrb[0].mxu0
    %v1112 = vadd.f32 0.0, %v1111
    %v1113 = vpop.f32.mrb[0].mxu0
    %1114 = vmatprep.mubr.f32.mxu0 0.0
    %1115 = vmatmul.mubr.f32.gmra.mrb[0].mxu0 %v1037
    %v1116 = vpop.f32.mrb[0].mxu0
    %v1117 = vadd.f32 0.0, %v1116
    %v1118 = vpop.f32.mrb[0].mxu0
    %1119 = vmatprep.mubr.f32.mxu0 0.0
    %1120 = vmatmul.mubr.f32.gmra.mrb[0].mxu0 %v1040
    %v1121 = vpop.f32.mrb[0].mxu0
    %v1122 = vadd.f32 0.0, %v1121
    %v1123 = vpop.f32.mrb[0].mxu0
    %1124 = vmatprep.mubr.f32.mxu0 0.0
    %1125 = vmatmul.mubr.f32.gmra.mrb[0].mxu0 %v1043
    %v1126 = vpop.f32.mrb[0].mxu0
    %v1127 = vadd.f32 0.0, %v1126
    %v1128 = vpop.f32.mrb[0].mxu0
    %1129 = vdwg.mxu0
    %v1130 = vadd.f32 %v924, %v1112
    %v1131 = vadd.f32 %v925, %v1117
    %v1132 = vadd.f32 %v926, %v1122
    %v1133 = vadd.f32 %v927, %v1127
    %s1134 = scalar_lea.vmem [#allocation10], 128
    %v1135 = vld [vmem:[%s1134] sm:$0xff]
    %v1136 = vld [vmem:[%s1134 + $0x8] sm:$0xff]
    %v1137 = vld [vmem:[%s1134 + $0x10] sm:$0xff]
    %v1138 = vld [vmem:[%s1134 + $0x18] sm:$0xff]
    %v1140 = vsel %vm322, %v1135, 0
    %v1143 = vsel %vm322, %v1136, 0
    %v1146 = vsel %vm322, %v1137, 0
    %v1149 = vsel %vm322, %v1138, 0
    %1151 = vmatprep.subr.mxu0 0.0
    %1152 = vmatpush1.msra.mxu0 %v314
    %1153 = vmatprep.subr.mxu0 0.0
    %1154 = vmatpush1.msra.mxu0 %v315
    %1155 = vmatprep.subr.mxu0 0.0
    %1156 = vmatpush1.msra.mxu0 %v316
    %1157 = vmatprep.subr.mxu0 0.0
    %1158 = vmatpush1.msra.mxu0 %v317
    %1159 = vmatprep.subr.mxu0 0.0
    %1160 = vmatpush1.msra.mxu0 0.0
    %1161 = vmatprep.subr.mxu0 0.0
    %1162 = vmatpush1.msra.mxu0 0.0
    %1163 = vmatprep.subr.mxu0 0.0
    %1164 = vmatpush1.msra.mxu0 0.0
    %1165 = vmatprep.subr.mxu0 0.0
    %1166 = vmatpush1.msra.mxu0 0.0
    %1167 = vmatprep.subr.mxu0 0.0
    %1168 = vmatpush1.msra.mxu0 0.0
    %1169 = vmatprep.subr.mxu0 0.0
    %1170 = vmatpush1.msra.mxu0 0.0
    %1171 = vmatprep.subr.mxu0 0.0
    %1172 = vmatpush1.msra.mxu0 0.0
    %1173 = vmatprep.subr.mxu0 0.0
    %1174 = vmatpush1.msra.mxu0 0.0
    %1175 = vmatprep.subr.mxu0 0.0
    %1176 = vmatpush1.msra.mxu0 0.0
    %1177 = vmatprep.subr.mxu0 0.0
    %1178 = vmatpush1.msra.mxu0 0.0
    %1179 = vmatprep.subr.mxu0 0.0
    %1180 = vmatpush1.msra.mxu0 0.0
    %1181 = vmatprep.subr.mxu0 0.0
    %1182 = vmatpush1.msra.mxu0 0.0
    %1183 = vmatprep.subr.mxu0 0.0
    %1184 = vmatpush1.msra.mxu0 0.0
    %1185 = vmatprep.subr.mxu0 0.0
    %1186 = vmatpush1.msra.mxu0 0.0
    %1187 = vmatprep.subr.mxu0 0.0
    %1188 = vmatpush1.msra.mxu0 0.0
    %1189 = vmatprep.subr.mxu0 0.0
    %1190 = vmatpush1.msra.mxu0 0.0
    %1191 = vmatprep.subr.mxu0 0.0
    %1192 = vmatpush1.msra.mxu0 0.0
    %1193 = vmatprep.subr.mxu0 0.0
    %1194 = vmatpush1.msra.mxu0 0.0
    %1195 = vmatprep.subr.mxu0 0.0
    %1196 = vmatpush1.msra.mxu0 0.0
    %1197 = vmatprep.subr.mxu0 0.0
    %1198 = vmatpush1.msra.mxu0 0.0
    %1199 = vmatprep.subr.mxu0 0.0
    %1200 = vmatpush1.msra.mxu0 0.0
    %1201 = vmatprep.subr.mxu0 0.0
    %1202 = vmatpush1.msra.mxu0 0.0
    %1203 = vmatprep.subr.mxu0 0.0
    %1204 = vmatpush1.msra.mxu0 0.0
    %1205 = vmatprep.subr.mxu0 0.0
    %1206 = vmatpush1.msra.mxu0 0.0
    %1207 = vmatprep.subr.mxu0 0.0
    %1208 = vmatpush1.msra.mxu0 0.0
    %1209 = vmatprep.subr.mxu0 0.0
    %1210 = vmatpush1.msra.mxu0 0.0
    %1211 = vmatprep.subr.mxu0 0.0
    %1212 = vmatpush1.msra.mxu0 0.0
    %1213 = vmatprep.subr.mxu0 0.0
    %1214 = vmatpush1.msra.mxu0 0.0
    %1215 = vmatprep.mubr.f32.mxu0 0.0
    %1216 = vmatmul.mubr.f32.gmra.mrb[0].mxu0 %v1140
    %v1217 = vpop.f32.mrb[0].mxu0
    %v1218 = vadd.f32 0.0, %v1217
    %v1219 = vpop.f32.mrb[0].mxu0
    %1220 = vmatprep.mubr.f32.mxu0 0.0
    %1221 = vmatmul.mubr.f32.gmra.mrb[0].mxu0 %v1143
    %v1222 = vpop.f32.mrb[0].mxu0
    %v1223 = vadd.f32 0.0, %v1222
    %v1224 = vpop.f32.mrb[0].mxu0
    %1225 = vmatprep.mubr.f32.mxu0 0.0
    %1226 = vmatmul.mubr.f32.gmra.mrb[0].mxu0 %v1146
    %v1227 = vpop.f32.mrb[0].mxu0
    %v1228 = vadd.f32 0.0, %v1227
    %v1229 = vpop.f32.mrb[0].mxu0
    %1230 = vmatprep.mubr.f32.mxu0 0.0
    %1231 = vmatmul.mubr.f32.gmra.mrb[0].mxu0 %v1149
    %v1232 = vpop.f32.mrb[0].mxu0
    %v1233 = vadd.f32 0.0, %v1232
    %v1234 = vpop.f32.mrb[0].mxu0
    %1235 = vdwg.mxu0
    %s1236 = scalar_lea.vmem [#allocation11], 64
    %v1237 = vld [vmem:[%s1236] sm:$0xff]
    %v1238 = vld [vmem:[%s1236 + $0x8] sm:$0xff]
    %v1240 = vsel %vm527, %v1218, 0
    %v1243 = vsel %vm527, %v1223, 0
    %v1246 = vsel %vm527, %v1228, 0
    %v1249 = vsel %vm527, %v1233, 0
    %1251 = vmatprep.subr.mxu0 0.0
    %1252 = vmatpush1.msra.mxu0 %v1237
    %1253 = vmatprep.subr.mxu0 0.0
    %1254 = vmatpush1.msra.mxu0 %v1238
    %1255 = vmatprep.subr.mxu0 0.0
    %1256 = vmatpush1.msra.mxu0 0.0
    %1257 = vmatprep.subr.mxu0 0.0
    %1258 = vmatpush1.msra.mxu0 0.0
    %1259 = vmatprep.subr.mxu0 0.0
    %1260 = vmatpush1.msra.mxu0 0.0
    %1261 = vmatprep.subr.mxu0 0.0
    %1262 = vmatpush1.msra.mxu0 0.0
    %1263 = vmatprep.subr.mxu0 0.0
    %1264 = vmatpush1.msra.mxu0 0.0
    %1265 = vmatprep.subr.mxu0 0.0
    %1266 = vmatpush1.msra.mxu0 0.0
    %1267 = vmatprep.subr.mxu0 0.0
    %1268 = vmatpush1.msra.mxu0 0.0
    %1269 = vmatprep.subr.mxu0 0.0
    %1270 = vmatpush1.msra.mxu0 0.0
    %1271 = vmatprep.subr.mxu0 0.0
    %1272 = vmatpush1.msra.mxu0 0.0
    %1273 = vmatprep.subr.mxu0 0.0
    %1274 = vmatpush1.msra.mxu0 0.0
    %1275 = vmatprep.subr.mxu0 0.0
    %1276 = vmatpush1.msra.mxu0 0.0
    %1277 = vmatprep.subr.mxu0 0.0
    %1278 = vmatpush1.msra.mxu0 0.0
    %1279 = vmatprep.subr.mxu0 0.0
    %1280 = vmatpush1.msra.mxu0 0.0
    %1281 = vmatprep.subr.mxu0 0.0
    %1282 = vmatpush1.msra.mxu0 0.0
    %1283 = vmatprep.subr.mxu0 0.0
    %1284 = vmatpush1.msra.mxu0 0.0
    %1285 = vmatprep.subr.mxu0 0.0
    %1286 = vmatpush1.msra.mxu0 0.0
    %1287 = vmatprep.subr.mxu0 0.0
    %1288 = vmatpush1.msra.mxu0 0.0
    %1289 = vmatprep.subr.mxu0 0.0
    %1290 = vmatpush1.msra.mxu0 0.0
    %1291 = vmatprep.subr.mxu0 0.0
    %1292 = vmatpush1.msra.mxu0 0.0
    %1293 = vmatprep.subr.mxu0 0.0
    %1294 = vmatpush1.msra.mxu0 0.0
    %1295 = vmatprep.subr.mxu0 0.0
    %1296 = vmatpush1.msra.mxu0 0.0
    %1297 = vmatprep.subr.mxu0 0.0
    %1298 = vmatpush1.msra.mxu0 0.0
    %1299 = vmatprep.subr.mxu0 0.0
    %1300 = vmatpush1.msra.mxu0 0.0
    %1301 = vmatprep.subr.mxu0 0.0
    %1302 = vmatpush1.msra.mxu0 0.0
    %1303 = vmatprep.subr.mxu0 0.0
    %1304 = vmatpush1.msra.mxu0 0.0
    %1305 = vmatprep.subr.mxu0 0.0
    %1306 = vmatpush1.msra.mxu0 0.0
    %1307 = vmatprep.subr.mxu0 0.0
    %1308 = vmatpush1.msra.mxu0 0.0
    %1309 = vmatprep.subr.mxu0 0.0
    %1310 = vmatpush1.msra.mxu0 0.0
    %1311 = vmatprep.subr.mxu0 0.0
    %1312 = vmatpush1.msra.mxu0 0.0
    %1313 = vmatprep.subr.mxu0 0.0
    %1314 = vmatpush1.msra.mxu0 0.0
    %1315 = vmatprep.mubr.f32.mxu0 0.0
    %1316 = vmatmul.mubr.f32.gmra.mrb[0].mxu0 %v1240
    %v1317 = vpop.f32.mrb[0].mxu0
    %v1318 = vadd.f32 0.0, %v1317
    %v1319 = vpop.f32.mrb[0].mxu0
    %1320 = vmatprep.mubr.f32.mxu0 0.0
    %1321 = vmatmul.mubr.f32.gmra.mrb[0].mxu0 %v1243
    %v1322 = vpop.f32.mrb[0].mxu0
    %v1323 = vadd.f32 0.0, %v1322
    %v1324 = vpop.f32.mrb[0].mxu0
    %1325 = vmatprep.mubr.f32.mxu0 0.0
    %1326 = vmatmul.mubr.f32.gmra.mrb[0].mxu0 %v1246
    %v1327 = vpop.f32.mrb[0].mxu0
    %v1328 = vadd.f32 0.0, %v1327
    %v1329 = vpop.f32.mrb[0].mxu0
    %1330 = vmatprep.mubr.f32.mxu0 0.0
    %1331 = vmatmul.mubr.f32.gmra.mrb[0].mxu0 %v1249
    %v1332 = vpop.f32.mrb[0].mxu0
    %v1333 = vadd.f32 0.0, %v1332
    %v1334 = vpop.f32.mrb[0].mxu0
    %1335 = vdwg.mxu0
    %v1336 = vadd.f32 %v1130, %v1318
    %v1337 = vadd.f32 %v1131, %v1323
    %v1338 = vadd.f32 %v1132, %v1328
    %v1339 = vadd.f32 %v1133, %v1333
    %s1340 = scalar_lea.vmem [#allocation10], 160
    %v1341 = vld [vmem:[%s1340] sm:$0xff]
    %v1342 = vld [vmem:[%s1340 + $0x8] sm:$0xff]
    %v1343 = vld [vmem:[%s1340 + $0x10] sm:$0xff]
    %v1344 = vld [vmem:[%s1340 + $0x18] sm:$0xff]
    %v1346 = vsel %vm322, %v1341, 0
    %v1349 = vsel %vm322, %v1342, 0
    %v1352 = vsel %vm322, %v1343, 0
    %v1355 = vsel %vm322, %v1344, 0
    %1357 = vmatprep.subr.mxu0 0.0
    %1358 = vmatpush1.msra.mxu0 %v314
    %1359 = vmatprep.subr.mxu0 0.0
    %1360 = vmatpush1.msra.mxu0 %v315
    %1361 = vmatprep.subr.mxu0 0.0
    %1362 = vmatpush1.msra.mxu0 %v316
    %1363 = vmatprep.subr.mxu0 0.0
    %1364 = vmatpush1.msra.mxu0 %v317
    %1365 = vmatprep.subr.mxu0 0.0
    %1366 = vmatpush1.msra.mxu0 0.0
    %1367 = vmatprep.subr.mxu0 0.0
    %1368 = vmatpush1.msra.mxu0 0.0
    %1369 = vmatprep.subr.mxu0 0.0
    %1370 = vmatpush1.msra.mxu0 0.0
    %1371 = vmatprep.subr.mxu0 0.0
    %1372 = vmatpush1.msra.mxu0 0.0
    %1373 = vmatprep.subr.mxu0 0.0
    %1374 = vmatpush1.msra.mxu0 0.0
    %1375 = vmatprep.subr.mxu0 0.0
    %1376 = vmatpush1.msra.mxu0 0.0
    %1377 = vmatprep.subr.mxu0 0.0
    %1378 = vmatpush1.msra.mxu0 0.0
    %1379 = vmatprep.subr.mxu0 0.0
    %1380 = vmatpush1.msra.mxu0 0.0
    %1381 = vmatprep.subr.mxu0 0.0
    %1382 = vmatpush1.msra.mxu0 0.0
    %1383 = vmatprep.subr.mxu0 0.0
    %1384 = vmatpush1.msra.mxu0 0.0
    %1385 = vmatprep.subr.mxu0 0.0
    %1386 = vmatpush1.msra.mxu0 0.0
    %1387 = vmatprep.subr.mxu0 0.0
    %1388 = vmatpush1.msra.mxu0 0.0
    %1389 = vmatprep.subr.mxu0 0.0
    %1390 = vmatpush1.msra.mxu0 0.0
    %1391 = vmatprep.subr.mxu0 0.0
    %1392 = vmatpush1.msra.mxu0 0.0
    %1393 = vmatprep.subr.mxu0 0.0
    %1394 = vmatpush1.msra.mxu0 0.0
    %1395 = vmatprep.subr.mxu0 0.0
    %1396 = vmatpush1.msra.mxu0 0.0
    %1397 = vmatprep.subr.mxu0 0.0
    %1398 = vmatpush1.msra.mxu0 0.0
    %1399 = vmatprep.subr.mxu0 0.0
    %1400 = vmatpush1.msra.mxu0 0.0
    %1401 = vmatprep.subr.mxu0 0.0
    %1402 = vmatpush1.msra.mxu0 0.0
    %1403 = vmatprep.subr.mxu0 0.0
    %1404 = vmatpush1.msra.mxu0 0.0
    %1405 = vmatprep.subr.mxu0 0.0
    %1406 = vmatpush1.msra.mxu0 0.0
    %1407 = vmatprep.subr.mxu0 0.0
    %1408 = vmatpush1.msra.mxu0 0.0
    %1409 = vmatprep.subr.mxu0 0.0
    %1410 = vmatpush1.msra.mxu0 0.0
    %1411 = vmatprep.subr.mxu0 0.0
    %1412 = vmatpush1.msra.mxu0 0.0
    %1413 = vmatprep.subr.mxu0 0.0
    %1414 = vmatpush1.msra.mxu0 0.0
    %1415 = vmatprep.subr.mxu0 0.0
    %1416 = vmatpush1.msra.mxu0 0.0
    %1417 = vmatprep.subr.mxu0 0.0
    %1418 = vmatpush1.msra.mxu0 0.0
    %1419 = vmatprep.subr.mxu0 0.0
    %1420 = vmatpush1.msra.mxu0 0.0
    %1421 = vmatprep.mubr.f32.mxu0 0.0
    %1422 = vmatmul.mubr.f32.gmra.mrb[0].mxu0 %v1346
    %v1423 = vpop.f32.mrb[0].mxu0
    %v1424 = vadd.f32 0.0, %v1423
    %v1425 = vpop.f32.mrb[0].mxu0
    %1426 = vmatprep.mubr.f32.mxu0 0.0
    %1427 = vmatmul.mubr.f32.gmra.mrb[0].mxu0 %v1349
    %v1428 = vpop.f32.mrb[0].mxu0
    %v1429 = vadd.f32 0.0, %v1428
    %v1430 = vpop.f32.mrb[0].mxu0
    %1431 = vmatprep.mubr.f32.mxu0 0.0
    %1432 = vmatmul.mubr.f32.gmra.mrb[0].mxu0 %v1352
    %v1433 = vpop.f32.mrb[0].mxu0
    %v1434 = vadd.f32 0.0, %v1433
    %v1435 = vpop.f32.mrb[0].mxu0
    %1436 = vmatprep.mubr.f32.mxu0 0.0
    %1437 = vmatmul.mubr.f32.gmra.mrb[0].mxu0 %v1355
    %v1438 = vpop.f32.mrb[0].mxu0
    %v1439 = vadd.f32 0.0, %v1438
    %v1440 = vpop.f32.mrb[0].mxu0
    %1441 = vdwg.mxu0
    %s1442 = scalar_lea.vmem [#allocation11], 80
    %v1443 = vld [vmem:[%s1442] sm:$0xff]
    %v1444 = vld [vmem:[%s1442 + $0x8] sm:$0xff]
    %v1446 = vsel %vm527, %v1424, 0
    %v1449 = vsel %vm527, %v1429, 0
    %v1452 = vsel %vm527, %v1434, 0
    %v1455 = vsel %vm527, %v1439, 0
    %1457 = vmatprep.subr.mxu0 0.0
    %1458 = vmatpush1.msra.mxu0 %v1443
    %1459 = vmatprep.subr.mxu0 0.0
    %1460 = vmatpush1.msra.mxu0 %v1444
    %1461 = vmatprep.subr.mxu0 0.0
    %1462 = vmatpush1.msra.mxu0 0.0
    %1463 = vmatprep.subr.mxu0 0.0
    %1464 = vmatpush1.msra.mxu0 0.0
    %1465 = vmatprep.subr.mxu0 0.0
    %1466 = vmatpush1.msra.mxu0 0.0
    %1467 = vmatprep.subr.mxu0 0.0
    %1468 = vmatpush1.msra.mxu0 0.0
    %1469 = vmatprep.subr.mxu0 0.0
    %1470 = vmatpush1.msra.mxu0 0.0
    %1471 = vmatprep.subr.mxu0 0.0
    %1472 = vmatpush1.msra.mxu0 0.0
    %1473 = vmatprep.subr.mxu0 0.0
    %1474 = vmatpush1.msra.mxu0 0.0
    %1475 = vmatprep.subr.mxu0 0.0
    %1476 = vmatpush1.msra.mxu0 0.0
    %1477 = vmatprep.subr.mxu0 0.0
    %1478 = vmatpush1.msra.mxu0 0.0
    %1479 = vmatprep.subr.mxu0 0.0
    %1480 = vmatpush1.msra.mxu0 0.0
    %1481 = vmatprep.subr.mxu0 0.0
    %1482 = vmatpush1.msra.mxu0 0.0
    %1483 = vmatprep.subr.mxu0 0.0
    %1484 = vmatpush1.msra.mxu0 0.0
    %1485 = vmatprep.subr.mxu0 0.0
    %1486 = vmatpush1.msra.mxu0 0.0
    %1487 = vmatprep.subr.mxu0 0.0
    %1488 = vmatpush1.msra.mxu0 0.0
    %1489 = vmatprep.subr.mxu0 0.0
    %1490 = vmatpush1.msra.mxu0 0.0
    %1491 = vmatprep.subr.mxu0 0.0
    %1492 = vmatpush1.msra.mxu0 0.0
    %1493 = vmatprep.subr.mxu0 0.0
    %1494 = vmatpush1.msra.mxu0 0.0
    %1495 = vmatprep.subr.mxu0 0.0
    %1496 = vmatpush1.msra.mxu0 0.0
    %1497 = vmatprep.subr.mxu0 0.0
    %1498 = vmatpush1.msra.mxu0 0.0
    %1499 = vmatprep.subr.mxu0 0.0
    %1500 = vmatpush1.msra.mxu0 0.0
    %1501 = vmatprep.subr.mxu0 0.0
    %1502 = vmatpush1.msra.mxu0 0.0
    %1503 = vmatprep.subr.mxu0 0.0
    %1504 = vmatpush1.msra.mxu0 0.0
    %1505 = vmatprep.subr.mxu0 0.0
    %1506 = vmatpush1.msra.mxu0 0.0
    %1507 = vmatprep.subr.mxu0 0.0
    %1508 = vmatpush1.msra.mxu0 0.0
    %1509 = vmatprep.subr.mxu0 0.0
    %1510 = vmatpush1.msra.mxu0 0.0
    %1511 = vmatprep.subr.mxu0 0.0
    %1512 = vmatpush1.msra.mxu0 0.0
    %1513 = vmatprep.subr.mxu0 0.0
    %1514 = vmatpush1.msra.mxu0 0.0
    %1515 = vmatprep.subr.mxu0 0.0
    %1516 = vmatpush1.msra.mxu0 0.0
    %1517 = vmatprep.subr.mxu0 0.0
    %1518 = vmatpush1.msra.mxu0 0.0
    %1519 = vmatprep.subr.mxu0 0.0
    %1520 = vmatpush1.msra.mxu0 0.0
    %1521 = vmatprep.mubr.f32.mxu0 0.0
    %1522 = vmatmul.mubr.f32.gmra.mrb[0].mxu0 %v1446
    %v1523 = vpop.f32.mrb[0].mxu0
    %v1524 = vadd.f32 0.0, %v1523
    %v1525 = vpop.f32.mrb[0].mxu0
    %1526 = vmatprep.mubr.f32.mxu0 0.0
    %1527 = vmatmul.mubr.f32.gmra.mrb[0].mxu0 %v1449
    %v1528 = vpop.f32.mrb[0].mxu0
    %v1529 = vadd.f32 0.0, %v1528
    %v1530 = vpop.f32.mrb[0].mxu0
    %1531 = vmatprep.mubr.f32.mxu0 0.0
    %1532 = vmatmul.mubr.f32.gmra.mrb[0].mxu0 %v1452
    %v1533 = vpop.f32.mrb[0].mxu0
    %v1534 = vadd.f32 0.0, %v1533
    %v1535 = vpop.f32.mrb[0].mxu0
    %1536 = vmatprep.mubr.f32.mxu0 0.0
    %1537 = vmatmul.mubr.f32.gmra.mrb[0].mxu0 %v1455
    %v1538 = vpop.f32.mrb[0].mxu0
    %v1539 = vadd.f32 0.0, %v1538
    %v1540 = vpop.f32.mrb[0].mxu0
    %1541 = vdwg.mxu0
    %v1542 = vadd.f32 %v1336, %v1524
    %v1543 = vadd.f32 %v1337, %v1529
    %v1544 = vadd.f32 %v1338, %v1534
    %v1545 = vadd.f32 %v1339, %v1539
    %s1546 = scalar_lea.vmem [#allocation10], 192
    %v1547 = vld [vmem:[%s1546] sm:$0xff]
    %v1548 = vld [vmem:[%s1546 + $0x8] sm:$0xff]
    %v1549 = vld [vmem:[%s1546 + $0x10] sm:$0xff]
    %v1550 = vld [vmem:[%s1546 + $0x18] sm:$0xff]
    %v1552 = vsel %vm322, %v1547, 0
    %v1555 = vsel %vm322, %v1548, 0
    %v1558 = vsel %vm322, %v1549, 0
    %v1561 = vsel %vm322, %v1550, 0
    %1563 = vmatprep.subr.mxu0 0.0
    %1564 = vmatpush1.msra.mxu0 %v314
    %1565 = vmatprep.subr.mxu0 0.0
    %1566 = vmatpush1.msra.mxu0 %v315
    %1567 = vmatprep.subr.mxu0 0.0
    %1568 = vmatpush1.msra.mxu0 %v316
    %1569 = vmatprep.subr.mxu0 0.0
    %1570 = vmatpush1.msra.mxu0 %v317
    %1571 = vmatprep.subr.mxu0 0.0
    %1572 = vmatpush1.msra.mxu0 0.0
    %1573 = vmatprep.subr.mxu0 0.0
    %1574 = vmatpush1.msra.mxu0 0.0
    %1575 = vmatprep.subr.mxu0 0.0
    %1576 = vmatpush1.msra.mxu0 0.0
    %1577 = vmatprep.subr.mxu0 0.0
    %1578 = vmatpush1.msra.mxu0 0.0
    %1579 = vmatprep.subr.mxu0 0.0
    %1580 = vmatpush1.msra.mxu0 0.0
    %1581 = vmatprep.subr.mxu0 0.0
    %1582 = vmatpush1.msra.mxu0 0.0
    %1583 = vmatprep.subr.mxu0 0.0
    %1584 = vmatpush1.msra.mxu0 0.0
    %1585 = vmatprep.subr.mxu0 0.0
    %1586 = vmatpush1.msra.mxu0 0.0
    %1587 = vmatprep.subr.mxu0 0.0
    %1588 = vmatpush1.msra.mxu0 0.0
    %1589 = vmatprep.subr.mxu0 0.0
    %1590 = vmatpush1.msra.mxu0 0.0
    %1591 = vmatprep.subr.mxu0 0.0
    %1592 = vmatpush1.msra.mxu0 0.0
    %1593 = vmatprep.subr.mxu0 0.0
    %1594 = vmatpush1.msra.mxu0 0.0
    %1595 = vmatprep.subr.mxu0 0.0
    %1596 = vmatpush1.msra.mxu0 0.0
    %1597 = vmatprep.subr.mxu0 0.0
    %1598 = vmatpush1.msra.mxu0 0.0
    %1599 = vmatprep.subr.mxu0 0.0
    %1600 = vmatpush1.msra.mxu0 0.0
    %1601 = vmatprep.subr.mxu0 0.0
    %1602 = vmatpush1.msra.mxu0 0.0
    %1603 = vmatprep.subr.mxu0 0.0
    %1604 = vmatpush1.msra.mxu0 0.0
    %1605 = vmatprep.subr.mxu0 0.0
    %1606 = vmatpush1.msra.mxu0 0.0
    %1607 = vmatprep.subr.mxu0 0.0
    %1608 = vmatpush1.msra.mxu0 0.0
    %1609 = vmatprep.subr.mxu0 0.0
    %1610 = vmatpush1.msra.mxu0 0.0
    %1611 = vmatprep.subr.mxu0 0.0
    %1612 = vmatpush1.msra.mxu0 0.0
    %1613 = vmatprep.subr.mxu0 0.0
    %1614 = vmatpush1.msra.mxu0 0.0
    %1615 = vmatprep.subr.mxu0 0.0
    %1616 = vmatpush1.msra.mxu0 0.0
    %1617 = vmatprep.subr.mxu0 0.0
    %1618 = vmatpush1.msra.mxu0 0.0
    %1619 = vmatprep.subr.mxu0 0.0
    %1620 = vmatpush1.msra.mxu0 0.0
    %1621 = vmatprep.subr.mxu0 0.0
    %1622 = vmatpush1.msra.mxu0 0.0
    %1623 = vmatprep.subr.mxu0 0.0
    %1624 = vmatpush1.msra.mxu0 0.0
    %1625 = vmatprep.subr.mxu0 0.0
    %1626 = vmatpush1.msra.mxu0 0.0
    %1627 = vmatprep.mubr.f32.mxu0 0.0
    %1628 = vmatmul.mubr.f32.gmra.mrb[0].mxu0 %v1552
    %v1629 = vpop.f32.mrb[0].mxu0
    %v1630 = vadd.f32 0.0, %v1629
    %v1631 = vpop.f32.mrb[0].mxu0
    %1632 = vmatprep.mubr.f32.mxu0 0.0
    %1633 = vmatmul.mubr.f32.gmra.mrb[0].mxu0 %v1555
    %v1634 = vpop.f32.mrb[0].mxu0
    %v1635 = vadd.f32 0.0, %v1634
    %v1636 = vpop.f32.mrb[0].mxu0
    %1637 = vmatprep.mubr.f32.mxu0 0.0
    %1638 = vmatmul.mubr.f32.gmra.mrb[0].mxu0 %v1558
    %v1639 = vpop.f32.mrb[0].mxu0
    %v1640 = vadd.f32 0.0, %v1639
    %v1641 = vpop.f32.mrb[0].mxu0
    %1642 = vmatprep.mubr.f32.mxu0 0.0
    %1643 = vmatmul.mubr.f32.gmra.mrb[0].mxu0 %v1561
    %v1644 = vpop.f32.mrb[0].mxu0
    %v1645 = vadd.f32 0.0, %v1644
    %v1646 = vpop.f32.mrb[0].mxu0
    %1647 = vdwg.mxu0
    %s1648 = scalar_lea.vmem [#allocation11], 96
    %v1649 = vld [vmem:[%s1648] sm:$0xff]
    %v1650 = vld [vmem:[%s1648 + $0x8] sm:$0xff]
    %v1652 = vsel %vm527, %v1630, 0
    %v1655 = vsel %vm527, %v1635, 0
    %v1658 = vsel %vm527, %v1640, 0
    %v1661 = vsel %vm527, %v1645, 0
    %1663 = vmatprep.subr.mxu0 0.0
    %1664 = vmatpush1.msra.mxu0 %v1649
    %1665 = vmatprep.subr.mxu0 0.0
    %1666 = vmatpush1.msra.mxu0 %v1650
    %1667 = vmatprep.subr.mxu0 0.0
    %1668 = vmatpush1.msra.mxu0 0.0
    %1669 = vmatprep.subr.mxu0 0.0
    %1670 = vmatpush1.msra.mxu0 0.0
    %1671 = vmatprep.subr.mxu0 0.0
    %1672 = vmatpush1.msra.mxu0 0.0
    %1673 = vmatprep.subr.mxu0 0.0
    %1674 = vmatpush1.msra.mxu0 0.0
    %1675 = vmatprep.subr.mxu0 0.0
    %1676 = vmatpush1.msra.mxu0 0.0
    %1677 = vmatprep.subr.mxu0 0.0
    %1678 = vmatpush1.msra.mxu0 0.0
    %1679 = vmatprep.subr.mxu0 0.0
    %1680 = vmatpush1.msra.mxu0 0.0
    %1681 = vmatprep.subr.mxu0 0.0
    %1682 = vmatpush1.msra.mxu0 0.0
    %1683 = vmatprep.subr.mxu0 0.0
    %1684 = vmatpush1.msra.mxu0 0.0
    %1685 = vmatprep.subr.mxu0 0.0
    %1686 = vmatpush1.msra.mxu0 0.0
    %1687 = vmatprep.subr.mxu0 0.0
    %1688 = vmatpush1.msra.mxu0 0.0
    %1689 = vmatprep.subr.mxu0 0.0
    %1690 = vmatpush1.msra.mxu0 0.0
    %1691 = vmatprep.subr.mxu0 0.0
    %1692 = vmatpush1.msra.mxu0 0.0
    %1693 = vmatprep.subr.mxu0 0.0
    %1694 = vmatpush1.msra.mxu0 0.0
    %1695 = vmatprep.subr.mxu0 0.0
    %1696 = vmatpush1.msra.mxu0 0.0
    %1697 = vmatprep.subr.mxu0 0.0
    %1698 = vmatpush1.msra.mxu0 0.0
    %1699 = vmatprep.subr.mxu0 0.0
    %1700 = vmatpush1.msra.mxu0 0.0
    %1701 = vmatprep.subr.mxu0 0.0
    %1702 = vmatpush1.msra.mxu0 0.0
    %1703 = vmatprep.subr.mxu0 0.0
    %1704 = vmatpush1.msra.mxu0 0.0
    %1705 = vmatprep.subr.mxu0 0.0
    %1706 = vmatpush1.msra.mxu0 0.0
    %1707 = vmatprep.subr.mxu0 0.0
    %1708 = vmatpush1.msra.mxu0 0.0
    %1709 = vmatprep.subr.mxu0 0.0
    %1710 = vmatpush1.msra.mxu0 0.0
    %1711 = vmatprep.subr.mxu0 0.0
    %1712 = vmatpush1.msra.mxu0 0.0
    %1713 = vmatprep.subr.mxu0 0.0
    %1714 = vmatpush1.msra.mxu0 0.0
    %1715 = vmatprep.subr.mxu0 0.0
    %1716 = vmatpush1.msra.mxu0 0.0
    %1717 = vmatprep.subr.mxu0 0.0
    %1718 = vmatpush1.msra.mxu0 0.0
    %1719 = vmatprep.subr.mxu0 0.0
    %1720 = vmatpush1.msra.mxu0 0.0
    %1721 = vmatprep.subr.mxu0 0.0
    %1722 = vmatpush1.msra.mxu0 0.0
    %1723 = vmatprep.subr.mxu0 0.0
    %1724 = vmatpush1.msra.mxu0 0.0
    %1725 = vmatprep.subr.mxu0 0.0
    %1726 = vmatpush1.msra.mxu0 0.0
    %1727 = vmatprep.mubr.f32.mxu0 0.0
    %1728 = vmatmul.mubr.f32.gmra.mrb[0].mxu0 %v1652
    %v1729 = vpop.f32.mrb[0].mxu0
    %v1730 = vadd.f32 0.0, %v1729
    %v1731 = vpop.f32.mrb[0].mxu0
    %1732 = vmatprep.mubr.f32.mxu0 0.0
    %1733 = vmatmul.mubr.f32.gmra.mrb[0].mxu0 %v1655
    %v1734 = vpop.f32.mrb[0].mxu0
    %v1735 = vadd.f32 0.0, %v1734
    %v1736 = vpop.f32.mrb[0].mxu0
    %1737 = vmatprep.mubr.f32.mxu0 0.0
    %1738 = vmatmul.mubr.f32.gmra.mrb[0].mxu0 %v1658
    %v1739 = vpop.f32.mrb[0].mxu0
    %v1740 = vadd.f32 0.0, %v1739
    %v1741 = vpop.f32.mrb[0].mxu0
    %1742 = vmatprep.mubr.f32.mxu0 0.0
    %1743 = vmatmul.mubr.f32.gmra.mrb[0].mxu0 %v1661
    %v1744 = vpop.f32.mrb[0].mxu0
    %v1745 = vadd.f32 0.0, %v1744
    %v1746 = vpop.f32.mrb[0].mxu0
    %1747 = vdwg.mxu0
    %v1748 = vadd.f32 %v1542, %v1730
    %v1749 = vadd.f32 %v1543, %v1735
    %v1750 = vadd.f32 %v1544, %v1740
    %v1751 = vadd.f32 %v1545, %v1745
    %v1752 = vld [vmem:[%s5] sm:$0x1]
    %v1754 = vlaneseq
    %v1755 = vshrl.u32 %v1754, 7
    %v1756 = vsub.s32 0, %v1755
    %v1757 = vrot.slane %v1752, %v1756
    %v1759 = vadd.f32 %v1748, %v1757
    %v1760 = vadd.f32 %v1749, %v1757
    %v1761 = vadd.f32 %v1750, %v1757
    %v1762 = vadd.f32 %v1751, %v1757
    %v1763 = vadd.f32 %v1759, %v1760
    %v1764 = vadd.f32 %v1763, %v1761
    %v1765 = vadd.f32 %v1764, %v1762
    %v1766 = vrot.slane %v1765, 4
    %v1767 = vadd.f32 %v1765, %v1766
    %v1768 = vrot.slane %v1767, 2
    %v1769 = vadd.f32 %v1767, %v1768
    %v1770 = vrot.slane %v1769, 1
    %v1771 = vadd.f32 %v1769, %v1770
    %1772 = vmatprep.subr.mxu0 0.0
    %1773 = vmatpush1.msra.mxu0 %v274
    %1774 = vmatprep.subr.mxu0 0.0
    %1775 = vmatpush1.msra.mxu0 %v275
    %1776 = vmatprep.subr.mxu0 0.0
    %1777 = vmatpush1.msra.mxu0 %v276
    %1778 = vmatprep.subr.mxu0 0.0
    %1779 = vmatpush1.msra.mxu0 %v277
    %1780 = vmatprep.subr.mxu0 0.0
    %1781 = vmatpush1.msra.mxu0 %v278
    %1782 = vmatprep.subr.mxu0 0.0
    %1783 = vmatpush1.msra.mxu0 %v279
    %1784 = vmatprep.subr.mxu0 0.0
    %1785 = vmatpush1.msra.mxu0 %v280
    %1786 = vmatprep.subr.mxu0 0.0
    %1787 = vmatpush1.msra.mxu0 %v281
    %1788 = vmatprep.subr.mxu0 0.0
    %1789 = vmatpush1.msra.mxu0 %v282
    %1790 = vmatprep.subr.mxu0 0.0
    %1791 = vmatpush1.msra.mxu0 %v283
    %1792 = vmatprep.subr.mxu0 0.0
    %1793 = vmatpush1.msra.mxu0 %v284
    %1794 = vmatprep.subr.mxu0 0.0
    %1795 = vmatpush1.msra.mxu0 %v285
    %1796 = vmatprep.subr.mxu0 0.0
    %1797 = vmatpush1.msra.mxu0 %v286
    %1798 = vmatprep.subr.mxu0 0.0
    %1799 = vmatpush1.msra.mxu0 %v287
    %1800 = vmatprep.subr.mxu0 0.0
    %1801 = vmatpush1.msra.mxu0 %v288
    %1802 = vmatprep.subr.mxu0 0.0
    %1803 = vmatpush1.msra.mxu0 %v289
    %1804 = vmatprep.subr.mxu0 0.0
    %1805 = vmatpush1.msra.mxu0 0.0
    %1806 = vmatprep.subr.mxu0 0.0
    %1807 = vmatpush1.msra.mxu0 0.0
    %1808 = vmatprep.subr.mxu0 0.0
    %1809 = vmatpush1.msra.mxu0 0.0
    %1810 = vmatprep.subr.mxu0 0.0
    %1811 = vmatpush1.msra.mxu0 0.0
    %1812 = vmatprep.subr.mxu0 0.0
    %1813 = vmatpush1.msra.mxu0 0.0
    %1814 = vmatprep.subr.mxu0 0.0
    %1815 = vmatpush1.msra.mxu0 0.0
    %1816 = vmatprep.subr.mxu0 0.0
    %1817 = vmatpush1.msra.mxu0 0.0
    %1818 = vmatprep.subr.mxu0 0.0
    %1819 = vmatpush1.msra.mxu0 0.0
    %1820 = vmatprep.subr.mxu0 0.0
    %1821 = vmatpush1.msra.mxu0 0.0
    %1822 = vmatprep.subr.mxu0 0.0
    %1823 = vmatpush1.msra.mxu0 0.0
    %1824 = vmatprep.subr.mxu0 0.0
    %1825 = vmatpush1.msra.mxu0 0.0
    %1826 = vmatprep.subr.mxu0 0.0
    %1827 = vmatpush1.msra.mxu0 0.0
    %1828 = vmatprep.subr.mxu0 0.0
    %1829 = vmatpush1.msra.mxu0 0.0
    %1830 = vmatprep.subr.mxu0 0.0
    %1831 = vmatpush1.msra.mxu0 0.0
    %1832 = vmatprep.subr.mxu0 0.0
    %1833 = vmatpush1.msra.mxu0 0.0
    %1834 = vmatprep.subr.mxu0 0.0
    %1835 = vmatpush1.msra.mxu0 0.0
    %1836 = vmatprep.mubr.f32.mxu0 0.0
    %1837 = vmatmul.mubr.f32.gmra.mrb[0].mxu0 %v1771
    %v1838 = vpop.f32.mrb[0].mxu0
    %v1839 = vadd.f32 0.0, %v1838
    %v1840 = vpop.f32.mrb[0].mxu0
    %1841 = vdwg.mxu0
    %v1842 = vmul.f32 %v1759, %v1759
    %v1843 = vmul.f32 %v1760, %v1760
    %v1844 = vmul.f32 %v1761, %v1761
    %v1845 = vmul.f32 %v1762, %v1762
    %v1846 = vadd.f32 %v1842, %v1843
    %v1847 = vadd.f32 %v1846, %v1844
    %v1848 = vadd.f32 %v1847, %v1845
    %v1849 = vrot.slane %v1848, 4
    %v1850 = vadd.f32 %v1848, %v1849
    %v1851 = vrot.slane %v1850, 2
    %v1852 = vadd.f32 %v1850, %v1851
    %v1853 = vrot.slane %v1852, 1
    %v1854 = vadd.f32 %v1852, %v1853
    %1855 = vmatprep.subr.mxu0 0.0
    %1856 = vmatpush1.msra.mxu0 %v274
    %1857 = vmatprep.subr.mxu0 0.0
    %1858 = vmatpush1.msra.mxu0 %v275
    %1859 = vmatprep.subr.mxu0 0.0
    %1860 = vmatpush1.msra.mxu0 %v276
    %1861 = vmatprep.subr.mxu0 0.0
    %1862 = vmatpush1.msra.mxu0 %v277
    %1863 = vmatprep.subr.mxu0 0.0
    %1864 = vmatpush1.msra.mxu0 %v278
    %1865 = vmatprep.subr.mxu0 0.0
    %1866 = vmatpush1.msra.mxu0 %v279
    %1867 = vmatprep.subr.mxu0 0.0
    %1868 = vmatpush1.msra.mxu0 %v280
    %1869 = vmatprep.subr.mxu0 0.0
    %1870 = vmatpush1.msra.mxu0 %v281
    %1871 = vmatprep.subr.mxu0 0.0
    %1872 = vmatpush1.msra.mxu0 %v282
    %1873 = vmatprep.subr.mxu0 0.0
    %1874 = vmatpush1.msra.mxu0 %v283
    %1875 = vmatprep.subr.mxu0 0.0
    %1876 = vmatpush1.msra.mxu0 %v284
    %1877 = vmatprep.subr.mxu0 0.0
    %1878 = vmatpush1.msra.mxu0 %v285
    %1879 = vmatprep.subr.mxu0 0.0
    %1880 = vmatpush1.msra.mxu0 %v286
    %1881 = vmatprep.subr.mxu0 0.0
    %1882 = vmatpush1.msra.mxu0 %v287
    %1883 = vmatprep.subr.mxu0 0.0
    %1884 = vmatpush1.msra.mxu0 %v288
    %1885 = vmatprep.subr.mxu0 0.0
    %1886 = vmatpush1.msra.mxu0 %v289
    %1887 = vmatprep.subr.mxu0 0.0
    %1888 = vmatpush1.msra.mxu0 0.0
    %1889 = vmatprep.subr.mxu0 0.0
    %1890 = vmatpush1.msra.mxu0 0.0
    %1891 = vmatprep.subr.mxu0 0.0
    %1892 = vmatpush1.msra.mxu0 0.0
    %1893 = vmatprep.subr.mxu0 0.0
    %1894 = vmatpush1.msra.mxu0 0.0
    %1895 = vmatprep.subr.mxu0 0.0
    %1896 = vmatpush1.msra.mxu0 0.0
    %1897 = vmatprep.subr.mxu0 0.0
    %1898 = vmatpush1.msra.mxu0 0.0
    %1899 = vmatprep.subr.mxu0 0.0
    %1900 = vmatpush1.msra.mxu0 0.0
    %1901 = vmatprep.subr.mxu0 0.0
    %1902 = vmatpush1.msra.mxu0 0.0
    %1903 = vmatprep.subr.mxu0 0.0
    %1904 = vmatpush1.msra.mxu0 0.0
    %1905 = vmatprep.subr.mxu0 0.0
    %1906 = vmatpush1.msra.mxu0 0.0
    %1907 = vmatprep.subr.mxu0 0.0
    %1908 = vmatpush1.msra.mxu0 0.0
    %1909 = vmatprep.subr.mxu0 0.0
    %1910 = vmatpush1.msra.mxu0 0.0
    %1911 = vmatprep.subr.mxu0 0.0
    %1912 = vmatpush1.msra.mxu0 0.0
    %1913 = vmatprep.subr.mxu0 0.0
    %1914 = vmatpush1.msra.mxu0 0.0
    %1915 = vmatprep.subr.mxu0 0.0
    %1916 = vmatpush1.msra.mxu0 0.0
    %1917 = vmatprep.subr.mxu0 0.0
    %1918 = vmatpush1.msra.mxu0 0.0
    %1919 = vmatprep.mubr.f32.mxu0 0.0
    %1920 = vmatmul.mubr.f32.gmra.mrb[0].mxu0 %v1854
    %v1921 = vpop.f32.mrb[0].mxu0
    %v1922 = vadd.f32 0.0, %v1921
    %v1923 = vpop.f32.mrb[0].mxu0
    %1924 = vdwg.mxu0
    %v1925 = vmul.f32 %v1839, 0.001953125
    %v1926 = vmul.f32 %v1922, 0.001953125
    %v1927 = vmul.f32 %v1925, %v1925
    %v1928 = vsub.f32 %v1926, %v1927
    %v1929 = vadd.f32 %v1928, 1e-05
    %v1930 = vrsqrt.pop %v1929
    %v1931 = vadd.f32 %v272, 1.0
    %v1932 = vlaneseq
    %v1933 = vshrl.u32 %v1932, 7
    %v1934 = vsub.s32 0, %v1933
    %v1935 = vrot.slane %v1930, %v1934
    %1937 = vrot.lane.b32.xlu0 %v1931, 120
    %v1938 = vpop.permute.xlu0 %1937
    %v1940 = vmul.f32 %v1935, %v1938
    %v1941 = vlaneseq
    %v1942 = vshrl.u32 %v1941, 7
    %v1943 = vsub.s32 0, %v1942
    %v1944 = vrot.slane %v1925, %v1943
    %v1945 = vmul.f32 %v1944, %v1940
    %v1946 = vsub.f32 %v272, %v1945
    %vm1947 = vcmask 64512
    %v1949 = vsel %vm1947, %v1940, 0
    %1951 = vmatprep.subr.mxu0 0.0
    %1952 = vmatpush1.msra.mxu0 %v273
    %1953 = vmatprep.subr.mxu0 0.0
    %1954 = vmatpush1.msra.mxu0 0.0
    %1955 = vmatprep.subr.mxu0 0.0
    %1956 = vmatpush1.msra.mxu0 0.0
    %1957 = vmatprep.subr.mxu0 0.0
    %1958 = vmatpush1.msra.mxu0 0.0
    %1959 = vmatprep.subr.mxu0 0.0
    %1960 = vmatpush1.msra.mxu0 0.0
    %1961 = vmatprep.subr.mxu0 0.0
    %1962 = vmatpush1.msra.mxu0 0.0
    %1963 = vmatprep.subr.mxu0 0.0
    %1964 = vmatpush1.msra.mxu0 0.0
    %1965 = vmatprep.subr.mxu0 0.0
    %1966 = vmatpush1.msra.mxu0 0.0
    %1967 = vmatprep.subr.mxu0 0.0
    %1968 = vmatpush1.msra.mxu0 0.0
    %1969 = vmatprep.subr.mxu0 0.0
    %1970 = vmatpush1.msra.mxu0 0.0
    %1971 = vmatprep.subr.mxu0 0.0
    %1972 = vmatpush1.msra.mxu0 0.0
    %1973 = vmatprep.subr.mxu0 0.0
    %1974 = vmatpush1.msra.mxu0 0.0
    %1975 = vmatprep.subr.mxu0 0.0
    %1976 = vmatpush1.msra.mxu0 0.0
    %1977 = vmatprep.subr.mxu0 0.0
    %1978 = vmatpush1.msra.mxu0 0.0
    %1979 = vmatprep.subr.mxu0 0.0
    %1980 = vmatpush1.msra.mxu0 0.0
    %1981 = vmatprep.subr.mxu0 0.0
    %1982 = vmatpush1.msra.mxu0 0.0
    %1983 = vmatprep.subr.mxu0 0.0
    %1984 = vmatpush1.msra.mxu0 0.0
    %1985 = vmatprep.subr.mxu0 0.0
    %1986 = vmatpush1.msra.mxu0 0.0
    %1987 = vmatprep.subr.mxu0 0.0
    %1988 = vmatpush1.msra.mxu0 0.0
    %1989 = vmatprep.subr.mxu0 0.0
    %1990 = vmatpush1.msra.mxu0 0.0
    %1991 = vmatprep.subr.mxu0 0.0
    %1992 = vmatpush1.msra.mxu0 0.0
    %1993 = vmatprep.subr.mxu0 0.0
    %1994 = vmatpush1.msra.mxu0 0.0
    %1995 = vmatprep.subr.mxu0 0.0
    %1996 = vmatpush1.msra.mxu0 0.0
    %1997 = vmatprep.subr.mxu0 0.0
    %1998 = vmatpush1.msra.mxu0 0.0
    %1999 = vmatprep.subr.mxu0 0.0
    %2000 = vmatpush1.msra.mxu0 0.0
    %2001 = vmatprep.subr.mxu0 0.0
    %2002 = vmatpush1.msra.mxu0 0.0
    %2003 = vmatprep.subr.mxu0 0.0
    %2004 = vmatpush1.msra.mxu0 0.0
    %2005 = vmatprep.subr.mxu0 0.0
    %2006 = vmatpush1.msra.mxu0 0.0
    %2007 = vmatprep.subr.mxu0 0.0
    %2008 = vmatpush1.msra.mxu0 0.0
    %2009 = vmatprep.subr.mxu0 0.0
    %2010 = vmatpush1.msra.mxu0 0.0
    %2011 = vmatprep.subr.mxu0 0.0
    %2012 = vmatpush1.msra.mxu0 0.0
    %2013 = vmatprep.subr.mxu0 0.0
    %2014 = vmatpush1.msra.mxu0 0.0
    %2015 = vmatprep.mubr.f32.mxu0 0.0
    %2016 = vmatmul.mubr.f32.gmra.mrb[0].mxu0 %v1949
    %v2017 = vpop.f32.mrb[0].mxu0
    %v2018 = vadd.f32 0.0, %v2017
    %v2019 = vpop.f32.mrb[0].mxu0
    %2020 = vdwg.mxu0
    %vm2021 = vcmask 15360
    %v2023 = vsel %vm2021, %v308, 0
    %v2026 = vsel %vm2021, %v309, 0
    %v2029 = vsel %vm2021, %v310, 0
    %v2032 = vsel %vm2021, %v311, 0
    %vm2034 = vcmask 1041408
    %v2036 = vsel %vm2034, %v2018, 0
    %2038 = vmatprep.subr.mxu0 0.0
    %2039 = vmatpush1.msra.mxu0 %v2036
    %2040 = vmatprep.subr.mxu0 0.0
    %2041 = vmatpush1.msra.mxu0 0.0
    %2042 = vmatprep.subr.mxu0 0.0
    %2043 = vmatpush1.msra.mxu0 0.0
    %2044 = vmatprep.subr.mxu0 0.0
    %2045 = vmatpush1.msra.mxu0 0.0
    %2046 = vmatprep.subr.mxu0 0.0
    %2047 = vmatpush1.msra.mxu0 0.0
    %2048 = vmatprep.subr.mxu0 0.0
    %2049 = vmatpush1.msra.mxu0 0.0
    %2050 = vmatprep.subr.mxu0 0.0
    %2051 = vmatpush1.msra.mxu0 0.0
    %2052 = vmatprep.subr.mxu0 0.0
    %2053 = vmatpush1.msra.mxu0 0.0
    %2054 = vmatprep.subr.mxu0 0.0
    %2055 = vmatpush1.msra.mxu0 0.0
    %2056 = vmatprep.subr.mxu0 0.0
    %2057 = vmatpush1.msra.mxu0 0.0
    %2058 = vmatprep.subr.mxu0 0.0
    %2059 = vmatpush1.msra.mxu0 0.0
    %2060 = vmatprep.subr.mxu0 0.0
    %2061 = vmatpush1.msra.mxu0 0.0
    %2062 = vmatprep.subr.mxu0 0.0
    %2063 = vmatpush1.msra.mxu0 0.0
    %2064 = vmatprep.subr.mxu0 0.0
    %2065 = vmatpush1.msra.mxu0 0.0
    %2066 = vmatprep.subr.mxu0 0.0
    %2067 = vmatpush1.msra.mxu0 0.0
    %2068 = vmatprep.subr.mxu0 0.0
    %2069 = vmatpush1.msra.mxu0 0.0
    %2070 = vmatprep.subr.mxu0 0.0
    %2071 = vmatpush1.msra.mxu0 0.0
    %2072 = vmatprep.subr.mxu0 0.0
    %2073 = vmatpush1.msra.mxu0 0.0
    %2074 = vmatprep.subr.mxu0 0.0
    %2075 = vmatpush1.msra.mxu0 0.0
    %2076 = vmatprep.subr.mxu0 0.0
    %2077 = vmatpush1.msra.mxu0 0.0
    %2078 = vmatprep.subr.mxu0 0.0
    %2079 = vmatpush1.msra.mxu0 0.0
    %2080 = vmatprep.subr.mxu0 0.0
    %2081 = vmatpush1.msra.mxu0 0.0
    %2082 = vmatprep.subr.mxu0 0.0
    %2083 = vmatpush1.msra.mxu0 0.0
    %2084 = vmatprep.subr.mxu0 0.0
    %2085 = vmatpush1.msra.mxu0 0.0
    %2086 = vmatprep.subr.mxu0 0.0
    %2087 = vmatpush1.msra.mxu0 0.0
    %2088 = vmatprep.subr.mxu0 0.0
    %2089 = vmatpush1.msra.mxu0 0.0
    %2090 = vmatprep.subr.mxu0 0.0
    %2091 = vmatpush1.msra.mxu0 0.0
    %2092 = vmatprep.subr.mxu0 0.0
    %2093 = vmatpush1.msra.mxu0 0.0
    %2094 = vmatprep.subr.mxu0 0.0
    %2095 = vmatpush1.msra.mxu0 0.0
    %2096 = vmatprep.subr.mxu0 0.0
    %2097 = vmatpush1.msra.mxu0 0.0
    %2098 = vmatprep.subr.mxu0 0.0
    %2099 = vmatpush1.msra.mxu0 0.0
    %2100 = vmatprep.subr.mxu0 0.0
    %2101 = vmatpush1.msra.mxu0 0.0
    %2102 = vmatprep.mubr.f32.mxu0 0.0
    %2103 = vmatmul.mubr.f32.gmra.mrb[0].mxu0 %v2023
    %v2104 = vpop.f32.mrb[0].mxu0
    %v2105 = vadd.f32 0.0, %v2104
    %v2106 = vpop.f32.mrb[0].mxu0
    %2107 = vmatprep.mubr.f32.mxu0 0.0
    %2108 = vmatmul.mubr.f32.gmra.mrb[0].mxu0 %v2026
    %v2109 = vpop.f32.mrb[0].mxu0
    %v2110 = vadd.f32 0.0, %v2109
    %v2111 = vpop.f32.mrb[0].mxu0
    %2112 = vmatprep.mubr.f32.mxu0 0.0
    %2113 = vmatmul.mubr.f32.gmra.mrb[0].mxu0 %v2029
    %v2114 = vpop.f32.mrb[0].mxu0
    %v2115 = vadd.f32 0.0, %v2114
    %v2116 = vpop.f32.mrb[0].mxu0
    %2117 = vmatprep.mubr.f32.mxu0 0.0
    %2118 = vmatmul.mubr.f32.gmra.mrb[0].mxu0 %v2032
    %v2119 = vpop.f32.mrb[0].mxu0
    %v2120 = vadd.f32 0.0, %v2119
    %v2121 = vpop.f32.mrb[0].mxu0
    %2122 = vdwg.mxu0
    %v2124 = vsel %vm1947, %v1946, 0
    %2126 = vmatprep.subr.mxu0 0.0
    %2127 = vmatpush1.msra.mxu0 %v273
    %2128 = vmatprep.subr.mxu0 0.0
    %2129 = vmatpush1.msra.mxu0 0.0
    %2130 = vmatprep.subr.mxu0 0.0
    %2131 = vmatpush1.msra.mxu0 0.0
    %2132 = vmatprep.subr.mxu0 0.0
    %2133 = vmatpush1.msra.mxu0 0.0
    %2134 = vmatprep.subr.mxu0 0.0
    %2135 = vmatpush1.msra.mxu0 0.0
    %2136 = vmatprep.subr.mxu0 0.0
    %2137 = vmatpush1.msra.mxu0 0.0
    %2138 = vmatprep.subr.mxu0 0.0
    %2139 = vmatpush1.msra.mxu0 0.0
    %2140 = vmatprep.subr.mxu0 0.0
    %2141 = vmatpush1.msra.mxu0 0.0
    %2142 = vmatprep.subr.mxu0 0.0
    %2143 = vmatpush1.msra.mxu0 0.0
    %2144 = vmatprep.subr.mxu0 0.0
    %2145 = vmatpush1.msra.mxu0 0.0
    %2146 = vmatprep.subr.mxu0 0.0
    %2147 = vmatpush1.msra.mxu0 0.0
    %2148 = vmatprep.subr.mxu0 0.0
    %2149 = vmatpush1.msra.mxu0 0.0
    %2150 = vmatprep.subr.mxu0 0.0
    %2151 = vmatpush1.msra.mxu0 0.0
    %2152 = vmatprep.subr.mxu0 0.0
    %2153 = vmatpush1.msra.mxu0 0.0
    %2154 = vmatprep.subr.mxu0 0.0
    %2155 = vmatpush1.msra.mxu0 0.0
    %2156 = vmatprep.subr.mxu0 0.0
    %2157 = vmatpush1.msra.mxu0 0.0
    %2158 = vmatprep.subr.mxu0 0.0
    %2159 = vmatpush1.msra.mxu0 0.0
    %2160 = vmatprep.subr.mxu0 0.0
    %2161 = vmatpush1.msra.mxu0 0.0
    %2162 = vmatprep.subr.mxu0 0.0
    %2163 = vmatpush1.msra.mxu0 0.0
    %2164 = vmatprep.subr.mxu0 0.0
    %2165 = vmatpush1.msra.mxu0 0.0
    %2166 = vmatprep.subr.mxu0 0.0
    %2167 = vmatpush1.msra.mxu0 0.0
    %2168 = vmatprep.subr.mxu0 0.0
    %2169 = vmatpush1.msra.mxu0 0.0
    %2170 = vmatprep.subr.mxu0 0.0
    %2171 = vmatpush1.msra.mxu0 0.0
    %2172 = vmatprep.subr.mxu0 0.0
    %2173 = vmatpush1.msra.mxu0 0.0
    %2174 = vmatprep.subr.mxu0 0.0
    %2175 = vmatpush1.msra.mxu0 0.0
    %2176 = vmatprep.subr.mxu0 0.0
    %2177 = vmatpush1.msra.mxu0 0.0
    %2178 = vmatprep.subr.mxu0 0.0
    %2179 = vmatpush1.msra.mxu0 0.0
    %2180 = vmatprep.subr.mxu0 0.0
    %2181 = vmatpush1.msra.mxu0 0.0
    %2182 = vmatprep.subr.mxu0 0.0
    %2183 = vmatpush1.msra.mxu0 0.0
    %2184 = vmatprep.subr.mxu0 0.0
    %2185 = vmatpush1.msra.mxu0 0.0
    %2186 = vmatprep.subr.mxu0 0.0
    %2187 = vmatpush1.msra.mxu0 0.0
    %2188 = vmatprep.subr.mxu0 0.0
    %2189 = vmatpush1.msra.mxu0 0.0
    %2190 = vmatprep.mubr.f32.mxu0 0.0
    %2191 = vmatmul.mubr.f32.gmra.mrb[0].mxu0 %v2124
    %v2192 = vpop.f32.mrb[0].mxu0
    %v2193 = vadd.f32 0.0, %v2192
    %v2194 = vpop.f32.mrb[0].mxu0
    %2195 = vdwg.mxu0
    %v2197 = vsel %vm2034, %v2193, 0
    %2199 = vmatprep.subr.mxu0 0.0
    %2200 = vmatpush1.msra.mxu0 %v2197
    %2201 = vmatprep.subr.mxu0 0.0
    %2202 = vmatpush1.msra.mxu0 0.0
    %2203 = vmatprep.subr.mxu0 0.0
    %2204 = vmatpush1.msra.mxu0 0.0
    %2205 = vmatprep.subr.mxu0 0.0
    %2206 = vmatpush1.msra.mxu0 0.0
    %2207 = vmatprep.subr.mxu0 0.0
    %2208 = vmatpush1.msra.mxu0 0.0
    %2209 = vmatprep.subr.mxu0 0.0
    %2210 = vmatpush1.msra.mxu0 0.0
    %2211 = vmatprep.subr.mxu0 0.0
    %2212 = vmatpush1.msra.mxu0 0.0
    %2213 = vmatprep.subr.mxu0 0.0
    %2214 = vmatpush1.msra.mxu0 0.0
    %2215 = vmatprep.subr.mxu0 0.0
    %2216 = vmatpush1.msra.mxu0 0.0
    %2217 = vmatprep.subr.mxu0 0.0
    %2218 = vmatpush1.msra.mxu0 0.0
    %2219 = vmatprep.subr.mxu0 0.0
    %2220 = vmatpush1.msra.mxu0 0.0
    %2221 = vmatprep.subr.mxu0 0.0
    %2222 = vmatpush1.msra.mxu0 0.0
    %2223 = vmatprep.subr.mxu0 0.0
    %2224 = vmatpush1.msra.mxu0 0.0
    %2225 = vmatprep.subr.mxu0 0.0
    %2226 = vmatpush1.msra.mxu0 0.0
    %2227 = vmatprep.subr.mxu0 0.0
    %2228 = vmatpush1.msra.mxu0 0.0
    %2229 = vmatprep.subr.mxu0 0.0
    %2230 = vmatpush1.msra.mxu0 0.0
    %2231 = vmatprep.subr.mxu0 0.0
    %2232 = vmatpush1.msra.mxu0 0.0
    %2233 = vmatprep.subr.mxu0 0.0
    %2234 = vmatpush1.msra.mxu0 0.0
    %2235 = vmatprep.subr.mxu0 0.0
    %2236 = vmatpush1.msra.mxu0 0.0
    %2237 = vmatprep.subr.mxu0 0.0
    %2238 = vmatpush1.msra.mxu0 0.0
    %2239 = vmatprep.subr.mxu0 0.0
    %2240 = vmatpush1.msra.mxu0 0.0
    %2241 = vmatprep.subr.mxu0 0.0
    %2242 = vmatpush1.msra.mxu0 0.0
    %2243 = vmatprep.subr.mxu0 0.0
    %2244 = vmatpush1.msra.mxu0 0.0
    %2245 = vmatprep.subr.mxu0 0.0
    %2246 = vmatpush1.msra.mxu0 0.0
    %2247 = vmatprep.subr.mxu0 0.0
    %2248 = vmatpush1.msra.mxu0 0.0
    %2249 = vmatprep.subr.mxu0 0.0
    %2250 = vmatpush1.msra.mxu0 0.0
    %2251 = vmatprep.subr.mxu0 0.0
    %2252 = vmatpush1.msra.mxu0 0.0
    %2253 = vmatprep.subr.mxu0 0.0
    %2254 = vmatpush1.msra.mxu0 0.0
    %2255 = vmatprep.subr.mxu0 0.0
    %2256 = vmatpush1.msra.mxu0 0.0
    %2257 = vmatprep.subr.mxu0 0.0
    %2258 = vmatpush1.msra.mxu0 0.0
    %2259 = vmatprep.subr.mxu0 0.0
    %2260 = vmatpush1.msra.mxu0 0.0
    %2261 = vmatprep.subr.mxu0 0.0
    %2262 = vmatpush1.msra.mxu0 0.0
    %2263 = vmatprep.mubr.f32.mxu0 0.0
    %2264 = vmatmul.mubr.f32.gmra.mrb[0].mxu0 %v2023
    %v2265 = vpop.f32.mrb[0].mxu0
    %v2266 = vadd.f32 0.0, %v2265
    %v2267 = vpop.f32.mrb[0].mxu0
    %2268 = vmatprep.mubr.f32.mxu0 0.0
    %2269 = vmatmul.mubr.f32.gmra.mrb[0].mxu0 %v2026
    %v2270 = vpop.f32.mrb[0].mxu0
    %v2271 = vadd.f32 0.0, %v2270
    %v2272 = vpop.f32.mrb[0].mxu0
    %2273 = vmatprep.mubr.f32.mxu0 0.0
    %2274 = vmatmul.mubr.f32.gmra.mrb[0].mxu0 %v2029
    %v2275 = vpop.f32.mrb[0].mxu0
    %v2276 = vadd.f32 0.0, %v2275
    %v2277 = vpop.f32.mrb[0].mxu0
    %2278 = vmatprep.mubr.f32.mxu0 0.0
    %2279 = vmatmul.mubr.f32.gmra.mrb[0].mxu0 %v2032
    %v2280 = vpop.f32.mrb[0].mxu0
    %v2281 = vadd.f32 0.0, %v2280
    %v2282 = vpop.f32.mrb[0].mxu0
    %2283 = vdwg.mxu0
    %v2284 = vmul.f32 %v1759, %v2105
    %v2285 = vmul.f32 %v1760, %v2110
    %v2286 = vmul.f32 %v1761, %v2115
    %v2287 = vmul.f32 %v1762, %v2120
    %v2288 = vadd.f32 %v2284, %v2266
    %v2289 = vadd.f32 %v2285, %v2271
    %v2290 = vadd.f32 %v2286, %v2276
    %v2291 = vadd.f32 %v2287, %v2281
    %v2292 = vmax.f32 %v2288, 0.0
    %v2293 = vmax.f32 %v2289, 0.0
    %v2294 = vmax.f32 %v2290, 0.0
    %v2295 = vmax.f32 %v2291, 0.0
    %v2296 = vld [vmem:[#allocation13] sm:$0xff]
    %v2297 = vld [vmem:[#allocation13 + $0x8] sm:$0xff]
    %v2299 = vsel %vm322, %v2296, 0
    %v2302 = vsel %vm322, %v2297, 0
    %2304 = vmatprep.subr.mxu0 0.0
    %2305 = vmatpush1.msra.mxu0 %v2292
    %2306 = vmatprep.subr.mxu0 0.0
    %2307 = vmatpush1.msra.mxu0 %v2293
    %2308 = vmatprep.subr.mxu0 0.0
    %2309 = vmatpush1.msra.mxu0 %v2294
    %2310 = vmatprep.subr.mxu0 0.0
    %2311 = vmatpush1.msra.mxu0 %v2295
    %2312 = vmatprep.subr.mxu0 0.0
    %2313 = vmatpush1.msra.mxu0 0.0
    %2314 = vmatprep.subr.mxu0 0.0
    %2315 = vmatpush1.msra.mxu0 0.0
    %2316 = vmatprep.subr.mxu0 0.0
    %2317 = vmatpush1.msra.mxu0 0.0
    %2318 = vmatprep.subr.mxu0 0.0
    %2319 = vmatpush1.msra.mxu0 0.0
    %2320 = vmatprep.subr.mxu0 0.0
    %2321 = vmatpush1.msra.mxu0 0.0
    %2322 = vmatprep.subr.mxu0 0.0
    %2323 = vmatpush1.msra.mxu0 0.0
    %2324 = vmatprep.subr.mxu0 0.0
    %2325 = vmatpush1.msra.mxu0 0.0
    %2326 = vmatprep.subr.mxu0 0.0
    %2327 = vmatpush1.msra.mxu0 0.0
    %2328 = vmatprep.subr.mxu0 0.0
    %2329 = vmatpush1.msra.mxu0 0.0
    %2330 = vmatprep.subr.mxu0 0.0
    %2331 = vmatpush1.msra.mxu0 0.0
    %2332 = vmatprep.subr.mxu0 0.0
    %2333 = vmatpush1.msra.mxu0 0.0
    %2334 = vmatprep.subr.mxu0 0.0
    %2335 = vmatpush1.msra.mxu0 0.0
    %2336 = vmatprep.subr.mxu0 0.0
    %2337 = vmatpush1.msra.mxu0 0.0
    %2338 = vmatprep.subr.mxu0 0.0
    %2339 = vmatpush1.msra.mxu0 0.0
    %2340 = vmatprep.subr.mxu0 0.0
    %2341 = vmatpush1.msra.mxu0 0.0
    %2342 = vmatprep.subr.mxu0 0.0
    %2343 = vmatpush1.msra.mxu0 0.0
    %2344 = vmatprep.subr.mxu0 0.0
    %2345 = vmatpush1.msra.mxu0 0.0
    %2346 = vmatprep.subr.mxu0 0.0
    %2347 = vmatpush1.msra.mxu0 0.0
    %2348 = vmatprep.subr.mxu0 0.0
    %2349 = vmatpush1.msra.mxu0 0.0
    %2350 = vmatprep.subr.mxu0 0.0
    %2351 = vmatpush1.msra.mxu0 0.0
    %2352 = vmatprep.subr.mxu0 0.0
    %2353 = vmatpush1.msra.mxu0 0.0
    %2354 = vmatprep.subr.mxu0 0.0
    %2355 = vmatpush1.msra.mxu0 0.0
    %2356 = vmatprep.subr.mxu0 0.0
    %2357 = vmatpush1.msra.mxu0 0.0
    %2358 = vmatprep.subr.mxu0 0.0
    %2359 = vmatpush1.msra.mxu0 0.0
    %2360 = vmatprep.subr.mxu0 0.0
    %2361 = vmatpush1.msra.mxu0 0.0
    %2362 = vmatprep.subr.mxu0 0.0
    %2363 = vmatpush1.msra.mxu0 0.0
    %2364 = vmatprep.subr.mxu0 0.0
    %2365 = vmatpush1.msra.mxu0 0.0
    %2366 = vmatprep.subr.mxu0 0.0
    %2367 = vmatpush1.msra.mxu0 0.0
    %2368 = vmatprep.mubr.f32.mxu0 0.0
    %2369 = vmatmul.mubr.f32.gmra.mrb[0].mxu0 %v2299
    %v2370 = vpop.f32.mrb[0].mxu0
    %v2371 = vadd.f32 0.0, %v2370
    %v2372 = vpop.f32.mrb[0].mxu0
    %2373 = vmatprep.mubr.f32.mxu0 0.0
    %2374 = vmatmul.mubr.f32.gmra.mrb[0].mxu0 %v2302
    %v2375 = vpop.f32.mrb[0].mxu0
    %v2376 = vadd.f32 0.0, %v2375
    %v2377 = vpop.f32.mrb[0].mxu0
    %2378 = vdwg.mxu0
    %v2379 = vld [vmem:[%s7] sm:$0xff]
    %v2380 = vld [vmem:[%s7 + $0x8] sm:$0xff]
    %v2381 = vld [vmem:[%s7 + $0x10] sm:$0xff]
    %v2382 = vld [vmem:[%s7 + $0x18] sm:$0xff]
    %v2383 = vld [vmem:[%s7 + $0x20] sm:$0xff]
    %v2384 = vld [vmem:[%s7 + $0x28] sm:$0xff]
    %v2385 = vld [vmem:[%s7 + $0x30] sm:$0xff]
    %v2386 = vld [vmem:[%s7 + $0x38] sm:$0xff]
    %v2387 = vld [vmem:[%s7 + $0x40] sm:$0xff]
    %v2388 = vld [vmem:[%s7 + $0x48] sm:$0xff]
    %v2389 = vld [vmem:[%s7 + $0x50] sm:$0xff]
    %v2390 = vld [vmem:[%s7 + $0x58] sm:$0xff]
    %v2391 = vld [vmem:[%s7 + $0x60] sm:$0xff]
    %v2392 = vld [vmem:[%s7 + $0x68] sm:$0xff]
    %v2393 = vld [vmem:[%s7 + $0x70] sm:$0xff]
    %v2394 = vld [vmem:[%s7 + $0x78] sm:$0xff]
    %s2395 = scalar_lea.vmem [#allocation13], 16
    %v2396 = vld [vmem:[%s2395] sm:$0xff]
    %v2397 = vld [vmem:[%s2395 + $0x8] sm:$0xff]
    %v2399 = vsel %vm322, %v2396, 0
    %v2402 = vsel %vm322, %v2397, 0
    %2404 = vmatprep.subr.mxu0 0.0
    %2405 = vmatpush1.msra.mxu0 %v2292
    %2406 = vmatprep.subr.mxu0 0.0
    %2407 = vmatpush1.msra.mxu0 %v2293
    %2408 = vmatprep.subr.mxu0 0.0
    %2409 = vmatpush1.msra.mxu0 %v2294
    %2410 = vmatprep.subr.mxu0 0.0
    %2411 = vmatpush1.msra.mxu0 %v2295
    %2412 = vmatprep.subr.mxu0 0.0
    %2413 = vmatpush1.msra.mxu0 0.0
    %2414 = vmatprep.subr.mxu0 0.0
    %2415 = vmatpush1.msra.mxu0 0.0
    %2416 = vmatprep.subr.mxu0 0.0
    %2417 = vmatpush1.msra.mxu0 0.0
    %2418 = vmatprep.subr.mxu0 0.0
    %2419 = vmatpush1.msra.mxu0 0.0
    %2420 = vmatprep.subr.mxu0 0.0
    %2421 = vmatpush1.msra.mxu0 0.0
    %2422 = vmatprep.subr.mxu0 0.0
    %2423 = vmatpush1.msra.mxu0 0.0
    %2424 = vmatprep.subr.mxu0 0.0
    %2425 = vmatpush1.msra.mxu0 0.0
    %2426 = vmatprep.subr.mxu0 0.0
    %2427 = vmatpush1.msra.mxu0 0.0
    %2428 = vmatprep.subr.mxu0 0.0
    %2429 = vmatpush1.msra.mxu0 0.0
    %2430 = vmatprep.subr.mxu0 0.0
    %2431 = vmatpush1.msra.mxu0 0.0
    %2432 = vmatprep.subr.mxu0 0.0
    %2433 = vmatpush1.msra.mxu0 0.0
    %2434 = vmatprep.subr.mxu0 0.0
    %2435 = vmatpush1.msra.mxu0 0.0
    %2436 = vmatprep.subr.mxu0 0.0
    %2437 = vmatpush1.msra.mxu0 0.0
    %2438 = vmatprep.subr.mxu0 0.0
    %2439 = vmatpush1.msra.mxu0 0.0
    %2440 = vmatprep.subr.mxu0 0.0
    %2441 = vmatpush1.msra.mxu0 0.0
    %2442 = vmatprep.subr.mxu0 0.0
    %2443 = vmatpush1.msra.mxu0 0.0
    %2444 = vmatprep.subr.mxu0 0.0
    %2445 = vmatpush1.msra.mxu0 0.0
    %2446 = vmatprep.subr.mxu0 0.0
    %2447 = vmatpush1.msra.mxu0 0.0
    %2448 = vmatprep.subr.mxu0 0.0
    %2449 = vmatpush1.msra.mxu0 0.0
    %2450 = vmatprep.subr.mxu0 0.0
    %2451 = vmatpush1.msra.mxu0 0.0
    %2452 = vmatprep.subr.mxu0 0.0
    %2453 = vmatpush1.msra.mxu0 0.0
    %2454 = vmatprep.subr.mxu0 0.0
    %2455 = vmatpush1.msra.mxu0 0.0
    %2456 = vmatprep.subr.mxu0 0.0
    %2457 = vmatpush1.msra.mxu0 0.0
    %2458 = vmatprep.subr.mxu0 0.0
    %2459 = vmatpush1.msra.mxu0 0.0
    %2460 = vmatprep.subr.mxu0 0.0
    %2461 = vmatpush1.msra.mxu0 0.0
    %2462 = vmatprep.subr.mxu0 0.0
    %2463 = vmatpush1.msra.mxu0 0.0
    %2464 = vmatprep.subr.mxu0 0.0
    %2465 = vmatpush1.msra.mxu0 0.0
    %2466 = vmatprep.subr.mxu0 0.0
    %2467 = vmatpush1.msra.mxu0 0.0
    %2468 = vmatprep.mubr.f32.mxu0 0.0
    %2469 = vmatmul.mubr.f32.gmra.mrb[0].mxu0 %v2399
    %v2470 = vpop.f32.mrb[0].mxu0
    %v2471 = vadd.f32 0.0, %v2470
    %v2472 = vpop.f32.mrb[0].mxu0
    %2473 = vmatprep.mubr.f32.mxu0 0.0
    %2474 = vmatmul.mubr.f32.gmra.mrb[0].mxu0 %v2402
    %v2475 = vpop.f32.mrb[0].mxu0
    %v2476 = vadd.f32 0.0, %v2475
    %v2477 = vpop.f32.mrb[0].mxu0
    %2478 = vdwg.mxu0
    %s2479 = scalar_lea.vmem %s7, 128
    %v2480 = vld [vmem:[%s2479] sm:$0xff]
    %v2481 = vld [vmem:[%s2479 + $0x8] sm:$0xff]
    %v2482 = vld [vmem:[%s2479 + $0x10] sm:$0xff]
    %v2483 = vld [vmem:[%s2479 + $0x18] sm:$0xff]
    %v2484 = vld [vmem:[%s2479 + $0x20] sm:$0xff]
    %v2485 = vld [vmem:[%s2479 + $0x28] sm:$0xff]
    %v2486 = vld [vmem:[%s2479 + $0x30] sm:$0xff]
    %v2487 = vld [vmem:[%s2479 + $0x38] sm:$0xff]
    %v2488 = vld [vmem:[%s2479 + $0x40] sm:$0xff]
    %v2489 = vld [vmem:[%s2479 + $0x48] sm:$0xff]
    %v2490 = vld [vmem:[%s2479 + $0x50] sm:$0xff]
    %v2491 = vld [vmem:[%s2479 + $0x58] sm:$0xff]
    %v2492 = vld [vmem:[%s2479 + $0x60] sm:$0xff]
    %v2493 = vld [vmem:[%s2479 + $0x68] sm:$0xff]
    %v2494 = vld [vmem:[%s2479 + $0x70] sm:$0xff]
    %v2495 = vld [vmem:[%s2479 + $0x78] sm:$0xff]
    %2496 = vmatprep.subr.mxu0 0.0
    %2497 = vmatpush1.msra.mxu0 %v2480
    %2498 = vmatprep.subr.mxu0 0.0
    %2499 = vmatpush1.msra.mxu0 %v2481
    %2500 = vmatprep.subr.mxu0 0.0
    %2501 = vmatpush1.msra.mxu0 %v2482
    %2502 = vmatprep.subr.mxu0 0.0
    %2503 = vmatpush1.msra.mxu0 %v2483
    %2504 = vmatprep.subr.mxu0 0.0
    %2505 = vmatpush1.msra.mxu0 %v2484
    %2506 = vmatprep.subr.mxu0 0.0
    %2507 = vmatpush1.msra.mxu0 %v2485
    %2508 = vmatprep.subr.mxu0 0.0
    %2509 = vmatpush1.msra.mxu0 %v2486
    %2510 = vmatprep.subr.mxu0 0.0
    %2511 = vmatpush1.msra.mxu0 %v2487
    %2512 = vmatprep.subr.mxu0 0.0
    %2513 = vmatpush1.msra.mxu0 %v2488
    %2514 = vmatprep.subr.mxu0 0.0
    %2515 = vmatpush1.msra.mxu0 %v2489
    %2516 = vmatprep.subr.mxu0 0.0
    %2517 = vmatpush1.msra.mxu0 %v2490
    %2518 = vmatprep.subr.mxu0 0.0
    %2519 = vmatpush1.msra.mxu0 %v2491
    %2520 = vmatprep.subr.mxu0 0.0
    %2521 = vmatpush1.msra.mxu0 %v2492
    %2522 = vmatprep.subr.mxu0 0.0
    %2523 = vmatpush1.msra.mxu0 %v2493
    %2524 = vmatprep.subr.mxu0 0.0
    %2525 = vmatpush1.msra.mxu0 %v2494
    %2526 = vmatprep.subr.mxu0 0.0
    %2527 = vmatpush1.msra.mxu0 %v2495
    %2528 = vmatprep.subr.mxu0 0.0
    %2529 = vmatpush1.msra.mxu0 0.0
    %2530 = vmatprep.subr.mxu0 0.0
    %2531 = vmatpush1.msra.mxu0 0.0
    %2532 = vmatprep.subr.mxu0 0.0
    %2533 = vmatpush1.msra.mxu0 0.0
    %2534 = vmatprep.subr.mxu0 0.0
    %2535 = vmatpush1.msra.mxu0 0.0
    %2536 = vmatprep.subr.mxu0 0.0
    %2537 = vmatpush1.msra.mxu0 0.0
    %2538 = vmatprep.subr.mxu0 0.0
    %2539 = vmatpush1.msra.mxu0 0.0
    %2540 = vmatprep.subr.mxu0 0.0
    %2541 = vmatpush1.msra.mxu0 0.0
    %2542 = vmatprep.subr.mxu0 0.0
    %2543 = vmatpush1.msra.mxu0 0.0
    %2544 = vmatprep.subr.mxu0 0.0
    %2545 = vmatpush1.msra.mxu0 0.0
    %2546 = vmatprep.subr.mxu0 0.0
    %2547 = vmatpush1.msra.mxu0 0.0
    %2548 = vmatprep.subr.mxu0 0.0
    %2549 = vmatpush1.msra.mxu0 0.0
    %2550 = vmatprep.subr.mxu0 0.0
    %2551 = vmatpush1.msra.mxu0 0.0
    %2552 = vmatprep.subr.mxu0 0.0
    %2553 = vmatpush1.msra.mxu0 0.0
    %2554 = vmatprep.subr.mxu0 0.0
    %2555 = vmatpush1.msra.mxu0 0.0
    %2556 = vmatprep.subr.mxu0 0.0
    %2557 = vmatpush1.msra.mxu0 0.0
    %2558 = vmatprep.subr.mxu0 0.0
    %2559 = vmatpush1.msra.mxu0 0.0
    %2560 = vmatprep.mubr.f32.mxu0 0.0
    %2561 = vmatmul.mubr.f32.gmra.mrb[0].mxu0 %v2471
    %v2562 = vpop.f32.mrb[0].mxu0
    %v2563 = vadd.f32 0.0, %v2562
    %v2564 = vpop.f32.mrb[0].mxu0
    %2565 = vmatprep.mubr.f32.mxu0 0.0
    %2566 = vmatmul.mubr.f32.gmra.mrb[0].mxu0 %v2476
    %v2567 = vpop.f32.mrb[0].mxu0
    %v2568 = vadd.f32 0.0, %v2567
    %v2569 = vpop.f32.mrb[0].mxu0
    %2570 = vdwg.mxu0
    %2571 = vmatprep.subr.mxu0 0.0
    %2572 = vmatpush1.msra.mxu0 %v2379
    %2573 = vmatprep.subr.mxu0 0.0
    %2574 = vmatpush1.msra.mxu0 %v2380
    %2575 = vmatprep.subr.mxu0 0.0
    %2576 = vmatpush1.msra.mxu0 %v2381
    %2577 = vmatprep.subr.mxu0 0.0
    %2578 = vmatpush1.msra.mxu0 %v2382
    %2579 = vmatprep.subr.mxu0 0.0
    %2580 = vmatpush1.msra.mxu0 %v2383
    %2581 = vmatprep.subr.mxu0 0.0
    %2582 = vmatpush1.msra.mxu0 %v2384
    %2583 = vmatprep.subr.mxu0 0.0
    %2584 = vmatpush1.msra.mxu0 %v2385
    %2585 = vmatprep.subr.mxu0 0.0
    %2586 = vmatpush1.msra.mxu0 %v2386
    %2587 = vmatprep.subr.mxu0 0.0
    %2588 = vmatpush1.msra.mxu0 %v2387
    %2589 = vmatprep.subr.mxu0 0.0
    %2590 = vmatpush1.msra.mxu0 %v2388
    %2591 = vmatprep.subr.mxu0 0.0
    %2592 = vmatpush1.msra.mxu0 %v2389
    %2593 = vmatprep.subr.mxu0 0.0
    %2594 = vmatpush1.msra.mxu0 %v2390
    %2595 = vmatprep.subr.mxu0 0.0
    %2596 = vmatpush1.msra.mxu0 %v2391
    %2597 = vmatprep.subr.mxu0 0.0
    %2598 = vmatpush1.msra.mxu0 %v2392
    %2599 = vmatprep.subr.mxu0 0.0
    %2600 = vmatpush1.msra.mxu0 %v2393
    %2601 = vmatprep.subr.mxu0 0.0
    %2602 = vmatpush1.msra.mxu0 %v2394
    %2603 = vmatprep.subr.mxu0 0.0
    %2604 = vmatpush1.msra.mxu0 0.0
    %2605 = vmatprep.subr.mxu0 0.0
    %2606 = vmatpush1.msra.mxu0 0.0
    %2607 = vmatprep.subr.mxu0 0.0
    %2608 = vmatpush1.msra.mxu0 0.0
    %2609 = vmatprep.subr.mxu0 0.0
    %2610 = vmatpush1.msra.mxu0 0.0
    %2611 = vmatprep.subr.mxu0 0.0
    %2612 = vmatpush1.msra.mxu0 0.0
    %2613 = vmatprep.subr.mxu0 0.0
    %2614 = vmatpush1.msra.mxu0 0.0
    %2615 = vmatprep.subr.mxu0 0.0
    %2616 = vmatpush1.msra.mxu0 0.0
    %2617 = vmatprep.subr.mxu0 0.0
    %2618 = vmatpush1.msra.mxu0 0.0
    %2619 = vmatprep.subr.mxu0 0.0
    %2620 = vmatpush1.msra.mxu0 0.0
    %2621 = vmatprep.subr.mxu0 0.0
    %2622 = vmatpush1.msra.mxu0 0.0
    %2623 = vmatprep.subr.mxu0 0.0
    %2624 = vmatpush1.msra.mxu0 0.0
    %2625 = vmatprep.subr.mxu0 0.0
    %2626 = vmatpush1.msra.mxu0 0.0
    %2627 = vmatprep.subr.mxu0 0.0
    %2628 = vmatpush1.msra.mxu0 0.0
    %2629 = vmatprep.subr.mxu0 0.0
    %2630 = vmatpush1.msra.mxu0 0.0
    %2631 = vmatprep.subr.mxu0 0.0
    %2632 = vmatpush1.msra.mxu0 0.0
    %2633 = vmatprep.subr.mxu0 0.0
    %2634 = vmatpush1.msra.mxu0 0.0
    %2635 = vmatprep.mubr.f32.mxu0 0.0
    %2636 = vmatmul.mubr.f32.gmra.mrb[0].mxu0 %v2371
    %v2637 = vpop.f32.mrb[0].mxu0
    %v2638 = vadd.f32 %v2563, %v2637
    %v2639 = vpop.f32.mrb[0].mxu0
    %2640 = vmatprep.mubr.f32.mxu0 0.0
    %2641 = vmatmul.mubr.f32.gmra.mrb[0].mxu0 %v2376
    %v2642 = vpop.f32.mrb[0].mxu0
    %v2643 = vadd.f32 %v2568, %v2642
    %v2644 = vpop.f32.mrb[0].mxu0
    %2645 = vdwg.mxu0
    %s2646 = scalar_lea.vmem [#allocation13], 32
    %v2647 = vld [vmem:[%s2646] sm:$0xff]
    %v2648 = vld [vmem:[%s2646 + $0x8] sm:$0xff]
    %v2650 = vsel %vm322, %v2647, 0
    %v2653 = vsel %vm322, %v2648, 0
    %2655 = vmatprep.subr.mxu0 0.0
    %2656 = vmatpush1.msra.mxu0 %v2292
    %2657 = vmatprep.subr.mxu0 0.0
    %2658 = vmatpush1.msra.mxu0 %v2293
    %2659 = vmatprep.subr.mxu0 0.0
    %2660 = vmatpush1.msra.mxu0 %v2294
    %2661 = vmatprep.subr.mxu0 0.0
    %2662 = vmatpush1.msra.mxu0 %v2295
    %2663 = vmatprep.subr.mxu0 0.0
    %2664 = vmatpush1.msra.mxu0 0.0
    %2665 = vmatprep.subr.mxu0 0.0
    %2666 = vmatpush1.msra.mxu0 0.0
    %2667 = vmatprep.subr.mxu0 0.0
    %2668 = vmatpush1.msra.mxu0 0.0
    %2669 = vmatprep.subr.mxu0 0.0
    %2670 = vmatpush1.msra.mxu0 0.0
    %2671 = vmatprep.subr.mxu0 0.0
    %2672 = vmatpush1.msra.mxu0 0.0
    %2673 = vmatprep.subr.mxu0 0.0
    %2674 = vmatpush1.msra.mxu0 0.0
    %2675 = vmatprep.subr.mxu0 0.0
    %2676 = vmatpush1.msra.mxu0 0.0
    %2677 = vmatprep.subr.mxu0 0.0
    %2678 = vmatpush1.msra.mxu0 0.0
    %2679 = vmatprep.subr.mxu0 0.0
    %2680 = vmatpush1.msra.mxu0 0.0
    %2681 = vmatprep.subr.mxu0 0.0
    %2682 = vmatpush1.msra.mxu0 0.0
    %2683 = vmatprep.subr.mxu0 0.0
    %2684 = vmatpush1.msra.mxu0 0.0
    %2685 = vmatprep.subr.mxu0 0.0
    %2686 = vmatpush1.msra.mxu0 0.0
    %2687 = vmatprep.subr.mxu0 0.0
    %2688 = vmatpush1.msra.mxu0 0.0
    %2689 = vmatprep.subr.mxu0 0.0
    %2690 = vmatpush1.msra.mxu0 0.0
    %2691 = vmatprep.subr.mxu0 0.0
    %2692 = vmatpush1.msra.mxu0 0.0
    %2693 = vmatprep.subr.mxu0 0.0
    %2694 = vmatpush1.msra.mxu0 0.0
    %2695 = vmatprep.subr.mxu0 0.0
    %2696 = vmatpush1.msra.mxu0 0.0
    %2697 = vmatprep.subr.mxu0 0.0
    %2698 = vmatpush1.msra.mxu0 0.0
    %2699 = vmatprep.subr.mxu0 0.0
    %2700 = vmatpush1.msra.mxu0 0.0
    %2701 = vmatprep.subr.mxu0 0.0
    %2702 = vmatpush1.msra.mxu0 0.0
    %2703 = vmatprep.subr.mxu0 0.0
    %2704 = vmatpush1.msra.mxu0 0.0
    %2705 = vmatprep.subr.mxu0 0.0
    %2706 = vmatpush1.msra.mxu0 0.0
    %2707 = vmatprep.subr.mxu0 0.0
    %2708 = vmatpush1.msra.mxu0 0.0
    %2709 = vmatprep.subr.mxu0 0.0
    %2710 = vmatpush1.msra.mxu0 0.0
    %2711 = vmatprep.subr.mxu0 0.0
    %2712 = vmatpush1.msra.mxu0 0.0
    %2713 = vmatprep.subr.mxu0 0.0
    %2714 = vmatpush1.msra.mxu0 0.0
    %2715 = vmatprep.subr.mxu0 0.0
    %2716 = vmatpush1.msra.mxu0 0.0
    %2717 = vmatprep.subr.mxu0 0.0
    %2718 = vmatpush1.msra.mxu0 0.0
    %2719 = vmatprep.mubr.f32.mxu0 0.0
    %2720 = vmatmul.mubr.f32.gmra.mrb[0].mxu0 %v2650
    %v2721 = vpop.f32.mrb[0].mxu0
    %v2722 = vadd.f32 0.0, %v2721
    %v2723 = vpop.f32.mrb[0].mxu0
    %2724 = vmatprep.mubr.f32.mxu0 0.0
    %2725 = vmatmul.mubr.f32.gmra.mrb[0].mxu0 %v2653
    %v2726 = vpop.f32.mrb[0].mxu0
    %v2727 = vadd.f32 0.0, %v2726
    %v2728 = vpop.f32.mrb[0].mxu0
    %2729 = vdwg.mxu0
    %s2730 = scalar_lea.vmem %s7, 256
    %v2731 = vld [vmem:[%s2730] sm:$0xff]
    %v2732 = vld [vmem:[%s2730 + $0x8] sm:$0xff]
    %v2733 = vld [vmem:[%s2730 + $0x10] sm:$0xff]
    %v2734 = vld [vmem:[%s2730 + $0x18] sm:$0xff]
    %v2735 = vld [vmem:[%s2730 + $0x20] sm:$0xff]
    %v2736 = vld [vmem:[%s2730 + $0x28] sm:$0xff]
    %v2737 = vld [vmem:[%s2730 + $0x30] sm:$0xff]
    %v2738 = vld [vmem:[%s2730 + $0x38] sm:$0xff]
    %v2739 = vld [vmem:[%s2730 + $0x40] sm:$0xff]
    %v2740 = vld [vmem:[%s2730 + $0x48] sm:$0xff]
    %v2741 = vld [vmem:[%s2730 + $0x50] sm:$0xff]
    %v2742 = vld [vmem:[%s2730 + $0x58] sm:$0xff]
    %v2743 = vld [vmem:[%s2730 + $0x60] sm:$0xff]
    %v2744 = vld [vmem:[%s2730 + $0x68] sm:$0xff]
    %v2745 = vld [vmem:[%s2730 + $0x70] sm:$0xff]
    %v2746 = vld [vmem:[%s2730 + $0x78] sm:$0xff]
    %2747 = vmatprep.subr.mxu0 0.0
    %2748 = vmatpush1.msra.mxu0 %v2731
    %2749 = vmatprep.subr.mxu0 0.0
    %2750 = vmatpush1.msra.mxu0 %v2732
    %2751 = vmatprep.subr.mxu0 0.0
    %2752 = vmatpush1.msra.mxu0 %v2733
    %2753 = vmatprep.subr.mxu0 0.0
    %2754 = vmatpush1.msra.mxu0 %v2734
    %2755 = vmatprep.subr.mxu0 0.0
    %2756 = vmatpush1.msra.mxu0 %v2735
    %2757 = vmatprep.subr.mxu0 0.0
    %2758 = vmatpush1.msra.mxu0 %v2736
    %2759 = vmatprep.subr.mxu0 0.0
    %2760 = vmatpush1.msra.mxu0 %v2737
    %2761 = vmatprep.subr.mxu0 0.0
    %2762 = vmatpush1.msra.mxu0 %v2738
    %2763 = vmatprep.subr.mxu0 0.0
    %2764 = vmatpush1.msra.mxu0 %v2739
    %2765 = vmatprep.subr.mxu0 0.0
    %2766 = vmatpush1.msra.mxu0 %v2740
    %2767 = vmatprep.subr.mxu0 0.0
    %2768 = vmatpush1.msra.mxu0 %v2741
    %2769 = vmatprep.subr.mxu0 0.0
    %2770 = vmatpush1.msra.mxu0 %v2742
    %2771 = vmatprep.subr.mxu0 0.0
    %2772 = vmatpush1.msra.mxu0 %v2743
    %2773 = vmatprep.subr.mxu0 0.0
    %2774 = vmatpush1.msra.mxu0 %v2744
    %2775 = vmatprep.subr.mxu0 0.0
    %2776 = vmatpush1.msra.mxu0 %v2745
    %2777 = vmatprep.subr.mxu0 0.0
    %2778 = vmatpush1.msra.mxu0 %v2746
    %2779 = vmatprep.subr.mxu0 0.0
    %2780 = vmatpush1.msra.mxu0 0.0
    %2781 = vmatprep.subr.mxu0 0.0
    %2782 = vmatpush1.msra.mxu0 0.0
    %2783 = vmatprep.subr.mxu0 0.0
    %2784 = vmatpush1.msra.mxu0 0.0
    %2785 = vmatprep.subr.mxu0 0.0
    %2786 = vmatpush1.msra.mxu0 0.0
    %2787 = vmatprep.subr.mxu0 0.0
    %2788 = vmatpush1.msra.mxu0 0.0
    %2789 = vmatprep.subr.mxu0 0.0
    %2790 = vmatpush1.msra.mxu0 0.0
    %2791 = vmatprep.subr.mxu0 0.0
    %2792 = vmatpush1.msra.mxu0 0.0
    %2793 = vmatprep.subr.mxu0 0.0
    %2794 = vmatpush1.msra.mxu0 0.0
    %2795 = vmatprep.subr.mxu0 0.0
    %2796 = vmatpush1.msra.mxu0 0.0
    %2797 = vmatprep.subr.mxu0 0.0
    %2798 = vmatpush1.msra.mxu0 0.0
    %2799 = vmatprep.subr.mxu0 0.0
    %2800 = vmatpush1.msra.mxu0 0.0
    %2801 = vmatprep.subr.mxu0 0.0
    %2802 = vmatpush1.msra.mxu0 0.0
    %2803 = vmatprep.subr.mxu0 0.0
    %2804 = vmatpush1.msra.mxu0 0.0
    %2805 = vmatprep.subr.mxu0 0.0
    %2806 = vmatpush1.msra.mxu0 0.0
    %2807 = vmatprep.subr.mxu0 0.0
    %2808 = vmatpush1.msra.mxu0 0.0
    %2809 = vmatprep.subr.mxu0 0.0
    %2810 = vmatpush1.msra.mxu0 0.0
    %2811 = vmatprep.mubr.f32.mxu0 0.0
    %2812 = vmatmul.mubr.f32.gmra.mrb[0].mxu0 %v2722
    %v2813 = vpop.f32.mrb[0].mxu0
    %v2814 = vadd.f32 0.0, %v2813
    %v2815 = vpop.f32.mrb[0].mxu0
    %2816 = vmatprep.mubr.f32.mxu0 0.0
    %2817 = vmatmul.mubr.f32.gmra.mrb[0].mxu0 %v2727
    %v2818 = vpop.f32.mrb[0].mxu0
    %v2819 = vadd.f32 0.0, %v2818
    %v2820 = vpop.f32.mrb[0].mxu0
    %2821 = vdwg.mxu0
    %v2822 = vadd.f32 %v2638, %v2814
    %v2823 = vadd.f32 %v2643, %v2819
    %s2824 = scalar_lea.vmem [#allocation13], 48
    %v2825 = vld [vmem:[%s2824] sm:$0xff]
    %v2826 = vld [vmem:[%s2824 + $0x8] sm:$0xff]
    %v2828 = vsel %vm322, %v2825, 0
    %v2831 = vsel %vm322, %v2826, 0
    %2833 = vmatprep.subr.mxu0 0.0
    %2834 = vmatpush1.msra.mxu0 %v2292
    %2835 = vmatprep.subr.mxu0 0.0
    %2836 = vmatpush1.msra.mxu0 %v2293
    %2837 = vmatprep.subr.mxu0 0.0
    %2838 = vmatpush1.msra.mxu0 %v2294
    %2839 = vmatprep.subr.mxu0 0.0
    %2840 = vmatpush1.msra.mxu0 %v2295
    %2841 = vmatprep.subr.mxu0 0.0
    %2842 = vmatpush1.msra.mxu0 0.0
    %2843 = vmatprep.subr.mxu0 0.0
    %2844 = vmatpush1.msra.mxu0 0.0
    %2845 = vmatprep.subr.mxu0 0.0
    %2846 = vmatpush1.msra.mxu0 0.0
    %2847 = vmatprep.subr.mxu0 0.0
    %2848 = vmatpush1.msra.mxu0 0.0
    %2849 = vmatprep.subr.mxu0 0.0
    %2850 = vmatpush1.msra.mxu0 0.0
    %2851 = vmatprep.subr.mxu0 0.0
    %2852 = vmatpush1.msra.mxu0 0.0
    %2853 = vmatprep.subr.mxu0 0.0
    %2854 = vmatpush1.msra.mxu0 0.0
    %2855 = vmatprep.subr.mxu0 0.0
    %2856 = vmatpush1.msra.mxu0 0.0
    %2857 = vmatprep.subr.mxu0 0.0
    %2858 = vmatpush1.msra.mxu0 0.0
    %2859 = vmatprep.subr.mxu0 0.0
    %2860 = vmatpush1.msra.mxu0 0.0
    %2861 = vmatprep.subr.mxu0 0.0
    %2862 = vmatpush1.msra.mxu0 0.0
    %2863 = vmatprep.subr.mxu0 0.0
    %2864 = vmatpush1.msra.mxu0 0.0
    %2865 = vmatprep.subr.mxu0 0.0
    %2866 = vmatpush1.msra.mxu0 0.0
    %2867 = vmatprep.subr.mxu0 0.0
    %2868 = vmatpush1.msra.mxu0 0.0
    %2869 = vmatprep.subr.mxu0 0.0
    %2870 = vmatpush1.msra.mxu0 0.0
    %2871 = vmatprep.subr.mxu0 0.0
    %2872 = vmatpush1.msra.mxu0 0.0
    %2873 = vmatprep.subr.mxu0 0.0
    %2874 = vmatpush1.msra.mxu0 0.0
    %2875 = vmatprep.subr.mxu0 0.0
    %2876 = vmatpush1.msra.mxu0 0.0
    %2877 = vmatprep.subr.mxu0 0.0
    %2878 = vmatpush1.msra.mxu0 0.0
    %2879 = vmatprep.subr.mxu0 0.0
    %2880 = vmatpush1.msra.mxu0 0.0
    %2881 = vmatprep.subr.mxu0 0.0
    %2882 = vmatpush1.msra.mxu0 0.0
    %2883 = vmatprep.subr.mxu0 0.0
    %2884 = vmatpush1.msra.mxu0 0.0
    %2885 = vmatprep.subr.mxu0 0.0
    %2886 = vmatpush1.msra.mxu0 0.0
    %2887 = vmatprep.subr.mxu0 0.0
    %2888 = vmatpush1.msra.mxu0 0.0
    %2889 = vmatprep.subr.mxu0 0.0
    %2890 = vmatpush1.msra.mxu0 0.0
    %2891 = vmatprep.subr.mxu0 0.0
    %2892 = vmatpush1.msra.mxu0 0.0
    %2893 = vmatprep.subr.mxu0 0.0
    %2894 = vmatpush1.msra.mxu0 0.0
    %2895 = vmatprep.subr.mxu0 0.0
    %2896 = vmatpush1.msra.mxu0 0.0
    %2897 = vmatprep.mubr.f32.mxu0 0.0
    %2898 = vmatmul.mubr.f32.gmra.mrb[0].mxu0 %v2828
    %v2899 = vpop.f32.mrb[0].mxu0
    %v2900 = vadd.f32 0.0, %v2899
    %v2901 = vpop.f32.mrb[0].mxu0
    %2902 = vmatprep.mubr.f32.mxu0 0.0
    %2903 = vmatmul.mubr.f32.gmra.mrb[0].mxu0 %v2831
    %v2904 = vpop.f32.mrb[0].mxu0
    %v2905 = vadd.f32 0.0, %v2904
    %v2906 = vpop.f32.mrb[0].mxu0
    %2907 = vdwg.mxu0
    %s2908 = scalar_lea.vmem %s7, 384
    %v2909 = vld [vmem:[%s2908] sm:$0xff]
    %v2910 = vld [vmem:[%s2908 + $0x8] sm:$0xff]
    %v2911 = vld [vmem:[%s2908 + $0x10] sm:$0xff]
    %v2912 = vld [vmem:[%s2908 + $0x18] sm:$0xff]
    %v2913 = vld [vmem:[%s2908 + $0x20] sm:$0xff]
    %v2914 = vld [vmem:[%s2908 + $0x28] sm:$0xff]
    %v2915 = vld [vmem:[%s2908 + $0x30] sm:$0xff]
    %v2916 = vld [vmem:[%s2908 + $0x38] sm:$0xff]
    %v2917 = vld [vmem:[%s2908 + $0x40] sm:$0xff]
    %v2918 = vld [vmem:[%s2908 + $0x48] sm:$0xff]
    %v2919 = vld [vmem:[%s2908 + $0x50] sm:$0xff]
    %v2920 = vld [vmem:[%s2908 + $0x58] sm:$0xff]
    %v2921 = vld [vmem:[%s2908 + $0x60] sm:$0xff]
    %v2922 = vld [vmem:[%s2908 + $0x68] sm:$0xff]
    %v2923 = vld [vmem:[%s2908 + $0x70] sm:$0xff]
    %v2924 = vld [vmem:[%s2908 + $0x78] sm:$0xff]
    %2925 = vmatprep.subr.mxu0 0.0
    %2926 = vmatpush1.msra.mxu0 %v2909
    %2927 = vmatprep.subr.mxu0 0.0
    %2928 = vmatpush1.msra.mxu0 %v2910
    %2929 = vmatprep.subr.mxu0 0.0
    %2930 = vmatpush1.msra.mxu0 %v2911
    %2931 = vmatprep.subr.mxu0 0.0
    %2932 = vmatpush1.msra.mxu0 %v2912
    %2933 = vmatprep.subr.mxu0 0.0
    %2934 = vmatpush1.msra.mxu0 %v2913
    %2935 = vmatprep.subr.mxu0 0.0
    %2936 = vmatpush1.msra.mxu0 %v2914
    %2937 = vmatprep.subr.mxu0 0.0
    %2938 = vmatpush1.msra.mxu0 %v2915
    %2939 = vmatprep.subr.mxu0 0.0
    %2940 = vmatpush1.msra.mxu0 %v2916
    %2941 = vmatprep.subr.mxu0 0.0
    %2942 = vmatpush1.msra.mxu0 %v2917
    %2943 = vmatprep.subr.mxu0 0.0
    %2944 = vmatpush1.msra.mxu0 %v2918
    %2945 = vmatprep.subr.mxu0 0.0
    %2946 = vmatpush1.msra.mxu0 %v2919
    %2947 = vmatprep.subr.mxu0 0.0
    %2948 = vmatpush1.msra.mxu0 %v2920
    %2949 = vmatprep.subr.mxu0 0.0
    %2950 = vmatpush1.msra.mxu0 %v2921
    %2951 = vmatprep.subr.mxu0 0.0
    %2952 = vmatpush1.msra.mxu0 %v2922
    %2953 = vmatprep.subr.mxu0 0.0
    %2954 = vmatpush1.msra.mxu0 %v2923
    %2955 = vmatprep.subr.mxu0 0.0
    %2956 = vmatpush1.msra.mxu0 %v2924
    %2957 = vmatprep.subr.mxu0 0.0
    %2958 = vmatpush1.msra.mxu0 0.0
    %2959 = vmatprep.subr.mxu0 0.0
    %2960 = vmatpush1.msra.mxu0 0.0
    %2961 = vmatprep.subr.mxu0 0.0
    %2962 = vmatpush1.msra.mxu0 0.0
    %2963 = vmatprep.subr.mxu0 0.0
    %2964 = vmatpush1.msra.mxu0 0.0
    %2965 = vmatprep.subr.mxu0 0.0
    %2966 = vmatpush1.msra.mxu0 0.0
    %2967 = vmatprep.subr.mxu0 0.0
    %2968 = vmatpush1.msra.mxu0 0.0
    %2969 = vmatprep.subr.mxu0 0.0
    %2970 = vmatpush1.msra.mxu0 0.0
    %2971 = vmatprep.subr.mxu0 0.0
    %2972 = vmatpush1.msra.mxu0 0.0
    %2973 = vmatprep.subr.mxu0 0.0
    %2974 = vmatpush1.msra.mxu0 0.0
    %2975 = vmatprep.subr.mxu0 0.0
    %2976 = vmatpush1.msra.mxu0 0.0
    %2977 = vmatprep.subr.mxu0 0.0
    %2978 = vmatpush1.msra.mxu0 0.0
    %2979 = vmatprep.subr.mxu0 0.0
    %2980 = vmatpush1.msra.mxu0 0.0
    %2981 = vmatprep.subr.mxu0 0.0
    %2982 = vmatpush1.msra.mxu0 0.0
    %2983 = vmatprep.subr.mxu0 0.0
    %2984 = vmatpush1.msra.mxu0 0.0
    %2985 = vmatprep.subr.mxu0 0.0
    %2986 = vmatpush1.msra.mxu0 0.0
    %2987 = vmatprep.subr.mxu0 0.0
    %2988 = vmatpush1.msra.mxu0 0.0
    %2989 = vmatprep.mubr.f32.mxu0 0.0
    %2990 = vmatmul.mubr.f32.gmra.mrb[0].mxu0 %v2900
    %v2991 = vpop.f32.mrb[0].mxu0
    %v2992 = vadd.f32 0.0, %v2991
    %v2993 = vpop.f32.mrb[0].mxu0
    %2994 = vmatprep.mubr.f32.mxu0 0.0
    %2995 = vmatmul.mubr.f32.gmra.mrb[0].mxu0 %v2905
    %v2996 = vpop.f32.mrb[0].mxu0
    %v2997 = vadd.f32 0.0, %v2996
    %v2998 = vpop.f32.mrb[0].mxu0
    %2999 = vdwg.mxu0
    %v3000 = vadd.f32 %v2822, %v2992
    %v3001 = vadd.f32 %v2823, %v2997
    %v3002 = vld [vmem:[%s8] sm:$0x1]
    %v3004 = vlaneseq
    %v3005 = vshrl.u32 %v3004, 7
    %v3006 = vsub.s32 0, %v3005
    %v3007 = vrot.slane %v3002, %v3006
    %v3009 = vadd.f32 %v3000, %v3007
    %v3010 = vadd.f32 %v3001, %v3007
    %v3011 = vadd.f32 %v3009, %v3010
    %v3012 = vrot.slane %v3011, 4
    %v3013 = vadd.f32 %v3011, %v3012
    %v3014 = vrot.slane %v3013, 2
    %v3015 = vadd.f32 %v3013, %v3014
    %v3016 = vrot.slane %v3015, 1
    %v3017 = vadd.f32 %v3015, %v3016
    %3018 = vmatprep.subr.mxu0 0.0
    %3019 = vmatpush1.msra.mxu0 %v292
    %3020 = vmatprep.subr.mxu0 0.0
    %3021 = vmatpush1.msra.mxu0 %v293
    %3022 = vmatprep.subr.mxu0 0.0
    %3023 = vmatpush1.msra.mxu0 %v294
    %3024 = vmatprep.subr.mxu0 0.0
    %3025 = vmatpush1.msra.mxu0 %v295
    %3026 = vmatprep.subr.mxu0 0.0
    %3027 = vmatpush1.msra.mxu0 %v296
    %3028 = vmatprep.subr.mxu0 0.0
    %3029 = vmatpush1.msra.mxu0 %v297
    %3030 = vmatprep.subr.mxu0 0.0
    %3031 = vmatpush1.msra.mxu0 %v298
    %3032 = vmatprep.subr.mxu0 0.0
    %3033 = vmatpush1.msra.mxu0 %v299
    %3034 = vmatprep.subr.mxu0 0.0
    %3035 = vmatpush1.msra.mxu0 %v300
    %3036 = vmatprep.subr.mxu0 0.0
    %3037 = vmatpush1.msra.mxu0 %v301
    %3038 = vmatprep.subr.mxu0 0.0
    %3039 = vmatpush1.msra.mxu0 %v302
    %3040 = vmatprep.subr.mxu0 0.0
    %3041 = vmatpush1.msra.mxu0 %v303
    %3042 = vmatprep.subr.mxu0 0.0
    %3043 = vmatpush1.msra.mxu0 %v304
    %3044 = vmatprep.subr.mxu0 0.0
    %3045 = vmatpush1.msra.mxu0 %v305
    %3046 = vmatprep.subr.mxu0 0.0
    %3047 = vmatpush1.msra.mxu0 %v306
    %3048 = vmatprep.subr.mxu0 0.0
    %3049 = vmatpush1.msra.mxu0 %v307
    %3050 = vmatprep.subr.mxu0 0.0
    %3051 = vmatpush1.msra.mxu0 0.0
    %3052 = vmatprep.subr.mxu0 0.0
    %3053 = vmatpush1.msra.mxu0 0.0
    %3054 = vmatprep.subr.mxu0 0.0
    %3055 = vmatpush1.msra.mxu0 0.0
    %3056 = vmatprep.subr.mxu0 0.0
    %3057 = vmatpush1.msra.mxu0 0.0
    %3058 = vmatprep.subr.mxu0 0.0
    %3059 = vmatpush1.msra.mxu0 0.0
    %3060 = vmatprep.subr.mxu0 0.0
    %3061 = vmatpush1.msra.mxu0 0.0
    %3062 = vmatprep.subr.mxu0 0.0
    %3063 = vmatpush1.msra.mxu0 0.0
    %3064 = vmatprep.subr.mxu0 0.0
    %3065 = vmatpush1.msra.mxu0 0.0
    %3066 = vmatprep.subr.mxu0 0.0
    %3067 = vmatpush1.msra.mxu0 0.0
    %3068 = vmatprep.subr.mxu0 0.0
    %3069 = vmatpush1.msra.mxu0 0.0
    %3070 = vmatprep.subr.mxu0 0.0
    %3071 = vmatpush1.msra.mxu0 0.0
    %3072 = vmatprep.subr.mxu0 0.0
    %3073 = vmatpush1.msra.mxu0 0.0
    %3074 = vmatprep.subr.mxu0 0.0
    %3075 = vmatpush1.msra.mxu0 0.0
    %3076 = vmatprep.subr.mxu0 0.0
    %3077 = vmatpush1.msra.mxu0 0.0
    %3078 = vmatprep.subr.mxu0 0.0
    %3079 = vmatpush1.msra.mxu0 0.0
    %3080 = vmatprep.subr.mxu0 0.0
    %3081 = vmatpush1.msra.mxu0 0.0
    %3082 = vmatprep.mubr.f32.mxu0 0.0
    %3083 = vmatmul.mubr.f32.gmra.mrb[0].mxu0 %v3017
    %v3084 = vpop.f32.mrb[0].mxu0
    %v3085 = vadd.f32 0.0, %v3084
    %v3086 = vpop.f32.mrb[0].mxu0
    %3087 = vdwg.mxu0
    %v3088 = vmul.f32 %v3009, %v3009
    %v3089 = vmul.f32 %v3010, %v3010
    %v3090 = vadd.f32 %v3088, %v3089
    %v3091 = vrot.slane %v3090, 4
    %v3092 = vadd.f32 %v3090, %v3091
    %v3093 = vrot.slane %v3092, 2
    %v3094 = vadd.f32 %v3092, %v3093
    %v3095 = vrot.slane %v3094, 1
    %v3096 = vadd.f32 %v3094, %v3095
    %3097 = vmatprep.subr.mxu0 0.0
    %3098 = vmatpush1.msra.mxu0 %v292
    %3099 = vmatprep.subr.mxu0 0.0
    %3100 = vmatpush1.msra.mxu0 %v293
    %3101 = vmatprep.subr.mxu0 0.0
    %3102 = vmatpush1.msra.mxu0 %v294
    %3103 = vmatprep.subr.mxu0 0.0
    %3104 = vmatpush1.msra.mxu0 %v295
    %3105 = vmatprep.subr.mxu0 0.0
    %3106 = vmatpush1.msra.mxu0 %v296
    %3107 = vmatprep.subr.mxu0 0.0
    %3108 = vmatpush1.msra.mxu0 %v297
    %3109 = vmatprep.subr.mxu0 0.0
    %3110 = vmatpush1.msra.mxu0 %v298
    %3111 = vmatprep.subr.mxu0 0.0
    %3112 = vmatpush1.msra.mxu0 %v299
    %3113 = vmatprep.subr.mxu0 0.0
    %3114 = vmatpush1.msra.mxu0 %v300
    %3115 = vmatprep.subr.mxu0 0.0
    %3116 = vmatpush1.msra.mxu0 %v301
    %3117 = vmatprep.subr.mxu0 0.0
    %3118 = vmatpush1.msra.mxu0 %v302
    %3119 = vmatprep.subr.mxu0 0.0
    %3120 = vmatpush1.msra.mxu0 %v303
    %3121 = vmatprep.subr.mxu0 0.0
    %3122 = vmatpush1.msra.mxu0 %v304
    %3123 = vmatprep.subr.mxu0 0.0
    %3124 = vmatpush1.msra.mxu0 %v305
    %3125 = vmatprep.subr.mxu0 0.0
    %3126 = vmatpush1.msra.mxu0 %v306
    %3127 = vmatprep.subr.mxu0 0.0
    %3128 = vmatpush1.msra.mxu0 %v307
    %3129 = vmatprep.subr.mxu0 0.0
    %3130 = vmatpush1.msra.mxu0 0.0
    %3131 = vmatprep.subr.mxu0 0.0
    %3132 = vmatpush1.msra.mxu0 0.0
    %3133 = vmatprep.subr.mxu0 0.0
    %3134 = vmatpush1.msra.mxu0 0.0
    %3135 = vmatprep.subr.mxu0 0.0
    %3136 = vmatpush1.msra.mxu0 0.0
    %3137 = vmatprep.subr.mxu0 0.0
    %3138 = vmatpush1.msra.mxu0 0.0
    %3139 = vmatprep.subr.mxu0 0.0
    %3140 = vmatpush1.msra.mxu0 0.0
    %3141 = vmatprep.subr.mxu0 0.0
    %3142 = vmatpush1.msra.mxu0 0.0
    %3143 = vmatprep.subr.mxu0 0.0
    %3144 = vmatpush1.msra.mxu0 0.0
    %3145 = vmatprep.subr.mxu0 0.0
    %3146 = vmatpush1.msra.mxu0 0.0
    %3147 = vmatprep.subr.mxu0 0.0
    %3148 = vmatpush1.msra.mxu0 0.0
    %3149 = vmatprep.subr.mxu0 0.0
    %3150 = vmatpush1.msra.mxu0 0.0
    %3151 = vmatprep.subr.mxu0 0.0
    %3152 = vmatpush1.msra.mxu0 0.0
    %3153 = vmatprep.subr.mxu0 0.0
    %3154 = vmatpush1.msra.mxu0 0.0
    %3155 = vmatprep.subr.mxu0 0.0
    %3156 = vmatpush1.msra.mxu0 0.0
    %3157 = vmatprep.subr.mxu0 0.0
    %3158 = vmatpush1.msra.mxu0 0.0
    %3159 = vmatprep.subr.mxu0 0.0
    %3160 = vmatpush1.msra.mxu0 0.0
    %3161 = vmatprep.mubr.f32.mxu0 0.0
    %3162 = vmatmul.mubr.f32.gmra.mrb[0].mxu0 %v3096
    %v3163 = vpop.f32.mrb[0].mxu0
    %v3164 = vadd.f32 0.0, %v3163
    %v3165 = vpop.f32.mrb[0].mxu0
    %3166 = vdwg.mxu0
    %v3167 = vmul.f32 %v3085, 0.0078125
    %v3168 = vmul.f32 %v3164, 0.0078125
    %v3169 = vmul.f32 %v3167, %v3167
    %v3170 = vsub.f32 %v3168, %v3169
    %v3171 = vadd.f32 %v3170, 1e-05
    %v3172 = vrsqrt.pop %v3171
    %v3173 = vlaneseq
    %v3174 = vshrl.u32 %v3173, 7
    %v3175 = vsub.s32 0, %v3174
    %v3176 = vrot.slane %v3172, %v3175
    %3177 = vrot.lane.b32.xlu0 %v1931, 96
    %v3178 = vpop.permute.xlu0 %3177
    %v3180 = vmul.f32 %v3176, %v3178
    %v3181 = vlaneseq
    %v3182 = vshrl.u32 %v3181, 7
    %v3183 = vsub.s32 0, %v3182
    %v3184 = vrot.slane %v3167, %v3183
    %v3185 = vmul.f32 %v3184, %v3180
    %3187 = vrot.lane.b32.xlu0 %v3185, 16
    %v3188 = vpop.permute.xlu0 %3187
    %v3190 = vsub.f32 %v272, %v3188
    %v3192 = vsel %vm527, %v3180, 0
    %3194 = vmatprep.subr.mxu0 0.0
    %3195 = vmatpush1.msra.mxu0 %v290
    %3196 = vmatprep.subr.mxu0 0.0
    %3197 = vmatpush1.msra.mxu0 %v291
    %3198 = vmatprep.subr.mxu0 0.0
    %3199 = vmatpush1.msra.mxu0 0.0
    %3200 = vmatprep.subr.mxu0 0.0
    %3201 = vmatpush1.msra.mxu0 0.0
    %3202 = vmatprep.subr.mxu0 0.0
    %3203 = vmatpush1.msra.mxu0 0.0
    %3204 = vmatprep.subr.mxu0 0.0
    %3205 = vmatpush1.msra.mxu0 0.0
    %3206 = vmatprep.subr.mxu0 0.0
    %3207 = vmatpush1.msra.mxu0 0.0
    %3208 = vmatprep.subr.mxu0 0.0
    %3209 = vmatpush1.msra.mxu0 0.0
    %3210 = vmatprep.subr.mxu0 0.0
    %3211 = vmatpush1.msra.mxu0 0.0
    %3212 = vmatprep.subr.mxu0 0.0
    %3213 = vmatpush1.msra.mxu0 0.0
    %3214 = vmatprep.subr.mxu0 0.0
    %3215 = vmatpush1.msra.mxu0 0.0
    %3216 = vmatprep.subr.mxu0 0.0
    %3217 = vmatpush1.msra.mxu0 0.0
    %3218 = vmatprep.subr.mxu0 0.0
    %3219 = vmatpush1.msra.mxu0 0.0
    %3220 = vmatprep.subr.mxu0 0.0
    %3221 = vmatpush1.msra.mxu0 0.0
    %3222 = vmatprep.subr.mxu0 0.0
    %3223 = vmatpush1.msra.mxu0 0.0
    %3224 = vmatprep.subr.mxu0 0.0
    %3225 = vmatpush1.msra.mxu0 0.0
    %3226 = vmatprep.subr.mxu0 0.0
    %3227 = vmatpush1.msra.mxu0 0.0
    %3228 = vmatprep.subr.mxu0 0.0
    %3229 = vmatpush1.msra.mxu0 0.0
    %3230 = vmatprep.subr.mxu0 0.0
    %3231 = vmatpush1.msra.mxu0 0.0
    %3232 = vmatprep.subr.mxu0 0.0
    %3233 = vmatpush1.msra.mxu0 0.0
    %3234 = vmatprep.subr.mxu0 0.0
    %3235 = vmatpush1.msra.mxu0 0.0
    %3236 = vmatprep.subr.mxu0 0.0
    %3237 = vmatpush1.msra.mxu0 0.0
    %3238 = vmatprep.subr.mxu0 0.0
    %3239 = vmatpush1.msra.mxu0 0.0
    %3240 = vmatprep.subr.mxu0 0.0
    %3241 = vmatpush1.msra.mxu0 0.0
    %3242 = vmatprep.subr.mxu0 0.0
    %3243 = vmatpush1.msra.mxu0 0.0
    %3244 = vmatprep.subr.mxu0 0.0
    %3245 = vmatpush1.msra.mxu0 0.0
    %3246 = vmatprep.subr.mxu0 0.0
    %3247 = vmatpush1.msra.mxu0 0.0
    %3248 = vmatprep.subr.mxu0 0.0
    %3249 = vmatpush1.msra.mxu0 0.0
    %3250 = vmatprep.subr.mxu0 0.0
    %3251 = vmatpush1.msra.mxu0 0.0
    %3252 = vmatprep.subr.mxu0 0.0
    %3253 = vmatpush1.msra.mxu0 0.0
    %3254 = vmatprep.subr.mxu0 0.0
    %3255 = vmatpush1.msra.mxu0 0.0
    %3256 = vmatprep.subr.mxu0 0.0
    %3257 = vmatpush1.msra.mxu0 0.0
    %3258 = vmatprep.mubr.f32.mxu0 0.0
    %3259 = vmatmul.mubr.f32.gmra.mrb[0].mxu0 %v3192
    %v3260 = vpop.f32.mrb[0].mxu0
    %v3261 = vadd.f32 0.0, %v3260
    %v3262 = vpop.f32.mrb[0].mxu0
    %3263 = vdwg.mxu0
    %v3265 = vsel %vm2021, %v312, 0
    %v3268 = vsel %vm2021, %v313, 0
    %v3271 = vsel %vm2034, %v3261, 0
    %3273 = vmatprep.subr.mxu0 0.0
    %3274 = vmatpush1.msra.mxu0 %v3271
    %3275 = vmatprep.subr.mxu0 0.0
    %3276 = vmatpush1.msra.mxu0 0.0
    %3277 = vmatprep.subr.mxu0 0.0
    %3278 = vmatpush1.msra.mxu0 0.0
    %3279 = vmatprep.subr.mxu0 0.0
    %3280 = vmatpush1.msra.mxu0 0.0
    %3281 = vmatprep.subr.mxu0 0.0
    %3282 = vmatpush1.msra.mxu0 0.0
    %3283 = vmatprep.subr.mxu0 0.0
    %3284 = vmatpush1.msra.mxu0 0.0
    %3285 = vmatprep.subr.mxu0 0.0
    %3286 = vmatpush1.msra.mxu0 0.0
    %3287 = vmatprep.subr.mxu0 0.0
    %3288 = vmatpush1.msra.mxu0 0.0
    %3289 = vmatprep.subr.mxu0 0.0
    %3290 = vmatpush1.msra.mxu0 0.0
    %3291 = vmatprep.subr.mxu0 0.0
    %3292 = vmatpush1.msra.mxu0 0.0
    %3293 = vmatprep.subr.mxu0 0.0
    %3294 = vmatpush1.msra.mxu0 0.0
    %3295 = vmatprep.subr.mxu0 0.0
    %3296 = vmatpush1.msra.mxu0 0.0
    %3297 = vmatprep.subr.mxu0 0.0
    %3298 = vmatpush1.msra.mxu0 0.0
    %3299 = vmatprep.subr.mxu0 0.0
    %3300 = vmatpush1.msra.mxu0 0.0
    %3301 = vmatprep.subr.mxu0 0.0
    %3302 = vmatpush1.msra.mxu0 0.0
    %3303 = vmatprep.subr.mxu0 0.0
    %3304 = vmatpush1.msra.mxu0 0.0
    %3305 = vmatprep.subr.mxu0 0.0
    %3306 = vmatpush1.msra.mxu0 0.0
    %3307 = vmatprep.subr.mxu0 0.0
    %3308 = vmatpush1.msra.mxu0 0.0
    %3309 = vmatprep.subr.mxu0 0.0
    %3310 = vmatpush1.msra.mxu0 0.0
    %3311 = vmatprep.subr.mxu0 0.0
    %3312 = vmatpush1.msra.mxu0 0.0
    %3313 = vmatprep.subr.mxu0 0.0
    %3314 = vmatpush1.msra.mxu0 0.0
    %3315 = vmatprep.subr.mxu0 0.0
    %3316 = vmatpush1.msra.mxu0 0.0
    %3317 = vmatprep.subr.mxu0 0.0
    %3318 = vmatpush1.msra.mxu0 0.0
    %3319 = vmatprep.subr.mxu0 0.0
    %3320 = vmatpush1.msra.mxu0 0.0
    %3321 = vmatprep.subr.mxu0 0.0
    %3322 = vmatpush1.msra.mxu0 0.0
    %3323 = vmatprep.subr.mxu0 0.0
    %3324 = vmatpush1.msra.mxu0 0.0
    %3325 = vmatprep.subr.mxu0 0.0
    %3326 = vmatpush1.msra.mxu0 0.0
    %3327 = vmatprep.subr.mxu0 0.0
    %3328 = vmatpush1.msra.mxu0 0.0
    %3329 = vmatprep.subr.mxu0 0.0
    %3330 = vmatpush1.msra.mxu0 0.0
    %3331 = vmatprep.subr.mxu0 0.0
    %3332 = vmatpush1.msra.mxu0 0.0
    %3333 = vmatprep.subr.mxu0 0.0
    %3334 = vmatpush1.msra.mxu0 0.0
    %3335 = vmatprep.subr.mxu0 0.0
    %3336 = vmatpush1.msra.mxu0 0.0
    %3337 = vmatprep.mubr.f32.mxu0 0.0
    %3338 = vmatmul.mubr.f32.gmra.mrb[0].mxu0 %v3265
    %v3339 = vpop.f32.mrb[0].mxu0
    %v3340 = vadd.f32 0.0, %v3339
    %v3341 = vpop.f32.mrb[0].mxu0
    %3342 = vmatprep.mubr.f32.mxu0 0.0
    %3343 = vmatmul.mubr.f32.gmra.mrb[0].mxu0 %v3268
    %v3344 = vpop.f32.mrb[0].mxu0
    %v3345 = vadd.f32 0.0, %v3344
    %v3346 = vpop.f32.mrb[0].mxu0
    %3347 = vdwg.mxu0
    %3349 = vrot.lane.b32.xlu0 %v3190, 112
    %v3350 = vpop.permute.xlu0 %3349
    %v3351 = vsel %vm527, %v3350, 0
    %3353 = vmatprep.subr.mxu0 0.0
    %3354 = vmatpush1.msra.mxu0 %v290
    %3355 = vmatprep.subr.mxu0 0.0
    %3356 = vmatpush1.msra.mxu0 %v291
    %3357 = vmatprep.subr.mxu0 0.0
    %3358 = vmatpush1.msra.mxu0 0.0
    %3359 = vmatprep.subr.mxu0 0.0
    %3360 = vmatpush1.msra.mxu0 0.0
    %3361 = vmatprep.subr.mxu0 0.0
    %3362 = vmatpush1.msra.mxu0 0.0
    %3363 = vmatprep.subr.mxu0 0.0
    %3364 = vmatpush1.msra.mxu0 0.0
    %3365 = vmatprep.subr.mxu0 0.0
    %3366 = vmatpush1.msra.mxu0 0.0
    %3367 = vmatprep.subr.mxu0 0.0
    %3368 = vmatpush1.msra.mxu0 0.0
    %3369 = vmatprep.subr.mxu0 0.0
    %3370 = vmatpush1.msra.mxu0 0.0
    %3371 = vmatprep.subr.mxu0 0.0
    %3372 = vmatpush1.msra.mxu0 0.0
    %3373 = vmatprep.subr.mxu0 0.0
    %3374 = vmatpush1.msra.mxu0 0.0
    %3375 = vmatprep.subr.mxu0 0.0
    %3376 = vmatpush1.msra.mxu0 0.0
    %3377 = vmatprep.subr.mxu0 0.0
    %3378 = vmatpush1.msra.mxu0 0.0
    %3379 = vmatprep.subr.mxu0 0.0
    %3380 = vmatpush1.msra.mxu0 0.0
    %3381 = vmatprep.subr.mxu0 0.0
    %3382 = vmatpush1.msra.mxu0 0.0
    %3383 = vmatprep.subr.mxu0 0.0
    %3384 = vmatpush1.msra.mxu0 0.0
    %3385 = vmatprep.subr.mxu0 0.0
    %3386 = vmatpush1.msra.mxu0 0.0
    %3387 = vmatprep.subr.mxu0 0.0
    %3388 = vmatpush1.msra.mxu0 0.0
    %3389 = vmatprep.subr.mxu0 0.0
    %3390 = vmatpush1.msra.mxu0 0.0
    %3391 = vmatprep.subr.mxu0 0.0
    %3392 = vmatpush1.msra.mxu0 0.0
    %3393 = vmatprep.subr.mxu0 0.0
    %3394 = vmatpush1.msra.mxu0 0.0
    %3395 = vmatprep.subr.mxu0 0.0
    %3396 = vmatpush1.msra.mxu0 0.0
    %3397 = vmatprep.subr.mxu0 0.0
    %3398 = vmatpush1.msra.mxu0 0.0
    %3399 = vmatprep.subr.mxu0 0.0
    %3400 = vmatpush1.msra.mxu0 0.0
    %3401 = vmatprep.subr.mxu0 0.0
    %3402 = vmatpush1.msra.mxu0 0.0
    %3403 = vmatprep.subr.mxu0 0.0
    %3404 = vmatpush1.msra.mxu0 0.0
    %3405 = vmatprep.subr.mxu0 0.0
    %3406 = vmatpush1.msra.mxu0 0.0
    %3407 = vmatprep.subr.mxu0 0.0
    %3408 = vmatpush1.msra.mxu0 0.0
    %3409 = vmatprep.subr.mxu0 0.0
    %3410 = vmatpush1.msra.mxu0 0.0
    %3411 = vmatprep.subr.mxu0 0.0
    %3412 = vmatpush1.msra.mxu0 0.0
    %3413 = vmatprep.subr.mxu0 0.0
    %3414 = vmatpush1.msra.mxu0 0.0
    %3415 = vmatprep.subr.mxu0 0.0
    %3416 = vmatpush1.msra.mxu0 0.0
    %3417 = vmatprep.mubr.f32.mxu0 0.0
    %3418 = vmatmul.mubr.f32.gmra.mrb[0].mxu0 %v3351
    %v3419 = vpop.f32.mrb[0].mxu0
    %v3420 = vadd.f32 0.0, %v3419
    %v3421 = vpop.f32.mrb[0].mxu0
    %3422 = vdwg.mxu0
    %v3424 = vsel %vm2034, %v3420, 0
    %3426 = vmatprep.subr.mxu0 0.0
    %3427 = vmatpush1.msra.mxu0 %v3424
    %3428 = vmatprep.subr.mxu0 0.0
    %3429 = vmatpush1.msra.mxu0 0.0
    %3430 = vmatprep.subr.mxu0 0.0
    %3431 = vmatpush1.msra.mxu0 0.0
    %3432 = vmatprep.subr.mxu0 0.0
    %3433 = vmatpush1.msra.mxu0 0.0
    %3434 = vmatprep.subr.mxu0 0.0
    %3435 = vmatpush1.msra.mxu0 0.0
    %3436 = vmatprep.subr.mxu0 0.0
    %3437 = vmatpush1.msra.mxu0 0.0
    %3438 = vmatprep.subr.mxu0 0.0
    %3439 = vmatpush1.msra.mxu0 0.0
    %3440 = vmatprep.subr.mxu0 0.0
    %3441 = vmatpush1.msra.mxu0 0.0
    %3442 = vmatprep.subr.mxu0 0.0
    %3443 = vmatpush1.msra.mxu0 0.0
    %3444 = vmatprep.subr.mxu0 0.0
    %3445 = vmatpush1.msra.mxu0 0.0
    %3446 = vmatprep.subr.mxu0 0.0
    %3447 = vmatpush1.msra.mxu0 0.0
    %3448 = vmatprep.subr.mxu0 0.0
    %3449 = vmatpush1.msra.mxu0 0.0
    %3450 = vmatprep.subr.mxu0 0.0
    %3451 = vmatpush1.msra.mxu0 0.0
    %3452 = vmatprep.subr.mxu0 0.0
    %3453 = vmatpush1.msra.mxu0 0.0
    %3454 = vmatprep.subr.mxu0 0.0
    %3455 = vmatpush1.msra.mxu0 0.0
    %3456 = vmatprep.subr.mxu0 0.0
    %3457 = vmatpush1.msra.mxu0 0.0
    %3458 = vmatprep.subr.mxu0 0.0
    %3459 = vmatpush1.msra.mxu0 0.0
    %3460 = vmatprep.subr.mxu0 0.0
    %3461 = vmatpush1.msra.mxu0 0.0
    %3462 = vmatprep.subr.mxu0 0.0
    %3463 = vmatpush1.msra.mxu0 0.0
    %3464 = vmatprep.subr.mxu0 0.0
    %3465 = vmatpush1.msra.mxu0 0.0
    %3466 = vmatprep.subr.mxu0 0.0
    %3467 = vmatpush1.msra.mxu0 0.0
    %3468 = vmatprep.subr.mxu0 0.0
    %3469 = vmatpush1.msra.mxu0 0.0
    %3470 = vmatprep.subr.mxu0 0.0
    %3471 = vmatpush1.msra.mxu0 0.0
    %3472 = vmatprep.subr.mxu0 0.0
    %3473 = vmatpush1.msra.mxu0 0.0
    %3474 = vmatprep.subr.mxu0 0.0
    %3475 = vmatpush1.msra.mxu0 0.0
    %3476 = vmatprep.subr.mxu0 0.0
    %3477 = vmatpush1.msra.mxu0 0.0
    %3478 = vmatprep.subr.mxu0 0.0
    %3479 = vmatpush1.msra.mxu0 0.0
    %3480 = vmatprep.subr.mxu0 0.0
    %3481 = vmatpush1.msra.mxu0 0.0
    %3482 = vmatprep.subr.mxu0 0.0
    %3483 = vmatpush1.msra.mxu0 0.0
    %3484 = vmatprep.subr.mxu0 0.0
    %3485 = vmatpush1.msra.mxu0 0.0
    %3486 = vmatprep.subr.mxu0 0.0
    %3487 = vmatpush1.msra.mxu0 0.0
    %3488 = vmatprep.subr.mxu0 0.0
    %3489 = vmatpush1.msra.mxu0 0.0
    %3490 = vmatprep.mubr.f32.mxu0 0.0
    %3491 = vmatmul.mubr.f32.gmra.mrb[0].mxu0 %v3265
    %v3492 = vpop.f32.mrb[0].mxu0
    %v3493 = vadd.f32 0.0, %v3492
    %v3494 = vpop.f32.mrb[0].mxu0
    %3495 = vmatprep.mubr.f32.mxu0 0.0
    %3496 = vmatmul.mubr.f32.gmra.mrb[0].mxu0 %v3268
    %v3497 = vpop.f32.mrb[0].mxu0
    %v3498 = vadd.f32 0.0, %v3497
    %v3499 = vpop.f32.mrb[0].mxu0
    %3500 = vdwg.mxu0
    %v3501 = vmul.f32 %v3009, %v3340
    %v3502 = vmul.f32 %v3010, %v3345
    %v3503 = vadd.f32 %v3501, %v3493
    %v3504 = vadd.f32 %v3502, %v3498
    %v3505 = vmax.f32 %v3503, 0.0
    %v3506 = vmax.f32 %v3504, 0.0
    %v3507 = vadd.f32 %v3505, %v3506
    %v3508 = vrot.slane %v3507, 4
    %v3509 = vadd.f32 %v3507, %v3508
    %v3510 = vrot.slane %v3509, 2
    %v3511 = vadd.f32 %v3509, %v3510
    %v3512 = vrot.slane %v3511, 1
    %v3513 = vadd.f32 %v3511, %v3512
    %3514 = vmatprep.subr.mxu0 0.0
    %3515 = vmatpush1.msra.mxu0 %v292
    %3516 = vmatprep.subr.mxu0 0.0
    %3517 = vmatpush1.msra.mxu0 %v293
    %3518 = vmatprep.subr.mxu0 0.0
    %3519 = vmatpush1.msra.mxu0 %v294
    %3520 = vmatprep.subr.mxu0 0.0
    %3521 = vmatpush1.msra.mxu0 %v295
    %3522 = vmatprep.subr.mxu0 0.0
    %3523 = vmatpush1.msra.mxu0 %v296
    %3524 = vmatprep.subr.mxu0 0.0
    %3525 = vmatpush1.msra.mxu0 %v297
    %3526 = vmatprep.subr.mxu0 0.0
    %3527 = vmatpush1.msra.mxu0 %v298
    %3528 = vmatprep.subr.mxu0 0.0
    %3529 = vmatpush1.msra.mxu0 %v299
    %3530 = vmatprep.subr.mxu0 0.0
    %3531 = vmatpush1.msra.mxu0 %v300
    %3532 = vmatprep.subr.mxu0 0.0
    %3533 = vmatpush1.msra.mxu0 %v301
    %3534 = vmatprep.subr.mxu0 0.0
    %3535 = vmatpush1.msra.mxu0 %v302
    %3536 = vmatprep.subr.mxu0 0.0
    %3537 = vmatpush1.msra.mxu0 %v303
    %3538 = vmatprep.subr.mxu0 0.0
    %3539 = vmatpush1.msra.mxu0 %v304
    %3540 = vmatprep.subr.mxu0 0.0
    %3541 = vmatpush1.msra.mxu0 %v305
    %3542 = vmatprep.subr.mxu0 0.0
    %3543 = vmatpush1.msra.mxu0 %v306
    %3544 = vmatprep.subr.mxu0 0.0
    %3545 = vmatpush1.msra.mxu0 %v307
    %3546 = vmatprep.subr.mxu0 0.0
    %3547 = vmatpush1.msra.mxu0 0.0
    %3548 = vmatprep.subr.mxu0 0.0
    %3549 = vmatpush1.msra.mxu0 0.0
    %3550 = vmatprep.subr.mxu0 0.0
    %3551 = vmatpush1.msra.mxu0 0.0
    %3552 = vmatprep.subr.mxu0 0.0
    %3553 = vmatpush1.msra.mxu0 0.0
    %3554 = vmatprep.subr.mxu0 0.0
    %3555 = vmatpush1.msra.mxu0 0.0
    %3556 = vmatprep.subr.mxu0 0.0
    %3557 = vmatpush1.msra.mxu0 0.0
    %3558 = vmatprep.subr.mxu0 0.0
    %3559 = vmatpush1.msra.mxu0 0.0
    %3560 = vmatprep.subr.mxu0 0.0
    %3561 = vmatpush1.msra.mxu0 0.0
    %3562 = vmatprep.subr.mxu0 0.0
    %3563 = vmatpush1.msra.mxu0 0.0
    %3564 = vmatprep.subr.mxu0 0.0
    %3565 = vmatpush1.msra.mxu0 0.0
    %3566 = vmatprep.subr.mxu0 0.0
    %3567 = vmatpush1.msra.mxu0 0.0
    %3568 = vmatprep.subr.mxu0 0.0
    %3569 = vmatpush1.msra.mxu0 0.0
    %3570 = vmatprep.subr.mxu0 0.0
    %3571 = vmatpush1.msra.mxu0 0.0
    %3572 = vmatprep.subr.mxu0 0.0
    %3573 = vmatpush1.msra.mxu0 0.0
    %3574 = vmatprep.subr.mxu0 0.0
    %3575 = vmatpush1.msra.mxu0 0.0
    %3576 = vmatprep.subr.mxu0 0.0
    %3577 = vmatpush1.msra.mxu0 0.0
    %3578 = vmatprep.mubr.f32.mxu0 0.0
    %3579 = vmatmul.mubr.f32.gmra.mrb[0].mxu0 %v3513
    %v3580 = vpop.f32.mrb[0].mxu0
    %v3581 = vadd.f32 0.0, %v3580
    %v3582 = vpop.f32.mrb[0].mxu0
    %3583 = vdwg.mxu0
    %v3584 = vmul.f32 %v3505, %v3505
    %v3585 = vmul.f32 %v3506, %v3506
    %v3586 = vadd.f32 %v3584, %v3585
    %v3587 = vrot.slane %v3586, 4
    %v3588 = vadd.f32 %v3586, %v3587
    %v3589 = vrot.slane %v3588, 2
    %v3590 = vadd.f32 %v3588, %v3589
    %v3591 = vrot.slane %v3590, 1
    %v3592 = vadd.f32 %v3590, %v3591
    %3593 = vmatprep.subr.mxu0 0.0
    %3594 = vmatpush1.msra.mxu0 %v292
    %3595 = vmatprep.subr.mxu0 0.0
    %3596 = vmatpush1.msra.mxu0 %v293
    %3597 = vmatprep.subr.mxu0 0.0
    %3598 = vmatpush1.msra.mxu0 %v294
    %3599 = vmatprep.subr.mxu0 0.0
    %3600 = vmatpush1.msra.mxu0 %v295
    %3601 = vmatprep.subr.mxu0 0.0
    %3602 = vmatpush1.msra.mxu0 %v296
    %3603 = vmatprep.subr.mxu0 0.0
    %3604 = vmatpush1.msra.mxu0 %v297
    %3605 = vmatprep.subr.mxu0 0.0
    %3606 = vmatpush1.msra.mxu0 %v298
    %3607 = vmatprep.subr.mxu0 0.0
    %3608 = vmatpush1.msra.mxu0 %v299
    %3609 = vmatprep.subr.mxu0 0.0
    %3610 = vmatpush1.msra.mxu0 %v300
    %3611 = vmatprep.subr.mxu0 0.0
    %3612 = vmatpush1.msra.mxu0 %v301
    %3613 = vmatprep.subr.mxu0 0.0
    %3614 = vmatpush1.msra.mxu0 %v302
    %3615 = vmatprep.subr.mxu0 0.0
    %3616 = vmatpush1.msra.mxu0 %v303
    %3617 = vmatprep.subr.mxu0 0.0
    %3618 = vmatpush1.msra.mxu0 %v304
    %3619 = vmatprep.subr.mxu0 0.0
    %3620 = vmatpush1.msra.mxu0 %v305
    %3621 = vmatprep.subr.mxu0 0.0
    %3622 = vmatpush1.msra.mxu0 %v306
    %3623 = vmatprep.subr.mxu0 0.0
    %3624 = vmatpush1.msra.mxu0 %v307
    %3625 = vmatprep.subr.mxu0 0.0
    %3626 = vmatpush1.msra.mxu0 0.0
    %3627 = vmatprep.subr.mxu0 0.0
    %3628 = vmatpush1.msra.mxu0 0.0
    %3629 = vmatprep.subr.mxu0 0.0
    %3630 = vmatpush1.msra.mxu0 0.0
    %3631 = vmatprep.subr.mxu0 0.0
    %3632 = vmatpush1.msra.mxu0 0.0
    %3633 = vmatprep.subr.mxu0 0.0
    %3634 = vmatpush1.msra.mxu0 0.0
    %3635 = vmatprep.subr.mxu0 0.0
    %3636 = vmatpush1.msra.mxu0 0.0
    %3637 = vmatprep.subr.mxu0 0.0
    %3638 = vmatpush1.msra.mxu0 0.0
    %3639 = vmatprep.subr.mxu0 0.0
    %3640 = vmatpush1.msra.mxu0 0.0
    %3641 = vmatprep.subr.mxu0 0.0
    %3642 = vmatpush1.msra.mxu0 0.0
    %3643 = vmatprep.subr.mxu0 0.0
    %3644 = vmatpush1.msra.mxu0 0.0
    %3645 = vmatprep.subr.mxu0 0.0
    %3646 = vmatpush1.msra.mxu0 0.0
    %3647 = vmatprep.subr.mxu0 0.0
    %3648 = vmatpush1.msra.mxu0 0.0
    %3649 = vmatprep.subr.mxu0 0.0
    %3650 = vmatpush1.msra.mxu0 0.0
    %3651 = vmatprep.subr.mxu0 0.0
    %3652 = vmatpush1.msra.mxu0 0.0
    %3653 = vmatprep.subr.mxu0 0.0
    %3654 = vmatpush1.msra.mxu0 0.0
    %3655 = vmatprep.subr.mxu0 0.0
    %3656 = vmatpush1.msra.mxu0 0.0
    %3657 = vmatprep.mubr.f32.mxu0 0.0
    %3658 = vmatmul.mubr.f32.gmra.mrb[0].mxu0 %v3592
    %v3659 = vpop.f32.mrb[0].mxu0
    %v3660 = vadd.f32 0.0, %v3659
    %v3661 = vpop.f32.mrb[0].mxu0
    %3662 = vdwg.mxu0
    %v3663 = vmul.f32 %v3581, 0.0078125
    %v3664 = vmul.f32 %v3660, 0.0078125
    %v3665 = vmul.f32 %v3663, %v3663
    %v3666 = vsub.f32 %v3664, %v3665
    %v3667 = vadd.f32 %v3666, 1e-05
    %v3668 = vrsqrt.pop %v3667
    %v3669 = vlaneseq
    %v3670 = vshrl.u32 %v3669, 7
    %v3671 = vsub.s32 0, %v3670
    %v3672 = vrot.slane %v3668, %v3671
    %3673 = vrot.lane.b32.xlu0 %v1931, 64
    %v3674 = vpop.permute.xlu0 %3673
    %v3676 = vmul.f32 %v3672, %v3674
    %v3677 = vlaneseq
    %v3678 = vshrl.u32 %v3677, 7
    %v3679 = vsub.s32 0, %v3678
    %v3680 = vrot.slane %v3663, %v3679
    %v3681 = vmul.f32 %v3680, %v3676
    %3683 = vrot.lane.b32.xlu0 %v3681, 48
    %v3684 = vpop.permute.xlu0 %3683
    %v3686 = vsub.f32 %v272, %v3684
    %v3688 = vsel %vm527, %v3676, 0
    %3690 = vmatprep.subr.mxu0 0.0
    %3691 = vmatpush1.msra.mxu0 %v290
    %3692 = vmatprep.subr.mxu0 0.0
    %3693 = vmatpush1.msra.mxu0 %v291
    %3694 = vmatprep.subr.mxu0 0.0
    %3695 = vmatpush1.msra.mxu0 0.0
    %3696 = vmatprep.subr.mxu0 0.0
    %3697 = vmatpush1.msra.mxu0 0.0
    %3698 = vmatprep.subr.mxu0 0.0
    %3699 = vmatpush1.msra.mxu0 0.0
    %3700 = vmatprep.subr.mxu0 0.0
    %3701 = vmatpush1.msra.mxu0 0.0
    %3702 = vmatprep.subr.mxu0 0.0
    %3703 = vmatpush1.msra.mxu0 0.0
    %3704 = vmatprep.subr.mxu0 0.0
    %3705 = vmatpush1.msra.mxu0 0.0
    %3706 = vmatprep.subr.mxu0 0.0
    %3707 = vmatpush1.msra.mxu0 0.0
    %3708 = vmatprep.subr.mxu0 0.0
    %3709 = vmatpush1.msra.mxu0 0.0
    %3710 = vmatprep.subr.mxu0 0.0
    %3711 = vmatpush1.msra.mxu0 0.0
    %3712 = vmatprep.subr.mxu0 0.0
    %3713 = vmatpush1.msra.mxu0 0.0
    %3714 = vmatprep.subr.mxu0 0.0
    %3715 = vmatpush1.msra.mxu0 0.0
    %3716 = vmatprep.subr.mxu0 0.0
    %3717 = vmatpush1.msra.mxu0 0.0
    %3718 = vmatprep.subr.mxu0 0.0
    %3719 = vmatpush1.msra.mxu0 0.0
    %3720 = vmatprep.subr.mxu0 0.0
    %3721 = vmatpush1.msra.mxu0 0.0
    %3722 = vmatprep.subr.mxu0 0.0
    %3723 = vmatpush1.msra.mxu0 0.0
    %3724 = vmatprep.subr.mxu0 0.0
    %3725 = vmatpush1.msra.mxu0 0.0
    %3726 = vmatprep.subr.mxu0 0.0
    %3727 = vmatpush1.msra.mxu0 0.0
    %3728 = vmatprep.subr.mxu0 0.0
    %3729 = vmatpush1.msra.mxu0 0.0
    %3730 = vmatprep.subr.mxu0 0.0
    %3731 = vmatpush1.msra.mxu0 0.0
    %3732 = vmatprep.subr.mxu0 0.0
    %3733 = vmatpush1.msra.mxu0 0.0
    %3734 = vmatprep.subr.mxu0 0.0
    %3735 = vmatpush1.msra.mxu0 0.0
    %3736 = vmatprep.subr.mxu0 0.0
    %3737 = vmatpush1.msra.mxu0 0.0
    %3738 = vmatprep.subr.mxu0 0.0
    %3739 = vmatpush1.msra.mxu0 0.0
    %3740 = vmatprep.subr.mxu0 0.0
    %3741 = vmatpush1.msra.mxu0 0.0
    %3742 = vmatprep.subr.mxu0 0.0
    %3743 = vmatpush1.msra.mxu0 0.0
    %3744 = vmatprep.subr.mxu0 0.0
    %3745 = vmatpush1.msra.mxu0 0.0
    %3746 = vmatprep.subr.mxu0 0.0
    %3747 = vmatpush1.msra.mxu0 0.0
    %3748 = vmatprep.subr.mxu0 0.0
    %3749 = vmatpush1.msra.mxu0 0.0
    %3750 = vmatprep.subr.mxu0 0.0
    %3751 = vmatpush1.msra.mxu0 0.0
    %3752 = vmatprep.subr.mxu0 0.0
    %3753 = vmatpush1.msra.mxu0 0.0
    %3754 = vmatprep.mubr.f32.mxu0 0.0
    %3755 = vmatmul.mubr.f32.gmra.mrb[0].mxu0 %v3688
    %v3756 = vpop.f32.mrb[0].mxu0
    %v3757 = vadd.f32 0.0, %v3756
    %v3758 = vpop.f32.mrb[0].mxu0
    %3759 = vdwg.mxu0
    %v3761 = vsel %vm2034, %v3757, 0
    %3763 = vmatprep.subr.mxu0 0.0
    %3764 = vmatpush1.msra.mxu0 %v3761
    %3765 = vmatprep.subr.mxu0 0.0
    %3766 = vmatpush1.msra.mxu0 0.0
    %3767 = vmatprep.subr.mxu0 0.0
    %3768 = vmatpush1.msra.mxu0 0.0
    %3769 = vmatprep.subr.mxu0 0.0
    %3770 = vmatpush1.msra.mxu0 0.0
    %3771 = vmatprep.subr.mxu0 0.0
    %3772 = vmatpush1.msra.mxu0 0.0
    %3773 = vmatprep.subr.mxu0 0.0
    %3774 = vmatpush1.msra.mxu0 0.0
    %3775 = vmatprep.subr.mxu0 0.0
    %3776 = vmatpush1.msra.mxu0 0.0
    %3777 = vmatprep.subr.mxu0 0.0
    %3778 = vmatpush1.msra.mxu0 0.0
    %3779 = vmatprep.subr.mxu0 0.0
    %3780 = vmatpush1.msra.mxu0 0.0
    %3781 = vmatprep.subr.mxu0 0.0
    %3782 = vmatpush1.msra.mxu0 0.0
    %3783 = vmatprep.subr.mxu0 0.0
    %3784 = vmatpush1.msra.mxu0 0.0
    %3785 = vmatprep.subr.mxu0 0.0
    %3786 = vmatpush1.msra.mxu0 0.0
    %3787 = vmatprep.subr.mxu0 0.0
    %3788 = vmatpush1.msra.mxu0 0.0
    %3789 = vmatprep.subr.mxu0 0.0
    %3790 = vmatpush1.msra.mxu0 0.0
    %3791 = vmatprep.subr.mxu0 0.0
    %3792 = vmatpush1.msra.mxu0 0.0
    %3793 = vmatprep.subr.mxu0 0.0
    %3794 = vmatpush1.msra.mxu0 0.0
    %3795 = vmatprep.subr.mxu0 0.0
    %3796 = vmatpush1.msra.mxu0 0.0
    %3797 = vmatprep.subr.mxu0 0.0
    %3798 = vmatpush1.msra.mxu0 0.0
    %3799 = vmatprep.subr.mxu0 0.0
    %3800 = vmatpush1.msra.mxu0 0.0
    %3801 = vmatprep.subr.mxu0 0.0
    %3802 = vmatpush1.msra.mxu0 0.0
    %3803 = vmatprep.subr.mxu0 0.0
    %3804 = vmatpush1.msra.mxu0 0.0
    %3805 = vmatprep.subr.mxu0 0.0
    %3806 = vmatpush1.msra.mxu0 0.0
    %3807 = vmatprep.subr.mxu0 0.0
    %3808 = vmatpush1.msra.mxu0 0.0
    %3809 = vmatprep.subr.mxu0 0.0
    %3810 = vmatpush1.msra.mxu0 0.0
    %3811 = vmatprep.subr.mxu0 0.0
    %3812 = vmatpush1.msra.mxu0 0.0
    %3813 = vmatprep.subr.mxu0 0.0
    %3814 = vmatpush1.msra.mxu0 0.0
    %3815 = vmatprep.subr.mxu0 0.0
    %3816 = vmatpush1.msra.mxu0 0.0
    %3817 = vmatprep.subr.mxu0 0.0
    %3818 = vmatpush1.msra.mxu0 0.0
    %3819 = vmatprep.subr.mxu0 0.0
    %3820 = vmatpush1.msra.mxu0 0.0
    %3821 = vmatprep.subr.mxu0 0.0
    %3822 = vmatpush1.msra.mxu0 0.0
    %3823 = vmatprep.subr.mxu0 0.0
    %3824 = vmatpush1.msra.mxu0 0.0
    %3825 = vmatprep.subr.mxu0 0.0
    %3826 = vmatpush1.msra.mxu0 0.0
    %3827 = vmatprep.mubr.f32.mxu0 0.0
    %3828 = vmatmul.mubr.f32.gmra.mrb[0].mxu0 %v3265
    %v3829 = vpop.f32.mrb[0].mxu0
    %v3830 = vadd.f32 0.0, %v3829
    %v3831 = vpop.f32.mrb[0].mxu0
    %3832 = vmatprep.mubr.f32.mxu0 0.0
    %3833 = vmatmul.mubr.f32.gmra.mrb[0].mxu0 %v3268
    %v3834 = vpop.f32.mrb[0].mxu0
    %v3835 = vadd.f32 0.0, %v3834
    %v3836 = vpop.f32.mrb[0].mxu0
    %3837 = vdwg.mxu0
    %3839 = vrot.lane.b32.xlu0 %v3686, 80
    %v3840 = vpop.permute.xlu0 %3839
    %v3841 = vsel %vm527, %v3840, 0
    %3843 = vmatprep.subr.mxu0 0.0
    %3844 = vmatpush1.msra.mxu0 %v290
    %3845 = vmatprep.subr.mxu0 0.0
    %3846 = vmatpush1.msra.mxu0 %v291
    %3847 = vmatprep.subr.mxu0 0.0
    %3848 = vmatpush1.msra.mxu0 0.0
    %3849 = vmatprep.subr.mxu0 0.0
    %3850 = vmatpush1.msra.mxu0 0.0
    %3851 = vmatprep.subr.mxu0 0.0
    %3852 = vmatpush1.msra.mxu0 0.0
    %3853 = vmatprep.subr.mxu0 0.0
    %3854 = vmatpush1.msra.mxu0 0.0
    %3855 = vmatprep.subr.mxu0 0.0
    %3856 = vmatpush1.msra.mxu0 0.0
    %3857 = vmatprep.subr.mxu0 0.0
    %3858 = vmatpush1.msra.mxu0 0.0
    %3859 = vmatprep.subr.mxu0 0.0
    %3860 = vmatpush1.msra.mxu0 0.0
    %3861 = vmatprep.subr.mxu0 0.0
    %3862 = vmatpush1.msra.mxu0 0.0
    %3863 = vmatprep.subr.mxu0 0.0
    %3864 = vmatpush1.msra.mxu0 0.0
    %3865 = vmatprep.subr.mxu0 0.0
    %3866 = vmatpush1.msra.mxu0 0.0
    %3867 = vmatprep.subr.mxu0 0.0
    %3868 = vmatpush1.msra.mxu0 0.0
    %3869 = vmatprep.subr.mxu0 0.0
    %3870 = vmatpush1.msra.mxu0 0.0
    %3871 = vmatprep.subr.mxu0 0.0
    %3872 = vmatpush1.msra.mxu0 0.0
    %3873 = vmatprep.subr.mxu0 0.0
    %3874 = vmatpush1.msra.mxu0 0.0
    %3875 = vmatprep.subr.mxu0 0.0
    %3876 = vmatpush1.msra.mxu0 0.0
    %3877 = vmatprep.subr.mxu0 0.0
    %3878 = vmatpush1.msra.mxu0 0.0
    %3879 = vmatprep.subr.mxu0 0.0
    %3880 = vmatpush1.msra.mxu0 0.0
    %3881 = vmatprep.subr.mxu0 0.0
    %3882 = vmatpush1.msra.mxu0 0.0
    %3883 = vmatprep.subr.mxu0 0.0
    %3884 = vmatpush1.msra.mxu0 0.0
    %3885 = vmatprep.subr.mxu0 0.0
    %3886 = vmatpush1.msra.mxu0 0.0
    %3887 = vmatprep.subr.mxu0 0.0
    %3888 = vmatpush1.msra.mxu0 0.0
    %3889 = vmatprep.subr.mxu0 0.0
    %3890 = vmatpush1.msra.mxu0 0.0
    %3891 = vmatprep.subr.mxu0 0.0
    %3892 = vmatpush1.msra.mxu0 0.0
    %3893 = vmatprep.subr.mxu0 0.0
    %3894 = vmatpush1.msra.mxu0 0.0
    %3895 = vmatprep.subr.mxu0 0.0
    %3896 = vmatpush1.msra.mxu0 0.0
    %3897 = vmatprep.subr.mxu0 0.0
    %3898 = vmatpush1.msra.mxu0 0.0
    %3899 = vmatprep.subr.mxu0 0.0
    %3900 = vmatpush1.msra.mxu0 0.0
    %3901 = vmatprep.subr.mxu0 0.0
    %3902 = vmatpush1.msra.mxu0 0.0
    %3903 = vmatprep.subr.mxu0 0.0
    %3904 = vmatpush1.msra.mxu0 0.0
    %3905 = vmatprep.subr.mxu0 0.0
    %3906 = vmatpush1.msra.mxu0 0.0
    %3907 = vmatprep.mubr.f32.mxu0 0.0
    %3908 = vmatmul.mubr.f32.gmra.mrb[0].mxu0 %v3841
    %v3909 = vpop.f32.mrb[0].mxu0
    %v3910 = vadd.f32 0.0, %v3909
    %v3911 = vpop.f32.mrb[0].mxu0
    %3912 = vdwg.mxu0
    %v3914 = vsel %vm2034, %v3910, 0
    %3916 = vmatprep.subr.mxu0 0.0
    %3917 = vmatpush1.msra.mxu0 %v3914
    %3918 = vmatprep.subr.mxu0 0.0
    %3919 = vmatpush1.msra.mxu0 0.0
    %3920 = vmatprep.subr.mxu0 0.0
    %3921 = vmatpush1.msra.mxu0 0.0
    %3922 = vmatprep.subr.mxu0 0.0
    %3923 = vmatpush1.msra.mxu0 0.0
    %3924 = vmatprep.subr.mxu0 0.0
    %3925 = vmatpush1.msra.mxu0 0.0
    %3926 = vmatprep.subr.mxu0 0.0
    %3927 = vmatpush1.msra.mxu0 0.0
    %3928 = vmatprep.subr.mxu0 0.0
    %3929 = vmatpush1.msra.mxu0 0.0
    %3930 = vmatprep.subr.mxu0 0.0
    %3931 = vmatpush1.msra.mxu0 0.0
    %3932 = vmatprep.subr.mxu0 0.0
    %3933 = vmatpush1.msra.mxu0 0.0
    %3934 = vmatprep.subr.mxu0 0.0
    %3935 = vmatpush1.msra.mxu0 0.0
    %3936 = vmatprep.subr.mxu0 0.0
    %3937 = vmatpush1.msra.mxu0 0.0
    %3938 = vmatprep.subr.mxu0 0.0
    %3939 = vmatpush1.msra.mxu0 0.0
    %3940 = vmatprep.subr.mxu0 0.0
    %3941 = vmatpush1.msra.mxu0 0.0
    %3942 = vmatprep.subr.mxu0 0.0
    %3943 = vmatpush1.msra.mxu0 0.0
    %3944 = vmatprep.subr.mxu0 0.0
    %3945 = vmatpush1.msra.mxu0 0.0
    %3946 = vmatprep.subr.mxu0 0.0
    %3947 = vmatpush1.msra.mxu0 0.0
    %3948 = vmatprep.subr.mxu0 0.0
    %3949 = vmatpush1.msra.mxu0 0.0
    %3950 = vmatprep.subr.mxu0 0.0
    %3951 = vmatpush1.msra.mxu0 0.0
    %3952 = vmatprep.subr.mxu0 0.0
    %3953 = vmatpush1.msra.mxu0 0.0
    %3954 = vmatprep.subr.mxu0 0.0
    %3955 = vmatpush1.msra.mxu0 0.0
    %3956 = vmatprep.subr.mxu0 0.0
    %3957 = vmatpush1.msra.mxu0 0.0
    %3958 = vmatprep.subr.mxu0 0.0
    %3959 = vmatpush1.msra.mxu0 0.0
    %3960 = vmatprep.subr.mxu0 0.0
    %3961 = vmatpush1.msra.mxu0 0.0
    %3962 = vmatprep.subr.mxu0 0.0
    %3963 = vmatpush1.msra.mxu0 0.0
    %3964 = vmatprep.subr.mxu0 0.0
    %3965 = vmatpush1.msra.mxu0 0.0
    %3966 = vmatprep.subr.mxu0 0.0
    %3967 = vmatpush1.msra.mxu0 0.0
    %3968 = vmatprep.subr.mxu0 0.0
    %3969 = vmatpush1.msra.mxu0 0.0
    %3970 = vmatprep.subr.mxu0 0.0
    %3971 = vmatpush1.msra.mxu0 0.0
    %3972 = vmatprep.subr.mxu0 0.0
    %3973 = vmatpush1.msra.mxu0 0.0
    %3974 = vmatprep.subr.mxu0 0.0
    %3975 = vmatpush1.msra.mxu0 0.0
    %3976 = vmatprep.subr.mxu0 0.0
    %3977 = vmatpush1.msra.mxu0 0.0
    %3978 = vmatprep.subr.mxu0 0.0
    %3979 = vmatpush1.msra.mxu0 0.0
    %3980 = vmatprep.mubr.f32.mxu0 0.0
    %3981 = vmatmul.mubr.f32.gmra.mrb[0].mxu0 %v3265
    %v3982 = vpop.f32.mrb[0].mxu0
    %v3983 = vadd.f32 0.0, %v3982
    %v3984 = vpop.f32.mrb[0].mxu0
    %3985 = vmatprep.mubr.f32.mxu0 0.0
    %3986 = vmatmul.mubr.f32.gmra.mrb[0].mxu0 %v3268
    %v3987 = vpop.f32.mrb[0].mxu0
    %v3988 = vadd.f32 0.0, %v3987
    %v3989 = vpop.f32.mrb[0].mxu0
    %3990 = vdwg.mxu0
    %v3991 = vmul.f32 %v3505, %v3830
    %v3992 = vmul.f32 %v3506, %v3835
    %v3993 = vadd.f32 %v3991, %v3983
    %v3994 = vadd.f32 %v3992, %v3988
    %v3995 = vmax.f32 %v3993, 0.0
    %v3996 = vmax.f32 %v3994, 0.0
    %v3997 = vld [vmem:[#allocation14] sm:$0xff]
    %v3998 = vld [vmem:[#allocation14 + $0x8] sm:$0xff]
    %v4000 = vsel %vm527, %v3997, 0
    %v4003 = vsel %vm527, %v3998, 0
    %4005 = vmatprep.subr.mxu0 0.0
    %4006 = vmatpush1.msra.mxu0 %v3995
    %4007 = vmatprep.subr.mxu0 0.0
    %4008 = vmatpush1.msra.mxu0 %v3996
    %4009 = vmatprep.subr.mxu0 0.0
    %4010 = vmatpush1.msra.mxu0 0.0
    %4011 = vmatprep.subr.mxu0 0.0
    %4012 = vmatpush1.msra.mxu0 0.0
    %4013 = vmatprep.subr.mxu0 0.0
    %4014 = vmatpush1.msra.mxu0 0.0
    %4015 = vmatprep.subr.mxu0 0.0
    %4016 = vmatpush1.msra.mxu0 0.0
    %4017 = vmatprep.subr.mxu0 0.0
    %4018 = vmatpush1.msra.mxu0 0.0
    %4019 = vmatprep.subr.mxu0 0.0
    %4020 = vmatpush1.msra.mxu0 0.0
    %4021 = vmatprep.subr.mxu0 0.0
    %4022 = vmatpush1.msra.mxu0 0.0
    %4023 = vmatprep.subr.mxu0 0.0
    %4024 = vmatpush1.msra.mxu0 0.0
    %4025 = vmatprep.subr.mxu0 0.0
    %4026 = vmatpush1.msra.mxu0 0.0
    %4027 = vmatprep.subr.mxu0 0.0
    %4028 = vmatpush1.msra.mxu0 0.0
    %4029 = vmatprep.subr.mxu0 0.0
    %4030 = vmatpush1.msra.mxu0 0.0
    %4031 = vmatprep.subr.mxu0 0.0
    %4032 = vmatpush1.msra.mxu0 0.0
    %4033 = vmatprep.subr.mxu0 0.0
    %4034 = vmatpush1.msra.mxu0 0.0
    %4035 = vmatprep.subr.mxu0 0.0
    %4036 = vmatpush1.msra.mxu0 0.0
    %4037 = vmatprep.subr.mxu0 0.0
    %4038 = vmatpush1.msra.mxu0 0.0
    %4039 = vmatprep.subr.mxu0 0.0
    %4040 = vmatpush1.msra.mxu0 0.0
    %4041 = vmatprep.subr.mxu0 0.0
    %4042 = vmatpush1.msra.mxu0 0.0
    %4043 = vmatprep.subr.mxu0 0.0
    %4044 = vmatpush1.msra.mxu0 0.0
    %4045 = vmatprep.subr.mxu0 0.0
    %4046 = vmatpush1.msra.mxu0 0.0
    %4047 = vmatprep.subr.mxu0 0.0
    %4048 = vmatpush1.msra.mxu0 0.0
    %4049 = vmatprep.subr.mxu0 0.0
    %4050 = vmatpush1.msra.mxu0 0.0
    %4051 = vmatprep.subr.mxu0 0.0
    %4052 = vmatpush1.msra.mxu0 0.0
    %4053 = vmatprep.subr.mxu0 0.0
    %4054 = vmatpush1.msra.mxu0 0.0
    %4055 = vmatprep.subr.mxu0 0.0
    %4056 = vmatpush1.msra.mxu0 0.0
    %4057 = vmatprep.subr.mxu0 0.0
    %4058 = vmatpush1.msra.mxu0 0.0
    %4059 = vmatprep.subr.mxu0 0.0
    %4060 = vmatpush1.msra.mxu0 0.0
    %4061 = vmatprep.subr.mxu0 0.0
    %4062 = vmatpush1.msra.mxu0 0.0
    %4063 = vmatprep.subr.mxu0 0.0
    %4064 = vmatpush1.msra.mxu0 0.0
    %4065 = vmatprep.subr.mxu0 0.0
    %4066 = vmatpush1.msra.mxu0 0.0
    %4067 = vmatprep.subr.mxu0 0.0
    %4068 = vmatpush1.msra.mxu0 0.0
    %4069 = vmatprep.mubr.f32.mxu0 0.0
    %4070 = vmatmul.mubr.f32.gmra.mrb[0].mxu0 %v4000
    %v4071 = vpop.f32.mrb[0].mxu0
    %v4072 = vadd.f32 0.0, %v4071
    %v4073 = vpop.f32.mrb[0].mxu0
    %4074 = vmatprep.mubr.f32.mxu0 0.0
    %4075 = vmatmul.mubr.f32.gmra.mrb[0].mxu0 %v4003
    %v4076 = vpop.f32.mrb[0].mxu0
    %v4077 = vadd.f32 0.0, %v4076
    %v4078 = vpop.f32.mrb[0].mxu0
    %4079 = vdwg.mxu0
    %v4080 = vld [vmem:[#allocation16] sm:$0xff]
    %v4081 = vld [vmem:[#allocation16 + $0x8] sm:$0xff]
    %v4082 = vld [vmem:[#allocation16 + $0x10] sm:$0xff]
    %v4083 = vld [vmem:[#allocation16 + $0x18] sm:$0xff]
    %v4084 = vld [vmem:[#allocation16 + $0x20] sm:$0xff]
    %v4085 = vld [vmem:[#allocation16 + $0x28] sm:$0xff]
    %v4086 = vld [vmem:[#allocation16 + $0x30] sm:$0xff]
    %v4087 = vld [vmem:[#allocation16 + $0x38] sm:$0xff]
    %v4088 = vld [vmem:[#allocation16 + $0x40] sm:$0xff]
    %v4089 = vld [vmem:[#allocation16 + $0x48] sm:$0xff]
    %v4090 = vld [vmem:[#allocation16 + $0x50] sm:$0xff]
    %v4091 = vld [vmem:[#allocation16 + $0x58] sm:$0xff]
    %v4092 = vld [vmem:[#allocation16 + $0x60] sm:$0xff]
    %v4093 = vld [vmem:[#allocation16 + $0x68] sm:$0xff]
    %v4094 = vld [vmem:[#allocation16 + $0x70] sm:$0xff]
    %v4095 = vld [vmem:[#allocation16 + $0x78] sm:$0xff]
    %s4096 = scalar_lea.vmem [#allocation14], 16
    %v4097 = vld [vmem:[%s4096] sm:$0xff]
    %v4098 = vld [vmem:[%s4096 + $0x8] sm:$0xff]
    %v4100 = vsel %vm527, %v4097, 0
    %v4103 = vsel %vm527, %v4098, 0
    %4105 = vmatprep.subr.mxu0 0.0
    %4106 = vmatpush1.msra.mxu0 %v3995
    %4107 = vmatprep.subr.mxu0 0.0
    %4108 = vmatpush1.msra.mxu0 %v3996
    %4109 = vmatprep.subr.mxu0 0.0
    %4110 = vmatpush1.msra.mxu0 0.0
    %4111 = vmatprep.subr.mxu0 0.0
    %4112 = vmatpush1.msra.mxu0 0.0
    %4113 = vmatprep.subr.mxu0 0.0
    %4114 = vmatpush1.msra.mxu0 0.0
    %4115 = vmatprep.subr.mxu0 0.0
    %4116 = vmatpush1.msra.mxu0 0.0
    %4117 = vmatprep.subr.mxu0 0.0
    %4118 = vmatpush1.msra.mxu0 0.0
    %4119 = vmatprep.subr.mxu0 0.0
    %4120 = vmatpush1.msra.mxu0 0.0
    %4121 = vmatprep.subr.mxu0 0.0
    %4122 = vmatpush1.msra.mxu0 0.0
    %4123 = vmatprep.subr.mxu0 0.0
    %4124 = vmatpush1.msra.mxu0 0.0
    %4125 = vmatprep.subr.mxu0 0.0
    %4126 = vmatpush1.msra.mxu0 0.0
    %4127 = vmatprep.subr.mxu0 0.0
    %4128 = vmatpush1.msra.mxu0 0.0
    %4129 = vmatprep.subr.mxu0 0.0
    %4130 = vmatpush1.msra.mxu0 0.0
    %4131 = vmatprep.subr.mxu0 0.0
    %4132 = vmatpush1.msra.mxu0 0.0
    %4133 = vmatprep.subr.mxu0 0.0
    %4134 = vmatpush1.msra.mxu0 0.0
    %4135 = vmatprep.subr.mxu0 0.0
    %4136 = vmatpush1.msra.mxu0 0.0
    %4137 = vmatprep.subr.mxu0 0.0
    %4138 = vmatpush1.msra.mxu0 0.0
    %4139 = vmatprep.subr.mxu0 0.0
    %4140 = vmatpush1.msra.mxu0 0.0
    %4141 = vmatprep.subr.mxu0 0.0
    %4142 = vmatpush1.msra.mxu0 0.0
    %4143 = vmatprep.subr.mxu0 0.0
    %4144 = vmatpush1.msra.mxu0 0.0
    %4145 = vmatprep.subr.mxu0 0.0
    %4146 = vmatpush1.msra.mxu0 0.0
    %4147 = vmatprep.subr.mxu0 0.0
    %4148 = vmatpush1.msra.mxu0 0.0
    %4149 = vmatprep.subr.mxu0 0.0
    %4150 = vmatpush1.msra.mxu0 0.0
    %4151 = vmatprep.subr.mxu0 0.0
    %4152 = vmatpush1.msra.mxu0 0.0
    %4153 = vmatprep.subr.mxu0 0.0
    %4154 = vmatpush1.msra.mxu0 0.0
    %4155 = vmatprep.subr.mxu0 0.0
    %4156 = vmatpush1.msra.mxu0 0.0
    %4157 = vmatprep.subr.mxu0 0.0
    %4158 = vmatpush1.msra.mxu0 0.0
    %4159 = vmatprep.subr.mxu0 0.0
    %4160 = vmatpush1.msra.mxu0 0.0
    %4161 = vmatprep.subr.mxu0 0.0
    %4162 = vmatpush1.msra.mxu0 0.0
    %4163 = vmatprep.subr.mxu0 0.0
    %4164 = vmatpush1.msra.mxu0 0.0
    %4165 = vmatprep.subr.mxu0 0.0
    %4166 = vmatpush1.msra.mxu0 0.0
    %4167 = vmatprep.subr.mxu0 0.0
    %4168 = vmatpush1.msra.mxu0 0.0
    %4169 = vmatprep.mubr.f32.mxu0 0.0
    %4170 = vmatmul.mubr.f32.gmra.mrb[0].mxu0 %v4100
    %v4171 = vpop.f32.mrb[0].mxu0
    %v4172 = vadd.f32 0.0, %v4171
    %v4173 = vpop.f32.mrb[0].mxu0
    %4174 = vmatprep.mubr.f32.mxu0 0.0
    %4175 = vmatmul.mubr.f32.gmra.mrb[0].mxu0 %v4103
    %v4176 = vpop.f32.mrb[0].mxu0
    %v4177 = vadd.f32 0.0, %v4176
    %v4178 = vpop.f32.mrb[0].mxu0
    %4179 = vdwg.mxu0
    %s4180 = scalar_lea.vmem [#allocation16], 128
    %v4181 = vld [vmem:[%s4180] sm:$0xff]
    %v4182 = vld [vmem:[%s4180 + $0x8] sm:$0xff]
    %v4183 = vld [vmem:[%s4180 + $0x10] sm:$0xff]
    %v4184 = vld [vmem:[%s4180 + $0x18] sm:$0xff]
    %v4185 = vld [vmem:[%s4180 + $0x20] sm:$0xff]
    %v4186 = vld [vmem:[%s4180 + $0x28] sm:$0xff]
    %v4187 = vld [vmem:[%s4180 + $0x30] sm:$0xff]
    %v4188 = vld [vmem:[%s4180 + $0x38] sm:$0xff]
    %v4189 = vld [vmem:[%s4180 + $0x40] sm:$0xff]
    %v4190 = vld [vmem:[%s4180 + $0x48] sm:$0xff]
    %v4191 = vld [vmem:[%s4180 + $0x50] sm:$0xff]
    %v4192 = vld [vmem:[%s4180 + $0x58] sm:$0xff]
    %v4193 = vld [vmem:[%s4180 + $0x60] sm:$0xff]
    %v4194 = vld [vmem:[%s4180 + $0x68] sm:$0xff]
    %v4195 = vld [vmem:[%s4180 + $0x70] sm:$0xff]
    %v4196 = vld [vmem:[%s4180 + $0x78] sm:$0xff]
    %4197 = vmatprep.subr.mxu0 0.0
    %4198 = vmatpush1.msra.mxu0 %v4181
    %4199 = vmatprep.subr.mxu0 0.0
    %4200 = vmatpush1.msra.mxu0 %v4182
    %4201 = vmatprep.subr.mxu0 0.0
    %4202 = vmatpush1.msra.mxu0 %v4183
    %4203 = vmatprep.subr.mxu0 0.0
    %4204 = vmatpush1.msra.mxu0 %v4184
    %4205 = vmatprep.subr.mxu0 0.0
    %4206 = vmatpush1.msra.mxu0 %v4185
    %4207 = vmatprep.subr.mxu0 0.0
    %4208 = vmatpush1.msra.mxu0 %v4186
    %4209 = vmatprep.subr.mxu0 0.0
    %4210 = vmatpush1.msra.mxu0 %v4187
    %4211 = vmatprep.subr.mxu0 0.0
    %4212 = vmatpush1.msra.mxu0 %v4188
    %4213 = vmatprep.subr.mxu0 0.0
    %4214 = vmatpush1.msra.mxu0 %v4189
    %4215 = vmatprep.subr.mxu0 0.0
    %4216 = vmatpush1.msra.mxu0 %v4190
    %4217 = vmatprep.subr.mxu0 0.0
    %4218 = vmatpush1.msra.mxu0 %v4191
    %4219 = vmatprep.subr.mxu0 0.0
    %4220 = vmatpush1.msra.mxu0 %v4192
    %4221 = vmatprep.subr.mxu0 0.0
    %4222 = vmatpush1.msra.mxu0 %v4193
    %4223 = vmatprep.subr.mxu0 0.0
    %4224 = vmatpush1.msra.mxu0 %v4194
    %4225 = vmatprep.subr.mxu0 0.0
    %4226 = vmatpush1.msra.mxu0 %v4195
    %4227 = vmatprep.subr.mxu0 0.0
    %4228 = vmatpush1.msra.mxu0 %v4196
    %4229 = vmatprep.subr.mxu0 0.0
    %4230 = vmatpush1.msra.mxu0 0.0
    %4231 = vmatprep.subr.mxu0 0.0
    %4232 = vmatpush1.msra.mxu0 0.0
    %4233 = vmatprep.subr.mxu0 0.0
    %4234 = vmatpush1.msra.mxu0 0.0
    %4235 = vmatprep.subr.mxu0 0.0
    %4236 = vmatpush1.msra.mxu0 0.0
    %4237 = vmatprep.subr.mxu0 0.0
    %4238 = vmatpush1.msra.mxu0 0.0
    %4239 = vmatprep.subr.mxu0 0.0
    %4240 = vmatpush1.msra.mxu0 0.0
    %4241 = vmatprep.subr.mxu0 0.0
    %4242 = vmatpush1.msra.mxu0 0.0
    %4243 = vmatprep.subr.mxu0 0.0
    %4244 = vmatpush1.msra.mxu0 0.0
    %4245 = vmatprep.subr.mxu0 0.0
    %4246 = vmatpush1.msra.mxu0 0.0
    %4247 = vmatprep.subr.mxu0 0.0
    %4248 = vmatpush1.msra.mxu0 0.0
    %4249 = vmatprep.subr.mxu0 0.0
    %4250 = vmatpush1.msra.mxu0 0.0
    %4251 = vmatprep.subr.mxu0 0.0
    %4252 = vmatpush1.msra.mxu0 0.0
    %4253 = vmatprep.subr.mxu0 0.0
    %4254 = vmatpush1.msra.mxu0 0.0
    %4255 = vmatprep.subr.mxu0 0.0
    %4256 = vmatpush1.msra.mxu0 0.0
    %4257 = vmatprep.subr.mxu0 0.0
    %4258 = vmatpush1.msra.mxu0 0.0
    %4259 = vmatprep.subr.mxu0 0.0
    %4260 = vmatpush1.msra.mxu0 0.0
    %4261 = vmatprep.mubr.f32.mxu0 0.0
    %4262 = vmatmul.mubr.f32.gmra.mrb[0].mxu0 %v4172
    %v4263 = vpop.f32.mrb[0].mxu0
    %v4264 = vadd.f32 0.0, %v4263
    %v4265 = vpop.f32.mrb[0].mxu0
    %4266 = vmatprep.mubr.f32.mxu0 0.0
    %4267 = vmatmul.mubr.f32.gmra.mrb[0].mxu0 %v4177
    %v4268 = vpop.f32.mrb[0].mxu0
    %v4269 = vadd.f32 0.0, %v4268
    %v4270 = vpop.f32.mrb[0].mxu0
    %4271 = vdwg.mxu0
    %4272 = vmatprep.subr.mxu0 0.0
    %4273 = vmatpush1.msra.mxu0 %v4080
    %4274 = vmatprep.subr.mxu0 0.0
    %4275 = vmatpush1.msra.mxu0 %v4081
    %4276 = vmatprep.subr.mxu0 0.0
    %4277 = vmatpush1.msra.mxu0 %v4082
    %4278 = vmatprep.subr.mxu0 0.0
    %4279 = vmatpush1.msra.mxu0 %v4083
    %4280 = vmatprep.subr.mxu0 0.0
    %4281 = vmatpush1.msra.mxu0 %v4084
    %4282 = vmatprep.subr.mxu0 0.0
    %4283 = vmatpush1.msra.mxu0 %v4085
    %4284 = vmatprep.subr.mxu0 0.0
    %4285 = vmatpush1.msra.mxu0 %v4086
    %4286 = vmatprep.subr.mxu0 0.0
    %4287 = vmatpush1.msra.mxu0 %v4087
    %4288 = vmatprep.subr.mxu0 0.0
    %4289 = vmatpush1.msra.mxu0 %v4088
    %4290 = vmatprep.subr.mxu0 0.0
    %4291 = vmatpush1.msra.mxu0 %v4089
    %4292 = vmatprep.subr.mxu0 0.0
    %4293 = vmatpush1.msra.mxu0 %v4090
    %4294 = vmatprep.subr.mxu0 0.0
    %4295 = vmatpush1.msra.mxu0 %v4091
    %4296 = vmatprep.subr.mxu0 0.0
    %4297 = vmatpush1.msra.mxu0 %v4092
    %4298 = vmatprep.subr.mxu0 0.0
    %4299 = vmatpush1.msra.mxu0 %v4093
    %4300 = vmatprep.subr.mxu0 0.0
    %4301 = vmatpush1.msra.mxu0 %v4094
    %4302 = vmatprep.subr.mxu0 0.0
    %4303 = vmatpush1.msra.mxu0 %v4095
    %4304 = vmatprep.subr.mxu0 0.0
    %4305 = vmatpush1.msra.mxu0 0.0
    %4306 = vmatprep.subr.mxu0 0.0
    %4307 = vmatpush1.msra.mxu0 0.0
    %4308 = vmatprep.subr.mxu0 0.0
    %4309 = vmatpush1.msra.mxu0 0.0
    %4310 = vmatprep.subr.mxu0 0.0
    %4311 = vmatpush1.msra.mxu0 0.0
    %4312 = vmatprep.subr.mxu0 0.0
    %4313 = vmatpush1.msra.mxu0 0.0
    %4314 = vmatprep.subr.mxu0 0.0
    %4315 = vmatpush1.msra.mxu0 0.0
    %4316 = vmatprep.subr.mxu0 0.0
    %4317 = vmatpush1.msra.mxu0 0.0
    %4318 = vmatprep.subr.mxu0 0.0
    %4319 = vmatpush1.msra.mxu0 0.0
    %4320 = vmatprep.subr.mxu0 0.0
    %4321 = vmatpush1.msra.mxu0 0.0
    %4322 = vmatprep.subr.mxu0 0.0
    %4323 = vmatpush1.msra.mxu0 0.0
    %4324 = vmatprep.subr.mxu0 0.0
    %4325 = vmatpush1.msra.mxu0 0.0
    %4326 = vmatprep.subr.mxu0 0.0
    %4327 = vmatpush1.msra.mxu0 0.0
    %4328 = vmatprep.subr.mxu0 0.0
    %4329 = vmatpush1.msra.mxu0 0.0
    %4330 = vmatprep.subr.mxu0 0.0
    %4331 = vmatpush1.msra.mxu0 0.0
    %4332 = vmatprep.subr.mxu0 0.0
    %4333 = vmatpush1.msra.mxu0 0.0
    %4334 = vmatprep.subr.mxu0 0.0
    %4335 = vmatpush1.msra.mxu0 0.0
    %4336 = vmatprep.mubr.f32.mxu0 0.0
    %4337 = vmatmul.mubr.f32.gmra.mrb[0].mxu0 %v4072
    %v4338 = vpop.f32.mrb[0].mxu0
    %v4339 = vadd.f32 %v4264, %v4338
    %v4340 = vpop.f32.mrb[0].mxu0
    %4341 = vmatprep.mubr.f32.mxu0 0.0
    %4342 = vmatmul.mubr.f32.gmra.mrb[0].mxu0 %v4077
    %v4343 = vpop.f32.mrb[0].mxu0
    %v4344 = vadd.f32 %v4269, %v4343
    %v4345 = vpop.f32.mrb[0].mxu0
    %4346 = vdwg.mxu0
    %s4347 = scalar_lea.vmem [#allocation14], 32
    %v4348 = vld [vmem:[%s4347] sm:$0xff]
    %v4349 = vld [vmem:[%s4347 + $0x8] sm:$0xff]
    %v4351 = vsel %vm527, %v4348, 0
    %v4354 = vsel %vm527, %v4349, 0
    %4356 = vmatprep.subr.mxu0 0.0
    %4357 = vmatpush1.msra.mxu0 %v3995
    %4358 = vmatprep.subr.mxu0 0.0
    %4359 = vmatpush1.msra.mxu0 %v3996
    %4360 = vmatprep.subr.mxu0 0.0
    %4361 = vmatpush1.msra.mxu0 0.0
    %4362 = vmatprep.subr.mxu0 0.0
    %4363 = vmatpush1.msra.mxu0 0.0
    %4364 = vmatprep.subr.mxu0 0.0
    %4365 = vmatpush1.msra.mxu0 0.0
    %4366 = vmatprep.subr.mxu0 0.0
    %4367 = vmatpush1.msra.mxu0 0.0
    %4368 = vmatprep.subr.mxu0 0.0
    %4369 = vmatpush1.msra.mxu0 0.0
    %4370 = vmatprep.subr.mxu0 0.0
    %4371 = vmatpush1.msra.mxu0 0.0
    %4372 = vmatprep.subr.mxu0 0.0
    %4373 = vmatpush1.msra.mxu0 0.0
    %4374 = vmatprep.subr.mxu0 0.0
    %4375 = vmatpush1.msra.mxu0 0.0
    %4376 = vmatprep.subr.mxu0 0.0
    %4377 = vmatpush1.msra.mxu0 0.0
    %4378 = vmatprep.subr.mxu0 0.0
    %4379 = vmatpush1.msra.mxu0 0.0
    %4380 = vmatprep.subr.mxu0 0.0
    %4381 = vmatpush1.msra.mxu0 0.0
    %4382 = vmatprep.subr.mxu0 0.0
    %4383 = vmatpush1.msra.mxu0 0.0
    %4384 = vmatprep.subr.mxu0 0.0
    %4385 = vmatpush1.msra.mxu0 0.0
    %4386 = vmatprep.subr.mxu0 0.0
    %4387 = vmatpush1.msra.mxu0 0.0
    %4388 = vmatprep.subr.mxu0 0.0
    %4389 = vmatpush1.msra.mxu0 0.0
    %4390 = vmatprep.subr.mxu0 0.0
    %4391 = vmatpush1.msra.mxu0 0.0
    %4392 = vmatprep.subr.mxu0 0.0
    %4393 = vmatpush1.msra.mxu0 0.0
    %4394 = vmatprep.subr.mxu0 0.0
    %4395 = vmatpush1.msra.mxu0 0.0
    %4396 = vmatprep.subr.mxu0 0.0
    %4397 = vmatpush1.msra.mxu0 0.0
    %4398 = vmatprep.subr.mxu0 0.0
    %4399 = vmatpush1.msra.mxu0 0.0
    %4400 = vmatprep.subr.mxu0 0.0
    %4401 = vmatpush1.msra.mxu0 0.0
    %4402 = vmatprep.subr.mxu0 0.0
    %4403 = vmatpush1.msra.mxu0 0.0
    %4404 = vmatprep.subr.mxu0 0.0
    %4405 = vmatpush1.msra.mxu0 0.0
    %4406 = vmatprep.subr.mxu0 0.0
    %4407 = vmatpush1.msra.mxu0 0.0
    %4408 = vmatprep.subr.mxu0 0.0
    %4409 = vmatpush1.msra.mxu0 0.0
    %4410 = vmatprep.subr.mxu0 0.0
    %4411 = vmatpush1.msra.mxu0 0.0
    %4412 = vmatprep.subr.mxu0 0.0
    %4413 = vmatpush1.msra.mxu0 0.0
    %4414 = vmatprep.subr.mxu0 0.0
    %4415 = vmatpush1.msra.mxu0 0.0
    %4416 = vmatprep.subr.mxu0 0.0
    %4417 = vmatpush1.msra.mxu0 0.0
    %4418 = vmatprep.subr.mxu0 0.0
    %4419 = vmatpush1.msra.mxu0 0.0
    %4420 = vmatprep.mubr.f32.mxu0 0.0
    %4421 = vmatmul.mubr.f32.gmra.mrb[0].mxu0 %v4351
    %v4422 = vpop.f32.mrb[0].mxu0
    %v4423 = vadd.f32 0.0, %v4422
    %v4424 = vpop.f32.mrb[0].mxu0
    %4425 = vmatprep.mubr.f32.mxu0 0.0
    %4426 = vmatmul.mubr.f32.gmra.mrb[0].mxu0 %v4354
    %v4427 = vpop.f32.mrb[0].mxu0
    %v4428 = vadd.f32 0.0, %v4427
    %v4429 = vpop.f32.mrb[0].mxu0
    %4430 = vdwg.mxu0
    %s4431 = scalar_lea.vmem [#allocation16], 256
    %v4432 = vld [vmem:[%s4431] sm:$0xff]
    %v4433 = vld [vmem:[%s4431 + $0x8] sm:$0xff]
    %v4434 = vld [vmem:[%s4431 + $0x10] sm:$0xff]
    %v4435 = vld [vmem:[%s4431 + $0x18] sm:$0xff]
    %v4436 = vld [vmem:[%s4431 + $0x20] sm:$0xff]
    %v4437 = vld [vmem:[%s4431 + $0x28] sm:$0xff]
    %v4438 = vld [vmem:[%s4431 + $0x30] sm:$0xff]
    %v4439 = vld [vmem:[%s4431 + $0x38] sm:$0xff]
    %v4440 = vld [vmem:[%s4431 + $0x40] sm:$0xff]
    %v4441 = vld [vmem:[%s4431 + $0x48] sm:$0xff]
    %v4442 = vld [vmem:[%s4431 + $0x50] sm:$0xff]
    %v4443 = vld [vmem:[%s4431 + $0x58] sm:$0xff]
    %v4444 = vld [vmem:[%s4431 + $0x60] sm:$0xff]
    %v4445 = vld [vmem:[%s4431 + $0x68] sm:$0xff]
    %v4446 = vld [vmem:[%s4431 + $0x70] sm:$0xff]
    %v4447 = vld [vmem:[%s4431 + $0x78] sm:$0xff]
    %4448 = vmatprep.subr.mxu0 0.0
    %4449 = vmatpush1.msra.mxu0 %v4432
    %4450 = vmatprep.subr.mxu0 0.0
    %4451 = vmatpush1.msra.mxu0 %v4433
    %4452 = vmatprep.subr.mxu0 0.0
    %4453 = vmatpush1.msra.mxu0 %v4434
    %4454 = vmatprep.subr.mxu0 0.0
    %4455 = vmatpush1.msra.mxu0 %v4435
    %4456 = vmatprep.subr.mxu0 0.0
    %4457 = vmatpush1.msra.mxu0 %v4436
    %4458 = vmatprep.subr.mxu0 0.0
    %4459 = vmatpush1.msra.mxu0 %v4437
    %4460 = vmatprep.subr.mxu0 0.0
    %4461 = vmatpush1.msra.mxu0 %v4438
    %4462 = vmatprep.subr.mxu0 0.0
    %4463 = vmatpush1.msra.mxu0 %v4439
    %4464 = vmatprep.subr.mxu0 0.0
    %4465 = vmatpush1.msra.mxu0 %v4440
    %4466 = vmatprep.subr.mxu0 0.0
    %4467 = vmatpush1.msra.mxu0 %v4441
    %4468 = vmatprep.subr.mxu0 0.0
    %4469 = vmatpush1.msra.mxu0 %v4442
    %4470 = vmatprep.subr.mxu0 0.0
    %4471 = vmatpush1.msra.mxu0 %v4443
    %4472 = vmatprep.subr.mxu0 0.0
    %4473 = vmatpush1.msra.mxu0 %v4444
    %4474 = vmatprep.subr.mxu0 0.0
    %4475 = vmatpush1.msra.mxu0 %v4445
    %4476 = vmatprep.subr.mxu0 0.0
    %4477 = vmatpush1.msra.mxu0 %v4446
    %4478 = vmatprep.subr.mxu0 0.0
    %4479 = vmatpush1.msra.mxu0 %v4447
    %4480 = vmatprep.subr.mxu0 0.0
    %4481 = vmatpush1.msra.mxu0 0.0
    %4482 = vmatprep.subr.mxu0 0.0
    %4483 = vmatpush1.msra.mxu0 0.0
    %4484 = vmatprep.subr.mxu0 0.0
    %4485 = vmatpush1.msra.mxu0 0.0
    %4486 = vmatprep.subr.mxu0 0.0
    %4487 = vmatpush1.msra.mxu0 0.0
    %4488 = vmatprep.subr.mxu0 0.0
    %4489 = vmatpush1.msra.mxu0 0.0
    %4490 = vmatprep.subr.mxu0 0.0
    %4491 = vmatpush1.msra.mxu0 0.0
    %4492 = vmatprep.subr.mxu0 0.0
    %4493 = vmatpush1.msra.mxu0 0.0
    %4494 = vmatprep.subr.mxu0 0.0
    %4495 = vmatpush1.msra.mxu0 0.0
    %4496 = vmatprep.subr.mxu0 0.0
    %4497 = vmatpush1.msra.mxu0 0.0
    %4498 = vmatprep.subr.mxu0 0.0
    %4499 = vmatpush1.msra.mxu0 0.0
    %4500 = vmatprep.subr.mxu0 0.0
    %4501 = vmatpush1.msra.mxu0 0.0
    %4502 = vmatprep.subr.mxu0 0.0
    %4503 = vmatpush1.msra.mxu0 0.0
    %4504 = vmatprep.subr.mxu0 0.0
    %4505 = vmatpush1.msra.mxu0 0.0
    %4506 = vmatprep.subr.mxu0 0.0
    %4507 = vmatpush1.msra.mxu0 0.0
    %4508 = vmatprep.subr.mxu0 0.0
    %4509 = vmatpush1.msra.mxu0 0.0
    %4510 = vmatprep.subr.mxu0 0.0
    %4511 = vmatpush1.msra.mxu0 0.0
    %4512 = vmatprep.mubr.f32.mxu0 0.0
    %4513 = vmatmul.mubr.f32.gmra.mrb[0].mxu0 %v4423
    %v4514 = vpop.f32.mrb[0].mxu0
    %v4515 = vadd.f32 0.0, %v4514
    %v4516 = vpop.f32.mrb[0].mxu0
    %4517 = vmatprep.mubr.f32.mxu0 0.0
    %4518 = vmatmul.mubr.f32.gmra.mrb[0].mxu0 %v4428
    %v4519 = vpop.f32.mrb[0].mxu0
    %v4520 = vadd.f32 0.0, %v4519
    %v4521 = vpop.f32.mrb[0].mxu0
    %4522 = vdwg.mxu0
    %v4523 = vadd.f32 %v4339, %v4515
    %v4524 = vadd.f32 %v4344, %v4520
    %v4525 = vld [vmem:[%s11] sm:$0x1]
    %v4527 = vlaneseq
    %v4528 = vshrl.u32 %v4527, 7
    %v4529 = vsub.s32 0, %v4528
    %v4530 = vrot.slane %v4525, %v4529
    %v4532 = vadd.f32 %v4523, %v4530
    %v4533 = vadd.f32 %v4524, %v4530
    %v4534 = vadd.f32 %v3505, %v4532
    %v4535 = vadd.f32 %v3506, %v4533
    %v4536 = vld [vmem:[#allocation17] sm:$0xff]
    %v4537 = vld [vmem:[#allocation17 + $0x8] sm:$0xff]
    %v4538 = vld [vmem:[#allocation17 + $0x10] sm:$0xff]
    %v4539 = vld [vmem:[#allocation17 + $0x18] sm:$0xff]
    %v4541 = vsel %vm527, %v4536, 0
    %v4544 = vsel %vm527, %v4537, 0
    %v4547 = vsel %vm527, %v4538, 0
    %v4550 = vsel %vm527, %v4539, 0
    %4552 = vmatprep.subr.mxu0 0.0
    %4553 = vmatpush1.msra.mxu0 %v4534
    %4554 = vmatprep.subr.mxu0 0.0
    %4555 = vmatpush1.msra.mxu0 %v4535
    %4556 = vmatprep.subr.mxu0 0.0
    %4557 = vmatpush1.msra.mxu0 0.0
    %4558 = vmatprep.subr.mxu0 0.0
    %4559 = vmatpush1.msra.mxu0 0.0
    %4560 = vmatprep.subr.mxu0 0.0
    %4561 = vmatpush1.msra.mxu0 0.0
    %4562 = vmatprep.subr.mxu0 0.0
    %4563 = vmatpush1.msra.mxu0 0.0
    %4564 = vmatprep.subr.mxu0 0.0
    %4565 = vmatpush1.msra.mxu0 0.0
    %4566 = vmatprep.subr.mxu0 0.0
    %4567 = vmatpush1.msra.mxu0 0.0
    %4568 = vmatprep.subr.mxu0 0.0
    %4569 = vmatpush1.msra.mxu0 0.0
    %4570 = vmatprep.subr.mxu0 0.0
    %4571 = vmatpush1.msra.mxu0 0.0
    %4572 = vmatprep.subr.mxu0 0.0
    %4573 = vmatpush1.msra.mxu0 0.0
    %4574 = vmatprep.subr.mxu0 0.0
    %4575 = vmatpush1.msra.mxu0 0.0
    %4576 = vmatprep.subr.mxu0 0.0
    %4577 = vmatpush1.msra.mxu0 0.0
    %4578 = vmatprep.subr.mxu0 0.0
    %4579 = vmatpush1.msra.mxu0 0.0
    %4580 = vmatprep.subr.mxu0 0.0
    %4581 = vmatpush1.msra.mxu0 0.0
    %4582 = vmatprep.subr.mxu0 0.0
    %4583 = vmatpush1.msra.mxu0 0.0
    %4584 = vmatprep.subr.mxu0 0.0
    %4585 = vmatpush1.msra.mxu0 0.0
    %4586 = vmatprep.subr.mxu0 0.0
    %4587 = vmatpush1.msra.mxu0 0.0
    %4588 = vmatprep.subr.mxu0 0.0
    %4589 = vmatpush1.msra.mxu0 0.0
    %4590 = vmatprep.subr.mxu0 0.0
    %4591 = vmatpush1.msra.mxu0 0.0
    %4592 = vmatprep.subr.mxu0 0.0
    %4593 = vmatpush1.msra.mxu0 0.0
    %4594 = vmatprep.subr.mxu0 0.0
    %4595 = vmatpush1.msra.mxu0 0.0
    %4596 = vmatprep.subr.mxu0 0.0
    %4597 = vmatpush1.msra.mxu0 0.0
    %4598 = vmatprep.subr.mxu0 0.0
    %4599 = vmatpush1.msra.mxu0 0.0
    %4600 = vmatprep.subr.mxu0 0.0
    %4601 = vmatpush1.msra.mxu0 0.0
    %4602 = vmatprep.subr.mxu0 0.0
    %4603 = vmatpush1.msra.mxu0 0.0
    %4604 = vmatprep.subr.mxu0 0.0
    %4605 = vmatpush1.msra.mxu0 0.0
    %4606 = vmatprep.subr.mxu0 0.0
    %4607 = vmatpush1.msra.mxu0 0.0
    %4608 = vmatprep.subr.mxu0 0.0
    %4609 = vmatpush1.msra.mxu0 0.0
    %4610 = vmatprep.subr.mxu0 0.0
    %4611 = vmatpush1.msra.mxu0 0.0
    %4612 = vmatprep.subr.mxu0 0.0
    %4613 = vmatpush1.msra.mxu0 0.0
    %4614 = vmatprep.subr.mxu0 0.0
    %4615 = vmatpush1.msra.mxu0 0.0
    %4616 = vmatprep.mubr.f32.mxu0 0.0
    %4617 = vmatmul.mubr.f32.gmra.mrb[0].mxu0 %v4541
    %v4618 = vpop.f32.mrb[0].mxu0
    %v4619 = vadd.f32 0.0, %v4618
    %v4620 = vpop.f32.mrb[0].mxu0
    %4621 = vmatprep.mubr.f32.mxu0 0.0
    %4622 = vmatmul.mubr.f32.gmra.mrb[0].mxu0 %v4544
    %v4623 = vpop.f32.mrb[0].mxu0
    %v4624 = vadd.f32 0.0, %v4623
    %v4625 = vpop.f32.mrb[0].mxu0
    %4626 = vmatprep.mubr.f32.mxu0 0.0
    %4627 = vmatmul.mubr.f32.gmra.mrb[0].mxu0 %v4547
    %v4628 = vpop.f32.mrb[0].mxu0
    %v4629 = vadd.f32 0.0, %v4628
    %v4630 = vpop.f32.mrb[0].mxu0
    %4631 = vmatprep.mubr.f32.mxu0 0.0
    %4632 = vmatmul.mubr.f32.gmra.mrb[0].mxu0 %v4550
    %v4633 = vpop.f32.mrb[0].mxu0
    %v4634 = vadd.f32 0.0, %v4633
    %v4635 = vpop.f32.mrb[0].mxu0
    %4636 = vdwg.mxu0
    %v4637 = vld [vmem:[%s13] sm:$0xff]
    %v4638 = vld [vmem:[%s13 + $0x8] sm:$0xff]
    %v4639 = vld [vmem:[%s13 + $0x10] sm:$0xff]
    %v4640 = vld [vmem:[%s13 + $0x18] sm:$0xff]
    %v4641 = vld [vmem:[%s13 + $0x20] sm:$0xff]
    %v4642 = vld [vmem:[%s13 + $0x28] sm:$0xff]
    %v4643 = vld [vmem:[%s13 + $0x30] sm:$0xff]
    %v4644 = vld [vmem:[%s13 + $0x38] sm:$0xff]
    %v4645 = vld [vmem:[%s13 + $0x40] sm:$0xff]
    %v4646 = vld [vmem:[%s13 + $0x48] sm:$0xff]
    %v4647 = vld [vmem:[%s13 + $0x50] sm:$0xff]
    %v4648 = vld [vmem:[%s13 + $0x58] sm:$0xff]
    %v4649 = vld [vmem:[%s13 + $0x60] sm:$0xff]
    %v4650 = vld [vmem:[%s13 + $0x68] sm:$0xff]
    %v4651 = vld [vmem:[%s13 + $0x70] sm:$0xff]
    %v4652 = vld [vmem:[%s13 + $0x78] sm:$0xff]
    %s4653 = scalar_lea.vmem [#allocation17], 32
    %v4654 = vld [vmem:[%s4653] sm:$0xff]
    %v4655 = vld [vmem:[%s4653 + $0x8] sm:$0xff]
    %v4656 = vld [vmem:[%s4653 + $0x10] sm:$0xff]
    %v4657 = vld [vmem:[%s4653 + $0x18] sm:$0xff]
    %v4659 = vsel %vm527, %v4654, 0
    %v4662 = vsel %vm527, %v4655, 0
    %v4665 = vsel %vm527, %v4656, 0
    %v4668 = vsel %vm527, %v4657, 0
    %4670 = vmatprep.subr.mxu0 0.0
    %4671 = vmatpush1.msra.mxu0 %v4534
    %4672 = vmatprep.subr.mxu0 0.0
    %4673 = vmatpush1.msra.mxu0 %v4535
    %4674 = vmatprep.subr.mxu0 0.0
    %4675 = vmatpush1.msra.mxu0 0.0
    %4676 = vmatprep.subr.mxu0 0.0
    %4677 = vmatpush1.msra.mxu0 0.0
    %4678 = vmatprep.subr.mxu0 0.0
    %4679 = vmatpush1.msra.mxu0 0.0
    %4680 = vmatprep.subr.mxu0 0.0
    %4681 = vmatpush1.msra.mxu0 0.0
    %4682 = vmatprep.subr.mxu0 0.0
    %4683 = vmatpush1.msra.mxu0 0.0
    %4684 = vmatprep.subr.mxu0 0.0
    %4685 = vmatpush1.msra.mxu0 0.0
    %4686 = vmatprep.subr.mxu0 0.0
    %4687 = vmatpush1.msra.mxu0 0.0
    %4688 = vmatprep.subr.mxu0 0.0
    %4689 = vmatpush1.msra.mxu0 0.0
    %4690 = vmatprep.subr.mxu0 0.0
    %4691 = vmatpush1.msra.mxu0 0.0
    %4692 = vmatprep.subr.mxu0 0.0
    %4693 = vmatpush1.msra.mxu0 0.0
    %4694 = vmatprep.subr.mxu0 0.0
    %4695 = vmatpush1.msra.mxu0 0.0
    %4696 = vmatprep.subr.mxu0 0.0
    %4697 = vmatpush1.msra.mxu0 0.0
    %4698 = vmatprep.subr.mxu0 0.0
    %4699 = vmatpush1.msra.mxu0 0.0
    %4700 = vmatprep.subr.mxu0 0.0
    %4701 = vmatpush1.msra.mxu0 0.0
    %4702 = vmatprep.subr.mxu0 0.0
    %4703 = vmatpush1.msra.mxu0 0.0
    %4704 = vmatprep.subr.mxu0 0.0
    %4705 = vmatpush1.msra.mxu0 0.0
    %4706 = vmatprep.subr.mxu0 0.0
    %4707 = vmatpush1.msra.mxu0 0.0
    %4708 = vmatprep.subr.mxu0 0.0
    %4709 = vmatpush1.msra.mxu0 0.0
    %4710 = vmatprep.subr.mxu0 0.0
    %4711 = vmatpush1.msra.mxu0 0.0
    %4712 = vmatprep.subr.mxu0 0.0
    %4713 = vmatpush1.msra.mxu0 0.0
    %4714 = vmatprep.subr.mxu0 0.0
    %4715 = vmatpush1.msra.mxu0 0.0
    %4716 = vmatprep.subr.mxu0 0.0
    %4717 = vmatpush1.msra.mxu0 0.0
    %4718 = vmatprep.subr.mxu0 0.0
    %4719 = vmatpush1.msra.mxu0 0.0
    %4720 = vmatprep.subr.mxu0 0.0
    %4721 = vmatpush1.msra.mxu0 0.0
    %4722 = vmatprep.subr.mxu0 0.0
    %4723 = vmatpush1.msra.mxu0 0.0
    %4724 = vmatprep.subr.mxu0 0.0
    %4725 = vmatpush1.msra.mxu0 0.0
    %4726 = vmatprep.subr.mxu0 0.0
    %4727 = vmatpush1.msra.mxu0 0.0
    %4728 = vmatprep.subr.mxu0 0.0
    %4729 = vmatpush1.msra.mxu0 0.0
    %4730 = vmatprep.subr.mxu0 0.0
    %4731 = vmatpush1.msra.mxu0 0.0
    %4732 = vmatprep.subr.mxu0 0.0
    %4733 = vmatpush1.msra.mxu0 0.0
    %4734 = vmatprep.mubr.f32.mxu0 0.0
    %4735 = vmatmul.mubr.f32.gmra.mrb[0].mxu0 %v4659
    %v4736 = vpop.f32.mrb[0].mxu0
    %v4737 = vadd.f32 0.0, %v4736
    %v4738 = vpop.f32.mrb[0].mxu0
    %4739 = vmatprep.mubr.f32.mxu0 0.0
    %4740 = vmatmul.mubr.f32.gmra.mrb[0].mxu0 %v4662
    %v4741 = vpop.f32.mrb[0].mxu0
    %v4742 = vadd.f32 0.0, %v4741
    %v4743 = vpop.f32.mrb[0].mxu0
    %4744 = vmatprep.mubr.f32.mxu0 0.0
    %4745 = vmatmul.mubr.f32.gmra.mrb[0].mxu0 %v4665
    %v4746 = vpop.f32.mrb[0].mxu0
    %v4747 = vadd.f32 0.0, %v4746
    %v4748 = vpop.f32.mrb[0].mxu0
    %4749 = vmatprep.mubr.f32.mxu0 0.0
    %4750 = vmatmul.mubr.f32.gmra.mrb[0].mxu0 %v4668
    %v4751 = vpop.f32.mrb[0].mxu0
    %v4752 = vadd.f32 0.0, %v4751
    %v4753 = vpop.f32.mrb[0].mxu0
    %4754 = vdwg.mxu0
    %s4755 = scalar_lea.vmem %s13, 128
    %v4756 = vld [vmem:[%s4755] sm:$0xff]
    %v4757 = vld [vmem:[%s4755 + $0x8] sm:$0xff]
    %v4758 = vld [vmem:[%s4755 + $0x10] sm:$0xff]
    %v4759 = vld [vmem:[%s4755 + $0x18] sm:$0xff]
    %v4760 = vld [vmem:[%s4755 + $0x20] sm:$0xff]
    %v4761 = vld [vmem:[%s4755 + $0x28] sm:$0xff]
    %v4762 = vld [vmem:[%s4755 + $0x30] sm:$0xff]
    %v4763 = vld [vmem:[%s4755 + $0x38] sm:$0xff]
    %v4764 = vld [vmem:[%s4755 + $0x40] sm:$0xff]
    %v4765 = vld [vmem:[%s4755 + $0x48] sm:$0xff]
    %v4766 = vld [vmem:[%s4755 + $0x50] sm:$0xff]
    %v4767 = vld [vmem:[%s4755 + $0x58] sm:$0xff]
    %v4768 = vld [vmem:[%s4755 + $0x60] sm:$0xff]
    %v4769 = vld [vmem:[%s4755 + $0x68] sm:$0xff]
    %v4770 = vld [vmem:[%s4755 + $0x70] sm:$0xff]
    %v4771 = vld [vmem:[%s4755 + $0x78] sm:$0xff]
    %4772 = vmatprep.subr.mxu0 0.0
    %4773 = vmatpush1.msra.mxu0 %v4756
    %4774 = vmatprep.subr.mxu0 0.0
    %4775 = vmatpush1.msra.mxu0 %v4757
    %4776 = vmatprep.subr.mxu0 0.0
    %4777 = vmatpush1.msra.mxu0 %v4758
    %4778 = vmatprep.subr.mxu0 0.0
    %4779 = vmatpush1.msra.mxu0 %v4759
    %4780 = vmatprep.subr.mxu0 0.0
    %4781 = vmatpush1.msra.mxu0 %v4760
    %4782 = vmatprep.subr.mxu0 0.0
    %4783 = vmatpush1.msra.mxu0 %v4761
    %4784 = vmatprep.subr.mxu0 0.0
    %4785 = vmatpush1.msra.mxu0 %v4762
    %4786 = vmatprep.subr.mxu0 0.0
    %4787 = vmatpush1.msra.mxu0 %v4763
    %4788 = vmatprep.subr.mxu0 0.0
    %4789 = vmatpush1.msra.mxu0 %v4764
    %4790 = vmatprep.subr.mxu0 0.0
    %4791 = vmatpush1.msra.mxu0 %v4765
    %4792 = vmatprep.subr.mxu0 0.0
    %4793 = vmatpush1.msra.mxu0 %v4766
    %4794 = vmatprep.subr.mxu0 0.0
    %4795 = vmatpush1.msra.mxu0 %v4767
    %4796 = vmatprep.subr.mxu0 0.0
    %4797 = vmatpush1.msra.mxu0 %v4768
    %4798 = vmatprep.subr.mxu0 0.0
    %4799 = vmatpush1.msra.mxu0 %v4769
    %4800 = vmatprep.subr.mxu0 0.0
    %4801 = vmatpush1.msra.mxu0 %v4770
    %4802 = vmatprep.subr.mxu0 0.0
    %4803 = vmatpush1.msra.mxu0 %v4771
    %4804 = vmatprep.subr.mxu0 0.0
    %4805 = vmatpush1.msra.mxu0 0.0
    %4806 = vmatprep.subr.mxu0 0.0
    %4807 = vmatpush1.msra.mxu0 0.0
    %4808 = vmatprep.subr.mxu0 0.0
    %4809 = vmatpush1.msra.mxu0 0.0
    %4810 = vmatprep.subr.mxu0 0.0
    %4811 = vmatpush1.msra.mxu0 0.0
    %4812 = vmatprep.subr.mxu0 0.0
    %4813 = vmatpush1.msra.mxu0 0.0
    %4814 = vmatprep.subr.mxu0 0.0
    %4815 = vmatpush1.msra.mxu0 0.0
    %4816 = vmatprep.subr.mxu0 0.0
    %4817 = vmatpush1.msra.mxu0 0.0
    %4818 = vmatprep.subr.mxu0 0.0
    %4819 = vmatpush1.msra.mxu0 0.0
    %4820 = vmatprep.subr.mxu0 0.0
    %4821 = vmatpush1.msra.mxu0 0.0
    %4822 = vmatprep.subr.mxu0 0.0
    %4823 = vmatpush1.msra.mxu0 0.0
    %4824 = vmatprep.subr.mxu0 0.0
    %4825 = vmatpush1.msra.mxu0 0.0
    %4826 = vmatprep.subr.mxu0 0.0
    %4827 = vmatpush1.msra.mxu0 0.0
    %4828 = vmatprep.subr.mxu0 0.0
    %4829 = vmatpush1.msra.mxu0 0.0
    %4830 = vmatprep.subr.mxu0 0.0
    %4831 = vmatpush1.msra.mxu0 0.0
    %4832 = vmatprep.subr.mxu0 0.0
    %4833 = vmatpush1.msra.mxu0 0.0
    %4834 = vmatprep.subr.mxu0 0.0
    %4835 = vmatpush1.msra.mxu0 0.0
    %4836 = vmatprep.mubr.f32.mxu0 0.0
    %4837 = vmatmul.mubr.f32.gmra.mrb[0].mxu0 %v4737
    %v4838 = vpop.f32.mrb[0].mxu0
    %v4839 = vadd.f32 0.0, %v4838
    %v4840 = vpop.f32.mrb[0].mxu0
    %4841 = vmatprep.mubr.f32.mxu0 0.0
    %4842 = vmatmul.mubr.f32.gmra.mrb[0].mxu0 %v4742
    %v4843 = vpop.f32.mrb[0].mxu0
    %v4844 = vadd.f32 0.0, %v4843
    %v4845 = vpop.f32.mrb[0].mxu0
    %4846 = vmatprep.mubr.f32.mxu0 0.0
    %4847 = vmatmul.mubr.f32.gmra.mrb[0].mxu0 %v4747
    %v4848 = vpop.f32.mrb[0].mxu0
    %v4849 = vadd.f32 0.0, %v4848
    %v4850 = vpop.f32.mrb[0].mxu0
    %4851 = vmatprep.mubr.f32.mxu0 0.0
    %4852 = vmatmul.mubr.f32.gmra.mrb[0].mxu0 %v4752
    %v4853 = vpop.f32.mrb[0].mxu0
    %v4854 = vadd.f32 0.0, %v4853
    %v4855 = vpop.f32.mrb[0].mxu0
    %4856 = vdwg.mxu0
    %4857 = vmatprep.subr.mxu0 0.0
    %4858 = vmatpush1.msra.mxu0 %v4637
    %4859 = vmatprep.subr.mxu0 0.0
    %4860 = vmatpush1.msra.mxu0 %v4638
    %4861 = vmatprep.subr.mxu0 0.0
    %4862 = vmatpush1.msra.mxu0 %v4639
    %4863 = vmatprep.subr.mxu0 0.0
    %4864 = vmatpush1.msra.mxu0 %v4640
    %4865 = vmatprep.subr.mxu0 0.0
    %4866 = vmatpush1.msra.mxu0 %v4641
    %4867 = vmatprep.subr.mxu0 0.0
    %4868 = vmatpush1.msra.mxu0 %v4642
    %4869 = vmatprep.subr.mxu0 0.0
    %4870 = vmatpush1.msra.mxu0 %v4643
    %4871 = vmatprep.subr.mxu0 0.0
    %4872 = vmatpush1.msra.mxu0 %v4644
    %4873 = vmatprep.subr.mxu0 0.0
    %4874 = vmatpush1.msra.mxu0 %v4645
    %4875 = vmatprep.subr.mxu0 0.0
    %4876 = vmatpush1.msra.mxu0 %v4646
    %4877 = vmatprep.subr.mxu0 0.0
    %4878 = vmatpush1.msra.mxu0 %v4647
    %4879 = vmatprep.subr.mxu0 0.0
    %4880 = vmatpush1.msra.mxu0 %v4648
    %4881 = vmatprep.subr.mxu0 0.0
    %4882 = vmatpush1.msra.mxu0 %v4649
    %4883 = vmatprep.subr.mxu0 0.0
    %4884 = vmatpush1.msra.mxu0 %v4650
    %4885 = vmatprep.subr.mxu0 0.0
    %4886 = vmatpush1.msra.mxu0 %v4651
    %4887 = vmatprep.subr.mxu0 0.0
    %4888 = vmatpush1.msra.mxu0 %v4652
    %4889 = vmatprep.subr.mxu0 0.0
    %4890 = vmatpush1.msra.mxu0 0.0
    %4891 = vmatprep.subr.mxu0 0.0
    %4892 = vmatpush1.msra.mxu0 0.0
    %4893 = vmatprep.subr.mxu0 0.0
    %4894 = vmatpush1.msra.mxu0 0.0
    %4895 = vmatprep.subr.mxu0 0.0
    %4896 = vmatpush1.msra.mxu0 0.0
    %4897 = vmatprep.subr.mxu0 0.0
    %4898 = vmatpush1.msra.mxu0 0.0
    %4899 = vmatprep.subr.mxu0 0.0
    %4900 = vmatpush1.msra.mxu0 0.0
    %4901 = vmatprep.subr.mxu0 0.0
    %4902 = vmatpush1.msra.mxu0 0.0
    %4903 = vmatprep.subr.mxu0 0.0
    %4904 = vmatpush1.msra.mxu0 0.0
    %4905 = vmatprep.subr.mxu0 0.0
    %4906 = vmatpush1.msra.mxu0 0.0
    %4907 = vmatprep.subr.mxu0 0.0
    %4908 = vmatpush1.msra.mxu0 0.0
    %4909 = vmatprep.subr.mxu0 0.0
    %4910 = vmatpush1.msra.mxu0 0.0
    %4911 = vmatprep.subr.mxu0 0.0
    %4912 = vmatpush1.msra.mxu0 0.0
    %4913 = vmatprep.subr.mxu0 0.0
    %4914 = vmatpush1.msra.mxu0 0.0
    %4915 = vmatprep.subr.mxu0 0.0
    %4916 = vmatpush1.msra.mxu0 0.0
    %4917 = vmatprep.subr.mxu0 0.0
    %4918 = vmatpush1.msra.mxu0 0.0
    %4919 = vmatprep.subr.mxu0 0.0
    %4920 = vmatpush1.msra.mxu0 0.0
    %4921 = vmatprep.mubr.f32.mxu0 0.0
    %4922 = vmatmul.mubr.f32.gmra.mrb[0].mxu0 %v4619
    %v4923 = vpop.f32.mrb[0].mxu0
    %v4924 = vadd.f32 %v4839, %v4923
    %v4925 = vpop.f32.mrb[0].mxu0
    %4926 = vmatprep.mubr.f32.mxu0 0.0
    %4927 = vmatmul.mubr.f32.gmra.mrb[0].mxu0 %v4624
    %v4928 = vpop.f32.mrb[0].mxu0
    %v4929 = vadd.f32 %v4844, %v4928
    %v4930 = vpop.f32.mrb[0].mxu0
    %4931 = vmatprep.mubr.f32.mxu0 0.0
    %4932 = vmatmul.mubr.f32.gmra.mrb[0].mxu0 %v4629
    %v4933 = vpop.f32.mrb[0].mxu0
    %v4934 = vadd.f32 %v4849, %v4933
    %v4935 = vpop.f32.mrb[0].mxu0
    %4936 = vmatprep.mubr.f32.mxu0 0.0
    %4937 = vmatmul.mubr.f32.gmra.mrb[0].mxu0 %v4634
    %v4938 = vpop.f32.mrb[0].mxu0
    %v4939 = vadd.f32 %v4854, %v4938
    %v4940 = vpop.f32.mrb[0].mxu0
    %4941 = vdwg.mxu0
    %s4942 = scalar_lea.vmem [#allocation17], 64
    %v4943 = vld [vmem:[%s4942] sm:$0xff]
    %v4944 = vld [vmem:[%s4942 + $0x8] sm:$0xff]
    %v4945 = vld [vmem:[%s4942 + $0x10] sm:$0xff]
    %v4946 = vld [vmem:[%s4942 + $0x18] sm:$0xff]
    %v4948 = vsel %vm527, %v4943, 0
    %v4951 = vsel %vm527, %v4944, 0
    %v4954 = vsel %vm527, %v4945, 0
    %v4957 = vsel %vm527, %v4946, 0
    %4959 = vmatprep.subr.mxu0 0.0
    %4960 = vmatpush1.msra.mxu0 %v4534
    %4961 = vmatprep.subr.mxu0 0.0
    %4962 = vmatpush1.msra.mxu0 %v4535
    %4963 = vmatprep.subr.mxu0 0.0
    %4964 = vmatpush1.msra.mxu0 0.0
    %4965 = vmatprep.subr.mxu0 0.0
    %4966 = vmatpush1.msra.mxu0 0.0
    %4967 = vmatprep.subr.mxu0 0.0
    %4968 = vmatpush1.msra.mxu0 0.0
    %4969 = vmatprep.subr.mxu0 0.0
    %4970 = vmatpush1.msra.mxu0 0.0
    %4971 = vmatprep.subr.mxu0 0.0
    %4972 = vmatpush1.msra.mxu0 0.0
    %4973 = vmatprep.subr.mxu0 0.0
    %4974 = vmatpush1.msra.mxu0 0.0
    %4975 = vmatprep.subr.mxu0 0.0
    %4976 = vmatpush1.msra.mxu0 0.0
    %4977 = vmatprep.subr.mxu0 0.0
    %4978 = vmatpush1.msra.mxu0 0.0
    %4979 = vmatprep.subr.mxu0 0.0
    %4980 = vmatpush1.msra.mxu0 0.0
    %4981 = vmatprep.subr.mxu0 0.0
    %4982 = vmatpush1.msra.mxu0 0.0
    %4983 = vmatprep.subr.mxu0 0.0
    %4984 = vmatpush1.msra.mxu0 0.0
    %4985 = vmatprep.subr.mxu0 0.0
    %4986 = vmatpush1.msra.mxu0 0.0
    %4987 = vmatprep.subr.mxu0 0.0
    %4988 = vmatpush1.msra.mxu0 0.0
    %4989 = vmatprep.subr.mxu0 0.0
    %4990 = vmatpush1.msra.mxu0 0.0
    %4991 = vmatprep.subr.mxu0 0.0
    %4992 = vmatpush1.msra.mxu0 0.0
    %4993 = vmatprep.subr.mxu0 0.0
    %4994 = vmatpush1.msra.mxu0 0.0
    %4995 = vmatprep.subr.mxu0 0.0
    %4996 = vmatpush1.msra.mxu0 0.0
    %4997 = vmatprep.subr.mxu0 0.0
    %4998 = vmatpush1.msra.mxu0 0.0
    %4999 = vmatprep.subr.mxu0 0.0
    %5000 = vmatpush1.msra.mxu0 0.0
    %5001 = vmatprep.subr.mxu0 0.0
    %5002 = vmatpush1.msra.mxu0 0.0
    %5003 = vmatprep.subr.mxu0 0.0
    %5004 = vmatpush1.msra.mxu0 0.0
    %5005 = vmatprep.subr.mxu0 0.0
    %5006 = vmatpush1.msra.mxu0 0.0
    %5007 = vmatprep.subr.mxu0 0.0
    %5008 = vmatpush1.msra.mxu0 0.0
    %5009 = vmatprep.subr.mxu0 0.0
    %5010 = vmatpush1.msra.mxu0 0.0
    %5011 = vmatprep.subr.mxu0 0.0
    %5012 = vmatpush1.msra.mxu0 0.0
    %5013 = vmatprep.subr.mxu0 0.0
    %5014 = vmatpush1.msra.mxu0 0.0
    %5015 = vmatprep.subr.mxu0 0.0
    %5016 = vmatpush1.msra.mxu0 0.0
    %5017 = vmatprep.subr.mxu0 0.0
    %5018 = vmatpush1.msra.mxu0 0.0
    %5019 = vmatprep.subr.mxu0 0.0
    %5020 = vmatpush1.msra.mxu0 0.0
    %5021 = vmatprep.subr.mxu0 0.0
    %5022 = vmatpush1.msra.mxu0 0.0
    %5023 = vmatprep.mubr.f32.mxu0 0.0
    %5024 = vmatmul.mubr.f32.gmra.mrb[0].mxu0 %v4948
    %v5025 = vpop.f32.mrb[0].mxu0
    %v5026 = vadd.f32 0.0, %v5025
    %v5027 = vpop.f32.mrb[0].mxu0
    %5028 = vmatprep.mubr.f32.mxu0 0.0
    %5029 = vmatmul.mubr.f32.gmra.mrb[0].mxu0 %v4951
    %v5030 = vpop.f32.mrb[0].mxu0
    %v5031 = vadd.f32 0.0, %v5030
    %v5032 = vpop.f32.mrb[0].mxu0
    %5033 = vmatprep.mubr.f32.mxu0 0.0
    %5034 = vmatmul.mubr.f32.gmra.mrb[0].mxu0 %v4954
    %v5035 = vpop.f32.mrb[0].mxu0
    %v5036 = vadd.f32 0.0, %v5035
    %v5037 = vpop.f32.mrb[0].mxu0
    %5038 = vmatprep.mubr.f32.mxu0 0.0
    %5039 = vmatmul.mubr.f32.gmra.mrb[0].mxu0 %v4957
    %v5040 = vpop.f32.mrb[0].mxu0
    %v5041 = vadd.f32 0.0, %v5040
    %v5042 = vpop.f32.mrb[0].mxu0
    %5043 = vdwg.mxu0
    %s5044 = scalar_lea.vmem %s13, 256
    %v5045 = vld [vmem:[%s5044] sm:$0xff]
    %v5046 = vld [vmem:[%s5044 + $0x8] sm:$0xff]
    %v5047 = vld [vmem:[%s5044 + $0x10] sm:$0xff]
    %v5048 = vld [vmem:[%s5044 + $0x18] sm:$0xff]
    %v5049 = vld [vmem:[%s5044 + $0x20] sm:$0xff]
    %v5050 = vld [vmem:[%s5044 + $0x28] sm:$0xff]
    %v5051 = vld [vmem:[%s5044 + $0x30] sm:$0xff]
    %v5052 = vld [vmem:[%s5044 + $0x38] sm:$0xff]
    %v5053 = vld [vmem:[%s5044 + $0x40] sm:$0xff]
    %v5054 = vld [vmem:[%s5044 + $0x48] sm:$0xff]
    %v5055 = vld [vmem:[%s5044 + $0x50] sm:$0xff]
    %v5056 = vld [vmem:[%s5044 + $0x58] sm:$0xff]
    %v5057 = vld [vmem:[%s5044 + $0x60] sm:$0xff]
    %v5058 = vld [vmem:[%s5044 + $0x68] sm:$0xff]
    %v5059 = vld [vmem:[%s5044 + $0x70] sm:$0xff]
    %v5060 = vld [vmem:[%s5044 + $0x78] sm:$0xff]
    %5061 = vmatprep.subr.mxu0 0.0
    %5062 = vmatpush1.msra.mxu0 %v5045
    %5063 = vmatprep.subr.mxu0 0.0
    %5064 = vmatpush1.msra.mxu0 %v5046
    %5065 = vmatprep.subr.mxu0 0.0
    %5066 = vmatpush1.msra.mxu0 %v5047
    %5067 = vmatprep.subr.mxu0 0.0
    %5068 = vmatpush1.msra.mxu0 %v5048
    %5069 = vmatprep.subr.mxu0 0.0
    %5070 = vmatpush1.msra.mxu0 %v5049
    %5071 = vmatprep.subr.mxu0 0.0
    %5072 = vmatpush1.msra.mxu0 %v5050
    %5073 = vmatprep.subr.mxu0 0.0
    %5074 = vmatpush1.msra.mxu0 %v5051
    %5075 = vmatprep.subr.mxu0 0.0
    %5076 = vmatpush1.msra.mxu0 %v5052
    %5077 = vmatprep.subr.mxu0 0.0
    %5078 = vmatpush1.msra.mxu0 %v5053
    %5079 = vmatprep.subr.mxu0 0.0
    %5080 = vmatpush1.msra.mxu0 %v5054
    %5081 = vmatprep.subr.mxu0 0.0
    %5082 = vmatpush1.msra.mxu0 %v5055
    %5083 = vmatprep.subr.mxu0 0.0
    %5084 = vmatpush1.msra.mxu0 %v5056
    %5085 = vmatprep.subr.mxu0 0.0
    %5086 = vmatpush1.msra.mxu0 %v5057
    %5087 = vmatprep.subr.mxu0 0.0
    %5088 = vmatpush1.msra.mxu0 %v5058
    %5089 = vmatprep.subr.mxu0 0.0
    %5090 = vmatpush1.msra.mxu0 %v5059
    %5091 = vmatprep.subr.mxu0 0.0
    %5092 = vmatpush1.msra.mxu0 %v5060
    %5093 = vmatprep.subr.mxu0 0.0
    %5094 = vmatpush1.msra.mxu0 0.0
    %5095 = vmatprep.subr.mxu0 0.0
    %5096 = vmatpush1.msra.mxu0 0.0
    %5097 = vmatprep.subr.mxu0 0.0
    %5098 = vmatpush1.msra.mxu0 0.0
    %5099 = vmatprep.subr.mxu0 0.0
    %5100 = vmatpush1.msra.mxu0 0.0
    %5101 = vmatprep.subr.mxu0 0.0
    %5102 = vmatpush1.msra.mxu0 0.0
    %5103 = vmatprep.subr.mxu0 0.0
    %5104 = vmatpush1.msra.mxu0 0.0
    %5105 = vmatprep.subr.mxu0 0.0
    %5106 = vmatpush1.msra.mxu0 0.0
    %5107 = vmatprep.subr.mxu0 0.0
    %5108 = vmatpush1.msra.mxu0 0.0
    %5109 = vmatprep.subr.mxu0 0.0
    %5110 = vmatpush1.msra.mxu0 0.0
    %5111 = vmatprep.subr.mxu0 0.0
    %5112 = vmatpush1.msra.mxu0 0.0
    %5113 = vmatprep.subr.mxu0 0.0
    %5114 = vmatpush1.msra.mxu0 0.0
    %5115 = vmatprep.subr.mxu0 0.0
    %5116 = vmatpush1.msra.mxu0 0.0
    %5117 = vmatprep.subr.mxu0 0.0
    %5118 = vmatpush1.msra.mxu0 0.0
    %5119 = vmatprep.subr.mxu0 0.0
    %5120 = vmatpush1.msra.mxu0 0.0
    %5121 = vmatprep.subr.mxu0 0.0
    %5122 = vmatpush1.msra.mxu0 0.0
    %5123 = vmatprep.subr.mxu0 0.0
    %5124 = vmatpush1.msra.mxu0 0.0
    %5125 = vmatprep.mubr.f32.mxu0 0.0
    %5126 = vmatmul.mubr.f32.gmra.mrb[0].mxu0 %v5026
    %v5127 = vpop.f32.mrb[0].mxu0
    %v5128 = vadd.f32 0.0, %v5127
    %v5129 = vpop.f32.mrb[0].mxu0
    %5130 = vmatprep.mubr.f32.mxu0 0.0
    %5131 = vmatmul.mubr.f32.gmra.mrb[0].mxu0 %v5031
    %v5132 = vpop.f32.mrb[0].mxu0
    %v5133 = vadd.f32 0.0, %v5132
    %v5134 = vpop.f32.mrb[0].mxu0
    %5135 = vmatprep.mubr.f32.mxu0 0.0
    %5136 = vmatmul.mubr.f32.gmra.mrb[0].mxu0 %v5036
    %v5137 = vpop.f32.mrb[0].mxu0
    %v5138 = vadd.f32 0.0, %v5137
    %v5139 = vpop.f32.mrb[0].mxu0
    %5140 = vmatprep.mubr.f32.mxu0 0.0
    %5141 = vmatmul.mubr.f32.gmra.mrb[0].mxu0 %v5041
    %v5142 = vpop.f32.mrb[0].mxu0
    %v5143 = vadd.f32 0.0, %v5142
    %v5144 = vpop.f32.mrb[0].mxu0
    %5145 = vdwg.mxu0
    %v5146 = vadd.f32 %v4924, %v5128
    %v5147 = vadd.f32 %v4929, %v5133
    %v5148 = vadd.f32 %v4934, %v5138
    %v5149 = vadd.f32 %v4939, %v5143
    %s5150 = scalar_lea.vmem [#allocation17], 96
    %v5151 = vld [vmem:[%s5150] sm:$0xff]
    %v5152 = vld [vmem:[%s5150 + $0x8] sm:$0xff]
    %v5153 = vld [vmem:[%s5150 + $0x10] sm:$0xff]
    %v5154 = vld [vmem:[%s5150 + $0x18] sm:$0xff]
    %v5156 = vsel %vm527, %v5151, 0
    %v5159 = vsel %vm527, %v5152, 0
    %v5162 = vsel %vm527, %v5153, 0
    %v5165 = vsel %vm527, %v5154, 0
    %5167 = vmatprep.subr.mxu0 0.0
    %5168 = vmatpush1.msra.mxu0 %v4534
    %5169 = vmatprep.subr.mxu0 0.0
    %5170 = vmatpush1.msra.mxu0 %v4535
    %5171 = vmatprep.subr.mxu0 0.0
    %5172 = vmatpush1.msra.mxu0 0.0
    %5173 = vmatprep.subr.mxu0 0.0
    %5174 = vmatpush1.msra.mxu0 0.0
    %5175 = vmatprep.subr.mxu0 0.0
    %5176 = vmatpush1.msra.mxu0 0.0
    %5177 = vmatprep.subr.mxu0 0.0
    %5178 = vmatpush1.msra.mxu0 0.0
    %5179 = vmatprep.subr.mxu0 0.0
    %5180 = vmatpush1.msra.mxu0 0.0
    %5181 = vmatprep.subr.mxu0 0.0
    %5182 = vmatpush1.msra.mxu0 0.0
    %5183 = vmatprep.subr.mxu0 0.0
    %5184 = vmatpush1.msra.mxu0 0.0
    %5185 = vmatprep.subr.mxu0 0.0
    %5186 = vmatpush1.msra.mxu0 0.0
    %5187 = vmatprep.subr.mxu0 0.0
    %5188 = vmatpush1.msra.mxu0 0.0
    %5189 = vmatprep.subr.mxu0 0.0
    %5190 = vmatpush1.msra.mxu0 0.0
    %5191 = vmatprep.subr.mxu0 0.0
    %5192 = vmatpush1.msra.mxu0 0.0
    %5193 = vmatprep.subr.mxu0 0.0
    %5194 = vmatpush1.msra.mxu0 0.0
    %5195 = vmatprep.subr.mxu0 0.0
    %5196 = vmatpush1.msra.mxu0 0.0
    %5197 = vmatprep.subr.mxu0 0.0
    %5198 = vmatpush1.msra.mxu0 0.0
    %5199 = vmatprep.subr.mxu0 0.0
    %5200 = vmatpush1.msra.mxu0 0.0
    %5201 = vmatprep.subr.mxu0 0.0
    %5202 = vmatpush1.msra.mxu0 0.0
    %5203 = vmatprep.subr.mxu0 0.0
    %5204 = vmatpush1.msra.mxu0 0.0
    %5205 = vmatprep.subr.mxu0 0.0
    %5206 = vmatpush1.msra.mxu0 0.0
    %5207 = vmatprep.subr.mxu0 0.0
    %5208 = vmatpush1.msra.mxu0 0.0
    %5209 = vmatprep.subr.mxu0 0.0
    %5210 = vmatpush1.msra.mxu0 0.0
    %5211 = vmatprep.subr.mxu0 0.0
    %5212 = vmatpush1.msra.mxu0 0.0
    %5213 = vmatprep.subr.mxu0 0.0
    %5214 = vmatpush1.msra.mxu0 0.0
    %5215 = vmatprep.subr.mxu0 0.0
    %5216 = vmatpush1.msra.mxu0 0.0
    %5217 = vmatprep.subr.mxu0 0.0
    %5218 = vmatpush1.msra.mxu0 0.0
    %5219 = vmatprep.subr.mxu0 0.0
    %5220 = vmatpush1.msra.mxu0 0.0
    %5221 = vmatprep.subr.mxu0 0.0
    %5222 = vmatpush1.msra.mxu0 0.0
    %5223 = vmatprep.subr.mxu0 0.0
    %5224 = vmatpush1.msra.mxu0 0.0
    %5225 = vmatprep.subr.mxu0 0.0
    %5226 = vmatpush1.msra.mxu0 0.0
    %5227 = vmatprep.subr.mxu0 0.0
    %5228 = vmatpush1.msra.mxu0 0.0
    %5229 = vmatprep.subr.mxu0 0.0
    %5230 = vmatpush1.msra.mxu0 0.0
    %5231 = vmatprep.mubr.f32.mxu0 0.0
    %5232 = vmatmul.mubr.f32.gmra.mrb[0].mxu0 %v5156
    %v5233 = vpop.f32.mrb[0].mxu0
    %v5234 = vadd.f32 0.0, %v5233
    %v5235 = vpop.f32.mrb[0].mxu0
    %5236 = vmatprep.mubr.f32.mxu0 0.0
    %5237 = vmatmul.mubr.f32.gmra.mrb[0].mxu0 %v5159
    %v5238 = vpop.f32.mrb[0].mxu0
    %v5239 = vadd.f32 0.0, %v5238
    %v5240 = vpop.f32.mrb[0].mxu0
    %5241 = vmatprep.mubr.f32.mxu0 0.0
    %5242 = vmatmul.mubr.f32.gmra.mrb[0].mxu0 %v5162
    %v5243 = vpop.f32.mrb[0].mxu0
    %v5244 = vadd.f32 0.0, %v5243
    %v5245 = vpop.f32.mrb[0].mxu0
    %5246 = vmatprep.mubr.f32.mxu0 0.0
    %5247 = vmatmul.mubr.f32.gmra.mrb[0].mxu0 %v5165
    %v5248 = vpop.f32.mrb[0].mxu0
    %v5249 = vadd.f32 0.0, %v5248
    %v5250 = vpop.f32.mrb[0].mxu0
    %5251 = vdwg.mxu0
    %s5252 = scalar_lea.vmem %s13, 384
    %v5253 = vld [vmem:[%s5252] sm:$0xff]
    %v5254 = vld [vmem:[%s5252 + $0x8] sm:$0xff]
    %v5255 = vld [vmem:[%s5252 + $0x10] sm:$0xff]
    %v5256 = vld [vmem:[%s5252 + $0x18] sm:$0xff]
    %v5257 = vld [vmem:[%s5252 + $0x20] sm:$0xff]
    %v5258 = vld [vmem:[%s5252 + $0x28] sm:$0xff]
    %v5259 = vld [vmem:[%s5252 + $0x30] sm:$0xff]
    %v5260 = vld [vmem:[%s5252 + $0x38] sm:$0xff]
    %v5261 = vld [vmem:[%s5252 + $0x40] sm:$0xff]
    %v5262 = vld [vmem:[%s5252 + $0x48] sm:$0xff]
    %v5263 = vld [vmem:[%s5252 + $0x50] sm:$0xff]
    %v5264 = vld [vmem:[%s5252 + $0x58] sm:$0xff]
    %v5265 = vld [vmem:[%s5252 + $0x60] sm:$0xff]
    %v5266 = vld [vmem:[%s5252 + $0x68] sm:$0xff]
    %v5267 = vld [vmem:[%s5252 + $0x70] sm:$0xff]
    %v5268 = vld [vmem:[%s5252 + $0x78] sm:$0xff]
    %5269 = vmatprep.subr.mxu0 0.0
    %5270 = vmatpush1.msra.mxu0 %v5253
    %5271 = vmatprep.subr.mxu0 0.0
    %5272 = vmatpush1.msra.mxu0 %v5254
    %5273 = vmatprep.subr.mxu0 0.0
    %5274 = vmatpush1.msra.mxu0 %v5255
    %5275 = vmatprep.subr.mxu0 0.0
    %5276 = vmatpush1.msra.mxu0 %v5256
    %5277 = vmatprep.subr.mxu0 0.0
    %5278 = vmatpush1.msra.mxu0 %v5257
    %5279 = vmatprep.subr.mxu0 0.0
    %5280 = vmatpush1.msra.mxu0 %v5258
    %5281 = vmatprep.subr.mxu0 0.0
    %5282 = vmatpush1.msra.mxu0 %v5259
    %5283 = vmatprep.subr.mxu0 0.0
    %5284 = vmatpush1.msra.mxu0 %v5260
    %5285 = vmatprep.subr.mxu0 0.0
    %5286 = vmatpush1.msra.mxu0 %v5261
    %5287 = vmatprep.subr.mxu0 0.0
    %5288 = vmatpush1.msra.mxu0 %v5262
    %5289 = vmatprep.subr.mxu0 0.0
    %5290 = vmatpush1.msra.mxu0 %v5263
    %5291 = vmatprep.subr.mxu0 0.0
    %5292 = vmatpush1.msra.mxu0 %v5264
    %5293 = vmatprep.subr.mxu0 0.0
    %5294 = vmatpush1.msra.mxu0 %v5265
    %5295 = vmatprep.subr.mxu0 0.0
    %5296 = vmatpush1.msra.mxu0 %v5266
    %5297 = vmatprep.subr.mxu0 0.0
    %5298 = vmatpush1.msra.mxu0 %v5267
    %5299 = vmatprep.subr.mxu0 0.0
    %5300 = vmatpush1.msra.mxu0 %v5268
    %5301 = vmatprep.subr.mxu0 0.0
    %5302 = vmatpush1.msra.mxu0 0.0
    %5303 = vmatprep.subr.mxu0 0.0
    %5304 = vmatpush1.msra.mxu0 0.0
    %5305 = vmatprep.subr.mxu0 0.0
    %5306 = vmatpush1.msra.mxu0 0.0
    %5307 = vmatprep.subr.mxu0 0.0
    %5308 = vmatpush1.msra.mxu0 0.0
    %5309 = vmatprep.subr.mxu0 0.0
    %5310 = vmatpush1.msra.mxu0 0.0
    %5311 = vmatprep.subr.mxu0 0.0
    %5312 = vmatpush1.msra.mxu0 0.0
    %5313 = vmatprep.subr.mxu0 0.0
    %5314 = vmatpush1.msra.mxu0 0.0
    %5315 = vmatprep.subr.mxu0 0.0
    %5316 = vmatpush1.msra.mxu0 0.0
    %5317 = vmatprep.subr.mxu0 0.0
    %5318 = vmatpush1.msra.mxu0 0.0
    %5319 = vmatprep.subr.mxu0 0.0
    %5320 = vmatpush1.msra.mxu0 0.0
    %5321 = vmatprep.subr.mxu0 0.0
    %5322 = vmatpush1.msra.mxu0 0.0
    %5323 = vmatprep.subr.mxu0 0.0
    %5324 = vmatpush1.msra.mxu0 0.0
    %5325 = vmatprep.subr.mxu0 0.0
    %5326 = vmatpush1.msra.mxu0 0.0
    %5327 = vmatprep.subr.mxu0 0.0
    %5328 = vmatpush1.msra.mxu0 0.0
    %5329 = vmatprep.subr.mxu0 0.0
    %5330 = vmatpush1.msra.mxu0 0.0
    %5331 = vmatprep.subr.mxu0 0.0
    %5332 = vmatpush1.msra.mxu0 0.0
    %5333 = vmatprep.mubr.f32.mxu0 0.0
    %5334 = vmatmul.mubr.f32.gmra.mrb[0].mxu0 %v5234
    %v5335 = vpop.f32.mrb[0].mxu0
    %v5336 = vadd.f32 0.0, %v5335
    %v5337 = vpop.f32.mrb[0].mxu0
    %5338 = vmatprep.mubr.f32.mxu0 0.0
    %5339 = vmatmul.mubr.f32.gmra.mrb[0].mxu0 %v5239
    %v5340 = vpop.f32.mrb[0].mxu0
    %v5341 = vadd.f32 0.0, %v5340
    %v5342 = vpop.f32.mrb[0].mxu0
    %5343 = vmatprep.mubr.f32.mxu0 0.0
    %5344 = vmatmul.mubr.f32.gmra.mrb[0].mxu0 %v5244
    %v5345 = vpop.f32.mrb[0].mxu0
    %v5346 = vadd.f32 0.0, %v5345
    %v5347 = vpop.f32.mrb[0].mxu0
    %5348 = vmatprep.mubr.f32.mxu0 0.0
    %5349 = vmatmul.mubr.f32.gmra.mrb[0].mxu0 %v5249
    %v5350 = vpop.f32.mrb[0].mxu0
    %v5351 = vadd.f32 0.0, %v5350
    %v5352 = vpop.f32.mrb[0].mxu0
    %5353 = vdwg.mxu0
    %v5354 = vadd.f32 %v5146, %v5336
    %v5355 = vadd.f32 %v5147, %v5341
    %v5356 = vadd.f32 %v5148, %v5346
    %v5357 = vadd.f32 %v5149, %v5351
    %v5358 = vld [vmem:[#allocation19] sm:$0x1]
    %v5360 = vlaneseq
    %v5361 = vshrl.u32 %v5360, 7
    %v5362 = vsub.s32 0, %v5361
    %v5363 = vrot.slane %v5358, %v5362
    %v5365 = vadd.f32 %v5354, %v5363
    %v5366 = vadd.f32 %v5355, %v5363
    %v5367 = vadd.f32 %v5356, %v5363
    %v5368 = vadd.f32 %v5357, %v5363
    %v5369 = vadd.f32 %v5365, %v5366
    %v5370 = vadd.f32 %v5369, %v5367
    %v5371 = vadd.f32 %v5370, %v5368
    %v5372 = vrot.slane %v5371, 4
    %v5373 = vadd.f32 %v5371, %v5372
    %v5374 = vrot.slane %v5373, 2
    %v5375 = vadd.f32 %v5373, %v5374
    %v5376 = vrot.slane %v5375, 1
    %v5377 = vadd.f32 %v5375, %v5376
    %5378 = vmatprep.subr.mxu0 0.0
    %5379 = vmatpush1.msra.mxu0 %v274
    %5380 = vmatprep.subr.mxu0 0.0
    %5381 = vmatpush1.msra.mxu0 %v275
    %5382 = vmatprep.subr.mxu0 0.0
    %5383 = vmatpush1.msra.mxu0 %v276
    %5384 = vmatprep.subr.mxu0 0.0
    %5385 = vmatpush1.msra.mxu0 %v277
    %5386 = vmatprep.subr.mxu0 0.0
    %5387 = vmatpush1.msra.mxu0 %v278
    %5388 = vmatprep.subr.mxu0 0.0
    %5389 = vmatpush1.msra.mxu0 %v279
    %5390 = vmatprep.subr.mxu0 0.0
    %5391 = vmatpush1.msra.mxu0 %v280
    %5392 = vmatprep.subr.mxu0 0.0
    %5393 = vmatpush1.msra.mxu0 %v281
    %5394 = vmatprep.subr.mxu0 0.0
    %5395 = vmatpush1.msra.mxu0 %v282
    %5396 = vmatprep.subr.mxu0 0.0
    %5397 = vmatpush1.msra.mxu0 %v283
    %5398 = vmatprep.subr.mxu0 0.0
    %5399 = vmatpush1.msra.mxu0 %v284
    %5400 = vmatprep.subr.mxu0 0.0
    %5401 = vmatpush1.msra.mxu0 %v285
    %5402 = vmatprep.subr.mxu0 0.0
    %5403 = vmatpush1.msra.mxu0 %v286
    %5404 = vmatprep.subr.mxu0 0.0
    %5405 = vmatpush1.msra.mxu0 %v287
    %5406 = vmatprep.subr.mxu0 0.0
    %5407 = vmatpush1.msra.mxu0 %v288
    %5408 = vmatprep.subr.mxu0 0.0
    %5409 = vmatpush1.msra.mxu0 %v289
    %5410 = vmatprep.subr.mxu0 0.0
    %5411 = vmatpush1.msra.mxu0 0.0
    %5412 = vmatprep.subr.mxu0 0.0
    %5413 = vmatpush1.msra.mxu0 0.0
    %5414 = vmatprep.subr.mxu0 0.0
    %5415 = vmatpush1.msra.mxu0 0.0
    %5416 = vmatprep.subr.mxu0 0.0
    %5417 = vmatpush1.msra.mxu0 0.0
    %5418 = vmatprep.subr.mxu0 0.0
    %5419 = vmatpush1.msra.mxu0 0.0
    %5420 = vmatprep.subr.mxu0 0.0
    %5421 = vmatpush1.msra.mxu0 0.0
    %5422 = vmatprep.subr.mxu0 0.0
    %5423 = vmatpush1.msra.mxu0 0.0
    %5424 = vmatprep.subr.mxu0 0.0
    %5425 = vmatpush1.msra.mxu0 0.0
    %5426 = vmatprep.subr.mxu0 0.0
    %5427 = vmatpush1.msra.mxu0 0.0
    %5428 = vmatprep.subr.mxu0 0.0
    %5429 = vmatpush1.msra.mxu0 0.0
    %5430 = vmatprep.subr.mxu0 0.0
    %5431 = vmatpush1.msra.mxu0 0.0
    %5432 = vmatprep.subr.mxu0 0.0
    %5433 = vmatpush1.msra.mxu0 0.0
    %5434 = vmatprep.subr.mxu0 0.0
    %5435 = vmatpush1.msra.mxu0 0.0
    %5436 = vmatprep.subr.mxu0 0.0
    %5437 = vmatpush1.msra.mxu0 0.0
    %5438 = vmatprep.subr.mxu0 0.0
    %5439 = vmatpush1.msra.mxu0 0.0
    %5440 = vmatprep.subr.mxu0 0.0
    %5441 = vmatpush1.msra.mxu0 0.0
    %5442 = vmatprep.mubr.f32.mxu0 0.0
    %5443 = vmatmul.mubr.f32.gmra.mrb[0].mxu0 %v5377
    %v5444 = vpop.f32.mrb[0].mxu0
    %v5445 = vadd.f32 0.0, %v5444
    %v5446 = vpop.f32.mrb[0].mxu0
    %5447 = vdwg.mxu0
    %v5448 = vmul.f32 %v5365, %v5365
    %v5449 = vmul.f32 %v5366, %v5366
    %v5450 = vmul.f32 %v5367, %v5367
    %v5451 = vmul.f32 %v5368, %v5368
    %v5452 = vadd.f32 %v5448, %v5449
    %v5453 = vadd.f32 %v5452, %v5450
    %v5454 = vadd.f32 %v5453, %v5451
    %v5455 = vrot.slane %v5454, 4
    %v5456 = vadd.f32 %v5454, %v5455
    %v5457 = vrot.slane %v5456, 2
    %v5458 = vadd.f32 %v5456, %v5457
    %v5459 = vrot.slane %v5458, 1
    %v5460 = vadd.f32 %v5458, %v5459
    %5461 = vmatprep.subr.mxu0 0.0
    %5462 = vmatpush1.msra.mxu0 %v274
    %5463 = vmatprep.subr.mxu0 0.0
    %5464 = vmatpush1.msra.mxu0 %v275
    %5465 = vmatprep.subr.mxu0 0.0
    %5466 = vmatpush1.msra.mxu0 %v276
    %5467 = vmatprep.subr.mxu0 0.0
    %5468 = vmatpush1.msra.mxu0 %v277
    %5469 = vmatprep.subr.mxu0 0.0
    %5470 = vmatpush1.msra.mxu0 %v278
    %5471 = vmatprep.subr.mxu0 0.0
    %5472 = vmatpush1.msra.mxu0 %v279
    %5473 = vmatprep.subr.mxu0 0.0
    %5474 = vmatpush1.msra.mxu0 %v280
    %5475 = vmatprep.subr.mxu0 0.0
    %5476 = vmatpush1.msra.mxu0 %v281
    %5477 = vmatprep.subr.mxu0 0.0
    %5478 = vmatpush1.msra.mxu0 %v282
    %5479 = vmatprep.subr.mxu0 0.0
    %5480 = vmatpush1.msra.mxu0 %v283
    %5481 = vmatprep.subr.mxu0 0.0
    %5482 = vmatpush1.msra.mxu0 %v284
    %5483 = vmatprep.subr.mxu0 0.0
    %5484 = vmatpush1.msra.mxu0 %v285
    %5485 = vmatprep.subr.mxu0 0.0
    %5486 = vmatpush1.msra.mxu0 %v286
    %5487 = vmatprep.subr.mxu0 0.0
    %5488 = vmatpush1.msra.mxu0 %v287
    %5489 = vmatprep.subr.mxu0 0.0
    %5490 = vmatpush1.msra.mxu0 %v288
    %5491 = vmatprep.subr.mxu0 0.0
    %5492 = vmatpush1.msra.mxu0 %v289
    %5493 = vmatprep.subr.mxu0 0.0
    %5494 = vmatpush1.msra.mxu0 0.0
    %5495 = vmatprep.subr.mxu0 0.0
    %5496 = vmatpush1.msra.mxu0 0.0
    %5497 = vmatprep.subr.mxu0 0.0
    %5498 = vmatpush1.msra.mxu0 0.0
    %5499 = vmatprep.subr.mxu0 0.0
    %5500 = vmatpush1.msra.mxu0 0.0
    %5501 = vmatprep.subr.mxu0 0.0
    %5502 = vmatpush1.msra.mxu0 0.0
    %5503 = vmatprep.subr.mxu0 0.0
    %5504 = vmatpush1.msra.mxu0 0.0
    %5505 = vmatprep.subr.mxu0 0.0
    %5506 = vmatpush1.msra.mxu0 0.0
    %5507 = vmatprep.subr.mxu0 0.0
    %5508 = vmatpush1.msra.mxu0 0.0
    %5509 = vmatprep.subr.mxu0 0.0
    %5510 = vmatpush1.msra.mxu0 0.0
    %5511 = vmatprep.subr.mxu0 0.0
    %5512 = vmatpush1.msra.mxu0 0.0
    %5513 = vmatprep.subr.mxu0 0.0
    %5514 = vmatpush1.msra.mxu0 0.0
    %5515 = vmatprep.subr.mxu0 0.0
    %5516 = vmatpush1.msra.mxu0 0.0
    %5517 = vmatprep.subr.mxu0 0.0
    %5518 = vmatpush1.msra.mxu0 0.0
    %5519 = vmatprep.subr.mxu0 0.0
    %5520 = vmatpush1.msra.mxu0 0.0
    %5521 = vmatprep.subr.mxu0 0.0
    %5522 = vmatpush1.msra.mxu0 0.0
    %5523 = vmatprep.subr.mxu0 0.0
    %5524 = vmatpush1.msra.mxu0 0.0
    %5525 = vmatprep.mubr.f32.mxu0 0.0
    %5526 = vmatmul.mubr.f32.gmra.mrb[0].mxu0 %v5460
    %v5527 = vpop.f32.mrb[0].mxu0
    %v5528 = vadd.f32 0.0, %v5527
    %v5529 = vpop.f32.mrb[0].mxu0
    %5530 = vdwg.mxu0
    %v5531 = vmul.f32 %v5445, 0.001953125
    %v5532 = vmul.f32 %v5528, 0.001953125
    %v5533 = vmul.f32 %v5531, %v5531
    %v5534 = vsub.f32 %v5532, %v5533
    %v5535 = vadd.f32 %v5534, 1e-05
    %v5536 = vrsqrt.pop %v5535
    %v5537 = vlaneseq
    %v5538 = vshrl.u32 %v5537, 7
    %v5539 = vsub.s32 0, %v5538
    %v5540 = vrot.slane %v5536, %v5539
    %5541 = vrot.lane.b32.xlu0 %v1931, 40
    %v5542 = vpop.permute.xlu0 %5541
    %v5544 = vmul.f32 %v5540, %v5542
    %v5545 = vlaneseq
    %v5546 = vshrl.u32 %v5545, 7
    %v5547 = vsub.s32 0, %v5546
    %v5548 = vrot.slane %v5531, %v5547
    %v5549 = vmul.f32 %v5548, %v5544
    %5551 = vrot.lane.b32.xlu0 %v5549, 80
    %v5552 = vpop.permute.xlu0 %5551
    %v5554 = vsub.f32 %v272, %v5552
    %v5556 = vsel %vm1947, %v5544, 0
    %5558 = vmatprep.subr.mxu0 0.0
    %5559 = vmatpush1.msra.mxu0 %v273
    %5560 = vmatprep.subr.mxu0 0.0
    %5561 = vmatpush1.msra.mxu0 0.0
    %5562 = vmatprep.subr.mxu0 0.0
    %5563 = vmatpush1.msra.mxu0 0.0
    %5564 = vmatprep.subr.mxu0 0.0
    %5565 = vmatpush1.msra.mxu0 0.0
    %5566 = vmatprep.subr.mxu0 0.0
    %5567 = vmatpush1.msra.mxu0 0.0
    %5568 = vmatprep.subr.mxu0 0.0
    %5569 = vmatpush1.msra.mxu0 0.0
    %5570 = vmatprep.subr.mxu0 0.0
    %5571 = vmatpush1.msra.mxu0 0.0
    %5572 = vmatprep.subr.mxu0 0.0
    %5573 = vmatpush1.msra.mxu0 0.0
    %5574 = vmatprep.subr.mxu0 0.0
    %5575 = vmatpush1.msra.mxu0 0.0
    %5576 = vmatprep.subr.mxu0 0.0
    %5577 = vmatpush1.msra.mxu0 0.0
    %5578 = vmatprep.subr.mxu0 0.0
    %5579 = vmatpush1.msra.mxu0 0.0
    %5580 = vmatprep.subr.mxu0 0.0
    %5581 = vmatpush1.msra.mxu0 0.0
    %5582 = vmatprep.subr.mxu0 0.0
    %5583 = vmatpush1.msra.mxu0 0.0
    %5584 = vmatprep.subr.mxu0 0.0
    %5585 = vmatpush1.msra.mxu0 0.0
    %5586 = vmatprep.subr.mxu0 0.0
    %5587 = vmatpush1.msra.mxu0 0.0
    %5588 = vmatprep.subr.mxu0 0.0
    %5589 = vmatpush1.msra.mxu0 0.0
    %5590 = vmatprep.subr.mxu0 0.0
    %5591 = vmatpush1.msra.mxu0 0.0
    %5592 = vmatprep.subr.mxu0 0.0
    %5593 = vmatpush1.msra.mxu0 0.0
    %5594 = vmatprep.subr.mxu0 0.0
    %5595 = vmatpush1.msra.mxu0 0.0
    %5596 = vmatprep.subr.mxu0 0.0
    %5597 = vmatpush1.msra.mxu0 0.0
    %5598 = vmatprep.subr.mxu0 0.0
    %5599 = vmatpush1.msra.mxu0 0.0
    %5600 = vmatprep.subr.mxu0 0.0
    %5601 = vmatpush1.msra.mxu0 0.0
    %5602 = vmatprep.subr.mxu0 0.0
    %5603 = vmatpush1.msra.mxu0 0.0
    %5604 = vmatprep.subr.mxu0 0.0
    %5605 = vmatpush1.msra.mxu0 0.0
    %5606 = vmatprep.subr.mxu0 0.0
    %5607 = vmatpush1.msra.mxu0 0.0
    %5608 = vmatprep.subr.mxu0 0.0
    %5609 = vmatpush1.msra.mxu0 0.0
    %5610 = vmatprep.subr.mxu0 0.0
    %5611 = vmatpush1.msra.mxu0 0.0
    %5612 = vmatprep.subr.mxu0 0.0
    %5613 = vmatpush1.msra.mxu0 0.0
    %5614 = vmatprep.subr.mxu0 0.0
    %5615 = vmatpush1.msra.mxu0 0.0
    %5616 = vmatprep.subr.mxu0 0.0
    %5617 = vmatpush1.msra.mxu0 0.0
    %5618 = vmatprep.subr.mxu0 0.0
    %5619 = vmatpush1.msra.mxu0 0.0
    %5620 = vmatprep.subr.mxu0 0.0
    %5621 = vmatpush1.msra.mxu0 0.0
    %5622 = vmatprep.mubr.f32.mxu0 0.0
    %5623 = vmatmul.mubr.f32.gmra.mrb[0].mxu0 %v5556
    %v5624 = vpop.f32.mrb[0].mxu0
    %v5625 = vadd.f32 0.0, %v5624
    %v5626 = vpop.f32.mrb[0].mxu0
    %5627 = vdwg.mxu0
    %v5629 = vsel %vm2034, %v5625, 0
    %5631 = vmatprep.subr.mxu0 0.0
    %5632 = vmatpush1.msra.mxu0 %v5629
    %5633 = vmatprep.subr.mxu0 0.0
    %5634 = vmatpush1.msra.mxu0 0.0
    %5635 = vmatprep.subr.mxu0 0.0
    %5636 = vmatpush1.msra.mxu0 0.0
    %5637 = vmatprep.subr.mxu0 0.0
    %5638 = vmatpush1.msra.mxu0 0.0
    %5639 = vmatprep.subr.mxu0 0.0
    %5640 = vmatpush1.msra.mxu0 0.0
    %5641 = vmatprep.subr.mxu0 0.0
    %5642 = vmatpush1.msra.mxu0 0.0
    %5643 = vmatprep.subr.mxu0 0.0
    %5644 = vmatpush1.msra.mxu0 0.0
    %5645 = vmatprep.subr.mxu0 0.0
    %5646 = vmatpush1.msra.mxu0 0.0
    %5647 = vmatprep.subr.mxu0 0.0
    %5648 = vmatpush1.msra.mxu0 0.0
    %5649 = vmatprep.subr.mxu0 0.0
    %5650 = vmatpush1.msra.mxu0 0.0
    %5651 = vmatprep.subr.mxu0 0.0
    %5652 = vmatpush1.msra.mxu0 0.0
    %5653 = vmatprep.subr.mxu0 0.0
    %5654 = vmatpush1.msra.mxu0 0.0
    %5655 = vmatprep.subr.mxu0 0.0
    %5656 = vmatpush1.msra.mxu0 0.0
    %5657 = vmatprep.subr.mxu0 0.0
    %5658 = vmatpush1.msra.mxu0 0.0
    %5659 = vmatprep.subr.mxu0 0.0
    %5660 = vmatpush1.msra.mxu0 0.0
    %5661 = vmatprep.subr.mxu0 0.0
    %5662 = vmatpush1.msra.mxu0 0.0
    %5663 = vmatprep.subr.mxu0 0.0
    %5664 = vmatpush1.msra.mxu0 0.0
    %5665 = vmatprep.subr.mxu0 0.0
    %5666 = vmatpush1.msra.mxu0 0.0
    %5667 = vmatprep.subr.mxu0 0.0
    %5668 = vmatpush1.msra.mxu0 0.0
    %5669 = vmatprep.subr.mxu0 0.0
    %5670 = vmatpush1.msra.mxu0 0.0
    %5671 = vmatprep.subr.mxu0 0.0
    %5672 = vmatpush1.msra.mxu0 0.0
    %5673 = vmatprep.subr.mxu0 0.0
    %5674 = vmatpush1.msra.mxu0 0.0
    %5675 = vmatprep.subr.mxu0 0.0
    %5676 = vmatpush1.msra.mxu0 0.0
    %5677 = vmatprep.subr.mxu0 0.0
    %5678 = vmatpush1.msra.mxu0 0.0
    %5679 = vmatprep.subr.mxu0 0.0
    %5680 = vmatpush1.msra.mxu0 0.0
    %5681 = vmatprep.subr.mxu0 0.0
    %5682 = vmatpush1.msra.mxu0 0.0
    %5683 = vmatprep.subr.mxu0 0.0
    %5684 = vmatpush1.msra.mxu0 0.0
    %5685 = vmatprep.subr.mxu0 0.0
    %5686 = vmatpush1.msra.mxu0 0.0
    %5687 = vmatprep.subr.mxu0 0.0
    %5688 = vmatpush1.msra.mxu0 0.0
    %5689 = vmatprep.subr.mxu0 0.0
    %5690 = vmatpush1.msra.mxu0 0.0
    %5691 = vmatprep.subr.mxu0 0.0
    %5692 = vmatpush1.msra.mxu0 0.0
    %5693 = vmatprep.subr.mxu0 0.0
    %5694 = vmatpush1.msra.mxu0 0.0
    %5695 = vmatprep.mubr.f32.mxu0 0.0
    %5696 = vmatmul.mubr.f32.gmra.mrb[0].mxu0 %v2023
    %v5697 = vpop.f32.mrb[0].mxu0
    %v5698 = vadd.f32 0.0, %v5697
    %v5699 = vpop.f32.mrb[0].mxu0
    %5700 = vmatprep.mubr.f32.mxu0 0.0
    %5701 = vmatmul.mubr.f32.gmra.mrb[0].mxu0 %v2026
    %v5702 = vpop.f32.mrb[0].mxu0
    %v5703 = vadd.f32 0.0, %v5702
    %v5704 = vpop.f32.mrb[0].mxu0
    %5705 = vmatprep.mubr.f32.mxu0 0.0
    %5706 = vmatmul.mubr.f32.gmra.mrb[0].mxu0 %v2029
    %v5707 = vpop.f32.mrb[0].mxu0
    %v5708 = vadd.f32 0.0, %v5707
    %v5709 = vpop.f32.mrb[0].mxu0
    %5710 = vmatprep.mubr.f32.mxu0 0.0
    %5711 = vmatmul.mubr.f32.gmra.mrb[0].mxu0 %v2032
    %v5712 = vpop.f32.mrb[0].mxu0
    %v5713 = vadd.f32 0.0, %v5712
    %v5714 = vpop.f32.mrb[0].mxu0
    %5715 = vdwg.mxu0
    %5717 = vrot.lane.b32.xlu0 %v5554, 48
    %v5718 = vpop.permute.xlu0 %5717
    %v5719 = vsel %vm1947, %v5718, 0
    %5721 = vmatprep.subr.mxu0 0.0
    %5722 = vmatpush1.msra.mxu0 %v273
    %5723 = vmatprep.subr.mxu0 0.0
    %5724 = vmatpush1.msra.mxu0 0.0
    %5725 = vmatprep.subr.mxu0 0.0
    %5726 = vmatpush1.msra.mxu0 0.0
    %5727 = vmatprep.subr.mxu0 0.0
    %5728 = vmatpush1.msra.mxu0 0.0
    %5729 = vmatprep.subr.mxu0 0.0
    %5730 = vmatpush1.msra.mxu0 0.0
    %5731 = vmatprep.subr.mxu0 0.0
    %5732 = vmatpush1.msra.mxu0 0.0
    %5733 = vmatprep.subr.mxu0 0.0
    %5734 = vmatpush1.msra.mxu0 0.0
    %5735 = vmatprep.subr.mxu0 0.0
    %5736 = vmatpush1.msra.mxu0 0.0
    %5737 = vmatprep.subr.mxu0 0.0
    %5738 = vmatpush1.msra.mxu0 0.0
    %5739 = vmatprep.subr.mxu0 0.0
    %5740 = vmatpush1.msra.mxu0 0.0
    %5741 = vmatprep.subr.mxu0 0.0
    %5742 = vmatpush1.msra.mxu0 0.0
    %5743 = vmatprep.subr.mxu0 0.0
    %5744 = vmatpush1.msra.mxu0 0.0
    %5745 = vmatprep.subr.mxu0 0.0
    %5746 = vmatpush1.msra.mxu0 0.0
    %5747 = vmatprep.subr.mxu0 0.0
    %5748 = vmatpush1.msra.mxu0 0.0
    %5749 = vmatprep.subr.mxu0 0.0
    %5750 = vmatpush1.msra.mxu0 0.0
    %5751 = vmatprep.subr.mxu0 0.0
    %5752 = vmatpush1.msra.mxu0 0.0
    %5753 = vmatprep.subr.mxu0 0.0
    %5754 = vmatpush1.msra.mxu0 0.0
    %5755 = vmatprep.subr.mxu0 0.0
    %5756 = vmatpush1.msra.mxu0 0.0
    %5757 = vmatprep.subr.mxu0 0.0
    %5758 = vmatpush1.msra.mxu0 0.0
    %5759 = vmatprep.subr.mxu0 0.0
    %5760 = vmatpush1.msra.mxu0 0.0
    %5761 = vmatprep.subr.mxu0 0.0
    %5762 = vmatpush1.msra.mxu0 0.0
    %5763 = vmatprep.subr.mxu0 0.0
    %5764 = vmatpush1.msra.mxu0 0.0
    %5765 = vmatprep.subr.mxu0 0.0
    %5766 = vmatpush1.msra.mxu0 0.0
    %5767 = vmatprep.subr.mxu0 0.0
    %5768 = vmatpush1.msra.mxu0 0.0
    %5769 = vmatprep.subr.mxu0 0.0
    %5770 = vmatpush1.msra.mxu0 0.0
    %5771 = vmatprep.subr.mxu0 0.0
    %5772 = vmatpush1.msra.mxu0 0.0
    %5773 = vmatprep.subr.mxu0 0.0
    %5774 = vmatpush1.msra.mxu0 0.0
    %5775 = vmatprep.subr.mxu0 0.0
    %5776 = vmatpush1.msra.mxu0 0.0
    %5777 = vmatprep.subr.mxu0 0.0
    %5778 = vmatpush1.msra.mxu0 0.0
    %5779 = vmatprep.subr.mxu0 0.0
    %5780 = vmatpush1.msra.mxu0 0.0
    %5781 = vmatprep.subr.mxu0 0.0
    %5782 = vmatpush1.msra.mxu0 0.0
    %5783 = vmatprep.subr.mxu0 0.0
    %5784 = vmatpush1.msra.mxu0 0.0
    %5785 = vmatprep.mubr.f32.mxu0 0.0
    %5786 = vmatmul.mubr.f32.gmra.mrb[0].mxu0 %v5719
    %v5787 = vpop.f32.mrb[0].mxu0
    %v5788 = vadd.f32 0.0, %v5787
    %v5789 = vpop.f32.mrb[0].mxu0
    %5790 = vdwg.mxu0
    %v5792 = vsel %vm2034, %v5788, 0
    %5794 = vmatprep.subr.mxu0 0.0
    %5795 = vmatpush1.msra.mxu0 %v5792
    %5796 = vmatprep.subr.mxu0 0.0
    %5797 = vmatpush1.msra.mxu0 0.0
    %5798 = vmatprep.subr.mxu0 0.0
    %5799 = vmatpush1.msra.mxu0 0.0
    %5800 = vmatprep.subr.mxu0 0.0
    %5801 = vmatpush1.msra.mxu0 0.0
    %5802 = vmatprep.subr.mxu0 0.0
    %5803 = vmatpush1.msra.mxu0 0.0
    %5804 = vmatprep.subr.mxu0 0.0
    %5805 = vmatpush1.msra.mxu0 0.0
    %5806 = vmatprep.subr.mxu0 0.0
    %5807 = vmatpush1.msra.mxu0 0.0
    %5808 = vmatprep.subr.mxu0 0.0
    %5809 = vmatpush1.msra.mxu0 0.0
    %5810 = vmatprep.subr.mxu0 0.0
    %5811 = vmatpush1.msra.mxu0 0.0
    %5812 = vmatprep.subr.mxu0 0.0
    %5813 = vmatpush1.msra.mxu0 0.0
    %5814 = vmatprep.subr.mxu0 0.0
    %5815 = vmatpush1.msra.mxu0 0.0
    %5816 = vmatprep.subr.mxu0 0.0
    %5817 = vmatpush1.msra.mxu0 0.0
    %5818 = vmatprep.subr.mxu0 0.0
    %5819 = vmatpush1.msra.mxu0 0.0
    %5820 = vmatprep.subr.mxu0 0.0
    %5821 = vmatpush1.msra.mxu0 0.0
    %5822 = vmatprep.subr.mxu0 0.0
    %5823 = vmatpush1.msra.mxu0 0.0
    %5824 = vmatprep.subr.mxu0 0.0
    %5825 = vmatpush1.msra.mxu0 0.0
    %5826 = vmatprep.subr.mxu0 0.0
    %5827 = vmatpush1.msra.mxu0 0.0
    %5828 = vmatprep.subr.mxu0 0.0
    %5829 = vmatpush1.msra.mxu0 0.0
    %5830 = vmatprep.subr.mxu0 0.0
    %5831 = vmatpush1.msra.mxu0 0.0
    %5832 = vmatprep.subr.mxu0 0.0
    %5833 = vmatpush1.msra.mxu0 0.0
    %5834 = vmatprep.subr.mxu0 0.0
    %5835 = vmatpush1.msra.mxu0 0.0
    %5836 = vmatprep.subr.mxu0 0.0
    %5837 = vmatpush1.msra.mxu0 0.0
    %5838 = vmatprep.subr.mxu0 0.0
    %5839 = vmatpush1.msra.mxu0 0.0
    %5840 = vmatprep.subr.mxu0 0.0
    %5841 = vmatpush1.msra.mxu0 0.0
    %5842 = vmatprep.subr.mxu0 0.0
    %5843 = vmatpush1.msra.mxu0 0.0
    %5844 = vmatprep.subr.mxu0 0.0
    %5845 = vmatpush1.msra.mxu0 0.0
    %5846 = vmatprep.subr.mxu0 0.0
    %5847 = vmatpush1.msra.mxu0 0.0
    %5848 = vmatprep.subr.mxu0 0.0
    %5849 = vmatpush1.msra.mxu0 0.0
    %5850 = vmatprep.subr.mxu0 0.0
    %5851 = vmatpush1.msra.mxu0 0.0
    %5852 = vmatprep.subr.mxu0 0.0
    %5853 = vmatpush1.msra.mxu0 0.0
    %5854 = vmatprep.subr.mxu0 0.0
    %5855 = vmatpush1.msra.mxu0 0.0
    %5856 = vmatprep.subr.mxu0 0.0
    %5857 = vmatpush1.msra.mxu0 0.0
    %5858 = vmatprep.mubr.f32.mxu0 0.0
    %5859 = vmatmul.mubr.f32.gmra.mrb[0].mxu0 %v2023
    %v5860 = vpop.f32.mrb[0].mxu0
    %v5861 = vadd.f32 0.0, %v5860
    %v5862 = vpop.f32.mrb[0].mxu0
    %5863 = vmatprep.mubr.f32.mxu0 0.0
    %5864 = vmatmul.mubr.f32.gmra.mrb[0].mxu0 %v2026
    %v5865 = vpop.f32.mrb[0].mxu0
    %v5866 = vadd.f32 0.0, %v5865
    %v5867 = vpop.f32.mrb[0].mxu0
    %5868 = vmatprep.mubr.f32.mxu0 0.0
    %5869 = vmatmul.mubr.f32.gmra.mrb[0].mxu0 %v2029
    %v5870 = vpop.f32.mrb[0].mxu0
    %v5871 = vadd.f32 0.0, %v5870
    %v5872 = vpop.f32.mrb[0].mxu0
    %5873 = vmatprep.mubr.f32.mxu0 0.0
    %5874 = vmatmul.mubr.f32.gmra.mrb[0].mxu0 %v2032
    %v5875 = vpop.f32.mrb[0].mxu0
    %v5876 = vadd.f32 0.0, %v5875
    %v5877 = vpop.f32.mrb[0].mxu0
    %5878 = vdwg.mxu0
    %v5879 = vmul.f32 %v5365, %v5698
    %v5880 = vmul.f32 %v5366, %v5703
    %v5881 = vmul.f32 %v5367, %v5708
    %v5882 = vmul.f32 %v5368, %v5713
    %v5883 = vadd.f32 %v5879, %v5861
    %v5884 = vadd.f32 %v5880, %v5866
    %v5885 = vadd.f32 %v5881, %v5871
    %v5886 = vadd.f32 %v5882, %v5876
    %v5887 = vmax.f32 %v5883, 0.0
    %v5888 = vmax.f32 %v5884, 0.0
    %v5889 = vmax.f32 %v5885, 0.0
    %v5890 = vmax.f32 %v5886, 0.0
    %5891 = vmatprep.subr.mxu0 0.0
    %5892 = vmatpush1.msra.mxu0 %v5887
    %5893 = vmatprep.subr.mxu0 0.0
    %5894 = vmatpush1.msra.mxu0 %v5888
    %5895 = vmatprep.subr.mxu0 0.0
    %5896 = vmatpush1.msra.mxu0 %v5889
    %5897 = vmatprep.subr.mxu0 0.0
    %5898 = vmatpush1.msra.mxu0 %v5890
    %5899 = vmatprep.subr.mxu0 0.0
    %5900 = vmatpush1.msra.mxu0 0.0
    %5901 = vmatprep.subr.mxu0 0.0
    %5902 = vmatpush1.msra.mxu0 0.0
    %5903 = vmatprep.subr.mxu0 0.0
    %5904 = vmatpush1.msra.mxu0 0.0
    %5905 = vmatprep.subr.mxu0 0.0
    %5906 = vmatpush1.msra.mxu0 0.0
    %5907 = vmatprep.subr.mxu0 0.0
    %5908 = vmatpush1.msra.mxu0 0.0
    %5909 = vmatprep.subr.mxu0 0.0
    %5910 = vmatpush1.msra.mxu0 0.0
    %5911 = vmatprep.subr.mxu0 0.0
    %5912 = vmatpush1.msra.mxu0 0.0
    %5913 = vmatprep.subr.mxu0 0.0
    %5914 = vmatpush1.msra.mxu0 0.0
    %5915 = vmatprep.subr.mxu0 0.0
    %5916 = vmatpush1.msra.mxu0 0.0
    %5917 = vmatprep.subr.mxu0 0.0
    %5918 = vmatpush1.msra.mxu0 0.0
    %5919 = vmatprep.subr.mxu0 0.0
    %5920 = vmatpush1.msra.mxu0 0.0
    %5921 = vmatprep.subr.mxu0 0.0
    %5922 = vmatpush1.msra.mxu0 0.0
    %5923 = vmatprep.subr.mxu0 0.0
    %5924 = vmatpush1.msra.mxu0 0.0
    %5925 = vmatprep.subr.mxu0 0.0
    %5926 = vmatpush1.msra.mxu0 0.0
    %5927 = vmatprep.subr.mxu0 0.0
    %5928 = vmatpush1.msra.mxu0 0.0
    %5929 = vmatprep.subr.mxu0 0.0
    %5930 = vmatpush1.msra.mxu0 0.0
    %5931 = vmatprep.subr.mxu0 0.0
    %5932 = vmatpush1.msra.mxu0 0.0
    %5933 = vmatprep.subr.mxu0 0.0
    %5934 = vmatpush1.msra.mxu0 0.0
    %5935 = vmatprep.subr.mxu0 0.0
    %5936 = vmatpush1.msra.mxu0 0.0
    %5937 = vmatprep.subr.mxu0 0.0
    %5938 = vmatpush1.msra.mxu0 0.0
    %5939 = vmatprep.subr.mxu0 0.0
    %5940 = vmatpush1.msra.mxu0 0.0
    %5941 = vmatprep.subr.mxu0 0.0
    %5942 = vmatpush1.msra.mxu0 0.0
    %5943 = vmatprep.subr.mxu0 0.0
    %5944 = vmatpush1.msra.mxu0 0.0
    %5945 = vmatprep.subr.mxu0 0.0
    %5946 = vmatpush1.msra.mxu0 0.0
    %5947 = vmatprep.subr.mxu0 0.0
    %5948 = vmatpush1.msra.mxu0 0.0
    %5949 = vmatprep.subr.mxu0 0.0
    %5950 = vmatpush1.msra.mxu0 0.0
    %5951 = vmatprep.subr.mxu0 0.0
    %5952 = vmatpush1.msra.mxu0 0.0
    %5953 = vmatprep.subr.mxu0 0.0
    %5954 = vmatpush1.msra.mxu0 0.0
    %5955 = vmatprep.mubr.f32.mxu0 0.0
    %5956 = vmatmul.mubr.f32.gmra.mrb[0].mxu0 %v324
    %v5957 = vpop.f32.mrb[0].mxu0
    %v5958 = vadd.f32 0.0, %v5957
    %v5959 = vpop.f32.mrb[0].mxu0
    %5960 = vmatprep.mubr.f32.mxu0 0.0
    %5961 = vmatmul.mubr.f32.gmra.mrb[0].mxu0 %v327
    %v5962 = vpop.f32.mrb[0].mxu0
    %v5963 = vadd.f32 0.0, %v5962
    %v5964 = vpop.f32.mrb[0].mxu0
    %5965 = vmatprep.mubr.f32.mxu0 0.0
    %5966 = vmatmul.mubr.f32.gmra.mrb[0].mxu0 %v330
    %v5967 = vpop.f32.mrb[0].mxu0
    %v5968 = vadd.f32 0.0, %v5967
    %v5969 = vpop.f32.mrb[0].mxu0
    %5970 = vmatprep.mubr.f32.mxu0 0.0
    %5971 = vmatmul.mubr.f32.gmra.mrb[0].mxu0 %v333
    %v5972 = vpop.f32.mrb[0].mxu0
    %v5973 = vadd.f32 0.0, %v5972
    %v5974 = vpop.f32.mrb[0].mxu0
    %5975 = vdwg.mxu0
    %v5976 = vld [vmem:[%s15] sm:$0xff]
    %v5977 = vld [vmem:[%s15 + $0x8] sm:$0xff]
    %v5978 = vld [vmem:[%s15 + $0x10] sm:$0xff]
    %v5979 = vld [vmem:[%s15 + $0x18] sm:$0xff]
    %v5980 = vld [vmem:[%s15 + $0x20] sm:$0xff]
    %v5981 = vld [vmem:[%s15 + $0x28] sm:$0xff]
    %v5982 = vld [vmem:[%s15 + $0x30] sm:$0xff]
    %v5983 = vld [vmem:[%s15 + $0x38] sm:$0xff]
    %v5984 = vld [vmem:[%s15 + $0x40] sm:$0xff]
    %v5985 = vld [vmem:[%s15 + $0x48] sm:$0xff]
    %v5986 = vld [vmem:[%s15 + $0x50] sm:$0xff]
    %v5987 = vld [vmem:[%s15 + $0x58] sm:$0xff]
    %v5988 = vld [vmem:[%s15 + $0x60] sm:$0xff]
    %v5989 = vld [vmem:[%s15 + $0x68] sm:$0xff]
    %v5990 = vld [vmem:[%s15 + $0x70] sm:$0xff]
    %v5991 = vld [vmem:[%s15 + $0x78] sm:$0xff]
    %5992 = vmatprep.subr.mxu0 0.0
    %5993 = vmatpush1.msra.mxu0 %v5887
    %5994 = vmatprep.subr.mxu0 0.0
    %5995 = vmatpush1.msra.mxu0 %v5888
    %5996 = vmatprep.subr.mxu0 0.0
    %5997 = vmatpush1.msra.mxu0 %v5889
    %5998 = vmatprep.subr.mxu0 0.0
    %5999 = vmatpush1.msra.mxu0 %v5890
    %6000 = vmatprep.subr.mxu0 0.0
    %6001 = vmatpush1.msra.mxu0 0.0
    %6002 = vmatprep.subr.mxu0 0.0
    %6003 = vmatpush1.msra.mxu0 0.0
    %6004 = vmatprep.subr.mxu0 0.0
    %6005 = vmatpush1.msra.mxu0 0.0
    %6006 = vmatprep.subr.mxu0 0.0
    %6007 = vmatpush1.msra.mxu0 0.0
    %6008 = vmatprep.subr.mxu0 0.0
    %6009 = vmatpush1.msra.mxu0 0.0
    %6010 = vmatprep.subr.mxu0 0.0
    %6011 = vmatpush1.msra.mxu0 0.0
    %6012 = vmatprep.subr.mxu0 0.0
    %6013 = vmatpush1.msra.mxu0 0.0
    %6014 = vmatprep.subr.mxu0 0.0
    %6015 = vmatpush1.msra.mxu0 0.0
    %6016 = vmatprep.subr.mxu0 0.0
    %6017 = vmatpush1.msra.mxu0 0.0
    %6018 = vmatprep.subr.mxu0 0.0
    %6019 = vmatpush1.msra.mxu0 0.0
    %6020 = vmatprep.subr.mxu0 0.0
    %6021 = vmatpush1.msra.mxu0 0.0
    %6022 = vmatprep.subr.mxu0 0.0
    %6023 = vmatpush1.msra.mxu0 0.0
    %6024 = vmatprep.subr.mxu0 0.0
    %6025 = vmatpush1.msra.mxu0 0.0
    %6026 = vmatprep.subr.mxu0 0.0
    %6027 = vmatpush1.msra.mxu0 0.0
    %6028 = vmatprep.subr.mxu0 0.0
    %6029 = vmatpush1.msra.mxu0 0.0
    %6030 = vmatprep.subr.mxu0 0.0
    %6031 = vmatpush1.msra.mxu0 0.0
    %6032 = vmatprep.subr.mxu0 0.0
    %6033 = vmatpush1.msra.mxu0 0.0
    %6034 = vmatprep.subr.mxu0 0.0
    %6035 = vmatpush1.msra.mxu0 0.0
    %6036 = vmatprep.subr.mxu0 0.0
    %6037 = vmatpush1.msra.mxu0 0.0
    %6038 = vmatprep.subr.mxu0 0.0
    %6039 = vmatpush1.msra.mxu0 0.0
    %6040 = vmatprep.subr.mxu0 0.0
    %6041 = vmatpush1.msra.mxu0 0.0
    %6042 = vmatprep.subr.mxu0 0.0
    %6043 = vmatpush1.msra.mxu0 0.0
    %6044 = vmatprep.subr.mxu0 0.0
    %6045 = vmatpush1.msra.mxu0 0.0
    %6046 = vmatprep.subr.mxu0 0.0
    %6047 = vmatpush1.msra.mxu0 0.0
    %6048 = vmatprep.subr.mxu0 0.0
    %6049 = vmatpush1.msra.mxu0 0.0
    %6050 = vmatprep.subr.mxu0 0.0
    %6051 = vmatpush1.msra.mxu0 0.0
    %6052 = vmatprep.subr.mxu0 0.0
    %6053 = vmatpush1.msra.mxu0 0.0
    %6054 = vmatprep.subr.mxu0 0.0
    %6055 = vmatpush1.msra.mxu0 0.0
    %6056 = vmatprep.mubr.f32.mxu0 0.0
    %6057 = vmatmul.mubr.f32.gmra.mrb[0].mxu0 %v428
    %v6058 = vpop.f32.mrb[0].mxu0
    %v6059 = vadd.f32 0.0, %v6058
    %v6060 = vpop.f32.mrb[0].mxu0
    %6061 = vmatprep.mubr.f32.mxu0 0.0
    %6062 = vmatmul.mubr.f32.gmra.mrb[0].mxu0 %v431
    %v6063 = vpop.f32.mrb[0].mxu0
    %v6064 = vadd.f32 0.0, %v6063
    %v6065 = vpop.f32.mrb[0].mxu0
    %6066 = vmatprep.mubr.f32.mxu0 0.0
    %6067 = vmatmul.mubr.f32.gmra.mrb[0].mxu0 %v434
    %v6068 = vpop.f32.mrb[0].mxu0
    %v6069 = vadd.f32 0.0, %v6068
    %v6070 = vpop.f32.mrb[0].mxu0
    %6071 = vmatprep.mubr.f32.mxu0 0.0
    %6072 = vmatmul.mubr.f32.gmra.mrb[0].mxu0 %v437
    %v6073 = vpop.f32.mrb[0].mxu0
    %v6074 = vadd.f32 0.0, %v6073
    %v6075 = vpop.f32.mrb[0].mxu0
    %6076 = vdwg.mxu0
    %s6077 = scalar_lea.vmem %s15, 128
    %v6078 = vld [vmem:[%s6077] sm:$0xff]
    %v6079 = vld [vmem:[%s6077 + $0x8] sm:$0xff]
    %v6080 = vld [vmem:[%s6077 + $0x10] sm:$0xff]
    %v6081 = vld [vmem:[%s6077 + $0x18] sm:$0xff]
    %v6082 = vld [vmem:[%s6077 + $0x20] sm:$0xff]
    %v6083 = vld [vmem:[%s6077 + $0x28] sm:$0xff]
    %v6084 = vld [vmem:[%s6077 + $0x30] sm:$0xff]
    %v6085 = vld [vmem:[%s6077 + $0x38] sm:$0xff]
    %v6086 = vld [vmem:[%s6077 + $0x40] sm:$0xff]
    %v6087 = vld [vmem:[%s6077 + $0x48] sm:$0xff]
    %v6088 = vld [vmem:[%s6077 + $0x50] sm:$0xff]
    %v6089 = vld [vmem:[%s6077 + $0x58] sm:$0xff]
    %v6090 = vld [vmem:[%s6077 + $0x60] sm:$0xff]
    %v6091 = vld [vmem:[%s6077 + $0x68] sm:$0xff]
    %v6092 = vld [vmem:[%s6077 + $0x70] sm:$0xff]
    %v6093 = vld [vmem:[%s6077 + $0x78] sm:$0xff]
    %6094 = vmatprep.subr.mxu0 0.0
    %6095 = vmatpush1.msra.mxu0 %v6078
    %6096 = vmatprep.subr.mxu0 0.0
    %6097 = vmatpush1.msra.mxu0 %v6079
    %6098 = vmatprep.subr.mxu0 0.0
    %6099 = vmatpush1.msra.mxu0 %v6080
    %6100 = vmatprep.subr.mxu0 0.0
    %6101 = vmatpush1.msra.mxu0 %v6081
    %6102 = vmatprep.subr.mxu0 0.0
    %6103 = vmatpush1.msra.mxu0 %v6082
    %6104 = vmatprep.subr.mxu0 0.0
    %6105 = vmatpush1.msra.mxu0 %v6083
    %6106 = vmatprep.subr.mxu0 0.0
    %6107 = vmatpush1.msra.mxu0 %v6084
    %6108 = vmatprep.subr.mxu0 0.0
    %6109 = vmatpush1.msra.mxu0 %v6085
    %6110 = vmatprep.subr.mxu0 0.0
    %6111 = vmatpush1.msra.mxu0 %v6086
    %6112 = vmatprep.subr.mxu0 0.0
    %6113 = vmatpush1.msra.mxu0 %v6087
    %6114 = vmatprep.subr.mxu0 0.0
    %6115 = vmatpush1.msra.mxu0 %v6088
    %6116 = vmatprep.subr.mxu0 0.0
    %6117 = vmatpush1.msra.mxu0 %v6089
    %6118 = vmatprep.subr.mxu0 0.0
    %6119 = vmatpush1.msra.mxu0 %v6090
    %6120 = vmatprep.subr.mxu0 0.0
    %6121 = vmatpush1.msra.mxu0 %v6091
    %6122 = vmatprep.subr.mxu0 0.0
    %6123 = vmatpush1.msra.mxu0 %v6092
    %6124 = vmatprep.subr.mxu0 0.0
    %6125 = vmatpush1.msra.mxu0 %v6093
    %6126 = vmatprep.subr.mxu0 0.0
    %6127 = vmatpush1.msra.mxu0 0.0
    %6128 = vmatprep.subr.mxu0 0.0
    %6129 = vmatpush1.msra.mxu0 0.0
    %6130 = vmatprep.subr.mxu0 0.0
    %6131 = vmatpush1.msra.mxu0 0.0
    %6132 = vmatprep.subr.mxu0 0.0
    %6133 = vmatpush1.msra.mxu0 0.0
    %6134 = vmatprep.subr.mxu0 0.0
    %6135 = vmatpush1.msra.mxu0 0.0
    %6136 = vmatprep.subr.mxu0 0.0
    %6137 = vmatpush1.msra.mxu0 0.0
    %6138 = vmatprep.subr.mxu0 0.0
    %6139 = vmatpush1.msra.mxu0 0.0
    %6140 = vmatprep.subr.mxu0 0.0
    %6141 = vmatpush1.msra.mxu0 0.0
    %6142 = vmatprep.subr.mxu0 0.0
    %6143 = vmatpush1.msra.mxu0 0.0
    %6144 = vmatprep.subr.mxu0 0.0
    %6145 = vmatpush1.msra.mxu0 0.0
    %6146 = vmatprep.subr.mxu0 0.0
    %6147 = vmatpush1.msra.mxu0 0.0
    %6148 = vmatprep.subr.mxu0 0.0
    %6149 = vmatpush1.msra.mxu0 0.0
    %6150 = vmatprep.subr.mxu0 0.0
    %6151 = vmatpush1.msra.mxu0 0.0
    %6152 = vmatprep.subr.mxu0 0.0
    %6153 = vmatpush1.msra.mxu0 0.0
    %6154 = vmatprep.subr.mxu0 0.0
    %6155 = vmatpush1.msra.mxu0 0.0
    %6156 = vmatprep.subr.mxu0 0.0
    %6157 = vmatpush1.msra.mxu0 0.0
    %6158 = vmatprep.mubr.f32.mxu0 0.0
    %6159 = vmatmul.mubr.f32.gmra.mrb[0].mxu0 %v6059
    %v6160 = vpop.f32.mrb[0].mxu0
    %v6161 = vadd.f32 0.0, %v6160
    %v6162 = vpop.f32.mrb[0].mxu0
    %6163 = vmatprep.mubr.f32.mxu0 0.0
    %6164 = vmatmul.mubr.f32.gmra.mrb[0].mxu0 %v6064
    %v6165 = vpop.f32.mrb[0].mxu0
    %v6166 = vadd.f32 0.0, %v6165
    %v6167 = vpop.f32.mrb[0].mxu0
    %6168 = vmatprep.mubr.f32.mxu0 0.0
    %6169 = vmatmul.mubr.f32.gmra.mrb[0].mxu0 %v6069
    %v6170 = vpop.f32.mrb[0].mxu0
    %v6171 = vadd.f32 0.0, %v6170
    %v6172 = vpop.f32.mrb[0].mxu0
    %6173 = vmatprep.mubr.f32.mxu0 0.0
    %6174 = vmatmul.mubr.f32.gmra.mrb[0].mxu0 %v6074
    %v6175 = vpop.f32.mrb[0].mxu0
    %v6176 = vadd.f32 0.0, %v6175
    %v6177 = vpop.f32.mrb[0].mxu0
    %6178 = vdwg.mxu0
    %6179 = vmatprep.subr.mxu0 0.0
    %6180 = vmatpush1.msra.mxu0 %v5976
    %6181 = vmatprep.subr.mxu0 0.0
    %6182 = vmatpush1.msra.mxu0 %v5977
    %6183 = vmatprep.subr.mxu0 0.0
    %6184 = vmatpush1.msra.mxu0 %v5978
    %6185 = vmatprep.subr.mxu0 0.0
    %6186 = vmatpush1.msra.mxu0 %v5979
    %6187 = vmatprep.subr.mxu0 0.0
    %6188 = vmatpush1.msra.mxu0 %v5980
    %6189 = vmatprep.subr.mxu0 0.0
    %6190 = vmatpush1.msra.mxu0 %v5981
    %6191 = vmatprep.subr.mxu0 0.0
    %6192 = vmatpush1.msra.mxu0 %v5982
    %6193 = vmatprep.subr.mxu0 0.0
    %6194 = vmatpush1.msra.mxu0 %v5983
    %6195 = vmatprep.subr.mxu0 0.0
    %6196 = vmatpush1.msra.mxu0 %v5984
    %6197 = vmatprep.subr.mxu0 0.0
    %6198 = vmatpush1.msra.mxu0 %v5985
    %6199 = vmatprep.subr.mxu0 0.0
    %6200 = vmatpush1.msra.mxu0 %v5986
    %6201 = vmatprep.subr.mxu0 0.0
    %6202 = vmatpush1.msra.mxu0 %v5987
    %6203 = vmatprep.subr.mxu0 0.0
    %6204 = vmatpush1.msra.mxu0 %v5988
    %6205 = vmatprep.subr.mxu0 0.0
    %6206 = vmatpush1.msra.mxu0 %v5989
    %6207 = vmatprep.subr.mxu0 0.0
    %6208 = vmatpush1.msra.mxu0 %v5990
    %6209 = vmatprep.subr.mxu0 0.0
    %6210 = vmatpush1.msra.mxu0 %v5991
    %6211 = vmatprep.subr.mxu0 0.0
    %6212 = vmatpush1.msra.mxu0 0.0
    %6213 = vmatprep.subr.mxu0 0.0
    %6214 = vmatpush1.msra.mxu0 0.0
    %6215 = vmatprep.subr.mxu0 0.0
    %6216 = vmatpush1.msra.mxu0 0.0
    %6217 = vmatprep.subr.mxu0 0.0
    %6218 = vmatpush1.msra.mxu0 0.0
    %6219 = vmatprep.subr.mxu0 0.0
    %6220 = vmatpush1.msra.mxu0 0.0
    %6221 = vmatprep.subr.mxu0 0.0
    %6222 = vmatpush1.msra.mxu0 0.0
    %6223 = vmatprep.subr.mxu0 0.0
    %6224 = vmatpush1.msra.mxu0 0.0
    %6225 = vmatprep.subr.mxu0 0.0
    %6226 = vmatpush1.msra.mxu0 0.0
    %6227 = vmatprep.subr.mxu0 0.0
    %6228 = vmatpush1.msra.mxu0 0.0
    %6229 = vmatprep.subr.mxu0 0.0
    %6230 = vmatpush1.msra.mxu0 0.0
    %6231 = vmatprep.subr.mxu0 0.0
    %6232 = vmatpush1.msra.mxu0 0.0
    %6233 = vmatprep.subr.mxu0 0.0
    %6234 = vmatpush1.msra.mxu0 0.0
    %6235 = vmatprep.subr.mxu0 0.0
    %6236 = vmatpush1.msra.mxu0 0.0
    %6237 = vmatprep.subr.mxu0 0.0
    %6238 = vmatpush1.msra.mxu0 0.0
    %6239 = vmatprep.subr.mxu0 0.0
    %6240 = vmatpush1.msra.mxu0 0.0
    %6241 = vmatprep.subr.mxu0 0.0
    %6242 = vmatpush1.msra.mxu0 0.0
    %6243 = vmatprep.mubr.f32.mxu0 0.0
    %6244 = vmatmul.mubr.f32.gmra.mrb[0].mxu0 %v5958
    %v6245 = vpop.f32.mrb[0].mxu0
    %v6246 = vadd.f32 %v6161, %v6245
    %v6247 = vpop.f32.mrb[0].mxu0
    %6248 = vmatprep.mubr.f32.mxu0 0.0
    %6249 = vmatmul.mubr.f32.gmra.mrb[0].mxu0 %v5963
    %v6250 = vpop.f32.mrb[0].mxu0
    %v6251 = vadd.f32 %v6166, %v6250
    %v6252 = vpop.f32.mrb[0].mxu0
    %6253 = vmatprep.mubr.f32.mxu0 0.0
    %6254 = vmatmul.mubr.f32.gmra.mrb[0].mxu0 %v5968
    %v6255 = vpop.f32.mrb[0].mxu0
    %v6256 = vadd.f32 %v6171, %v6255
    %v6257 = vpop.f32.mrb[0].mxu0
    %6258 = vmatprep.mubr.f32.mxu0 0.0
    %6259 = vmatmul.mubr.f32.gmra.mrb[0].mxu0 %v5973
    %v6260 = vpop.f32.mrb[0].mxu0
    %v6261 = vadd.f32 %v6176, %v6260
    %v6262 = vpop.f32.mrb[0].mxu0
    %6263 = vdwg.mxu0
    %6264 = vmatprep.subr.mxu0 0.0
    %6265 = vmatpush1.msra.mxu0 %v5887
    %6266 = vmatprep.subr.mxu0 0.0
    %6267 = vmatpush1.msra.mxu0 %v5888
    %6268 = vmatprep.subr.mxu0 0.0
    %6269 = vmatpush1.msra.mxu0 %v5889
    %6270 = vmatprep.subr.mxu0 0.0
    %6271 = vmatpush1.msra.mxu0 %v5890
    %6272 = vmatprep.subr.mxu0 0.0
    %6273 = vmatpush1.msra.mxu0 0.0
    %6274 = vmatprep.subr.mxu0 0.0
    %6275 = vmatpush1.msra.mxu0 0.0
    %6276 = vmatprep.subr.mxu0 0.0
    %6277 = vmatpush1.msra.mxu0 0.0
    %6278 = vmatprep.subr.mxu0 0.0
    %6279 = vmatpush1.msra.mxu0 0.0
    %6280 = vmatprep.subr.mxu0 0.0
    %6281 = vmatpush1.msra.mxu0 0.0
    %6282 = vmatprep.subr.mxu0 0.0
    %6283 = vmatpush1.msra.mxu0 0.0
    %6284 = vmatprep.subr.mxu0 0.0
    %6285 = vmatpush1.msra.mxu0 0.0
    %6286 = vmatprep.subr.mxu0 0.0
    %6287 = vmatpush1.msra.mxu0 0.0
    %6288 = vmatprep.subr.mxu0 0.0
    %6289 = vmatpush1.msra.mxu0 0.0
    %6290 = vmatprep.subr.mxu0 0.0
    %6291 = vmatpush1.msra.mxu0 0.0
    %6292 = vmatprep.subr.mxu0 0.0
    %6293 = vmatpush1.msra.mxu0 0.0
    %6294 = vmatprep.subr.mxu0 0.0
    %6295 = vmatpush1.msra.mxu0 0.0
    %6296 = vmatprep.subr.mxu0 0.0
    %6297 = vmatpush1.msra.mxu0 0.0
    %6298 = vmatprep.subr.mxu0 0.0
    %6299 = vmatpush1.msra.mxu0 0.0
    %6300 = vmatprep.subr.mxu0 0.0
    %6301 = vmatpush1.msra.mxu0 0.0
    %6302 = vmatprep.subr.mxu0 0.0
    %6303 = vmatpush1.msra.mxu0 0.0
    %6304 = vmatprep.subr.mxu0 0.0
    %6305 = vmatpush1.msra.mxu0 0.0
    %6306 = vmatprep.subr.mxu0 0.0
    %6307 = vmatpush1.msra.mxu0 0.0
    %6308 = vmatprep.subr.mxu0 0.0
    %6309 = vmatpush1.msra.mxu0 0.0
    %6310 = vmatprep.subr.mxu0 0.0
    %6311 = vmatpush1.msra.mxu0 0.0
    %6312 = vmatprep.subr.mxu0 0.0
    %6313 = vmatpush1.msra.mxu0 0.0
    %6314 = vmatprep.subr.mxu0 0.0
    %6315 = vmatpush1.msra.mxu0 0.0
    %6316 = vmatprep.subr.mxu0 0.0
    %6317 = vmatpush1.msra.mxu0 0.0
    %6318 = vmatprep.subr.mxu0 0.0
    %6319 = vmatpush1.msra.mxu0 0.0
    %6320 = vmatprep.subr.mxu0 0.0
    %6321 = vmatpush1.msra.mxu0 0.0
    %6322 = vmatprep.subr.mxu0 0.0
    %6323 = vmatpush1.msra.mxu0 0.0
    %6324 = vmatprep.subr.mxu0 0.0
    %6325 = vmatpush1.msra.mxu0 0.0
    %6326 = vmatprep.subr.mxu0 0.0
    %6327 = vmatpush1.msra.mxu0 0.0
    %6328 = vmatprep.mubr.f32.mxu0 0.0
    %6329 = vmatmul.mubr.f32.gmra.mrb[0].mxu0 %v728
    %v6330 = vpop.f32.mrb[0].mxu0
    %v6331 = vadd.f32 0.0, %v6330
    %v6332 = vpop.f32.mrb[0].mxu0
    %6333 = vmatprep.mubr.f32.mxu0 0.0
    %6334 = vmatmul.mubr.f32.gmra.mrb[0].mxu0 %v731
    %v6335 = vpop.f32.mrb[0].mxu0
    %v6336 = vadd.f32 0.0, %v6335
    %v6337 = vpop.f32.mrb[0].mxu0
    %6338 = vmatprep.mubr.f32.mxu0 0.0
    %6339 = vmatmul.mubr.f32.gmra.mrb[0].mxu0 %v734
    %v6340 = vpop.f32.mrb[0].mxu0
    %v6341 = vadd.f32 0.0, %v6340
    %v6342 = vpop.f32.mrb[0].mxu0
    %6343 = vmatprep.mubr.f32.mxu0 0.0
    %6344 = vmatmul.mubr.f32.gmra.mrb[0].mxu0 %v737
    %v6345 = vpop.f32.mrb[0].mxu0
    %v6346 = vadd.f32 0.0, %v6345
    %v6347 = vpop.f32.mrb[0].mxu0
    %6348 = vdwg.mxu0
    %s6349 = scalar_lea.vmem %s15, 256
    %v6350 = vld [vmem:[%s6349] sm:$0xff]
    %v6351 = vld [vmem:[%s6349 + $0x8] sm:$0xff]
    %v6352 = vld [vmem:[%s6349 + $0x10] sm:$0xff]
    %v6353 = vld [vmem:[%s6349 + $0x18] sm:$0xff]
    %v6354 = vld [vmem:[%s6349 + $0x20] sm:$0xff]
    %v6355 = vld [vmem:[%s6349 + $0x28] sm:$0xff]
    %v6356 = vld [vmem:[%s6349 + $0x30] sm:$0xff]
    %v6357 = vld [vmem:[%s6349 + $0x38] sm:$0xff]
    %v6358 = vld [vmem:[%s6349 + $0x40] sm:$0xff]
    %v6359 = vld [vmem:[%s6349 + $0x48] sm:$0xff]
    %v6360 = vld [vmem:[%s6349 + $0x50] sm:$0xff]
    %v6361 = vld [vmem:[%s6349 + $0x58] sm:$0xff]
    %v6362 = vld [vmem:[%s6349 + $0x60] sm:$0xff]
    %v6363 = vld [vmem:[%s6349 + $0x68] sm:$0xff]
    %v6364 = vld [vmem:[%s6349 + $0x70] sm:$0xff]
    %v6365 = vld [vmem:[%s6349 + $0x78] sm:$0xff]
    %6366 = vmatprep.subr.mxu0 0.0
    %6367 = vmatpush1.msra.mxu0 %v6350
    %6368 = vmatprep.subr.mxu0 0.0
    %6369 = vmatpush1.msra.mxu0 %v6351
    %6370 = vmatprep.subr.mxu0 0.0
    %6371 = vmatpush1.msra.mxu0 %v6352
    %6372 = vmatprep.subr.mxu0 0.0
    %6373 = vmatpush1.msra.mxu0 %v6353
    %6374 = vmatprep.subr.mxu0 0.0
    %6375 = vmatpush1.msra.mxu0 %v6354
    %6376 = vmatprep.subr.mxu0 0.0
    %6377 = vmatpush1.msra.mxu0 %v6355
    %6378 = vmatprep.subr.mxu0 0.0
    %6379 = vmatpush1.msra.mxu0 %v6356
    %6380 = vmatprep.subr.mxu0 0.0
    %6381 = vmatpush1.msra.mxu0 %v6357
    %6382 = vmatprep.subr.mxu0 0.0
    %6383 = vmatpush1.msra.mxu0 %v6358
    %6384 = vmatprep.subr.mxu0 0.0
    %6385 = vmatpush1.msra.mxu0 %v6359
    %6386 = vmatprep.subr.mxu0 0.0
    %6387 = vmatpush1.msra.mxu0 %v6360
    %6388 = vmatprep.subr.mxu0 0.0
    %6389 = vmatpush1.msra.mxu0 %v6361
    %6390 = vmatprep.subr.mxu0 0.0
    %6391 = vmatpush1.msra.mxu0 %v6362
    %6392 = vmatprep.subr.mxu0 0.0
    %6393 = vmatpush1.msra.mxu0 %v6363
    %6394 = vmatprep.subr.mxu0 0.0
    %6395 = vmatpush1.msra.mxu0 %v6364
    %6396 = vmatprep.subr.mxu0 0.0
    %6397 = vmatpush1.msra.mxu0 %v6365
    %6398 = vmatprep.subr.mxu0 0.0
    %6399 = vmatpush1.msra.mxu0 0.0
    %6400 = vmatprep.subr.mxu0 0.0
    %6401 = vmatpush1.msra.mxu0 0.0
    %6402 = vmatprep.subr.mxu0 0.0
    %6403 = vmatpush1.msra.mxu0 0.0
    %6404 = vmatprep.subr.mxu0 0.0
    %6405 = vmatpush1.msra.mxu0 0.0
    %6406 = vmatprep.subr.mxu0 0.0
    %6407 = vmatpush1.msra.mxu0 0.0
    %6408 = vmatprep.subr.mxu0 0.0
    %6409 = vmatpush1.msra.mxu0 0.0
    %6410 = vmatprep.subr.mxu0 0.0
    %6411 = vmatpush1.msra.mxu0 0.0
    %6412 = vmatprep.subr.mxu0 0.0
    %6413 = vmatpush1.msra.mxu0 0.0
    %6414 = vmatprep.subr.mxu0 0.0
    %6415 = vmatpush1.msra.mxu0 0.0
    %6416 = vmatprep.subr.mxu0 0.0
    %6417 = vmatpush1.msra.mxu0 0.0
    %6418 = vmatprep.subr.mxu0 0.0
    %6419 = vmatpush1.msra.mxu0 0.0
    %6420 = vmatprep.subr.mxu0 0.0
    %6421 = vmatpush1.msra.mxu0 0.0
    %6422 = vmatprep.subr.mxu0 0.0
    %6423 = vmatpush1.msra.mxu0 0.0
    %6424 = vmatprep.subr.mxu0 0.0
    %6425 = vmatpush1.msra.mxu0 0.0
    %6426 = vmatprep.subr.mxu0 0.0
    %6427 = vmatpush1.msra.mxu0 0.0
    %6428 = vmatprep.subr.mxu0 0.0
    %6429 = vmatpush1.msra.mxu0 0.0
    %6430 = vmatprep.mubr.f32.mxu0 0.0
    %6431 = vmatmul.mubr.f32.gmra.mrb[0].mxu0 %v6331
    %v6432 = vpop.f32.mrb[0].mxu0
    %v6433 = vadd.f32 0.0, %v6432
    %v6434 = vpop.f32.mrb[0].mxu0
    %6435 = vmatprep.mubr.f32.mxu0 0.0
    %6436 = vmatmul.mubr.f32.gmra.mrb[0].mxu0 %v6336
    %v6437 = vpop.f32.mrb[0].mxu0
    %v6438 = vadd.f32 0.0, %v6437
    %v6439 = vpop.f32.mrb[0].mxu0
    %6440 = vmatprep.mubr.f32.mxu0 0.0
    %6441 = vmatmul.mubr.f32.gmra.mrb[0].mxu0 %v6341
    %v6442 = vpop.f32.mrb[0].mxu0
    %v6443 = vadd.f32 0.0, %v6442
    %v6444 = vpop.f32.mrb[0].mxu0
    %6445 = vmatprep.mubr.f32.mxu0 0.0
    %6446 = vmatmul.mubr.f32.gmra.mrb[0].mxu0 %v6346
    %v6447 = vpop.f32.mrb[0].mxu0
    %v6448 = vadd.f32 0.0, %v6447
    %v6449 = vpop.f32.mrb[0].mxu0
    %6450 = vdwg.mxu0
    %v6451 = vadd.f32 %v6246, %v6433
    %v6452 = vadd.f32 %v6251, %v6438
    %v6453 = vadd.f32 %v6256, %v6443
    %v6454 = vadd.f32 %v6261, %v6448
    %6455 = vmatprep.subr.mxu0 0.0
    %6456 = vmatpush1.msra.mxu0 %v5887
    %6457 = vmatprep.subr.mxu0 0.0
    %6458 = vmatpush1.msra.mxu0 %v5888
    %6459 = vmatprep.subr.mxu0 0.0
    %6460 = vmatpush1.msra.mxu0 %v5889
    %6461 = vmatprep.subr.mxu0 0.0
    %6462 = vmatpush1.msra.mxu0 %v5890
    %6463 = vmatprep.subr.mxu0 0.0
    %6464 = vmatpush1.msra.mxu0 0.0
    %6465 = vmatprep.subr.mxu0 0.0
    %6466 = vmatpush1.msra.mxu0 0.0
    %6467 = vmatprep.subr.mxu0 0.0
    %6468 = vmatpush1.msra.mxu0 0.0
    %6469 = vmatprep.subr.mxu0 0.0
    %6470 = vmatpush1.msra.mxu0 0.0
    %6471 = vmatprep.subr.mxu0 0.0
    %6472 = vmatpush1.msra.mxu0 0.0
    %6473 = vmatprep.subr.mxu0 0.0
    %6474 = vmatpush1.msra.mxu0 0.0
    %6475 = vmatprep.subr.mxu0 0.0
    %6476 = vmatpush1.msra.mxu0 0.0
    %6477 = vmatprep.subr.mxu0 0.0
    %6478 = vmatpush1.msra.mxu0 0.0
    %6479 = vmatprep.subr.mxu0 0.0
    %6480 = vmatpush1.msra.mxu0 0.0
    %6481 = vmatprep.subr.mxu0 0.0
    %6482 = vmatpush1.msra.mxu0 0.0
    %6483 = vmatprep.subr.mxu0 0.0
    %6484 = vmatpush1.msra.mxu0 0.0
    %6485 = vmatprep.subr.mxu0 0.0
    %6486 = vmatpush1.msra.mxu0 0.0
    %6487 = vmatprep.subr.mxu0 0.0
    %6488 = vmatpush1.msra.mxu0 0.0
    %6489 = vmatprep.subr.mxu0 0.0
    %6490 = vmatpush1.msra.mxu0 0.0
    %6491 = vmatprep.subr.mxu0 0.0
    %6492 = vmatpush1.msra.mxu0 0.0
    %6493 = vmatprep.subr.mxu0 0.0
    %6494 = vmatpush1.msra.mxu0 0.0
    %6495 = vmatprep.subr.mxu0 0.0
    %6496 = vmatpush1.msra.mxu0 0.0
    %6497 = vmatprep.subr.mxu0 0.0
    %6498 = vmatpush1.msra.mxu0 0.0
    %6499 = vmatprep.subr.mxu0 0.0
    %6500 = vmatpush1.msra.mxu0 0.0
    %6501 = vmatprep.subr.mxu0 0.0
    %6502 = vmatpush1.msra.mxu0 0.0
    %6503 = vmatprep.subr.mxu0 0.0
    %6504 = vmatpush1.msra.mxu0 0.0
    %6505 = vmatprep.subr.mxu0 0.0
    %6506 = vmatpush1.msra.mxu0 0.0
    %6507 = vmatprep.subr.mxu0 0.0
    %6508 = vmatpush1.msra.mxu0 0.0
    %6509 = vmatprep.subr.mxu0 0.0
    %6510 = vmatpush1.msra.mxu0 0.0
    %6511 = vmatprep.subr.mxu0 0.0
    %6512 = vmatpush1.msra.mxu0 0.0
    %6513 = vmatprep.subr.mxu0 0.0
    %6514 = vmatpush1.msra.mxu0 0.0
    %6515 = vmatprep.subr.mxu0 0.0
    %6516 = vmatpush1.msra.mxu0 0.0
    %6517 = vmatprep.subr.mxu0 0.0
    %6518 = vmatpush1.msra.mxu0 0.0
    %6519 = vmatprep.mubr.f32.mxu0 0.0
    %6520 = vmatmul.mubr.f32.gmra.mrb[0].mxu0 %v934
    %v6521 = vpop.f32.mrb[0].mxu0
    %v6522 = vadd.f32 0.0, %v6521
    %v6523 = vpop.f32.mrb[0].mxu0
    %6524 = vmatprep.mubr.f32.mxu0 0.0
    %6525 = vmatmul.mubr.f32.gmra.mrb[0].mxu0 %v937
    %v6526 = vpop.f32.mrb[0].mxu0
    %v6527 = vadd.f32 0.0, %v6526
    %v6528 = vpop.f32.mrb[0].mxu0
    %6529 = vmatprep.mubr.f32.mxu0 0.0
    %6530 = vmatmul.mubr.f32.gmra.mrb[0].mxu0 %v940
    %v6531 = vpop.f32.mrb[0].mxu0
    %v6532 = vadd.f32 0.0, %v6531
    %v6533 = vpop.f32.mrb[0].mxu0
    %6534 = vmatprep.mubr.f32.mxu0 0.0
    %6535 = vmatmul.mubr.f32.gmra.mrb[0].mxu0 %v943
    %v6536 = vpop.f32.mrb[0].mxu0
    %v6537 = vadd.f32 0.0, %v6536
    %v6538 = vpop.f32.mrb[0].mxu0
    %6539 = vdwg.mxu0
    %s6540 = scalar_lea.vmem %s15, 384
    %v6541 = vld [vmem:[%s6540] sm:$0xff]
    %v6542 = vld [vmem:[%s6540 + $0x8] sm:$0xff]
    %v6543 = vld [vmem:[%s6540 + $0x10] sm:$0xff]
    %v6544 = vld [vmem:[%s6540 + $0x18] sm:$0xff]
    %v6545 = vld [vmem:[%s6540 + $0x20] sm:$0xff]
    %v6546 = vld [vmem:[%s6540 + $0x28] sm:$0xff]
    %v6547 = vld [vmem:[%s6540 + $0x30] sm:$0xff]
    %v6548 = vld [vmem:[%s6540 + $0x38] sm:$0xff]
    %v6549 = vld [vmem:[%s6540 + $0x40] sm:$0xff]
    %v6550 = vld [vmem:[%s6540 + $0x48] sm:$0xff]
    %v6551 = vld [vmem:[%s6540 + $0x50] sm:$0xff]
    %v6552 = vld [vmem:[%s6540 + $0x58] sm:$0xff]
    %v6553 = vld [vmem:[%s6540 + $0x60] sm:$0xff]
    %v6554 = vld [vmem:[%s6540 + $0x68] sm:$0xff]
    %v6555 = vld [vmem:[%s6540 + $0x70] sm:$0xff]
    %v6556 = vld [vmem:[%s6540 + $0x78] sm:$0xff]
    %6557 = vmatprep.subr.mxu0 0.0
    %6558 = vmatpush1.msra.mxu0 %v6541
    %6559 = vmatprep.subr.mxu0 0.0
    %6560 = vmatpush1.msra.mxu0 %v6542
    %6561 = vmatprep.subr.mxu0 0.0
    %6562 = vmatpush1.msra.mxu0 %v6543
    %6563 = vmatprep.subr.mxu0 0.0
    %6564 = vmatpush1.msra.mxu0 %v6544
    %6565 = vmatprep.subr.mxu0 0.0
    %6566 = vmatpush1.msra.mxu0 %v6545
    %6567 = vmatprep.subr.mxu0 0.0
    %6568 = vmatpush1.msra.mxu0 %v6546
    %6569 = vmatprep.subr.mxu0 0.0
    %6570 = vmatpush1.msra.mxu0 %v6547
    %6571 = vmatprep.subr.mxu0 0.0
    %6572 = vmatpush1.msra.mxu0 %v6548
    %6573 = vmatprep.subr.mxu0 0.0
    %6574 = vmatpush1.msra.mxu0 %v6549
    %6575 = vmatprep.subr.mxu0 0.0
    %6576 = vmatpush1.msra.mxu0 %v6550
    %6577 = vmatprep.subr.mxu0 0.0
    %6578 = vmatpush1.msra.mxu0 %v6551
    %6579 = vmatprep.subr.mxu0 0.0
    %6580 = vmatpush1.msra.mxu0 %v6552
    %6581 = vmatprep.subr.mxu0 0.0
    %6582 = vmatpush1.msra.mxu0 %v6553
    %6583 = vmatprep.subr.mxu0 0.0
    %6584 = vmatpush1.msra.mxu0 %v6554
    %6585 = vmatprep.subr.mxu0 0.0
    %6586 = vmatpush1.msra.mxu0 %v6555
    %6587 = vmatprep.subr.mxu0 0.0
    %6588 = vmatpush1.msra.mxu0 %v6556
    %6589 = vmatprep.subr.mxu0 0.0
    %6590 = vmatpush1.msra.mxu0 0.0
    %6591 = vmatprep.subr.mxu0 0.0
    %6592 = vmatpush1.msra.mxu0 0.0
    %6593 = vmatprep.subr.mxu0 0.0
    %6594 = vmatpush1.msra.mxu0 0.0
    %6595 = vmatprep.subr.mxu0 0.0
    %6596 = vmatpush1.msra.mxu0 0.0
    %6597 = vmatprep.subr.mxu0 0.0
    %6598 = vmatpush1.msra.mxu0 0.0
    %6599 = vmatprep.subr.mxu0 0.0
    %6600 = vmatpush1.msra.mxu0 0.0
    %6601 = vmatprep.subr.mxu0 0.0
    %6602 = vmatpush1.msra.mxu0 0.0
    %6603 = vmatprep.subr.mxu0 0.0
    %6604 = vmatpush1.msra.mxu0 0.0
    %6605 = vmatprep.subr.mxu0 0.0
    %6606 = vmatpush1.msra.mxu0 0.0
    %6607 = vmatprep.subr.mxu0 0.0
    %6608 = vmatpush1.msra.mxu0 0.0
    %6609 = vmatprep.subr.mxu0 0.0
    %6610 = vmatpush1.msra.mxu0 0.0
    %6611 = vmatprep.subr.mxu0 0.0
    %6612 = vmatpush1.msra.mxu0 0.0
    %6613 = vmatprep.subr.mxu0 0.0
    %6614 = vmatpush1.msra.mxu0 0.0
    %6615 = vmatprep.subr.mxu0 0.0
    %6616 = vmatpush1.msra.mxu0 0.0
    %6617 = vmatprep.subr.mxu0 0.0
    %6618 = vmatpush1.msra.mxu0 0.0
    %6619 = vmatprep.subr.mxu0 0.0
    %6620 = vmatpush1.msra.mxu0 0.0
    %6621 = vmatprep.mubr.f32.mxu0 0.0
    %6622 = vmatmul.mubr.f32.gmra.mrb[0].mxu0 %v6522
    %v6623 = vpop.f32.mrb[0].mxu0
    %v6624 = vadd.f32 0.0, %v6623
    %v6625 = vpop.f32.mrb[0].mxu0
    %6626 = vmatprep.mubr.f32.mxu0 0.0
    %6627 = vmatmul.mubr.f32.gmra.mrb[0].mxu0 %v6527
    %v6628 = vpop.f32.mrb[0].mxu0
    %v6629 = vadd.f32 0.0, %v6628
    %v6630 = vpop.f32.mrb[0].mxu0
    %6631 = vmatprep.mubr.f32.mxu0 0.0
    %6632 = vmatmul.mubr.f32.gmra.mrb[0].mxu0 %v6532
    %v6633 = vpop.f32.mrb[0].mxu0
    %v6634 = vadd.f32 0.0, %v6633
    %v6635 = vpop.f32.mrb[0].mxu0
    %6636 = vmatprep.mubr.f32.mxu0 0.0
    %6637 = vmatmul.mubr.f32.gmra.mrb[0].mxu0 %v6537
    %v6638 = vpop.f32.mrb[0].mxu0
    %v6639 = vadd.f32 0.0, %v6638
    %v6640 = vpop.f32.mrb[0].mxu0
    %6641 = vdwg.mxu0
    %v6642 = vadd.f32 %v6451, %v6624
    %v6643 = vadd.f32 %v6452, %v6629
    %v6644 = vadd.f32 %v6453, %v6634
    %v6645 = vadd.f32 %v6454, %v6639
    %6646 = vmatprep.subr.mxu0 0.0
    %6647 = vmatpush1.msra.mxu0 %v5887
    %6648 = vmatprep.subr.mxu0 0.0
    %6649 = vmatpush1.msra.mxu0 %v5888
    %6650 = vmatprep.subr.mxu0 0.0
    %6651 = vmatpush1.msra.mxu0 %v5889
    %6652 = vmatprep.subr.mxu0 0.0
    %6653 = vmatpush1.msra.mxu0 %v5890
    %6654 = vmatprep.subr.mxu0 0.0
    %6655 = vmatpush1.msra.mxu0 0.0
    %6656 = vmatprep.subr.mxu0 0.0
    %6657 = vmatpush1.msra.mxu0 0.0
    %6658 = vmatprep.subr.mxu0 0.0
    %6659 = vmatpush1.msra.mxu0 0.0
    %6660 = vmatprep.subr.mxu0 0.0
    %6661 = vmatpush1.msra.mxu0 0.0
    %6662 = vmatprep.subr.mxu0 0.0
    %6663 = vmatpush1.msra.mxu0 0.0
    %6664 = vmatprep.subr.mxu0 0.0
    %6665 = vmatpush1.msra.mxu0 0.0
    %6666 = vmatprep.subr.mxu0 0.0
    %6667 = vmatpush1.msra.mxu0 0.0
    %6668 = vmatprep.subr.mxu0 0.0
    %6669 = vmatpush1.msra.mxu0 0.0
    %6670 = vmatprep.subr.mxu0 0.0
    %6671 = vmatpush1.msra.mxu0 0.0
    %6672 = vmatprep.subr.mxu0 0.0
    %6673 = vmatpush1.msra.mxu0 0.0
    %6674 = vmatprep.subr.mxu0 0.0
    %6675 = vmatpush1.msra.mxu0 0.0
    %6676 = vmatprep.subr.mxu0 0.0
    %6677 = vmatpush1.msra.mxu0 0.0
    %6678 = vmatprep.subr.mxu0 0.0
    %6679 = vmatpush1.msra.mxu0 0.0
    %6680 = vmatprep.subr.mxu0 0.0
    %6681 = vmatpush1.msra.mxu0 0.0
    %6682 = vmatprep.subr.mxu0 0.0
    %6683 = vmatpush1.msra.mxu0 0.0
    %6684 = vmatprep.subr.mxu0 0.0
    %6685 = vmatpush1.msra.mxu0 0.0
    %6686 = vmatprep.subr.mxu0 0.0
    %6687 = vmatpush1.msra.mxu0 0.0
    %6688 = vmatprep.subr.mxu0 0.0
    %6689 = vmatpush1.msra.mxu0 0.0
    %6690 = vmatprep.subr.mxu0 0.0
    %6691 = vmatpush1.msra.mxu0 0.0
    %6692 = vmatprep.subr.mxu0 0.0
    %6693 = vmatpush1.msra.mxu0 0.0
    %6694 = vmatprep.subr.mxu0 0.0
    %6695 = vmatpush1.msra.mxu0 0.0
    %6696 = vmatprep.subr.mxu0 0.0
    %6697 = vmatpush1.msra.mxu0 0.0
    %6698 = vmatprep.subr.mxu0 0.0
    %6699 = vmatpush1.msra.mxu0 0.0
    %6700 = vmatprep.subr.mxu0 0.0
    %6701 = vmatpush1.msra.mxu0 0.0
    %6702 = vmatprep.subr.mxu0 0.0
    %6703 = vmatpush1.msra.mxu0 0.0
    %6704 = vmatprep.subr.mxu0 0.0
    %6705 = vmatpush1.msra.mxu0 0.0
    %6706 = vmatprep.subr.mxu0 0.0
    %6707 = vmatpush1.msra.mxu0 0.0
    %6708 = vmatprep.subr.mxu0 0.0
    %6709 = vmatpush1.msra.mxu0 0.0
    %6710 = vmatprep.mubr.f32.mxu0 0.0
    %6711 = vmatmul.mubr.f32.gmra.mrb[0].mxu0 %v1140
    %v6712 = vpop.f32.mrb[0].mxu0
    %v6713 = vadd.f32 0.0, %v6712
    %v6714 = vpop.f32.mrb[0].mxu0
    %6715 = vmatprep.mubr.f32.mxu0 0.0
    %6716 = vmatmul.mubr.f32.gmra.mrb[0].mxu0 %v1143
    %v6717 = vpop.f32.mrb[0].mxu0
    %v6718 = vadd.f32 0.0, %v6717
    %v6719 = vpop.f32.mrb[0].mxu0
    %6720 = vmatprep.mubr.f32.mxu0 0.0
    %6721 = vmatmul.mubr.f32.gmra.mrb[0].mxu0 %v1146
    %v6722 = vpop.f32.mrb[0].mxu0
    %v6723 = vadd.f32 0.0, %v6722
    %v6724 = vpop.f32.mrb[0].mxu0
    %6725 = vmatprep.mubr.f32.mxu0 0.0
    %6726 = vmatmul.mubr.f32.gmra.mrb[0].mxu0 %v1149
    %v6727 = vpop.f32.mrb[0].mxu0
    %v6728 = vadd.f32 0.0, %v6727
    %v6729 = vpop.f32.mrb[0].mxu0
    %6730 = vdwg.mxu0
    %s6731 = scalar_lea.vmem %s15, 512
    %v6732 = vld [vmem:[%s6731] sm:$0xff]
    %v6733 = vld [vmem:[%s6731 + $0x8] sm:$0xff]
    %v6734 = vld [vmem:[%s6731 + $0x10] sm:$0xff]
    %v6735 = vld [vmem:[%s6731 + $0x18] sm:$0xff]
    %v6736 = vld [vmem:[%s6731 + $0x20] sm:$0xff]
    %v6737 = vld [vmem:[%s6731 + $0x28] sm:$0xff]
    %v6738 = vld [vmem:[%s6731 + $0x30] sm:$0xff]
    %v6739 = vld [vmem:[%s6731 + $0x38] sm:$0xff]
    %v6740 = vld [vmem:[%s6731 + $0x40] sm:$0xff]
    %v6741 = vld [vmem:[%s6731 + $0x48] sm:$0xff]
    %v6742 = vld [vmem:[%s6731 + $0x50] sm:$0xff]
    %v6743 = vld [vmem:[%s6731 + $0x58] sm:$0xff]
    %v6744 = vld [vmem:[%s6731 + $0x60] sm:$0xff]
    %v6745 = vld [vmem:[%s6731 + $0x68] sm:$0xff]
    %v6746 = vld [vmem:[%s6731 + $0x70] sm:$0xff]
    %v6747 = vld [vmem:[%s6731 + $0x78] sm:$0xff]
    %6748 = vmatprep.subr.mxu0 0.0
    %6749 = vmatpush1.msra.mxu0 %v6732
    %6750 = vmatprep.subr.mxu0 0.0
    %6751 = vmatpush1.msra.mxu0 %v6733
    %6752 = vmatprep.subr.mxu0 0.0
    %6753 = vmatpush1.msra.mxu0 %v6734
    %6754 = vmatprep.subr.mxu0 0.0
    %6755 = vmatpush1.msra.mxu0 %v6735
    %6756 = vmatprep.subr.mxu0 0.0
    %6757 = vmatpush1.msra.mxu0 %v6736
    %6758 = vmatprep.subr.mxu0 0.0
    %6759 = vmatpush1.msra.mxu0 %v6737
    %6760 = vmatprep.subr.mxu0 0.0
    %6761 = vmatpush1.msra.mxu0 %v6738
    %6762 = vmatprep.subr.mxu0 0.0
    %6763 = vmatpush1.msra.mxu0 %v6739
    %6764 = vmatprep.subr.mxu0 0.0
    %6765 = vmatpush1.msra.mxu0 %v6740
    %6766 = vmatprep.subr.mxu0 0.0
    %6767 = vmatpush1.msra.mxu0 %v6741
    %6768 = vmatprep.subr.mxu0 0.0
    %6769 = vmatpush1.msra.mxu0 %v6742
    %6770 = vmatprep.subr.mxu0 0.0
    %6771 = vmatpush1.msra.mxu0 %v6743
    %6772 = vmatprep.subr.mxu0 0.0
    %6773 = vmatpush1.msra.mxu0 %v6744
    %6774 = vmatprep.subr.mxu0 0.0
    %6775 = vmatpush1.msra.mxu0 %v6745
    %6776 = vmatprep.subr.mxu0 0.0
    %6777 = vmatpush1.msra.mxu0 %v6746
    %6778 = vmatprep.subr.mxu0 0.0
    %6779 = vmatpush1.msra.mxu0 %v6747
    %6780 = vmatprep.subr.mxu0 0.0
    %6781 = vmatpush1.msra.mxu0 0.0
    %6782 = vmatprep.subr.mxu0 0.0
    %6783 = vmatpush1.msra.mxu0 0.0
    %6784 = vmatprep.subr.mxu0 0.0
    %6785 = vmatpush1.msra.mxu0 0.0
    %6786 = vmatprep.subr.mxu0 0.0
    %6787 = vmatpush1.msra.mxu0 0.0
    %6788 = vmatprep.subr.mxu0 0.0
    %6789 = vmatpush1.msra.mxu0 0.0
    %6790 = vmatprep.subr.mxu0 0.0
    %6791 = vmatpush1.msra.mxu0 0.0
    %6792 = vmatprep.subr.mxu0 0.0
    %6793 = vmatpush1.msra.mxu0 0.0
    %6794 = vmatprep.subr.mxu0 0.0
    %6795 = vmatpush1.msra.mxu0 0.0
    %6796 = vmatprep.subr.mxu0 0.0
    %6797 = vmatpush1.msra.mxu0 0.0
    %6798 = vmatprep.subr.mxu0 0.0
    %6799 = vmatpush1.msra.mxu0 0.0
    %6800 = vmatprep.subr.mxu0 0.0
    %6801 = vmatpush1.msra.mxu0 0.0
    %6802 = vmatprep.subr.mxu0 0.0
    %6803 = vmatpush1.msra.mxu0 0.0
    %6804 = vmatprep.subr.mxu0 0.0
    %6805 = vmatpush1.msra.mxu0 0.0
    %6806 = vmatprep.subr.mxu0 0.0
    %6807 = vmatpush1.msra.mxu0 0.0
    %6808 = vmatprep.subr.mxu0 0.0
    %6809 = vmatpush1.msra.mxu0 0.0
    %6810 = vmatprep.subr.mxu0 0.0
    %6811 = vmatpush1.msra.mxu0 0.0
    %6812 = vmatprep.mubr.f32.mxu0 0.0
    %6813 = vmatmul.mubr.f32.gmra.mrb[0].mxu0 %v6713
    %v6814 = vpop.f32.mrb[0].mxu0
    %v6815 = vadd.f32 0.0, %v6814
    %v6816 = vpop.f32.mrb[0].mxu0
    %6817 = vmatprep.mubr.f32.mxu0 0.0
    %6818 = vmatmul.mubr.f32.gmra.mrb[0].mxu0 %v6718
    %v6819 = vpop.f32.mrb[0].mxu0
    %v6820 = vadd.f32 0.0, %v6819
    %v6821 = vpop.f32.mrb[0].mxu0
    %6822 = vmatprep.mubr.f32.mxu0 0.0
    %6823 = vmatmul.mubr.f32.gmra.mrb[0].mxu0 %v6723
    %v6824 = vpop.f32.mrb[0].mxu0
    %v6825 = vadd.f32 0.0, %v6824
    %v6826 = vpop.f32.mrb[0].mxu0
    %6827 = vmatprep.mubr.f32.mxu0 0.0
    %6828 = vmatmul.mubr.f32.gmra.mrb[0].mxu0 %v6728
    %v6829 = vpop.f32.mrb[0].mxu0
    %v6830 = vadd.f32 0.0, %v6829
    %v6831 = vpop.f32.mrb[0].mxu0
    %6832 = vdwg.mxu0
    %v6833 = vadd.f32 %v6642, %v6815
    %v6834 = vadd.f32 %v6643, %v6820
    %v6835 = vadd.f32 %v6644, %v6825
    %v6836 = vadd.f32 %v6645, %v6830
    %6837 = vmatprep.subr.mxu0 0.0
    %6838 = vmatpush1.msra.mxu0 %v5887
    %6839 = vmatprep.subr.mxu0 0.0
    %6840 = vmatpush1.msra.mxu0 %v5888
    %6841 = vmatprep.subr.mxu0 0.0
    %6842 = vmatpush1.msra.mxu0 %v5889
    %6843 = vmatprep.subr.mxu0 0.0
    %6844 = vmatpush1.msra.mxu0 %v5890
    %6845 = vmatprep.subr.mxu0 0.0
    %6846 = vmatpush1.msra.mxu0 0.0
    %6847 = vmatprep.subr.mxu0 0.0
    %6848 = vmatpush1.msra.mxu0 0.0
    %6849 = vmatprep.subr.mxu0 0.0
    %6850 = vmatpush1.msra.mxu0 0.0
    %6851 = vmatprep.subr.mxu0 0.0
    %6852 = vmatpush1.msra.mxu0 0.0
    %6853 = vmatprep.subr.mxu0 0.0
    %6854 = vmatpush1.msra.mxu0 0.0
    %6855 = vmatprep.subr.mxu0 0.0
    %6856 = vmatpush1.msra.mxu0 0.0
    %6857 = vmatprep.subr.mxu0 0.0
    %6858 = vmatpush1.msra.mxu0 0.0
    %6859 = vmatprep.subr.mxu0 0.0
    %6860 = vmatpush1.msra.mxu0 0.0
    %6861 = vmatprep.subr.mxu0 0.0
    %6862 = vmatpush1.msra.mxu0 0.0
    %6863 = vmatprep.subr.mxu0 0.0
    %6864 = vmatpush1.msra.mxu0 0.0
    %6865 = vmatprep.subr.mxu0 0.0
    %6866 = vmatpush1.msra.mxu0 0.0
    %6867 = vmatprep.subr.mxu0 0.0
    %6868 = vmatpush1.msra.mxu0 0.0
    %6869 = vmatprep.subr.mxu0 0.0
    %6870 = vmatpush1.msra.mxu0 0.0
    %6871 = vmatprep.subr.mxu0 0.0
    %6872 = vmatpush1.msra.mxu0 0.0
    %6873 = vmatprep.subr.mxu0 0.0
    %6874 = vmatpush1.msra.mxu0 0.0
    %6875 = vmatprep.subr.mxu0 0.0
    %6876 = vmatpush1.msra.mxu0 0.0
    %6877 = vmatprep.subr.mxu0 0.0
    %6878 = vmatpush1.msra.mxu0 0.0
    %6879 = vmatprep.subr.mxu0 0.0
    %6880 = vmatpush1.msra.mxu0 0.0
    %6881 = vmatprep.subr.mxu0 0.0
    %6882 = vmatpush1.msra.mxu0 0.0
    %6883 = vmatprep.subr.mxu0 0.0
    %6884 = vmatpush1.msra.mxu0 0.0
    %6885 = vmatprep.subr.mxu0 0.0
    %6886 = vmatpush1.msra.mxu0 0.0
    %6887 = vmatprep.subr.mxu0 0.0
    %6888 = vmatpush1.msra.mxu0 0.0
    %6889 = vmatprep.subr.mxu0 0.0
    %6890 = vmatpush1.msra.mxu0 0.0
    %6891 = vmatprep.subr.mxu0 0.0
    %6892 = vmatpush1.msra.mxu0 0.0
    %6893 = vmatprep.subr.mxu0 0.0
    %6894 = vmatpush1.msra.mxu0 0.0
    %6895 = vmatprep.subr.mxu0 0.0
    %6896 = vmatpush1.msra.mxu0 0.0
    %6897 = vmatprep.subr.mxu0 0.0
    %6898 = vmatpush1.msra.mxu0 0.0
    %6899 = vmatprep.subr.mxu0 0.0
    %6900 = vmatpush1.msra.mxu0 0.0
    %6901 = vmatprep.mubr.f32.mxu0 0.0
    %6902 = vmatmul.mubr.f32.gmra.mrb[0].mxu0 %v1346
    %v6903 = vpop.f32.mrb[0].mxu0
    %v6904 = vadd.f32 0.0, %v6903
    %v6905 = vpop.f32.mrb[0].mxu0
    %6906 = vmatprep.mubr.f32.mxu0 0.0
    %6907 = vmatmul.mubr.f32.gmra.mrb[0].mxu0 %v1349
    %v6908 = vpop.f32.mrb[0].mxu0
    %v6909 = vadd.f32 0.0, %v6908
    %v6910 = vpop.f32.mrb[0].mxu0
    %6911 = vmatprep.mubr.f32.mxu0 0.0
    %6912 = vmatmul.mubr.f32.gmra.mrb[0].mxu0 %v1352
    %v6913 = vpop.f32.mrb[0].mxu0
    %v6914 = vadd.f32 0.0, %v6913
    %v6915 = vpop.f32.mrb[0].mxu0
    %6916 = vmatprep.mubr.f32.mxu0 0.0
    %6917 = vmatmul.mubr.f32.gmra.mrb[0].mxu0 %v1355
    %v6918 = vpop.f32.mrb[0].mxu0
    %v6919 = vadd.f32 0.0, %v6918
    %v6920 = vpop.f32.mrb[0].mxu0
    %6921 = vdwg.mxu0
    %s6922 = scalar_lea.vmem %s15, 640
    %v6923 = vld [vmem:[%s6922] sm:$0xff]
    %v6924 = vld [vmem:[%s6922 + $0x8] sm:$0xff]
    %v6925 = vld [vmem:[%s6922 + $0x10] sm:$0xff]
    %v6926 = vld [vmem:[%s6922 + $0x18] sm:$0xff]
    %v6927 = vld [vmem:[%s6922 + $0x20] sm:$0xff]
    %v6928 = vld [vmem:[%s6922 + $0x28] sm:$0xff]
    %v6929 = vld [vmem:[%s6922 + $0x30] sm:$0xff]
    %v6930 = vld [vmem:[%s6922 + $0x38] sm:$0xff]
    %v6931 = vld [vmem:[%s6922 + $0x40] sm:$0xff]
    %v6932 = vld [vmem:[%s6922 + $0x48] sm:$0xff]
    %v6933 = vld [vmem:[%s6922 + $0x50] sm:$0xff]
    %v6934 = vld [vmem:[%s6922 + $0x58] sm:$0xff]
    %v6935 = vld [vmem:[%s6922 + $0x60] sm:$0xff]
    %v6936 = vld [vmem:[%s6922 + $0x68] sm:$0xff]
    %v6937 = vld [vmem:[%s6922 + $0x70] sm:$0xff]
    %v6938 = vld [vmem:[%s6922 + $0x78] sm:$0xff]
    %6939 = vmatprep.subr.mxu0 0.0
    %6940 = vmatpush1.msra.mxu0 %v6923
    %6941 = vmatprep.subr.mxu0 0.0
    %6942 = vmatpush1.msra.mxu0 %v6924
    %6943 = vmatprep.subr.mxu0 0.0
    %6944 = vmatpush1.msra.mxu0 %v6925
    %6945 = vmatprep.subr.mxu0 0.0
    %6946 = vmatpush1.msra.mxu0 %v6926
    %6947 = vmatprep.subr.mxu0 0.0
    %6948 = vmatpush1.msra.mxu0 %v6927
    %6949 = vmatprep.subr.mxu0 0.0
    %6950 = vmatpush1.msra.mxu0 %v6928
    %6951 = vmatprep.subr.mxu0 0.0
    %6952 = vmatpush1.msra.mxu0 %v6929
    %6953 = vmatprep.subr.mxu0 0.0
    %6954 = vmatpush1.msra.mxu0 %v6930
    %6955 = vmatprep.subr.mxu0 0.0
    %6956 = vmatpush1.msra.mxu0 %v6931
    %6957 = vmatprep.subr.mxu0 0.0
    %6958 = vmatpush1.msra.mxu0 %v6932
    %6959 = vmatprep.subr.mxu0 0.0
    %6960 = vmatpush1.msra.mxu0 %v6933
    %6961 = vmatprep.subr.mxu0 0.0
    %6962 = vmatpush1.msra.mxu0 %v6934
    %6963 = vmatprep.subr.mxu0 0.0
    %6964 = vmatpush1.msra.mxu0 %v6935
    %6965 = vmatprep.subr.mxu0 0.0
    %6966 = vmatpush1.msra.mxu0 %v6936
    %6967 = vmatprep.subr.mxu0 0.0
    %6968 = vmatpush1.msra.mxu0 %v6937
    %6969 = vmatprep.subr.mxu0 0.0
    %6970 = vmatpush1.msra.mxu0 %v6938
    %6971 = vmatprep.subr.mxu0 0.0
    %6972 = vmatpush1.msra.mxu0 0.0
    %6973 = vmatprep.subr.mxu0 0.0
    %6974 = vmatpush1.msra.mxu0 0.0
    %6975 = vmatprep.subr.mxu0 0.0
    %6976 = vmatpush1.msra.mxu0 0.0
    %6977 = vmatprep.subr.mxu0 0.0
    %6978 = vmatpush1.msra.mxu0 0.0
    %6979 = vmatprep.subr.mxu0 0.0
    %6980 = vmatpush1.msra.mxu0 0.0
    %6981 = vmatprep.subr.mxu0 0.0
    %6982 = vmatpush1.msra.mxu0 0.0
    %6983 = vmatprep.subr.mxu0 0.0
    %6984 = vmatpush1.msra.mxu0 0.0
    %6985 = vmatprep.subr.mxu0 0.0
    %6986 = vmatpush1.msra.mxu0 0.0
    %6987 = vmatprep.subr.mxu0 0.0
    %6988 = vmatpush1.msra.mxu0 0.0
    %6989 = vmatprep.subr.mxu0 0.0
    %6990 = vmatpush1.msra.mxu0 0.0
    %6991 = vmatprep.subr.mxu0 0.0
    %6992 = vmatpush1.msra.mxu0 0.0
    %6993 = vmatprep.subr.mxu0 0.0
    %6994 = vmatpush1.msra.mxu0 0.0
    %6995 = vmatprep.subr.mxu0 0.0
    %6996 = vmatpush1.msra.mxu0 0.0
    %6997 = vmatprep.subr.mxu0 0.0
    %6998 = vmatpush1.msra.mxu0 0.0
    %6999 = vmatprep.subr.mxu0 0.0
    %7000 = vmatpush1.msra.mxu0 0.0
    %7001 = vmatprep.subr.mxu0 0.0
    %7002 = vmatpush1.msra.mxu0 0.0
    %7003 = vmatprep.mubr.f32.mxu0 0.0
    %7004 = vmatmul.mubr.f32.gmra.mrb[0].mxu0 %v6904
    %v7005 = vpop.f32.mrb[0].mxu0
    %v7006 = vadd.f32 0.0, %v7005
    %v7007 = vpop.f32.mrb[0].mxu0
    %7008 = vmatprep.mubr.f32.mxu0 0.0
    %7009 = vmatmul.mubr.f32.gmra.mrb[0].mxu0 %v6909
    %v7010 = vpop.f32.mrb[0].mxu0
    %v7011 = vadd.f32 0.0, %v7010
    %v7012 = vpop.f32.mrb[0].mxu0
    %7013 = vmatprep.mubr.f32.mxu0 0.0
    %7014 = vmatmul.mubr.f32.gmra.mrb[0].mxu0 %v6914
    %v7015 = vpop.f32.mrb[0].mxu0
    %v7016 = vadd.f32 0.0, %v7015
    %v7017 = vpop.f32.mrb[0].mxu0
    %7018 = vmatprep.mubr.f32.mxu0 0.0
    %7019 = vmatmul.mubr.f32.gmra.mrb[0].mxu0 %v6919
    %v7020 = vpop.f32.mrb[0].mxu0
    %v7021 = vadd.f32 0.0, %v7020
    %v7022 = vpop.f32.mrb[0].mxu0
    %7023 = vdwg.mxu0
    %v7024 = vadd.f32 %v6833, %v7006
    %v7025 = vadd.f32 %v6834, %v7011
    %v7026 = vadd.f32 %v6835, %v7016
    %v7027 = vadd.f32 %v6836, %v7021
    %7028 = vmatprep.subr.mxu0 0.0
    %7029 = vmatpush1.msra.mxu0 %v5887
    %7030 = vmatprep.subr.mxu0 0.0
    %7031 = vmatpush1.msra.mxu0 %v5888
    %7032 = vmatprep.subr.mxu0 0.0
    %7033 = vmatpush1.msra.mxu0 %v5889
    %7034 = vmatprep.subr.mxu0 0.0
    %7035 = vmatpush1.msra.mxu0 %v5890
    %7036 = vmatprep.subr.mxu0 0.0
    %7037 = vmatpush1.msra.mxu0 0.0
    %7038 = vmatprep.subr.mxu0 0.0
    %7039 = vmatpush1.msra.mxu0 0.0
    %7040 = vmatprep.subr.mxu0 0.0
    %7041 = vmatpush1.msra.mxu0 0.0
    %7042 = vmatprep.subr.mxu0 0.0
    %7043 = vmatpush1.msra.mxu0 0.0
    %7044 = vmatprep.subr.mxu0 0.0
    %7045 = vmatpush1.msra.mxu0 0.0
    %7046 = vmatprep.subr.mxu0 0.0
    %7047 = vmatpush1.msra.mxu0 0.0
    %7048 = vmatprep.subr.mxu0 0.0
    %7049 = vmatpush1.msra.mxu0 0.0
    %7050 = vmatprep.subr.mxu0 0.0
    %7051 = vmatpush1.msra.mxu0 0.0
    %7052 = vmatprep.subr.mxu0 0.0
    %7053 = vmatpush1.msra.mxu0 0.0
    %7054 = vmatprep.subr.mxu0 0.0
    %7055 = vmatpush1.msra.mxu0 0.0
    %7056 = vmatprep.subr.mxu0 0.0
    %7057 = vmatpush1.msra.mxu0 0.0
    %7058 = vmatprep.subr.mxu0 0.0
    %7059 = vmatpush1.msra.mxu0 0.0
    %7060 = vmatprep.subr.mxu0 0.0
    %7061 = vmatpush1.msra.mxu0 0.0
    %7062 = vmatprep.subr.mxu0 0.0
    %7063 = vmatpush1.msra.mxu0 0.0
    %7064 = vmatprep.subr.mxu0 0.0
    %7065 = vmatpush1.msra.mxu0 0.0
    %7066 = vmatprep.subr.mxu0 0.0
    %7067 = vmatpush1.msra.mxu0 0.0
    %7068 = vmatprep.subr.mxu0 0.0
    %7069 = vmatpush1.msra.mxu0 0.0
    %7070 = vmatprep.subr.mxu0 0.0
    %7071 = vmatpush1.msra.mxu0 0.0
    %7072 = vmatprep.subr.mxu0 0.0
    %7073 = vmatpush1.msra.mxu0 0.0
    %7074 = vmatprep.subr.mxu0 0.0
    %7075 = vmatpush1.msra.mxu0 0.0
    %7076 = vmatprep.subr.mxu0 0.0
    %7077 = vmatpush1.msra.mxu0 0.0
    %7078 = vmatprep.subr.mxu0 0.0
    %7079 = vmatpush1.msra.mxu0 0.0
    %7080 = vmatprep.subr.mxu0 0.0
    %7081 = vmatpush1.msra.mxu0 0.0
    %7082 = vmatprep.subr.mxu0 0.0
    %7083 = vmatpush1.msra.mxu0 0.0
    %7084 = vmatprep.subr.mxu0 0.0
    %7085 = vmatpush1.msra.mxu0 0.0
    %7086 = vmatprep.subr.mxu0 0.0
    %7087 = vmatpush1.msra.mxu0 0.0
    %7088 = vmatprep.subr.mxu0 0.0
    %7089 = vmatpush1.msra.mxu0 0.0
    %7090 = vmatprep.subr.mxu0 0.0
    %7091 = vmatpush1.msra.mxu0 0.0
    %7092 = vmatprep.mubr.f32.mxu0 0.0
    %7093 = vmatmul.mubr.f32.gmra.mrb[0].mxu0 %v1552
    %v7094 = vpop.f32.mrb[0].mxu0
    %v7095 = vadd.f32 0.0, %v7094
    %v7096 = vpop.f32.mrb[0].mxu0
    %7097 = vmatprep.mubr.f32.mxu0 0.0
    %7098 = vmatmul.mubr.f32.gmra.mrb[0].mxu0 %v1555
    %v7099 = vpop.f32.mrb[0].mxu0
    %v7100 = vadd.f32 0.0, %v7099
    %v7101 = vpop.f32.mrb[0].mxu0
    %7102 = vmatprep.mubr.f32.mxu0 0.0
    %7103 = vmatmul.mubr.f32.gmra.mrb[0].mxu0 %v1558
    %v7104 = vpop.f32.mrb[0].mxu0
    %v7105 = vadd.f32 0.0, %v7104
    %v7106 = vpop.f32.mrb[0].mxu0
    %7107 = vmatprep.mubr.f32.mxu0 0.0
    %7108 = vmatmul.mubr.f32.gmra.mrb[0].mxu0 %v1561
    %v7109 = vpop.f32.mrb[0].mxu0
    %v7110 = vadd.f32 0.0, %v7109
    %v7111 = vpop.f32.mrb[0].mxu0
    %7112 = vdwg.mxu0
    %s7113 = scalar_lea.vmem %s15, 768
    %v7114 = vld [vmem:[%s7113] sm:$0xff]
    %v7115 = vld [vmem:[%s7113 + $0x8] sm:$0xff]
    %v7116 = vld [vmem:[%s7113 + $0x10] sm:$0xff]
    %v7117 = vld [vmem:[%s7113 + $0x18] sm:$0xff]
    %v7118 = vld [vmem:[%s7113 + $0x20] sm:$0xff]
    %v7119 = vld [vmem:[%s7113 + $0x28] sm:$0xff]
    %v7120 = vld [vmem:[%s7113 + $0x30] sm:$0xff]
    %v7121 = vld [vmem:[%s7113 + $0x38] sm:$0xff]
    %v7122 = vld [vmem:[%s7113 + $0x40] sm:$0xff]
    %v7123 = vld [vmem:[%s7113 + $0x48] sm:$0xff]
    %v7124 = vld [vmem:[%s7113 + $0x50] sm:$0xff]
    %v7125 = vld [vmem:[%s7113 + $0x58] sm:$0xff]
    %v7126 = vld [vmem:[%s7113 + $0x60] sm:$0xff]
    %v7127 = vld [vmem:[%s7113 + $0x68] sm:$0xff]
    %v7128 = vld [vmem:[%s7113 + $0x70] sm:$0xff]
    %v7129 = vld [vmem:[%s7113 + $0x78] sm:$0xff]
    %7130 = vmatprep.subr.mxu0 0.0
    %7131 = vmatpush1.msra.mxu0 %v7114
    %7132 = vmatprep.subr.mxu0 0.0
    %7133 = vmatpush1.msra.mxu0 %v7115
    %7134 = vmatprep.subr.mxu0 0.0
    %7135 = vmatpush1.msra.mxu0 %v7116
    %7136 = vmatprep.subr.mxu0 0.0
    %7137 = vmatpush1.msra.mxu0 %v7117
    %7138 = vmatprep.subr.mxu0 0.0
    %7139 = vmatpush1.msra.mxu0 %v7118
    %7140 = vmatprep.subr.mxu0 0.0
    %7141 = vmatpush1.msra.mxu0 %v7119
    %7142 = vmatprep.subr.mxu0 0.0
    %7143 = vmatpush1.msra.mxu0 %v7120
    %7144 = vmatprep.subr.mxu0 0.0
    %7145 = vmatpush1.msra.mxu0 %v7121
    %7146 = vmatprep.subr.mxu0 0.0
    %7147 = vmatpush1.msra.mxu0 %v7122
    %7148 = vmatprep.subr.mxu0 0.0
    %7149 = vmatpush1.msra.mxu0 %v7123
    %7150 = vmatprep.subr.mxu0 0.0
    %7151 = vmatpush1.msra.mxu0 %v7124
    %7152 = vmatprep.subr.mxu0 0.0
    %7153 = vmatpush1.msra.mxu0 %v7125
    %7154 = vmatprep.subr.mxu0 0.0
    %7155 = vmatpush1.msra.mxu0 %v7126
    %7156 = vmatprep.subr.mxu0 0.0
    %7157 = vmatpush1.msra.mxu0 %v7127
    %7158 = vmatprep.subr.mxu0 0.0
    %7159 = vmatpush1.msra.mxu0 %v7128
    %7160 = vmatprep.subr.mxu0 0.0
    %7161 = vmatpush1.msra.mxu0 %v7129
    %7162 = vmatprep.subr.mxu0 0.0
    %7163 = vmatpush1.msra.mxu0 0.0
    %7164 = vmatprep.subr.mxu0 0.0
    %7165 = vmatpush1.msra.mxu0 0.0
    %7166 = vmatprep.subr.mxu0 0.0
    %7167 = vmatpush1.msra.mxu0 0.0
    %7168 = vmatprep.subr.mxu0 0.0
    %7169 = vmatpush1.msra.mxu0 0.0
    %7170 = vmatprep.subr.mxu0 0.0
    %7171 = vmatpush1.msra.mxu0 0.0
    %7172 = vmatprep.subr.mxu0 0.0
    %7173 = vmatpush1.msra.mxu0 0.0
    %7174 = vmatprep.subr.mxu0 0.0
    %7175 = vmatpush1.msra.mxu0 0.0
    %7176 = vmatprep.subr.mxu0 0.0
    %7177 = vmatpush1.msra.mxu0 0.0
    %7178 = vmatprep.subr.mxu0 0.0
    %7179 = vmatpush1.msra.mxu0 0.0
    %7180 = vmatprep.subr.mxu0 0.0
    %7181 = vmatpush1.msra.mxu0 0.0
    %7182 = vmatprep.subr.mxu0 0.0
    %7183 = vmatpush1.msra.mxu0 0.0
    %7184 = vmatprep.subr.mxu0 0.0
    %7185 = vmatpush1.msra.mxu0 0.0
    %7186 = vmatprep.subr.mxu0 0.0
    %7187 = vmatpush1.msra.mxu0 0.0
    %7188 = vmatprep.subr.mxu0 0.0
    %7189 = vmatpush1.msra.mxu0 0.0
    %7190 = vmatprep.subr.mxu0 0.0
    %7191 = vmatpush1.msra.mxu0 0.0
    %7192 = vmatprep.subr.mxu0 0.0
    %7193 = vmatpush1.msra.mxu0 0.0
    %7194 = vmatprep.mubr.f32.mxu0 0.0
    %7195 = vmatmul.mubr.f32.gmra.mrb[0].mxu0 %v7095
    %v7196 = vpop.f32.mrb[0].mxu0
    %v7197 = vadd.f32 0.0, %v7196
    %v7198 = vpop.f32.mrb[0].mxu0
    %7199 = vmatprep.mubr.f32.mxu0 0.0
    %7200 = vmatmul.mubr.f32.gmra.mrb[0].mxu0 %v7100
    %v7201 = vpop.f32.mrb[0].mxu0
    %v7202 = vadd.f32 0.0, %v7201
    %v7203 = vpop.f32.mrb[0].mxu0
    %7204 = vmatprep.mubr.f32.mxu0 0.0
    %7205 = vmatmul.mubr.f32.gmra.mrb[0].mxu0 %v7105
    %v7206 = vpop.f32.mrb[0].mxu0
    %v7207 = vadd.f32 0.0, %v7206
    %v7208 = vpop.f32.mrb[0].mxu0
    %7209 = vmatprep.mubr.f32.mxu0 0.0
    %7210 = vmatmul.mubr.f32.gmra.mrb[0].mxu0 %v7110
    %v7211 = vpop.f32.mrb[0].mxu0
    %v7212 = vadd.f32 0.0, %v7211
    %v7213 = vpop.f32.mrb[0].mxu0
    %7214 = vdwg.mxu0
    %v7215 = vadd.f32 %v7024, %v7197
    %v7216 = vadd.f32 %v7025, %v7202
    %v7217 = vadd.f32 %v7026, %v7207
    %v7218 = vadd.f32 %v7027, %v7212
    %v7219 = vld [vmem:[#allocation20] sm:$0x1]
    %v7221 = vlaneseq
    %v7222 = vshrl.u32 %v7221, 7
    %v7223 = vsub.s32 0, %v7222
    %v7224 = vrot.slane %v7219, %v7223
    %v7226 = vadd.f32 %v7215, %v7224
    %v7227 = vadd.f32 %v7216, %v7224
    %v7228 = vadd.f32 %v7217, %v7224
    %v7229 = vadd.f32 %v7218, %v7224
    %v7230 = vtanh.pop %v7226
    %v7231 = vtanh.pop %v7227
    %v7232 = vtanh.pop %v7228
    %v7233 = vtanh.pop %v7229
    %7234 = vst.msk [vmem:[#allocation28] sm:$0xff] %vm527, %v7230
    %7235 = vst.msk [vmem:[#allocation28 + $0x8] sm:$0xff] %vm527, %v7231
    %7236 = vst.msk [vmem:[#allocation28 + $0x10] sm:$0xff] %vm527, %v7232
    %7237 = vst.msk [vmem:[#allocation28 + $0x18] sm:$0xff] %vm527, %v7233
    // Predicated region
    $region146: #{mnist_net_forward.1} parent=1 // pred_check
      _
    $region147: #{mnist_net_forward.1} parent=1 // pred_check_branch
      %7239 = sbr.rel (0) target = $region149
    $region148: #{mnist_net_forward.1} parent=1 // pred_region
      %s7241 = ssub.s32 512, 512
      %7242 = vsyncadd [#allocation7], %s7241
      %s7243 = sshll.u32 [#allocation28], 4
      %s7244 = int_to_ptr.vmem [resolvable:$true] %s7243
      %7249 = dma.vmem_to_hbm [thread:$0]  %s7244, 512, %s23, [#allocation7], 128, 128, 8
    $region149: #{mnist_net_forward.1} parent=1 // pred_fallthru
      _
    // Predicated region
    $region150: #{mnist_net_forward.1} parent=1 // pred_check
      _
    $region151: #{mnist_net_forward.1} parent=1 // pred_check_branch
      %7251 = sbr.rel (0) target = $region153
    $region152: #{mnist_net_forward.1} parent=1 // pred_region
      %7252 = dma.done [#allocation7], 512
    $region153: #{mnist_net_forward.1} parent=1 // pred_fallthru
      _
    %7253 = vsyncpa [#allocation6], 1
    %7254 = vsyncpa [#allocation9], 1
    %7255 = vsyncpa [#allocation12], 1
    %7256 = vsyncpa [#allocation15], 1
    %7257 = vsyncpa [#allocation18], 1
    %7258 = vsyncpa [#allocation21], 1
    %7259 = vsyncpa [#allocation24], 1
    %7260 = vsyncpa [#allocation27], 1
    %7261 = vsyncpa [#allocation7], 1

</llo_original>
